<compile_context>
chip_gen: v7x
topology: tpu7x:2x2x1
jax: 0.10.0
libtpu: 0.0.40
codegen_flags: <defaults>
</compile_context>

<pallas_src>
import jax
import jax.numpy as jnp
import numpy as np
from jax.experimental import pallas as pl
from jax.experimental.pallas import tpu as pltpu

# Set to jnp.bfloat16 on v6e/v7x for lower HBM/VMEM traffic (f32 accumulation is
# kept either way); f32 default preserves exact reference semantics.
MATMUL_DTYPE = jnp.float32


def _round_up(x, m):
    return ((x + m - 1) // m) * m


# ----------------------------- Pallas kernels ------------------------------

def _conv_pool_kernel(pat_ref, w_ref, b_ref, o_ref):
    """relu(patches @ W + b) followed by max over the 4 pool-window offsets.

    pat_ref: (4*Mo, Kp)  patches, row order = (window offset d, pooled pos pq)
    w_ref:   (Kp, Cp)    zero-padded conv weight
    b_ref:   (1, Cp)     zero-padded bias (f32)
    o_ref:   (Mo, Cp)    pooled output (f32, lane-dense)
    """
    y = jnp.dot(pat_ref[...], w_ref[...], preferred_element_type=jnp.float32)
    y = jnp.maximum(y + b_ref[...], 0.0)
    mo = o_ref.shape[0]
    pooled = jnp.maximum(jnp.maximum(y[0 * mo:1 * mo], y[1 * mo:2 * mo]),
                         jnp.maximum(y[2 * mo:3 * mo], y[3 * mo:4 * mo]))
    o_ref[...] = pooled


def _mlp_kernel(x_ref, w1_ref, b1_ref, w2_ref, b2_ref, o_ref):
    """Fused fc1(+ReLU) and fc2 in a single kernel (whole arrays in VMEM)."""
    h = jnp.dot(x_ref[...], w1_ref[...], preferred_element_type=jnp.float32)
    h = jnp.maximum(h + b1_ref[...], 0.0)
    o = jnp.dot(h.astype(w2_ref.dtype), w2_ref[...],
                preferred_element_type=jnp.float32)
    o_ref[...] = o + b2_ref[...]


# ------------------------------- wrappers ----------------------------------

def _pool_conv_patches(x, k, pad, pool_stride, k_pad):
    """im2col restricted to the conv positions read by the 2x2 max-pool windows.

    x: (B, H, W, C).  Returns (patches, Po, Mo, Mo_pad) with patches shaped
    (B, 4*Mo_pad, k_pad); rows ordered (window offset d = 2*dh+dw, pooled row p,
    pooled col q); feature order along K is (kh, kw, cin).
    """
    B, H, W, C = x.shape
    xp = jnp.pad(x, ((0, 0), (pad, pad), (pad, pad), (0, 0)))
    hc = H + 2 * pad - k + 1                   # conv output spatial size
    po = (hc - 2) // pool_stride + 1           # pooled output spatial size
    mo = po * po
    mo_pad = _round_up(mo, 8)                  # keep row-group slices tile-aligned
    groups = []
    for dh in range(2):
        for dw in range(2):
            feats = []
            for kh in range(k):
                for kw in range(k):
                    r0, c0 = dh + kh, dw + kw
                    feats.append(jax.lax.slice(
                        xp,
                        (0, r0, c0, 0),
                        (B, r0 + pool_stride * (po - 1) + 1,
                         c0 + pool_stride * (po - 1) + 1, C),
                        (1, pool_stride, pool_stride, 1)))       # (B, po, po, C)
            g = jnp.concatenate(feats, axis=-1).reshape(B, mo, k * k * C)
            if mo_pad > mo:
                g = jnp.pad(g, ((0, 0), (0, mo_pad - mo), (0, 0)))
            groups.append(g)
    pat = jnp.concatenate(groups, axis=1)                         # (B, 4*mo_pad, k*k*C)
    if k_pad > k * k * C:
        pat = jnp.pad(pat, ((0, 0), (0, 0), (0, k_pad - k * k * C)))
    return pat.astype(MATMUL_DTYPE), po, mo, mo_pad


def conv_relu_pool(x, w, b, *, k, pad, pool_stride, cout):
    """Fused Conv2d(k, stride=1, padding=pad) + ReLU + MaxPool2d(2, pool_stride).

    x: (B, H, W, Cin) NHWC.  w: (k*k*Cin, cout) with row order (kh, kw, cin)
    (PyTorch Conv2d weights (cout, cin, kh, kw) must be permuted (2, 3, 1, 0)
    before reshaping).  Returns (B, Po, Po, cout) float32.
    """
    B, H, W, C = x.shape
    k_raw = k * k * C
    k_pad = _round_up(k_raw, 128)              # lane-dense K for the MXU
    c_pad = _round_up(cout, 128)               # lane-dense output channels
    pat, po, mo, mo_pad = _pool_conv_patches(x, k, pad, pool_stride, k_pad)
    wp = jnp.pad(w.astype(MATMUL_DTYPE), ((0, k_pad - k_raw), (0, c_pad - cout)))
    bp = jnp.pad(b.astype(jnp.float32), (0, c_pad - cout)).reshape(1, c_pad)

    out = pl.pallas_call(
        _conv_pool_kernel,
        out_shape=jax.ShapeDtypeStruct((B, mo_pad, c_pad), jnp.float32),
        grid=(B,),
        in_specs=[
            pl.BlockSpec((None, 4 * mo_pad, k_pad), lambda bi: (bi, 0, 0)),
            pl.BlockSpec((k_pad, c_pad), lambda bi: (0, 0)),
            pl.BlockSpec((1, c_pad), lambda bi: (0, 0)),
        ],
        out_specs=pl.BlockSpec((None, mo_pad, c_pad), lambda bi: (bi, 0, 0)),
        compiler_params=pltpu.CompilerParams(
            dimension_semantics=("parallel",)),   # >=2 parallel steps (v7x 2 TCs)
    )(pat, wp, bp)
    return out[:, :mo, :cout].reshape(B, po, po, cout)


def mlp_head(x, w1, b1, w2, b2, *, n_out):
    """Fused Linear(5408,128)+ReLU+Linear(128,n_out).  x: (B, 5408)."""
    B, k1 = x.shape
    n1 = w1.shape[1]
    m_pad = _round_up(B, 8)                    # sublane only, NOT 128
    n_pad = _round_up(n_out, 128)              # lane-dense fc2 output
    if m_pad > B:
        x = jnp.pad(x, ((0, m_pad - B), (0, 0)))
    w2p = jnp.pad(w2.astype(MATMUL_DTYPE), ((0, 0), (0, n_pad - n_out)))
    b2p = jnp.pad(b2.astype(jnp.float32), (0, n_pad - n_out)).reshape(1, n_pad)

    out = pl.pallas_call(
        _mlp_kernel,
        out_shape=jax.ShapeDtypeStruct((m_pad, n_pad), jnp.float32),
        grid=(1,),
        in_specs=[
            pl.BlockSpec((m_pad, k1), lambda i: (0, 0)),
            pl.BlockSpec((k1, n1), lambda i: (0, 0)),
            pl.BlockSpec((1, n1), lambda i: (0, 0)),
            pl.BlockSpec((n1, n_pad), lambda i: (0, 0)),
            pl.BlockSpec((1, n_pad), lambda i: (0, 0)),
        ],
        out_specs=pl.BlockSpec((m_pad, n_pad), lambda i: (0, 0)),
    )(x.astype(MATMUL_DTYPE), w1.astype(MATMUL_DTYPE),
      b1.astype(jnp.float32).reshape(1, n1), w2p, b2p)
    return out[:B, :n_out]


# ------------------------------ full network -------------------------------

def init_params(key):
    ks = jax.random.split(key, 8)

    def w(k, shape, scale=0.05):
        return scale * jax.random.normal(k, shape, dtype=jnp.float32)

    # Conv weights stored as (kh, kw, cin, cout).reshape(k*k*cin, cout).
    # (PyTorch Conv2d weight (cout, cin, kh, kw) -> permute(2, 3, 1, 0) first.)
    return {
        "w1": w(ks[0], (5, 5, 3, 16)).reshape(75, 16),     # Conv2d(3, 16, k=5)
        "b1": w(ks[1], (16,)),
        "w2": w(ks[2], (3, 3, 16, 32)).reshape(144, 32),   # Conv2d(16, 32, k=3)
        "b2": w(ks[3], (32,)),
        "wfc1": w(ks[4], (5408, 128)),                     # Linear(5408, 128)
        "bfc1": w(ks[5], (128,)),
        "wfc2": w(ks[6], (128, 9)),                        # Linear(128, 9)
        "bfc2": w(ks[7], (9,)),
    }


def classification_network_forward(obs, params):
    """obs: (B, 96, 96, 3) float32 -> logits (B, 9)."""
    B = obs.shape[0]
    # observation.permute(0, 3, 2, 1) -> NCHW with H/W swapped; NHWC equivalent:
    x = jnp.transpose(obs, (0, 2, 1, 3))                              # (B,96,96,3)

    # layer1: Conv2d(3,16,k=5,p=2) + ReLU + MaxPool2d(2, stride=4) -> (B,24,24,16)
    y = conv_relu_pool(x, params["w1"], params["b1"],
                       k=5, pad=2, pool_stride=4, cout=16)

    # dropout(p=0.5): identity at inference
    # TODO(synk): training-mode dropout (random mask + 1/(1-p) scale) not implemented.

    # layer2: Conv2d(16,32,k=3,p=2) + ReLU + MaxPool2d(2, stride=2) -> (B,13,13,32)
    y = conv_relu_pool(y, params["w2"], params["b2"],
                       k=3, pad=2, pool_stride=2, cout=32)

    # flatten in PyTorch NCHW order: (B, 32, 13, 13).reshape(B, -1)
    y = jnp.transpose(y, (0, 3, 1, 2)).reshape(B, 5408)

    # dropout: identity at inference; fc1 + fc2 fused in one kernel
    return mlp_head(y, params["wfc1"], params["bfc1"],
                    params["wfc2"], params["bfc2"], n_out=9)


# ------------------------- pure-XLA reference check -------------------------

def _reference_forward(obs, params):
    """Plain-XLA f32 (HIGHEST precision) reference, used only for validation."""
    hi = jax.lax.Precision.HIGHEST
    x = jnp.transpose(obs, (0, 2, 1, 3))

    def conv_relu(x, w, b, k, cin, cout, pad):
        wf = w.reshape(k, k, cin, cout)
        y = jax.lax.conv_general_dilated(
            x, wf, window_strides=(1, 1), padding=((pad, pad), (pad, pad)),
            dimension_numbers=("NHWC", "HWIO", "NHWC"), precision=hi)
        return jnp.maximum(y + b, 0.0)

    def pool(x, s):
        return jax.lax.reduce_window(
            x, -jnp.inf, jax.lax.max, (1, 2, 2, 1), (1, s, s, 1), "VALID")

    y = pool(conv_relu(x, params["w1"], params["b1"], 5, 3, 16, 2), 4)
    y = pool(conv_relu(y, params["w2"], params["b2"], 3, 16, 32, 2), 2)
    y = jnp.transpose(y, (0, 3, 1, 2)).reshape(obs.shape[0], -1)
    y = jnp.maximum(jnp.dot(y, params["wfc1"], precision=hi) + params["bfc1"], 0.0)
    return jnp.dot(y, params["wfc2"], precision=hi) + params["bfc2"]


if __name__ == "__main__":
    key = jax.random.PRNGKey(0)
    k_obs, k_par = jax.random.split(key)
    obs = jax.random.uniform(k_obs, (2, 96, 96, 3), dtype=jnp.float32)
    params = init_params(k_par)

    fwd = jax.jit(classification_network_forward)
    out = jax.block_until_ready(fwd(obs, params))
    assert out.shape == (2, 9) and out.dtype == jnp.float32

    ref = jax.block_until_ready(jax.jit(_reference_forward)(obs, params))
    scale = float(jnp.max(jnp.abs(ref)))
    np.testing.assert_allclose(np.asarray(out), np.asarray(ref),
                               rtol=2e-2, atol=2e-2 * scale + 1e-6)
    print("KERNEL_OK")
</pallas_src>

<mosaic_0001>
module attributes {stable_mosaic.version = 11 : i64} {
  func.func @_conv_pool_kernel(%arg0: i32, %arg1: memref<1x2304x128xf32, #tpu.memory_space<vmem>>, %arg2: memref<128x128xf32, #tpu.memory_space<vmem>>, %arg3: memref<1x128xf32, #tpu.memory_space<vmem>>, %arg4: memref<1x576x128xf32, #tpu.memory_space<vmem>>) attributes {dimension_semantics = [#tpu.dimension_semantics<parallel>], iteration_bounds = array<i64: 2>, scalar_prefetch = 0 : i64, scratch_operands = 0 : i64, tpu.core_type = #tpu.core_type<tc>, window_params = [{transform_indices = @transform_0, window_bounds = array<i64: 1, 2304, 128>}, {pipeline_mode = #tpu.pipeline_mode<synchronous>, transform_indices = @transform_1, window_bounds = array<i64: 128, 128>}, {pipeline_mode = #tpu.pipeline_mode<synchronous>, transform_indices = @transform_2, window_bounds = array<i64: 1, 128>}, {transform_indices = @transform_3, window_bounds = array<i64: 1, 576, 128>}]} {
    %c0 = arith.constant 0 : index
    %c0_0 = arith.constant 0 : index
    %c0_1 = arith.constant 0 : index
    %0 = vector.load %arg1[%c0, %c0_0, %c0_1] : memref<1x2304x128xf32, #tpu.memory_space<vmem>>, vector<1x2304x128xf32>
    %1 = vector.shape_cast %0 : vector<1x2304x128xf32> to vector<2304x128xf32>
    %c0_2 = arith.constant 0 : index
    %c0_3 = arith.constant 0 : index
    %2 = vector.load %arg2[%c0_2, %c0_3] : memref<128x128xf32, #tpu.memory_space<vmem>>, vector<128x128xf32>
    %cst = arith.constant dense<0.000000e+00> : vector<2304x128xf32>
    %3 = tpu.matmul %1, %2, %cst {dimension_numbers = #tpu.dot_dimension_numbers<[1], [0], [0], [1], [0, 0, 1, 1], [], []>} : vector<2304x128xf32>, vector<128x128xf32>, vector<2304x128xf32> -> vector<2304x128xf32>
    %c0_4 = arith.constant 0 : index
    %c0_5 = arith.constant 0 : index
    %4 = vector.load %arg3[%c0_4, %c0_5] : memref<1x128xf32, #tpu.memory_space<vmem>>, vector<1x128xf32>
    %5 = vector.broadcast %4 : vector<1x128xf32> to vector<2304x128xf32>
    %6 = arith.addf %3, %5 : vector<2304x128xf32>
    %cst_6 = arith.constant 0.000000e+00 : f32
    %7 = vector.broadcast %cst_6 : f32 to vector<2304x128xf32>
    %8 = arith.maximumf %6, %7 : vector<2304x128xf32>
    %9 = vector.extract_strided_slice %8 {offsets = [0, 0], sizes = [576, 128], strides = [1, 1]} : vector<2304x128xf32> to vector<576x128xf32>
    %10 = vector.extract_strided_slice %8 {offsets = [576, 0], sizes = [576, 128], strides = [1, 1]} : vector<2304x128xf32> to vector<576x128xf32>
    %11 = arith.maximumf %9, %10 : vector<576x128xf32>
    %12 = vector.extract_strided_slice %8 {offsets = [1152, 0], sizes = [576, 128], strides = [1, 1]} : vector<2304x128xf32> to vector<576x128xf32>
    %13 = vector.extract_strided_slice %8 {offsets = [1728, 0], sizes = [576, 128], strides = [1, 1]} : vector<2304x128xf32> to vector<576x128xf32>
    %14 = arith.maximumf %12, %13 : vector<576x128xf32>
    %15 = arith.maximumf %11, %14 : vector<576x128xf32>
    %c0_7 = arith.constant 0 : index
    %c0_8 = arith.constant 0 : index
    %c0_9 = arith.constant 0 : index
    %16 = vector.load %arg4[%c0_7, %c0_8, %c0_9] : memref<1x576x128xf32, #tpu.memory_space<vmem>>, vector<1x576x128xf32>
    %17 = vector.shape_cast %16 : vector<1x576x128xf32> to vector<576x128xf32>
    %18 = vector.shape_cast %15 : vector<576x128xf32> to vector<1x576x128xf32>
    tpu.vector_store %arg4[%c0_7, %c0_8, %c0_9], %18 {strides = array<i32>} : memref<1x576x128xf32, #tpu.memory_space<vmem>>, vector<1x576x128xf32>,
    return
  }
  func.func @transform_0(%arg0: i32) -> (i32, i32, i32) {
    %c0_i32 = arith.constant 0 : i32
    %c0_i32_0 = arith.constant 0 : i32
    %c0_i32_1 = arith.constant 0 : i32
    return %arg0, %c0_i32, %c0_i32_0 : i32, i32, i32
  }
  func.func @transform_1(%arg0: i32) -> (i32, i32) {
    %c0_i32 = arith.constant 0 : i32
    %c0_i32_0 = arith.constant 0 : i32
    %c0_i32_1 = arith.constant 0 : i32
    return %c0_i32, %c0_i32_0 : i32, i32
  }
  func.func @transform_2(%arg0: i32) -> (i32, i32) {
    %c0_i32 = arith.constant 0 : i32
    %c0_i32_0 = arith.constant 0 : i32
    %c0_i32_1 = arith.constant 0 : i32
    return %c0_i32, %c0_i32_0 : i32, i32
  }
  func.func @transform_3(%arg0: i32) -> (i32, i32, i32) {
    %c0_i32 = arith.constant 0 : i32
    %c0_i32_0 = arith.constant 0 : i32
    %c0_i32_1 = arith.constant 0 : i32
    return %arg0, %c0_i32, %c0_i32_0 : i32, i32, i32
  }
}

module attributes {stable_mosaic.version = 11 : i64} {
  func.func @_conv_pool_kernel(%arg0: i32, %arg1: memref<1x704x256xf32, #tpu.memory_space<vmem>>, %arg2: memref<256x128xf32, #tpu.memory_space<vmem>>, %arg3: memref<1x128xf32, #tpu.memory_space<vmem>>, %arg4: memref<1x176x128xf32, #tpu.memory_space<vmem>>) attributes {dimension_semantics = [#tpu.dimension_semantics<parallel>], iteration_bounds = array<i64: 2>, scalar_prefetch = 0 : i64, scratch_operands = 0 : i64, tpu.core_type = #tpu.core_type<tc>, window_params = [{transform_indices = @transform_0, window_bounds = array<i64: 1, 704, 256>}, {pipeline_mode = #tpu.pipeline_mode<synchronous>, transform_indices = @transform_1, window_bounds = array<i64: 256, 128>}, {pipeline_mode = #tpu.pipeline_mode<synchronous>, transform_indices = @transform_2, window_bounds = array<i64: 1, 128>}, {transform_indices = @transform_3, window_bounds = array<i64: 1, 176, 128>}]} {
    %c0 = arith.constant 0 : index
    %c0_0 = arith.constant 0 : index
    %c0_1 = arith.constant 0 : index
    %0 = vector.load %arg1[%c0, %c0_0, %c0_1] : memref<1x704x256xf32, #tpu.memory_space<vmem>>, vector<1x704x256xf32>
    %1 = vector.shape_cast %0 : vector<1x704x256xf32> to vector<704x256xf32>
    %c0_2 = arith.constant 0 : index
    %c0_3 = arith.constant 0 : index
    %2 = vector.load %arg2[%c0_2, %c0_3] : memref<256x128xf32, #tpu.memory_space<vmem>>, vector<256x128xf32>
    %cst = arith.constant dense<0.000000e+00> : vector<704x128xf32>
    %3 = tpu.matmul %1, %2, %cst {dimension_numbers = #tpu.dot_dimension_numbers<[1], [0], [0], [1], [0, 0, 1, 1], [], []>} : vector<704x256xf32>, vector<256x128xf32>, vector<704x128xf32> -> vector<704x128xf32>
    %c0_4 = arith.constant 0 : index
    %c0_5 = arith.constant 0 : index
    %4 = vector.load %arg3[%c0_4, %c0_5] : memref<1x128xf32, #tpu.memory_space<vmem>>, vector<1x128xf32>
    %5 = vector.broadcast %4 : vector<1x128xf32> to vector<704x128xf32>
    %6 = arith.addf %3, %5 : vector<704x128xf32>
    %cst_6 = arith.constant 0.000000e+00 : f32
    %7 = vector.broadcast %cst_6 : f32 to vector<704x128xf32>
    %8 = arith.maximumf %6, %7 : vector<704x128xf32>
    %9 = vector.extract_strided_slice %8 {offsets = [0, 0], sizes = [176, 128], strides = [1, 1]} : vector<704x128xf32> to vector<176x128xf32>
    %10 = vector.extract_strided_slice %8 {offsets = [176, 0], sizes = [176, 128], strides = [1, 1]} : vector<704x128xf32> to vector<176x128xf32>
    %11 = arith.maximumf %9, %10 : vector<176x128xf32>
    %12 = vector.extract_strided_slice %8 {offsets = [352, 0], sizes = [176, 128], strides = [1, 1]} : vector<704x128xf32> to vector<176x128xf32>
    %13 = vector.extract_strided_slice %8 {offsets = [528, 0], sizes = [176, 128], strides = [1, 1]} : vector<704x128xf32> to vector<176x128xf32>
    %14 = arith.maximumf %12, %13 : vector<176x128xf32>
    %15 = arith.maximumf %11, %14 : vector<176x128xf32>
    %c0_7 = arith.constant 0 : index
    %c0_8 = arith.constant 0 : index
    %c0_9 = arith.constant 0 : index
    %16 = vector.load %arg4[%c0_7, %c0_8, %c0_9] : memref<1x176x128xf32, #tpu.memory_space<vmem>>, vector<1x176x128xf32>
    %17 = vector.shape_cast %16 : vector<1x176x128xf32> to vector<176x128xf32>
    %18 = vector.shape_cast %15 : vector<176x128xf32> to vector<1x176x128xf32>
    tpu.vector_store %arg4[%c0_7, %c0_8, %c0_9], %18 {strides = array<i32>} : memref<1x176x128xf32, #tpu.memory_space<vmem>>, vector<1x176x128xf32>,
    return
  }
  func.func @transform_0(%arg0: i32) -> (i32, i32, i32) {
    %c0_i32 = arith.constant 0 : i32
    %c0_i32_0 = arith.constant 0 : i32
    %c0_i32_1 = arith.constant 0 : i32
    return %arg0, %c0_i32, %c0_i32_0 : i32, i32, i32
  }
  func.func @transform_1(%arg0: i32) -> (i32, i32) {
    %c0_i32 = arith.constant 0 : i32
    %c0_i32_0 = arith.constant 0 : i32
    %c0_i32_1 = arith.constant 0 : i32
    return %c0_i32, %c0_i32_0 : i32, i32
  }
  func.func @transform_2(%arg0: i32) -> (i32, i32) {
    %c0_i32 = arith.constant 0 : i32
    %c0_i32_0 = arith.constant 0 : i32
    %c0_i32_1 = arith.constant 0 : i32
    return %c0_i32, %c0_i32_0 : i32, i32
  }
  func.func @transform_3(%arg0: i32) -> (i32, i32, i32) {
    %c0_i32 = arith.constant 0 : i32
    %c0_i32_0 = arith.constant 0 : i32
    %c0_i32_1 = arith.constant 0 : i32
    return %arg0, %c0_i32, %c0_i32_0 : i32, i32, i32
  }
}

module attributes {stable_mosaic.version = 11 : i64} {
  func.func @_mlp_kernel(%arg0: i32, %arg1: memref<8x5408xf32, #tpu.memory_space<vmem>>, %arg2: memref<5408x128xf32, #tpu.memory_space<vmem>>, %arg3: memref<1x128xf32, #tpu.memory_space<vmem>>, %arg4: memref<128x128xf32, #tpu.memory_space<vmem>>, %arg5: memref<1x128xf32, #tpu.memory_space<vmem>>, %arg6: memref<8x128xf32, #tpu.memory_space<vmem>>) attributes {dimension_semantics = [#tpu.dimension_semantics<arbitrary>], iteration_bounds = array<i64: 1>, scalar_prefetch = 0 : i64, scratch_operands = 0 : i64, tpu.core_type = #tpu.core_type<tc>, window_params = [{pipeline_mode = #tpu.pipeline_mode<synchronous>, transform_indices = @transform_0, window_bounds = array<i64: 8, 5408>}, {pipeline_mode = #tpu.pipeline_mode<synchronous>, transform_indices = @transform_1, window_bounds = array<i64: 5408, 128>}, {pipeline_mode = #tpu.pipeline_mode<synchronous>, transform_indices = @transform_2, window_bounds = array<i64: 1, 128>}, {pipeline_mode = #tpu.pipeline_mode<synchronous>, transform_indices = @transform_3, window_bounds = array<i64: 128, 128>}, {pipeline_mode = #tpu.pipeline_mode<synchronous>, transform_indices = @transform_4, window_bounds = array<i64: 1, 128>}, {pipeline_mode = #tpu.pipeline_mode<synchronous>, transform_indices = @transform_5, window_bounds = array<i64: 8, 128>}]} {
    %c0 = arith.constant 0 : index
    %c0_0 = arith.constant 0 : index
    %0 = vector.load %arg1[%c0, %c0_0] : memref<8x5408xf32, #tpu.memory_space<vmem>>, vector<8x5408xf32>
    %c0_1 = arith.constant 0 : index
    %c0_2 = arith.constant 0 : index
    %1 = vector.load %arg2[%c0_1, %c0_2] : memref<5408x128xf32, #tpu.memory_space<vmem>>, vector<5408x128xf32>
    %cst = arith.constant dense<0.000000e+00> : vector<8x128xf32>
    %2 = tpu.matmul %0, %1, %cst {dimension_numbers = #tpu.dot_dimension_numbers<[1], [0], [0], [1], [0, 0, 1, 1], [], []>} : vector<8x5408xf32>, vector<5408x128xf32>, vector<8x128xf32> -> vector<8x128xf32>
    %c0_3 = arith.constant 0 : index
    %c0_4 = arith.constant 0 : index
    %3 = vector.load %arg3[%c0_3, %c0_4] : memref<1x128xf32, #tpu.memory_space<vmem>>, vector<1x128xf32>
    %4 = vector.broadcast %3 : vector<1x128xf32> to vector<8x128xf32>
    %5 = arith.addf %2, %4 : vector<8x128xf32>
    %cst_5 = arith.constant 0.000000e+00 : f32
    %6 = vector.broadcast %cst_5 : f32 to vector<8x128xf32>
    %7 = arith.maximumf %5, %6 : vector<8x128xf32>
    %c0_6 = arith.constant 0 : index
    %c0_7 = arith.constant 0 : index
    %8 = vector.load %arg4[%c0_6, %c0_7] : memref<128x128xf32, #tpu.memory_space<vmem>>, vector<128x128xf32>
    %cst_8 = arith.constant dense<0.000000e+00> : vector<8x128xf32>
    %9 = tpu.matmul %7, %8, %cst_8 {dimension_numbers = #tpu.dot_dimension_numbers<[1], [0], [0], [1], [0, 0, 1, 1], [], []>} : vector<8x128xf32>, vector<128x128xf32>, vector<8x128xf32> -> vector<8x128xf32>
    %c0_9 = arith.constant 0 : index
    %c0_10 = arith.constant 0 : index
    %10 = vector.load %arg5[%c0_9, %c0_10] : memref<1x128xf32, #tpu.memory_space<vmem>>, vector<1x128xf32>
    %11 = vector.broadcast %10 : vector<1x128xf32> to vector<8x128xf32>
    %12 = arith.addf %9, %11 : vector<8x128xf32>
    %c0_11 = arith.constant 0 : index
    %c0_12 = arith.constant 0 : index
    %13 = vector.load %arg6[%c0_11, %c0_12] : memref<8x128xf32, #tpu.memory_space<vmem>>, vector<8x128xf32>
    tpu.vector_store %arg6[%c0_11, %c0_12], %12 {strides = array<i32>} : memref<8x128xf32, #tpu.memory_space<vmem>>, vector<8x128xf32>,
    return
  }
  func.func @transform_0(%arg0: i32) -> (i32, i32) {
    %c0_i32 = arith.constant 0 : i32
    %c0_i32_0 = arith.constant 0 : i32
    %c0_i32_1 = arith.constant 0 : i32
    return %c0_i32, %c0_i32_0 : i32, i32
  }
  func.func @transform_1(%arg0: i32) -> (i32, i32) {
    %c0_i32 = arith.constant 0 : i32
    %c0_i32_0 = arith.constant 0 : i32
    %c0_i32_1 = arith.constant 0 : i32
    return %c0_i32, %c0_i32_0 : i32, i32
  }
  func.func @transform_2(%arg0: i32) -> (i32, i32) {
    %c0_i32 = arith.constant 0 : i32
    %c0_i32_0 = arith.constant 0 : i32
    %c0_i32_1 = arith.constant 0 : i32
    return %c0_i32, %c0_i32_0 : i32, i32
  }
  func.func @transform_3(%arg0: i32) -> (i32, i32) {
    %c0_i32 = arith.constant 0 : i32
    %c0_i32_0 = arith.constant 0 : i32
    %c0_i32_1 = arith.constant 0 : i32
    return %c0_i32, %c0_i32_0 : i32, i32
  }
  func.func @transform_4(%arg0: i32) -> (i32, i32) {
    %c0_i32 = arith.constant 0 : i32
    %c0_i32_0 = arith.constant 0 : i32
    %c0_i32_1 = arith.constant 0 : i32
    return %c0_i32, %c0_i32_0 : i32, i32
  }
  func.func @transform_5(%arg0: i32) -> (i32, i32) {
    %c0_i32 = arith.constant 0 : i32
    %c0_i32_0 = arith.constant 0 : i32
    %c0_i32_1 = arith.constant 0 : i32
    return %c0_i32, %c0_i32_0 : i32, i32
  }
}

</mosaic_0001>

<llo_original>
// kernel: classification_network_forward.3
$region0: #{classification_network_forward.3}
  #allocation0 [shape = 'u32[]', space=smem, size = 0x4, offset = 0x4, fixed_abs, tag = 'smem constant byte address 0x4 - core index']
  #allocation1 [shape = 'u32[144,128]{1,0:T(1,128)}', space=vmem, size = 0x12000, scoped, tag = 'internal scratch']
  %s0 = inlined_call_operand.vmem [shape: f32[2,2304,128], index: 0, kind: input, shape index: {}]
  %s1 = inlined_call_operand.vmem [shape: f32[128,128], index: 1, kind: input, shape index: {}]
  %s2 = inlined_call_operand.vmem [shape: f32[1,128], index: 2, kind: input, shape index: {}]
  %s3 = inlined_call_operand.vmem [shape: f32[2,576,128], index: 3, kind: output, shape index: {}]
  %s4 = sld [smem:[#allocation0]]
  $region45: #{classification_network_forward.3} parent=0
    _
  %s6 = ssub.s32 1, %s4
  %s7 = scalar_select 0, %s6, %s4
  loop: start=0, step=1, limit=4
  $region2: #{classification_network_forward.3} parent=0 // loop_pre_header
    _
  $region3: #{classification_network_forward.3} parent=0 // loop_header
    %s9 = sphi 0, %s13
    %p10 = scmp.ge.s32.totalorder %s9, 4
    %s19 = sphi 0, %s21
    %s22 = sphi 0, %s19
    %s23 = sphi 0, %s22
    %s39 = sphi 0, %s23
    %s43 = sphi 0, %s43
    %s45 = sphi 0, %s43
    %s46 = sphi 0, %s45
    %s60 = sphi 0, %s46
    %s64 = sphi 0, %s64
    %s66 = sphi 0, %s64
    %s67 = sphi 0, %s66
    %s81 = sphi 0, %s67
    %s87 = sphi 0, %s89
    %s90 = sphi 0, %s87
    %s91 = sphi 0, %s90
    %s107 = sphi 0, %s91
  $region4: #{classification_network_forward.3} parent=0 // loop_header_branch
    %12 = sbr.rel (%p10) target = $region8
  $region5: #{classification_network_forward.3} parent=0 // loop_body
    %s14 = ssub.s32 %s9, 1
    %s15 = ssub.s32 %s9, 2
    %s16 = sadd.s32 %s9, 1
    %s17 = ssub.s32 %s9, %s16
    %p18 = scmp.eq.s32.totalorder %s17, 0
    %s20 = sadd.s32 %s19, 1
    %s21 = scalar_select %p18, %s19, %s20
    %p24 = pneg %p18
    %p25 = scmp.eq.s32.totalorder %s9, 1
    %p26 = por %p24, %p25
    %p27 = scmp.ne.s32.totalorder %s19, %s22
    %p28 = scmp.eq.s32.totalorder %s9, 0
    %p29 = por %p27, %p28
    %p30 = scmp.ne.s32.totalorder %s19, %s22
    %p31 = scmp.eq.s32.totalorder %s14, 1
    %p32 = por %p30, %p31
    %p33 = scmp.ne.s32.totalorder %s22, %s23
    %p34 = scmp.eq.s32.totalorder %s14, 0
    %p35 = por %p33, %p34
    %p36 = scmp.ne.s32.totalorder %s22, %s23
    %p37 = scmp.eq.s32.totalorder %s15, 1
    %p38 = por %p36, %p37
    %p40 = scmp.ne.s32.totalorder %s23, %s39
    %p41 = scmp.eq.s32.totalorder %s15, 0
    %p42 = por %p40, %p41
    %s44 = sadd.s32 %s43, 1
    %p47 = scmp.eq.s32.totalorder %s9, 1
    %p48 = scmp.ne.s32.totalorder %s43, %s45
    %p49 = scmp.eq.s32.totalorder %s9, 0
    %p50 = por %p48, %p49
    %p51 = scmp.ne.s32.totalorder %s43, %s45
    %p52 = scmp.eq.s32.totalorder %s14, 1
    %p53 = por %p51, %p52
    %p54 = scmp.ne.s32.totalorder %s45, %s46
    %p55 = scmp.eq.s32.totalorder %s14, 0
    %p56 = por %p54, %p55
    %p57 = scmp.ne.s32.totalorder %s45, %s46
    %p58 = scmp.eq.s32.totalorder %s15, 1
    %p59 = por %p57, %p58
    %p61 = scmp.ne.s32.totalorder %s46, %s60
    %p62 = scmp.eq.s32.totalorder %s15, 0
    %p63 = por %p61, %p62
    %s65 = sadd.s32 %s64, 1
    %p68 = scmp.eq.s32.totalorder %s9, 1
    %p69 = scmp.ne.s32.totalorder %s64, %s66
    %p70 = scmp.eq.s32.totalorder %s9, 0
    %p71 = por %p69, %p70
    %p72 = scmp.ne.s32.totalorder %s64, %s66
    %p73 = scmp.eq.s32.totalorder %s14, 1
    %p74 = por %p72, %p73
    %p75 = scmp.ne.s32.totalorder %s66, %s67
    %p76 = scmp.eq.s32.totalorder %s14, 0
    %p77 = por %p75, %p76
    %p78 = scmp.ne.s32.totalorder %s66, %s67
    %p79 = scmp.eq.s32.totalorder %s15, 1
    %p80 = por %p78, %p79
    %p82 = scmp.ne.s32.totalorder %s67, %s81
    %p83 = scmp.eq.s32.totalorder %s15, 0
    %p84 = por %p82, %p83
    %s85 = ssub.s32 %s9, %s16
    %p86 = scmp.eq.s32.totalorder %s85, 0
    %s88 = sadd.s32 %s87, 1
    %s89 = scalar_select %p86, %s87, %s88
    %p92 = pneg %p86
    %p93 = scmp.eq.s32.totalorder %s9, 1
    %p94 = por %p92, %p93
    %p95 = scmp.ne.s32.totalorder %s87, %s90
    %p96 = scmp.eq.s32.totalorder %s9, 0
    %p97 = por %p95, %p96
    %p98 = scmp.ne.s32.totalorder %s87, %s90
    %p99 = scmp.eq.s32.totalorder %s14, 1
    %p100 = por %p98, %p99
    %p101 = scmp.ne.s32.totalorder %s90, %s91
    %p102 = scmp.eq.s32.totalorder %s14, 0
    %p103 = por %p101, %p102
    %p104 = scmp.ne.s32.totalorder %s90, %s91
    %p105 = scmp.eq.s32.totalorder %s15, 1
    %p106 = por %p104, %p105
    %p108 = scmp.ne.s32.totalorder %s91, %s107
    %p109 = scmp.eq.s32.totalorder %s15, 0
    %p110 = por %p108, %p109
    %p111 = scmp.le.s32.totalorder 1, %s9
    %p112 = scmp.lt.s32.totalorder %s9, 3
    %p113 = pnand %p111, %p112
    %p114 = pneg %p113
    // Predicated region
    $region9: #{classification_network_forward.3} parent=5 // pred_check
      _
    $region10: #{classification_network_forward.3} parent=5 // pred_check_branch
      %116 = sbr.rel (%p113) target = $region12
    $region11: #{classification_network_forward.3} parent=5 // pred_region
      %s117 = ssub.s32 %s9, 1
      // Predicated region
      $region13: #{classification_network_forward.3} parent=11 // pred_check
        %p118 = pneg %p56
      $region14: #{classification_network_forward.3} parent=11 // pred_check_branch
        %120 = sbr.rel (%p118) target = $region16
      $region15: #{classification_network_forward.3} parent=11 // pred_region
        _
      $region16: #{classification_network_forward.3} parent=11 // pred_fallthru
        _
      // Predicated region
      $region17: #{classification_network_forward.3} parent=11 // pred_check
        %p121 = pneg %p77
      $region18: #{classification_network_forward.3} parent=11 // pred_check_branch
        %123 = sbr.rel (%p121) target = $region20
      $region19: #{classification_network_forward.3} parent=11 // pred_region
        _
      $region20: #{classification_network_forward.3} parent=11 // pred_fallthru
        _
    $region12: #{classification_network_forward.3} parent=5 // pred_fallthru
      _
    %p124 = scmp.lt.s32.totalorder %s9, 2
    // Predicated region
    $region21: #{classification_network_forward.3} parent=5 // pred_check
      %p125 = pneg %p124
    $region22: #{classification_network_forward.3} parent=5 // pred_check_branch
      %127 = sbr.rel (%p125) target = $region24
    $region23: #{classification_network_forward.3} parent=5 // pred_region
      // Predicated region
      $region25: #{classification_network_forward.3} parent=23 // pred_check
        %p128 = pneg %p29
      $region26: #{classification_network_forward.3} parent=23 // pred_check_branch
        %130 = sbr.rel (%p128) target = $region28
      $region27: #{classification_network_forward.3} parent=23 // pred_region
        %p131 = scmp.lt.s32.totalorder %s9, 1
        %s132 = scalar_select %p131, %s9, 1
        %s133 = smul.addr %s132, 288
        %s134 = smul.addr %s133, 8
        %s135 = scalar_lea.vmem %s0, %s134
      $region28: #{classification_network_forward.3} parent=23 // pred_fallthru
        _
    $region24: #{classification_network_forward.3} parent=5 // pred_fallthru
      _
    %p136 = scmp.le.s32.totalorder 1, %s9
    %p137 = scmp.lt.s32.totalorder %s9, 3
    %p138 = pnand %p136, %p137
    %p139 = pneg %p138
    // Predicated region
    $region29: #{classification_network_forward.3} parent=5 // pred_check
      _
    $region30: #{classification_network_forward.3} parent=5 // pred_check_branch
      %141 = sbr.rel (%p138) target = $region32
    $region31: #{classification_network_forward.3} parent=5 // pred_region
      %s142 = ssub.s32 %s9, 1
      %p143 = scmp.lt.s32.totalorder %s14, 1
      %s144 = scalar_select %p143, %s14, 1
      %s145 = smul.addr %s144, 288
      %s146 = smul.addr %s145, 8
      %s147 = scalar_lea.vmem %s0, %s146
      %p148 = pneg %p35
      %p149 = pneg %p32
      %p150 = pneg %p56
      %p151 = pneg %p53
      %p152 = pneg %p77
      %p153 = pneg %p74
      %p154 = pneg %p103
      %p155 = pneg %p100
      %p156 = scmp.lt.s32.totalorder %s14, 1
      %s157 = scalar_select %p156, %s14, 1
      %s158 = smul.addr %s157, 72
      %s159 = smul.addr %s158, 8
      %s160 = scalar_lea.vmem %s3, %s159
      %p161 = scmp.lt.s32.totalorder %s14, 1
      %s162 = scalar_select %p161, %s14, 1
      %s163 = smul.addr %s162, 288
      %s164 = smul.addr %s163, 8
      %s165 = scalar_lea.vmem %s0, %s164
      %p166 = scmp.lt.s32.totalorder %s14, 1
      %s167 = scalar_select %p166, %s14, 1
      %s168 = smul.addr %s167, 72
      %s169 = smul.addr %s168, 8
      %s170 = scalar_lea.vmem %s3, %s169
      %v171 = vld [vmem:[%s165] sm:$0xff]
      %v172 = vld [vmem:[%s165 + $0x8] sm:$0xff]
      %v173 = vld [vmem:[%s165 + $0x10] sm:$0xff]
      %v174 = vld [vmem:[%s165 + $0x18] sm:$0xff]
      %v175 = vld [vmem:[%s165 + $0x20] sm:$0xff]
      %v176 = vld [vmem:[%s165 + $0x28] sm:$0xff]
      %v177 = vld [vmem:[%s165 + $0x30] sm:$0xff]
      %v178 = vld [vmem:[%s165 + $0x38] sm:$0xff]
      %v179 = vld [vmem:[%s165 + $0x40] sm:$0xff]
      %v180 = vld [vmem:[%s165 + $0x48] sm:$0xff]
      %v181 = vld [vmem:[%s165 + $0x50] sm:$0xff]
      %v182 = vld [vmem:[%s165 + $0x58] sm:$0xff]
      %v183 = vld [vmem:[%s165 + $0x60] sm:$0xff]
      %v184 = vld [vmem:[%s165 + $0x68] sm:$0xff]
      %v185 = vld [vmem:[%s165 + $0x70] sm:$0xff]
      %v186 = vld [vmem:[%s165 + $0x78] sm:$0xff]
      %v187 = vld [vmem:[%s165 + $0x80] sm:$0xff]
      %v188 = vld [vmem:[%s165 + $0x88] sm:$0xff]
      %v189 = vld [vmem:[%s165 + $0x90] sm:$0xff]
      %v190 = vld [vmem:[%s165 + $0x98] sm:$0xff]
      %v191 = vld [vmem:[%s165 + $0xa0] sm:$0xff]
      %v192 = vld [vmem:[%s165 + $0xa8] sm:$0xff]
      %v193 = vld [vmem:[%s165 + $0xb0] sm:$0xff]
      %v194 = vld [vmem:[%s165 + $0xb8] sm:$0xff]
      %v195 = vld [vmem:[%s165 + $0xc0] sm:$0xff]
      %v196 = vld [vmem:[%s165 + $0xc8] sm:$0xff]
      %v197 = vld [vmem:[%s165 + $0xd0] sm:$0xff]
      %v198 = vld [vmem:[%s165 + $0xd8] sm:$0xff]
      %v199 = vld [vmem:[%s165 + $0xe0] sm:$0xff]
      %v200 = vld [vmem:[%s165 + $0xe8] sm:$0xff]
      %v201 = vld [vmem:[%s165 + $0xf0] sm:$0xff]
      %v202 = vld [vmem:[%s165 + $0xf8] sm:$0xff]
      %v203 = vld [vmem:[%s165 + $0x100] sm:$0xff]
      %v204 = vld [vmem:[%s165 + $0x108] sm:$0xff]
      %v205 = vld [vmem:[%s165 + $0x110] sm:$0xff]
      %v206 = vld [vmem:[%s165 + $0x118] sm:$0xff]
      %v207 = vld [vmem:[%s165 + $0x120] sm:$0xff]
      %v208 = vld [vmem:[%s165 + $0x128] sm:$0xff]
      %v209 = vld [vmem:[%s165 + $0x130] sm:$0xff]
      %v210 = vld [vmem:[%s165 + $0x138] sm:$0xff]
      %v211 = vld [vmem:[%s165 + $0x140] sm:$0xff]
      %v212 = vld [vmem:[%s165 + $0x148] sm:$0xff]
      %v213 = vld [vmem:[%s165 + $0x150] sm:$0xff]
      %v214 = vld [vmem:[%s165 + $0x158] sm:$0xff]
      %v215 = vld [vmem:[%s165 + $0x160] sm:$0xff]
      %v216 = vld [vmem:[%s165 + $0x168] sm:$0xff]
      %v217 = vld [vmem:[%s165 + $0x170] sm:$0xff]
      %v218 = vld [vmem:[%s165 + $0x178] sm:$0xff]
      %v219 = vld [vmem:[%s165 + $0x180] sm:$0xff]
      %v220 = vld [vmem:[%s165 + $0x188] sm:$0xff]
      %v221 = vld [vmem:[%s165 + $0x190] sm:$0xff]
      %v222 = vld [vmem:[%s165 + $0x198] sm:$0xff]
      %v223 = vld [vmem:[%s165 + $0x1a0] sm:$0xff]
      %v224 = vld [vmem:[%s165 + $0x1a8] sm:$0xff]
      %v225 = vld [vmem:[%s165 + $0x1b0] sm:$0xff]
      %v226 = vld [vmem:[%s165 + $0x1b8] sm:$0xff]
      %v227 = vld [vmem:[%s165 + $0x1c0] sm:$0xff]
      %v228 = vld [vmem:[%s165 + $0x1c8] sm:$0xff]
      %v229 = vld [vmem:[%s165 + $0x1d0] sm:$0xff]
      %v230 = vld [vmem:[%s165 + $0x1d8] sm:$0xff]
      %v231 = vld [vmem:[%s165 + $0x1e0] sm:$0xff]
      %v232 = vld [vmem:[%s165 + $0x1e8] sm:$0xff]
      %v233 = vld [vmem:[%s165 + $0x1f0] sm:$0xff]
      %v234 = vld [vmem:[%s165 + $0x1f8] sm:$0xff]
      %v235 = vld [vmem:[%s165 + $0x200] sm:$0xff]
      %v236 = vld [vmem:[%s165 + $0x208] sm:$0xff]
      %v237 = vld [vmem:[%s165 + $0x210] sm:$0xff]
      %v238 = vld [vmem:[%s165 + $0x218] sm:$0xff]
      %v239 = vld [vmem:[%s165 + $0x220] sm:$0xff]
      %v240 = vld [vmem:[%s165 + $0x228] sm:$0xff]
      %v241 = vld [vmem:[%s165 + $0x230] sm:$0xff]
      %v242 = vld [vmem:[%s165 + $0x238] sm:$0xff]
      %v243 = vld [vmem:[%s165 + $0x240] sm:$0xff]
      %v244 = vld [vmem:[%s165 + $0x248] sm:$0xff]
      %v245 = vld [vmem:[%s165 + $0x250] sm:$0xff]
      %v246 = vld [vmem:[%s165 + $0x258] sm:$0xff]
      %v247 = vld [vmem:[%s165 + $0x260] sm:$0xff]
      %v248 = vld [vmem:[%s165 + $0x268] sm:$0xff]
      %v249 = vld [vmem:[%s165 + $0x270] sm:$0xff]
      %v250 = vld [vmem:[%s165 + $0x278] sm:$0xff]
      %v251 = vld [vmem:[%s165 + $0x280] sm:$0xff]
      %v252 = vld [vmem:[%s165 + $0x288] sm:$0xff]
      %v253 = vld [vmem:[%s165 + $0x290] sm:$0xff]
      %v254 = vld [vmem:[%s165 + $0x298] sm:$0xff]
      %v255 = vld [vmem:[%s165 + $0x2a0] sm:$0xff]
      %v256 = vld [vmem:[%s165 + $0x2a8] sm:$0xff]
      %v257 = vld [vmem:[%s165 + $0x2b0] sm:$0xff]
      %v258 = vld [vmem:[%s165 + $0x2b8] sm:$0xff]
      %v259 = vld [vmem:[%s165 + $0x2c0] sm:$0xff]
      %v260 = vld [vmem:[%s165 + $0x2c8] sm:$0xff]
      %v261 = vld [vmem:[%s165 + $0x2d0] sm:$0xff]
      %v262 = vld [vmem:[%s165 + $0x2d8] sm:$0xff]
      %v263 = vld [vmem:[%s165 + $0x2e0] sm:$0xff]
      %v264 = vld [vmem:[%s165 + $0x2e8] sm:$0xff]
      %v265 = vld [vmem:[%s165 + $0x2f0] sm:$0xff]
      %v266 = vld [vmem:[%s165 + $0x2f8] sm:$0xff]
      %v267 = vld [vmem:[%s165 + $0x300] sm:$0xff]
      %v268 = vld [vmem:[%s165 + $0x308] sm:$0xff]
      %v269 = vld [vmem:[%s165 + $0x310] sm:$0xff]
      %v270 = vld [vmem:[%s165 + $0x318] sm:$0xff]
      %v271 = vld [vmem:[%s165 + $0x320] sm:$0xff]
      %v272 = vld [vmem:[%s165 + $0x328] sm:$0xff]
      %v273 = vld [vmem:[%s165 + $0x330] sm:$0xff]
      %v274 = vld [vmem:[%s165 + $0x338] sm:$0xff]
      %v275 = vld [vmem:[%s165 + $0x340] sm:$0xff]
      %v276 = vld [vmem:[%s165 + $0x348] sm:$0xff]
      %v277 = vld [vmem:[%s165 + $0x350] sm:$0xff]
      %v278 = vld [vmem:[%s165 + $0x358] sm:$0xff]
      %v279 = vld [vmem:[%s165 + $0x360] sm:$0xff]
      %v280 = vld [vmem:[%s165 + $0x368] sm:$0xff]
      %v281 = vld [vmem:[%s165 + $0x370] sm:$0xff]
      %v282 = vld [vmem:[%s165 + $0x378] sm:$0xff]
      %v283 = vld [vmem:[%s165 + $0x380] sm:$0xff]
      %v284 = vld [vmem:[%s165 + $0x388] sm:$0xff]
      %v285 = vld [vmem:[%s165 + $0x390] sm:$0xff]
      %v286 = vld [vmem:[%s165 + $0x398] sm:$0xff]
      %v287 = vld [vmem:[%s165 + $0x3a0] sm:$0xff]
      %v288 = vld [vmem:[%s165 + $0x3a8] sm:$0xff]
      %v289 = vld [vmem:[%s165 + $0x3b0] sm:$0xff]
      %v290 = vld [vmem:[%s165 + $0x3b8] sm:$0xff]
      %v291 = vld [vmem:[%s165 + $0x3c0] sm:$0xff]
      %v292 = vld [vmem:[%s165 + $0x3c8] sm:$0xff]
      %v293 = vld [vmem:[%s165 + $0x3d0] sm:$0xff]
      %v294 = vld [vmem:[%s165 + $0x3d8] sm:$0xff]
      %v295 = vld [vmem:[%s165 + $0x3e0] sm:$0xff]
      %v296 = vld [vmem:[%s165 + $0x3e8] sm:$0xff]
      %v297 = vld [vmem:[%s165 + $0x3f0] sm:$0xff]
      %v298 = vld [vmem:[%s165 + $0x3f8] sm:$0xff]
      %v299 = vld [vmem:[%s165 + $0x400] sm:$0xff]
      %v300 = vld [vmem:[%s165 + $0x408] sm:$0xff]
      %v301 = vld [vmem:[%s165 + $0x410] sm:$0xff]
      %v302 = vld [vmem:[%s165 + $0x418] sm:$0xff]
      %v303 = vld [vmem:[%s165 + $0x420] sm:$0xff]
      %v304 = vld [vmem:[%s165 + $0x428] sm:$0xff]
      %v305 = vld [vmem:[%s165 + $0x430] sm:$0xff]
      %v306 = vld [vmem:[%s165 + $0x438] sm:$0xff]
      %v307 = vld [vmem:[%s165 + $0x440] sm:$0xff]
      %v308 = vld [vmem:[%s165 + $0x448] sm:$0xff]
      %v309 = vld [vmem:[%s165 + $0x450] sm:$0xff]
      %v310 = vld [vmem:[%s165 + $0x458] sm:$0xff]
      %v311 = vld [vmem:[%s165 + $0x460] sm:$0xff]
      %v312 = vld [vmem:[%s165 + $0x468] sm:$0xff]
      %v313 = vld [vmem:[%s165 + $0x470] sm:$0xff]
      %v314 = vld [vmem:[%s165 + $0x478] sm:$0xff]
      %v315 = vld [vmem:[%s165 + $0x480] sm:$0xff]
      %v316 = vld [vmem:[%s165 + $0x488] sm:$0xff]
      %v317 = vld [vmem:[%s165 + $0x490] sm:$0xff]
      %v318 = vld [vmem:[%s165 + $0x498] sm:$0xff]
      %v319 = vld [vmem:[%s165 + $0x4a0] sm:$0xff]
      %v320 = vld [vmem:[%s165 + $0x4a8] sm:$0xff]
      %v321 = vld [vmem:[%s165 + $0x4b0] sm:$0xff]
      %v322 = vld [vmem:[%s165 + $0x4b8] sm:$0xff]
      %v323 = vld [vmem:[%s165 + $0x4c0] sm:$0xff]
      %v324 = vld [vmem:[%s165 + $0x4c8] sm:$0xff]
      %v325 = vld [vmem:[%s165 + $0x4d0] sm:$0xff]
      %v326 = vld [vmem:[%s165 + $0x4d8] sm:$0xff]
      %v327 = vld [vmem:[%s165 + $0x4e0] sm:$0xff]
      %v328 = vld [vmem:[%s165 + $0x4e8] sm:$0xff]
      %v329 = vld [vmem:[%s165 + $0x4f0] sm:$0xff]
      %v330 = vld [vmem:[%s165 + $0x4f8] sm:$0xff]
      %v331 = vld [vmem:[%s165 + $0x500] sm:$0xff]
      %v332 = vld [vmem:[%s165 + $0x508] sm:$0xff]
      %v333 = vld [vmem:[%s165 + $0x510] sm:$0xff]
      %v334 = vld [vmem:[%s165 + $0x518] sm:$0xff]
      %v335 = vld [vmem:[%s165 + $0x520] sm:$0xff]
      %v336 = vld [vmem:[%s165 + $0x528] sm:$0xff]
      %v337 = vld [vmem:[%s165 + $0x530] sm:$0xff]
      %v338 = vld [vmem:[%s165 + $0x538] sm:$0xff]
      %v339 = vld [vmem:[%s165 + $0x540] sm:$0xff]
      %v340 = vld [vmem:[%s165 + $0x548] sm:$0xff]
      %v341 = vld [vmem:[%s165 + $0x550] sm:$0xff]
      %v342 = vld [vmem:[%s165 + $0x558] sm:$0xff]
      %v343 = vld [vmem:[%s165 + $0x560] sm:$0xff]
      %v344 = vld [vmem:[%s165 + $0x568] sm:$0xff]
      %v345 = vld [vmem:[%s165 + $0x570] sm:$0xff]
      %v346 = vld [vmem:[%s165 + $0x578] sm:$0xff]
      %v347 = vld [vmem:[%s165 + $0x580] sm:$0xff]
      %v348 = vld [vmem:[%s165 + $0x588] sm:$0xff]
      %v349 = vld [vmem:[%s165 + $0x590] sm:$0xff]
      %v350 = vld [vmem:[%s165 + $0x598] sm:$0xff]
      %v351 = vld [vmem:[%s165 + $0x5a0] sm:$0xff]
      %v352 = vld [vmem:[%s165 + $0x5a8] sm:$0xff]
      %v353 = vld [vmem:[%s165 + $0x5b0] sm:$0xff]
      %v354 = vld [vmem:[%s165 + $0x5b8] sm:$0xff]
      %v355 = vld [vmem:[%s165 + $0x5c0] sm:$0xff]
      %v356 = vld [vmem:[%s165 + $0x5c8] sm:$0xff]
      %v357 = vld [vmem:[%s165 + $0x5d0] sm:$0xff]
      %v358 = vld [vmem:[%s165 + $0x5d8] sm:$0xff]
      %v359 = vld [vmem:[%s165 + $0x5e0] sm:$0xff]
      %v360 = vld [vmem:[%s165 + $0x5e8] sm:$0xff]
      %v361 = vld [vmem:[%s165 + $0x5f0] sm:$0xff]
      %v362 = vld [vmem:[%s165 + $0x5f8] sm:$0xff]
      %v363 = vld [vmem:[%s165 + $0x600] sm:$0xff]
      %v364 = vld [vmem:[%s165 + $0x608] sm:$0xff]
      %v365 = vld [vmem:[%s165 + $0x610] sm:$0xff]
      %v366 = vld [vmem:[%s165 + $0x618] sm:$0xff]
      %v367 = vld [vmem:[%s165 + $0x620] sm:$0xff]
      %v368 = vld [vmem:[%s165 + $0x628] sm:$0xff]
      %v369 = vld [vmem:[%s165 + $0x630] sm:$0xff]
      %v370 = vld [vmem:[%s165 + $0x638] sm:$0xff]
      %v371 = vld [vmem:[%s165 + $0x640] sm:$0xff]
      %v372 = vld [vmem:[%s165 + $0x648] sm:$0xff]
      %v373 = vld [vmem:[%s165 + $0x650] sm:$0xff]
      %v374 = vld [vmem:[%s165 + $0x658] sm:$0xff]
      %v375 = vld [vmem:[%s165 + $0x660] sm:$0xff]
      %v376 = vld [vmem:[%s165 + $0x668] sm:$0xff]
      %v377 = vld [vmem:[%s165 + $0x670] sm:$0xff]
      %v378 = vld [vmem:[%s165 + $0x678] sm:$0xff]
      %v379 = vld [vmem:[%s165 + $0x680] sm:$0xff]
      %v380 = vld [vmem:[%s165 + $0x688] sm:$0xff]
      %v381 = vld [vmem:[%s165 + $0x690] sm:$0xff]
      %v382 = vld [vmem:[%s165 + $0x698] sm:$0xff]
      %v383 = vld [vmem:[%s165 + $0x6a0] sm:$0xff]
      %v384 = vld [vmem:[%s165 + $0x6a8] sm:$0xff]
      %v385 = vld [vmem:[%s165 + $0x6b0] sm:$0xff]
      %v386 = vld [vmem:[%s165 + $0x6b8] sm:$0xff]
      %v387 = vld [vmem:[%s165 + $0x6c0] sm:$0xff]
      %v388 = vld [vmem:[%s165 + $0x6c8] sm:$0xff]
      %v389 = vld [vmem:[%s165 + $0x6d0] sm:$0xff]
      %v390 = vld [vmem:[%s165 + $0x6d8] sm:$0xff]
      %v391 = vld [vmem:[%s165 + $0x6e0] sm:$0xff]
      %v392 = vld [vmem:[%s165 + $0x6e8] sm:$0xff]
      %v393 = vld [vmem:[%s165 + $0x6f0] sm:$0xff]
      %v394 = vld [vmem:[%s165 + $0x6f8] sm:$0xff]
      %v395 = vld [vmem:[%s165 + $0x700] sm:$0xff]
      %v396 = vld [vmem:[%s165 + $0x708] sm:$0xff]
      %v397 = vld [vmem:[%s165 + $0x710] sm:$0xff]
      %v398 = vld [vmem:[%s165 + $0x718] sm:$0xff]
      %v399 = vld [vmem:[%s165 + $0x720] sm:$0xff]
      %v400 = vld [vmem:[%s165 + $0x728] sm:$0xff]
      %v401 = vld [vmem:[%s165 + $0x730] sm:$0xff]
      %v402 = vld [vmem:[%s165 + $0x738] sm:$0xff]
      %v403 = vld [vmem:[%s165 + $0x740] sm:$0xff]
      %v404 = vld [vmem:[%s165 + $0x748] sm:$0xff]
      %v405 = vld [vmem:[%s165 + $0x750] sm:$0xff]
      %v406 = vld [vmem:[%s165 + $0x758] sm:$0xff]
      %v407 = vld [vmem:[%s165 + $0x760] sm:$0xff]
      %v408 = vld [vmem:[%s165 + $0x768] sm:$0xff]
      %v409 = vld [vmem:[%s165 + $0x770] sm:$0xff]
      %v410 = vld [vmem:[%s165 + $0x778] sm:$0xff]
      %v411 = vld [vmem:[%s165 + $0x780] sm:$0xff]
      %v412 = vld [vmem:[%s165 + $0x788] sm:$0xff]
      %v413 = vld [vmem:[%s165 + $0x790] sm:$0xff]
      %v414 = vld [vmem:[%s165 + $0x798] sm:$0xff]
      %v415 = vld [vmem:[%s165 + $0x7a0] sm:$0xff]
      %v416 = vld [vmem:[%s165 + $0x7a8] sm:$0xff]
      %v417 = vld [vmem:[%s165 + $0x7b0] sm:$0xff]
      %v418 = vld [vmem:[%s165 + $0x7b8] sm:$0xff]
      %v419 = vld [vmem:[%s165 + $0x7c0] sm:$0xff]
      %v420 = vld [vmem:[%s165 + $0x7c8] sm:$0xff]
      %v421 = vld [vmem:[%s165 + $0x7d0] sm:$0xff]
      %v422 = vld [vmem:[%s165 + $0x7d8] sm:$0xff]
      %v423 = vld [vmem:[%s165 + $0x7e0] sm:$0xff]
      %v424 = vld [vmem:[%s165 + $0x7e8] sm:$0xff]
      %v425 = vld [vmem:[%s165 + $0x7f0] sm:$0xff]
      %v426 = vld [vmem:[%s165 + $0x7f8] sm:$0xff]
      %v427 = vld [vmem:[%s165 + $0x800] sm:$0xff]
      %v428 = vld [vmem:[%s165 + $0x808] sm:$0xff]
      %v429 = vld [vmem:[%s165 + $0x810] sm:$0xff]
      %v430 = vld [vmem:[%s165 + $0x818] sm:$0xff]
      %v431 = vld [vmem:[%s165 + $0x820] sm:$0xff]
      %v432 = vld [vmem:[%s165 + $0x828] sm:$0xff]
      %v433 = vld [vmem:[%s165 + $0x830] sm:$0xff]
      %v434 = vld [vmem:[%s165 + $0x838] sm:$0xff]
      %v435 = vld [vmem:[%s165 + $0x840] sm:$0xff]
      %v436 = vld [vmem:[%s165 + $0x848] sm:$0xff]
      %v437 = vld [vmem:[%s165 + $0x850] sm:$0xff]
      %v438 = vld [vmem:[%s165 + $0x858] sm:$0xff]
      %v439 = vld [vmem:[%s165 + $0x860] sm:$0xff]
      %v440 = vld [vmem:[%s165 + $0x868] sm:$0xff]
      %v441 = vld [vmem:[%s165 + $0x870] sm:$0xff]
      %v442 = vld [vmem:[%s165 + $0x878] sm:$0xff]
      %v443 = vld [vmem:[%s165 + $0x880] sm:$0xff]
      %v444 = vld [vmem:[%s165 + $0x888] sm:$0xff]
      %v445 = vld [vmem:[%s165 + $0x890] sm:$0xff]
      %v446 = vld [vmem:[%s165 + $0x898] sm:$0xff]
      %v447 = vld [vmem:[%s165 + $0x8a0] sm:$0xff]
      %v448 = vld [vmem:[%s165 + $0x8a8] sm:$0xff]
      %v449 = vld [vmem:[%s165 + $0x8b0] sm:$0xff]
      %v450 = vld [vmem:[%s165 + $0x8b8] sm:$0xff]
      %v451 = vld [vmem:[%s165 + $0x8c0] sm:$0xff]
      %v452 = vld [vmem:[%s165 + $0x8c8] sm:$0xff]
      %v453 = vld [vmem:[%s165 + $0x8d0] sm:$0xff]
      %v454 = vld [vmem:[%s165 + $0x8d8] sm:$0xff]
      %v455 = vld [vmem:[%s165 + $0x8e0] sm:$0xff]
      %v456 = vld [vmem:[%s165 + $0x8e8] sm:$0xff]
      %v457 = vld [vmem:[%s165 + $0x8f0] sm:$0xff]
      %v458 = vld [vmem:[%s165 + $0x8f8] sm:$0xff]
      %v459 = vld [vmem:[%s1] sm:$0xff]
      %v460 = vld [vmem:[%s1 + $0x8] sm:$0xff]
      %v461 = vld [vmem:[%s1 + $0x10] sm:$0xff]
      %v462 = vld [vmem:[%s1 + $0x18] sm:$0xff]
      %v463 = vld [vmem:[%s1 + $0x20] sm:$0xff]
      %v464 = vld [vmem:[%s1 + $0x28] sm:$0xff]
      %v465 = vld [vmem:[%s1 + $0x30] sm:$0xff]
      %v466 = vld [vmem:[%s1 + $0x38] sm:$0xff]
      %v467 = vld [vmem:[%s1 + $0x40] sm:$0xff]
      %v468 = vld [vmem:[%s1 + $0x48] sm:$0xff]
      %v469 = vld [vmem:[%s1 + $0x50] sm:$0xff]
      %v470 = vld [vmem:[%s1 + $0x58] sm:$0xff]
      %v471 = vld [vmem:[%s1 + $0x60] sm:$0xff]
      %v472 = vld [vmem:[%s1 + $0x68] sm:$0xff]
      %v473 = vld [vmem:[%s1 + $0x70] sm:$0xff]
      %v474 = vld [vmem:[%s1 + $0x78] sm:$0xff]
      %v475 = vld [vmem:[%s2] sm:$0x1]
      %v477 = vlaneseq
      %v478 = vshrl.u32 %v477, 7
      %v479 = vsub.s32 0, %v478
      %v480 = vrot.slane %v475, %v479
      %482 = vmatprep.subr.mxu0 0.0
      %483 = vmatpush1.msra.mxu0 %v459
      %484 = vmatprep.subr.mxu0 0.0
      %485 = vmatpush1.msra.mxu0 %v460
      %486 = vmatprep.subr.mxu0 0.0
      %487 = vmatpush1.msra.mxu0 %v461
      %488 = vmatprep.subr.mxu0 0.0
      %489 = vmatpush1.msra.mxu0 %v462
      %490 = vmatprep.subr.mxu0 0.0
      %491 = vmatpush1.msra.mxu0 %v463
      %492 = vmatprep.subr.mxu0 0.0
      %493 = vmatpush1.msra.mxu0 %v464
      %494 = vmatprep.subr.mxu0 0.0
      %495 = vmatpush1.msra.mxu0 %v465
      %496 = vmatprep.subr.mxu0 0.0
      %497 = vmatpush1.msra.mxu0 %v466
      %498 = vmatprep.subr.mxu0 0.0
      %499 = vmatpush1.msra.mxu0 %v467
      %500 = vmatprep.subr.mxu0 0.0
      %501 = vmatpush1.msra.mxu0 %v468
      %502 = vmatprep.subr.mxu0 0.0
      %503 = vmatpush1.msra.mxu0 %v469
      %504 = vmatprep.subr.mxu0 0.0
      %505 = vmatpush1.msra.mxu0 %v470
      %506 = vmatprep.subr.mxu0 0.0
      %507 = vmatpush1.msra.mxu0 %v471
      %508 = vmatprep.subr.mxu0 0.0
      %509 = vmatpush1.msra.mxu0 %v472
      %510 = vmatprep.subr.mxu0 0.0
      %511 = vmatpush1.msra.mxu0 %v473
      %512 = vmatprep.subr.mxu0 0.0
      %513 = vmatpush1.msra.mxu0 %v474
      %514 = vmatprep.subr.mxu0 0.0
      %515 = vmatpush1.msra.mxu0 0.0
      %516 = vmatprep.subr.mxu0 0.0
      %517 = vmatpush1.msra.mxu0 0.0
      %518 = vmatprep.subr.mxu0 0.0
      %519 = vmatpush1.msra.mxu0 0.0
      %520 = vmatprep.subr.mxu0 0.0
      %521 = vmatpush1.msra.mxu0 0.0
      %522 = vmatprep.subr.mxu0 0.0
      %523 = vmatpush1.msra.mxu0 0.0
      %524 = vmatprep.subr.mxu0 0.0
      %525 = vmatpush1.msra.mxu0 0.0
      %526 = vmatprep.subr.mxu0 0.0
      %527 = vmatpush1.msra.mxu0 0.0
      %528 = vmatprep.subr.mxu0 0.0
      %529 = vmatpush1.msra.mxu0 0.0
      %530 = vmatprep.subr.mxu0 0.0
      %531 = vmatpush1.msra.mxu0 0.0
      %532 = vmatprep.subr.mxu0 0.0
      %533 = vmatpush1.msra.mxu0 0.0
      %534 = vmatprep.subr.mxu0 0.0
      %535 = vmatpush1.msra.mxu0 0.0
      %536 = vmatprep.subr.mxu0 0.0
      %537 = vmatpush1.msra.mxu0 0.0
      %538 = vmatprep.subr.mxu0 0.0
      %539 = vmatpush1.msra.mxu0 0.0
      %540 = vmatprep.subr.mxu0 0.0
      %541 = vmatpush1.msra.mxu0 0.0
      %542 = vmatprep.subr.mxu0 0.0
      %543 = vmatpush1.msra.mxu0 0.0
      %544 = vmatprep.subr.mxu0 0.0
      %545 = vmatpush1.msra.mxu0 0.0
      %546 = vmatprep.mubr.f32.mxu0 0.0
      %547 = vmatmul.mubr.f32.gmra.mrb[0].mxu0 %v171
      %v548 = vpop.f32.mrb[0].mxu0
      %v549 = vadd.f32 %v480, %v548
      %v550 = vpop.f32.mrb[0].mxu0
      %551 = vmatprep.mubr.f32.mxu0 0.0
      %552 = vmatmul.mubr.f32.gmra.mrb[0].mxu0 %v172
      %v553 = vpop.f32.mrb[0].mxu0
      %v554 = vadd.f32 %v480, %v553
      %v555 = vpop.f32.mrb[0].mxu0
      %556 = vmatprep.mubr.f32.mxu0 0.0
      %557 = vmatmul.mubr.f32.gmra.mrb[0].mxu0 %v173
      %v558 = vpop.f32.mrb[0].mxu0
      %v559 = vadd.f32 %v480, %v558
      %v560 = vpop.f32.mrb[0].mxu0
      %561 = vmatprep.mubr.f32.mxu0 0.0
      %562 = vmatmul.mubr.f32.gmra.mrb[0].mxu0 %v174
      %v563 = vpop.f32.mrb[0].mxu0
      %v564 = vadd.f32 %v480, %v563
      %v565 = vpop.f32.mrb[0].mxu0
      %566 = vmatprep.mubr.f32.mxu0 0.0
      %567 = vmatmul.mubr.f32.gmra.mrb[0].mxu0 %v175
      %v568 = vpop.f32.mrb[0].mxu0
      %v569 = vadd.f32 %v480, %v568
      %v570 = vpop.f32.mrb[0].mxu0
      %571 = vmatprep.mubr.f32.mxu0 0.0
      %572 = vmatmul.mubr.f32.gmra.mrb[0].mxu0 %v176
      %v573 = vpop.f32.mrb[0].mxu0
      %v574 = vadd.f32 %v480, %v573
      %v575 = vpop.f32.mrb[0].mxu0
      %576 = vmatprep.mubr.f32.mxu0 0.0
      %577 = vmatmul.mubr.f32.gmra.mrb[0].mxu0 %v177
      %v578 = vpop.f32.mrb[0].mxu0
      %v579 = vadd.f32 %v480, %v578
      %v580 = vpop.f32.mrb[0].mxu0
      %581 = vmatprep.mubr.f32.mxu0 0.0
      %582 = vmatmul.mubr.f32.gmra.mrb[0].mxu0 %v178
      %v583 = vpop.f32.mrb[0].mxu0
      %v584 = vadd.f32 %v480, %v583
      %v585 = vpop.f32.mrb[0].mxu0
      %586 = vmatprep.mubr.f32.mxu0 0.0
      %587 = vmatmul.mubr.f32.gmra.mrb[0].mxu0 %v179
      %v588 = vpop.f32.mrb[0].mxu0
      %v589 = vadd.f32 %v480, %v588
      %v590 = vpop.f32.mrb[0].mxu0
      %591 = vmatprep.mubr.f32.mxu0 0.0
      %592 = vmatmul.mubr.f32.gmra.mrb[0].mxu0 %v180
      %v593 = vpop.f32.mrb[0].mxu0
      %v594 = vadd.f32 %v480, %v593
      %v595 = vpop.f32.mrb[0].mxu0
      %596 = vmatprep.mubr.f32.mxu0 0.0
      %597 = vmatmul.mubr.f32.gmra.mrb[0].mxu0 %v181
      %v598 = vpop.f32.mrb[0].mxu0
      %v599 = vadd.f32 %v480, %v598
      %v600 = vpop.f32.mrb[0].mxu0
      %601 = vmatprep.mubr.f32.mxu0 0.0
      %602 = vmatmul.mubr.f32.gmra.mrb[0].mxu0 %v182
      %v603 = vpop.f32.mrb[0].mxu0
      %v604 = vadd.f32 %v480, %v603
      %v605 = vpop.f32.mrb[0].mxu0
      %606 = vmatprep.mubr.f32.mxu0 0.0
      %607 = vmatmul.mubr.f32.gmra.mrb[0].mxu0 %v183
      %v608 = vpop.f32.mrb[0].mxu0
      %v609 = vadd.f32 %v480, %v608
      %v610 = vpop.f32.mrb[0].mxu0
      %611 = vmatprep.mubr.f32.mxu0 0.0
      %612 = vmatmul.mubr.f32.gmra.mrb[0].mxu0 %v184
      %v613 = vpop.f32.mrb[0].mxu0
      %v614 = vadd.f32 %v480, %v613
      %v615 = vpop.f32.mrb[0].mxu0
      %616 = vmatprep.mubr.f32.mxu0 0.0
      %617 = vmatmul.mubr.f32.gmra.mrb[0].mxu0 %v185
      %v618 = vpop.f32.mrb[0].mxu0
      %v619 = vadd.f32 %v480, %v618
      %v620 = vpop.f32.mrb[0].mxu0
      %621 = vmatprep.mubr.f32.mxu0 0.0
      %622 = vmatmul.mubr.f32.gmra.mrb[0].mxu0 %v186
      %v623 = vpop.f32.mrb[0].mxu0
      %v624 = vadd.f32 %v480, %v623
      %v625 = vpop.f32.mrb[0].mxu0
      %626 = vmatprep.mubr.f32.mxu0 0.0
      %627 = vmatmul.mubr.f32.gmra.mrb[0].mxu0 %v187
      %v628 = vpop.f32.mrb[0].mxu0
      %v629 = vadd.f32 %v480, %v628
      %v630 = vpop.f32.mrb[0].mxu0
      %631 = vmatprep.mubr.f32.mxu0 0.0
      %632 = vmatmul.mubr.f32.gmra.mrb[0].mxu0 %v188
      %v633 = vpop.f32.mrb[0].mxu0
      %v634 = vadd.f32 %v480, %v633
      %v635 = vpop.f32.mrb[0].mxu0
      %636 = vmatprep.mubr.f32.mxu0 0.0
      %637 = vmatmul.mubr.f32.gmra.mrb[0].mxu0 %v189
      %v638 = vpop.f32.mrb[0].mxu0
      %v639 = vadd.f32 %v480, %v638
      %v640 = vpop.f32.mrb[0].mxu0
      %641 = vmatprep.mubr.f32.mxu0 0.0
      %642 = vmatmul.mubr.f32.gmra.mrb[0].mxu0 %v190
      %v643 = vpop.f32.mrb[0].mxu0
      %v644 = vadd.f32 %v480, %v643
      %v645 = vpop.f32.mrb[0].mxu0
      %646 = vmatprep.mubr.f32.mxu0 0.0
      %647 = vmatmul.mubr.f32.gmra.mrb[0].mxu0 %v191
      %v648 = vpop.f32.mrb[0].mxu0
      %v649 = vadd.f32 %v480, %v648
      %v650 = vpop.f32.mrb[0].mxu0
      %651 = vmatprep.mubr.f32.mxu0 0.0
      %652 = vmatmul.mubr.f32.gmra.mrb[0].mxu0 %v192
      %v653 = vpop.f32.mrb[0].mxu0
      %v654 = vadd.f32 %v480, %v653
      %v655 = vpop.f32.mrb[0].mxu0
      %656 = vmatprep.mubr.f32.mxu0 0.0
      %657 = vmatmul.mubr.f32.gmra.mrb[0].mxu0 %v193
      %v658 = vpop.f32.mrb[0].mxu0
      %v659 = vadd.f32 %v480, %v658
      %v660 = vpop.f32.mrb[0].mxu0
      %661 = vmatprep.mubr.f32.mxu0 0.0
      %662 = vmatmul.mubr.f32.gmra.mrb[0].mxu0 %v194
      %v663 = vpop.f32.mrb[0].mxu0
      %v664 = vadd.f32 %v480, %v663
      %v665 = vpop.f32.mrb[0].mxu0
      %666 = vmatprep.mubr.f32.mxu0 0.0
      %667 = vmatmul.mubr.f32.gmra.mrb[0].mxu0 %v195
      %v668 = vpop.f32.mrb[0].mxu0
      %v669 = vadd.f32 %v480, %v668
      %v670 = vpop.f32.mrb[0].mxu0
      %671 = vmatprep.mubr.f32.mxu0 0.0
      %672 = vmatmul.mubr.f32.gmra.mrb[0].mxu0 %v196
      %v673 = vpop.f32.mrb[0].mxu0
      %v674 = vadd.f32 %v480, %v673
      %v675 = vpop.f32.mrb[0].mxu0
      %676 = vmatprep.mubr.f32.mxu0 0.0
      %677 = vmatmul.mubr.f32.gmra.mrb[0].mxu0 %v197
      %v678 = vpop.f32.mrb[0].mxu0
      %v679 = vadd.f32 %v480, %v678
      %v680 = vpop.f32.mrb[0].mxu0
      %681 = vmatprep.mubr.f32.mxu0 0.0
      %682 = vmatmul.mubr.f32.gmra.mrb[0].mxu0 %v198
      %v683 = vpop.f32.mrb[0].mxu0
      %v684 = vadd.f32 %v480, %v683
      %v685 = vpop.f32.mrb[0].mxu0
      %686 = vmatprep.mubr.f32.mxu0 0.0
      %687 = vmatmul.mubr.f32.gmra.mrb[0].mxu0 %v199
      %v688 = vpop.f32.mrb[0].mxu0
      %v689 = vadd.f32 %v480, %v688
      %v690 = vpop.f32.mrb[0].mxu0
      %691 = vmatprep.mubr.f32.mxu0 0.0
      %692 = vmatmul.mubr.f32.gmra.mrb[0].mxu0 %v200
      %v693 = vpop.f32.mrb[0].mxu0
      %v694 = vadd.f32 %v480, %v693
      %v695 = vpop.f32.mrb[0].mxu0
      %696 = vmatprep.mubr.f32.mxu0 0.0
      %697 = vmatmul.mubr.f32.gmra.mrb[0].mxu0 %v201
      %v698 = vpop.f32.mrb[0].mxu0
      %v699 = vadd.f32 %v480, %v698
      %v700 = vpop.f32.mrb[0].mxu0
      %701 = vmatprep.mubr.f32.mxu0 0.0
      %702 = vmatmul.mubr.f32.gmra.mrb[0].mxu0 %v202
      %v703 = vpop.f32.mrb[0].mxu0
      %v704 = vadd.f32 %v480, %v703
      %v705 = vpop.f32.mrb[0].mxu0
      %706 = vmatprep.mubr.f32.mxu0 0.0
      %707 = vmatmul.mubr.f32.gmra.mrb[0].mxu0 %v203
      %v708 = vpop.f32.mrb[0].mxu0
      %v709 = vadd.f32 %v480, %v708
      %v710 = vpop.f32.mrb[0].mxu0
      %711 = vmatprep.mubr.f32.mxu0 0.0
      %712 = vmatmul.mubr.f32.gmra.mrb[0].mxu0 %v204
      %v713 = vpop.f32.mrb[0].mxu0
      %v714 = vadd.f32 %v480, %v713
      %v715 = vpop.f32.mrb[0].mxu0
      %716 = vmatprep.mubr.f32.mxu0 0.0
      %717 = vmatmul.mubr.f32.gmra.mrb[0].mxu0 %v205
      %v718 = vpop.f32.mrb[0].mxu0
      %v719 = vadd.f32 %v480, %v718
      %v720 = vpop.f32.mrb[0].mxu0
      %721 = vmatprep.mubr.f32.mxu0 0.0
      %722 = vmatmul.mubr.f32.gmra.mrb[0].mxu0 %v206
      %v723 = vpop.f32.mrb[0].mxu0
      %v724 = vadd.f32 %v480, %v723
      %v725 = vpop.f32.mrb[0].mxu0
      %726 = vmatprep.mubr.f32.mxu0 0.0
      %727 = vmatmul.mubr.f32.gmra.mrb[0].mxu0 %v207
      %v728 = vpop.f32.mrb[0].mxu0
      %v729 = vadd.f32 %v480, %v728
      %v730 = vpop.f32.mrb[0].mxu0
      %731 = vmatprep.mubr.f32.mxu0 0.0
      %732 = vmatmul.mubr.f32.gmra.mrb[0].mxu0 %v208
      %v733 = vpop.f32.mrb[0].mxu0
      %v734 = vadd.f32 %v480, %v733
      %v735 = vpop.f32.mrb[0].mxu0
      %736 = vmatprep.mubr.f32.mxu0 0.0
      %737 = vmatmul.mubr.f32.gmra.mrb[0].mxu0 %v209
      %v738 = vpop.f32.mrb[0].mxu0
      %v739 = vadd.f32 %v480, %v738
      %v740 = vpop.f32.mrb[0].mxu0
      %741 = vmatprep.mubr.f32.mxu0 0.0
      %742 = vmatmul.mubr.f32.gmra.mrb[0].mxu0 %v210
      %v743 = vpop.f32.mrb[0].mxu0
      %v744 = vadd.f32 %v480, %v743
      %v745 = vpop.f32.mrb[0].mxu0
      %746 = vmatprep.mubr.f32.mxu0 0.0
      %747 = vmatmul.mubr.f32.gmra.mrb[0].mxu0 %v211
      %v748 = vpop.f32.mrb[0].mxu0
      %v749 = vadd.f32 %v480, %v748
      %v750 = vpop.f32.mrb[0].mxu0
      %751 = vmatprep.mubr.f32.mxu0 0.0
      %752 = vmatmul.mubr.f32.gmra.mrb[0].mxu0 %v212
      %v753 = vpop.f32.mrb[0].mxu0
      %v754 = vadd.f32 %v480, %v753
      %v755 = vpop.f32.mrb[0].mxu0
      %756 = vmatprep.mubr.f32.mxu0 0.0
      %757 = vmatmul.mubr.f32.gmra.mrb[0].mxu0 %v213
      %v758 = vpop.f32.mrb[0].mxu0
      %v759 = vadd.f32 %v480, %v758
      %v760 = vpop.f32.mrb[0].mxu0
      %761 = vmatprep.mubr.f32.mxu0 0.0
      %762 = vmatmul.mubr.f32.gmra.mrb[0].mxu0 %v214
      %v763 = vpop.f32.mrb[0].mxu0
      %v764 = vadd.f32 %v480, %v763
      %v765 = vpop.f32.mrb[0].mxu0
      %766 = vmatprep.mubr.f32.mxu0 0.0
      %767 = vmatmul.mubr.f32.gmra.mrb[0].mxu0 %v215
      %v768 = vpop.f32.mrb[0].mxu0
      %v769 = vadd.f32 %v480, %v768
      %v770 = vpop.f32.mrb[0].mxu0
      %771 = vmatprep.mubr.f32.mxu0 0.0
      %772 = vmatmul.mubr.f32.gmra.mrb[0].mxu0 %v216
      %v773 = vpop.f32.mrb[0].mxu0
      %v774 = vadd.f32 %v480, %v773
      %v775 = vpop.f32.mrb[0].mxu0
      %776 = vmatprep.mubr.f32.mxu0 0.0
      %777 = vmatmul.mubr.f32.gmra.mrb[0].mxu0 %v217
      %v778 = vpop.f32.mrb[0].mxu0
      %v779 = vadd.f32 %v480, %v778
      %v780 = vpop.f32.mrb[0].mxu0
      %781 = vmatprep.mubr.f32.mxu0 0.0
      %782 = vmatmul.mubr.f32.gmra.mrb[0].mxu0 %v218
      %v783 = vpop.f32.mrb[0].mxu0
      %v784 = vadd.f32 %v480, %v783
      %v785 = vpop.f32.mrb[0].mxu0
      %786 = vmatprep.mubr.f32.mxu0 0.0
      %787 = vmatmul.mubr.f32.gmra.mrb[0].mxu0 %v219
      %v788 = vpop.f32.mrb[0].mxu0
      %v789 = vadd.f32 %v480, %v788
      %v790 = vpop.f32.mrb[0].mxu0
      %791 = vmatprep.mubr.f32.mxu0 0.0
      %792 = vmatmul.mubr.f32.gmra.mrb[0].mxu0 %v220
      %v793 = vpop.f32.mrb[0].mxu0
      %v794 = vadd.f32 %v480, %v793
      %v795 = vpop.f32.mrb[0].mxu0
      %796 = vmatprep.mubr.f32.mxu0 0.0
      %797 = vmatmul.mubr.f32.gmra.mrb[0].mxu0 %v221
      %v798 = vpop.f32.mrb[0].mxu0
      %v799 = vadd.f32 %v480, %v798
      %v800 = vpop.f32.mrb[0].mxu0
      %801 = vmatprep.mubr.f32.mxu0 0.0
      %802 = vmatmul.mubr.f32.gmra.mrb[0].mxu0 %v222
      %v803 = vpop.f32.mrb[0].mxu0
      %v804 = vadd.f32 %v480, %v803
      %v805 = vpop.f32.mrb[0].mxu0
      %806 = vmatprep.mubr.f32.mxu0 0.0
      %807 = vmatmul.mubr.f32.gmra.mrb[0].mxu0 %v223
      %v808 = vpop.f32.mrb[0].mxu0
      %v809 = vadd.f32 %v480, %v808
      %v810 = vpop.f32.mrb[0].mxu0
      %811 = vmatprep.mubr.f32.mxu0 0.0
      %812 = vmatmul.mubr.f32.gmra.mrb[0].mxu0 %v224
      %v813 = vpop.f32.mrb[0].mxu0
      %v814 = vadd.f32 %v480, %v813
      %v815 = vpop.f32.mrb[0].mxu0
      %816 = vmatprep.mubr.f32.mxu0 0.0
      %817 = vmatmul.mubr.f32.gmra.mrb[0].mxu0 %v225
      %v818 = vpop.f32.mrb[0].mxu0
      %v819 = vadd.f32 %v480, %v818
      %v820 = vpop.f32.mrb[0].mxu0
      %821 = vmatprep.mubr.f32.mxu0 0.0
      %822 = vmatmul.mubr.f32.gmra.mrb[0].mxu0 %v226
      %v823 = vpop.f32.mrb[0].mxu0
      %v824 = vadd.f32 %v480, %v823
      %v825 = vpop.f32.mrb[0].mxu0
      %826 = vmatprep.mubr.f32.mxu0 0.0
      %827 = vmatmul.mubr.f32.gmra.mrb[0].mxu0 %v227
      %v828 = vpop.f32.mrb[0].mxu0
      %v829 = vadd.f32 %v480, %v828
      %v830 = vpop.f32.mrb[0].mxu0
      %831 = vmatprep.mubr.f32.mxu0 0.0
      %832 = vmatmul.mubr.f32.gmra.mrb[0].mxu0 %v228
      %v833 = vpop.f32.mrb[0].mxu0
      %v834 = vadd.f32 %v480, %v833
      %v835 = vpop.f32.mrb[0].mxu0
      %836 = vmatprep.mubr.f32.mxu0 0.0
      %837 = vmatmul.mubr.f32.gmra.mrb[0].mxu0 %v229
      %v838 = vpop.f32.mrb[0].mxu0
      %v839 = vadd.f32 %v480, %v838
      %v840 = vpop.f32.mrb[0].mxu0
      %841 = vmatprep.mubr.f32.mxu0 0.0
      %842 = vmatmul.mubr.f32.gmra.mrb[0].mxu0 %v230
      %v843 = vpop.f32.mrb[0].mxu0
      %v844 = vadd.f32 %v480, %v843
      %v845 = vpop.f32.mrb[0].mxu0
      %846 = vmatprep.mubr.f32.mxu0 0.0
      %847 = vmatmul.mubr.f32.gmra.mrb[0].mxu0 %v231
      %v848 = vpop.f32.mrb[0].mxu0
      %v849 = vadd.f32 %v480, %v848
      %v850 = vpop.f32.mrb[0].mxu0
      %851 = vmatprep.mubr.f32.mxu0 0.0
      %852 = vmatmul.mubr.f32.gmra.mrb[0].mxu0 %v232
      %v853 = vpop.f32.mrb[0].mxu0
      %v854 = vadd.f32 %v480, %v853
      %v855 = vpop.f32.mrb[0].mxu0
      %856 = vmatprep.mubr.f32.mxu0 0.0
      %857 = vmatmul.mubr.f32.gmra.mrb[0].mxu0 %v233
      %v858 = vpop.f32.mrb[0].mxu0
      %v859 = vadd.f32 %v480, %v858
      %v860 = vpop.f32.mrb[0].mxu0
      %861 = vmatprep.mubr.f32.mxu0 0.0
      %862 = vmatmul.mubr.f32.gmra.mrb[0].mxu0 %v234
      %v863 = vpop.f32.mrb[0].mxu0
      %v864 = vadd.f32 %v480, %v863
      %v865 = vpop.f32.mrb[0].mxu0
      %866 = vmatprep.mubr.f32.mxu0 0.0
      %867 = vmatmul.mubr.f32.gmra.mrb[0].mxu0 %v235
      %v868 = vpop.f32.mrb[0].mxu0
      %v869 = vadd.f32 %v480, %v868
      %v870 = vpop.f32.mrb[0].mxu0
      %871 = vmatprep.mubr.f32.mxu0 0.0
      %872 = vmatmul.mubr.f32.gmra.mrb[0].mxu0 %v236
      %v873 = vpop.f32.mrb[0].mxu0
      %v874 = vadd.f32 %v480, %v873
      %v875 = vpop.f32.mrb[0].mxu0
      %876 = vmatprep.mubr.f32.mxu0 0.0
      %877 = vmatmul.mubr.f32.gmra.mrb[0].mxu0 %v237
      %v878 = vpop.f32.mrb[0].mxu0
      %v879 = vadd.f32 %v480, %v878
      %v880 = vpop.f32.mrb[0].mxu0
      %881 = vmatprep.mubr.f32.mxu0 0.0
      %882 = vmatmul.mubr.f32.gmra.mrb[0].mxu0 %v238
      %v883 = vpop.f32.mrb[0].mxu0
      %v884 = vadd.f32 %v480, %v883
      %v885 = vpop.f32.mrb[0].mxu0
      %886 = vmatprep.mubr.f32.mxu0 0.0
      %887 = vmatmul.mubr.f32.gmra.mrb[0].mxu0 %v239
      %v888 = vpop.f32.mrb[0].mxu0
      %v889 = vadd.f32 %v480, %v888
      %v890 = vpop.f32.mrb[0].mxu0
      %891 = vmatprep.mubr.f32.mxu0 0.0
      %892 = vmatmul.mubr.f32.gmra.mrb[0].mxu0 %v240
      %v893 = vpop.f32.mrb[0].mxu0
      %v894 = vadd.f32 %v480, %v893
      %v895 = vpop.f32.mrb[0].mxu0
      %896 = vmatprep.mubr.f32.mxu0 0.0
      %897 = vmatmul.mubr.f32.gmra.mrb[0].mxu0 %v241
      %v898 = vpop.f32.mrb[0].mxu0
      %v899 = vadd.f32 %v480, %v898
      %v900 = vpop.f32.mrb[0].mxu0
      %901 = vmatprep.mubr.f32.mxu0 0.0
      %902 = vmatmul.mubr.f32.gmra.mrb[0].mxu0 %v242
      %v903 = vpop.f32.mrb[0].mxu0
      %v904 = vadd.f32 %v480, %v903
      %v905 = vpop.f32.mrb[0].mxu0
      %906 = vmatprep.mubr.f32.mxu0 0.0
      %907 = vmatmul.mubr.f32.gmra.mrb[0].mxu0 %v243
      %v908 = vpop.f32.mrb[0].mxu0
      %v909 = vadd.f32 %v480, %v908
      %v910 = vpop.f32.mrb[0].mxu0
      %911 = vmatprep.mubr.f32.mxu0 0.0
      %912 = vmatmul.mubr.f32.gmra.mrb[0].mxu0 %v244
      %v913 = vpop.f32.mrb[0].mxu0
      %v914 = vadd.f32 %v480, %v913
      %v915 = vpop.f32.mrb[0].mxu0
      %916 = vmatprep.mubr.f32.mxu0 0.0
      %917 = vmatmul.mubr.f32.gmra.mrb[0].mxu0 %v245
      %v918 = vpop.f32.mrb[0].mxu0
      %v919 = vadd.f32 %v480, %v918
      %v920 = vpop.f32.mrb[0].mxu0
      %921 = vmatprep.mubr.f32.mxu0 0.0
      %922 = vmatmul.mubr.f32.gmra.mrb[0].mxu0 %v246
      %v923 = vpop.f32.mrb[0].mxu0
      %v924 = vadd.f32 %v480, %v923
      %v925 = vpop.f32.mrb[0].mxu0
      %926 = vmatprep.mubr.f32.mxu0 0.0
      %927 = vmatmul.mubr.f32.gmra.mrb[0].mxu0 %v247
      %v928 = vpop.f32.mrb[0].mxu0
      %v929 = vadd.f32 %v480, %v928
      %v930 = vpop.f32.mrb[0].mxu0
      %931 = vmatprep.mubr.f32.mxu0 0.0
      %932 = vmatmul.mubr.f32.gmra.mrb[0].mxu0 %v248
      %v933 = vpop.f32.mrb[0].mxu0
      %v934 = vadd.f32 %v480, %v933
      %v935 = vpop.f32.mrb[0].mxu0
      %936 = vmatprep.mubr.f32.mxu0 0.0
      %937 = vmatmul.mubr.f32.gmra.mrb[0].mxu0 %v249
      %v938 = vpop.f32.mrb[0].mxu0
      %v939 = vadd.f32 %v480, %v938
      %v940 = vpop.f32.mrb[0].mxu0
      %941 = vmatprep.mubr.f32.mxu0 0.0
      %942 = vmatmul.mubr.f32.gmra.mrb[0].mxu0 %v250
      %v943 = vpop.f32.mrb[0].mxu0
      %v944 = vadd.f32 %v480, %v943
      %v945 = vpop.f32.mrb[0].mxu0
      %946 = vmatprep.mubr.f32.mxu0 0.0
      %947 = vmatmul.mubr.f32.gmra.mrb[0].mxu0 %v251
      %v948 = vpop.f32.mrb[0].mxu0
      %v949 = vadd.f32 %v480, %v948
      %v950 = vpop.f32.mrb[0].mxu0
      %951 = vmatprep.mubr.f32.mxu0 0.0
      %952 = vmatmul.mubr.f32.gmra.mrb[0].mxu0 %v252
      %v953 = vpop.f32.mrb[0].mxu0
      %v954 = vadd.f32 %v480, %v953
      %v955 = vpop.f32.mrb[0].mxu0
      %956 = vmatprep.mubr.f32.mxu0 0.0
      %957 = vmatmul.mubr.f32.gmra.mrb[0].mxu0 %v253
      %v958 = vpop.f32.mrb[0].mxu0
      %v959 = vadd.f32 %v480, %v958
      %v960 = vpop.f32.mrb[0].mxu0
      %961 = vmatprep.mubr.f32.mxu0 0.0
      %962 = vmatmul.mubr.f32.gmra.mrb[0].mxu0 %v254
      %v963 = vpop.f32.mrb[0].mxu0
      %v964 = vadd.f32 %v480, %v963
      %v965 = vpop.f32.mrb[0].mxu0
      %966 = vmatprep.mubr.f32.mxu0 0.0
      %967 = vmatmul.mubr.f32.gmra.mrb[0].mxu0 %v255
      %v968 = vpop.f32.mrb[0].mxu0
      %v969 = vadd.f32 %v480, %v968
      %v970 = vpop.f32.mrb[0].mxu0
      %971 = vmatprep.mubr.f32.mxu0 0.0
      %972 = vmatmul.mubr.f32.gmra.mrb[0].mxu0 %v256
      %v973 = vpop.f32.mrb[0].mxu0
      %v974 = vadd.f32 %v480, %v973
      %v975 = vpop.f32.mrb[0].mxu0
      %976 = vmatprep.mubr.f32.mxu0 0.0
      %977 = vmatmul.mubr.f32.gmra.mrb[0].mxu0 %v257
      %v978 = vpop.f32.mrb[0].mxu0
      %v979 = vadd.f32 %v480, %v978
      %v980 = vpop.f32.mrb[0].mxu0
      %981 = vmatprep.mubr.f32.mxu0 0.0
      %982 = vmatmul.mubr.f32.gmra.mrb[0].mxu0 %v258
      %v983 = vpop.f32.mrb[0].mxu0
      %v984 = vadd.f32 %v480, %v983
      %v985 = vpop.f32.mrb[0].mxu0
      %986 = vmatprep.mubr.f32.mxu0 0.0
      %987 = vmatmul.mubr.f32.gmra.mrb[0].mxu0 %v259
      %v988 = vpop.f32.mrb[0].mxu0
      %v989 = vadd.f32 %v480, %v988
      %v990 = vpop.f32.mrb[0].mxu0
      %991 = vmatprep.mubr.f32.mxu0 0.0
      %992 = vmatmul.mubr.f32.gmra.mrb[0].mxu0 %v260
      %v993 = vpop.f32.mrb[0].mxu0
      %v994 = vadd.f32 %v480, %v993
      %v995 = vpop.f32.mrb[0].mxu0
      %996 = vmatprep.mubr.f32.mxu0 0.0
      %997 = vmatmul.mubr.f32.gmra.mrb[0].mxu0 %v261
      %v998 = vpop.f32.mrb[0].mxu0
      %v999 = vadd.f32 %v480, %v998
      %v1000 = vpop.f32.mrb[0].mxu0
      %1001 = vmatprep.mubr.f32.mxu0 0.0
      %1002 = vmatmul.mubr.f32.gmra.mrb[0].mxu0 %v262
      %v1003 = vpop.f32.mrb[0].mxu0
      %v1004 = vadd.f32 %v480, %v1003
      %v1005 = vpop.f32.mrb[0].mxu0
      %1006 = vmatprep.mubr.f32.mxu0 0.0
      %1007 = vmatmul.mubr.f32.gmra.mrb[0].mxu0 %v263
      %v1008 = vpop.f32.mrb[0].mxu0
      %v1009 = vadd.f32 %v480, %v1008
      %v1010 = vpop.f32.mrb[0].mxu0
      %1011 = vmatprep.mubr.f32.mxu0 0.0
      %1012 = vmatmul.mubr.f32.gmra.mrb[0].mxu0 %v264
      %v1013 = vpop.f32.mrb[0].mxu0
      %v1014 = vadd.f32 %v480, %v1013
      %v1015 = vpop.f32.mrb[0].mxu0
      %1016 = vmatprep.mubr.f32.mxu0 0.0
      %1017 = vmatmul.mubr.f32.gmra.mrb[0].mxu0 %v265
      %v1018 = vpop.f32.mrb[0].mxu0
      %v1019 = vadd.f32 %v480, %v1018
      %v1020 = vpop.f32.mrb[0].mxu0
      %1021 = vmatprep.mubr.f32.mxu0 0.0
      %1022 = vmatmul.mubr.f32.gmra.mrb[0].mxu0 %v266
      %v1023 = vpop.f32.mrb[0].mxu0
      %v1024 = vadd.f32 %v480, %v1023
      %v1025 = vpop.f32.mrb[0].mxu0
      %1026 = vmatprep.mubr.f32.mxu0 0.0
      %1027 = vmatmul.mubr.f32.gmra.mrb[0].mxu0 %v267
      %v1028 = vpop.f32.mrb[0].mxu0
      %v1029 = vadd.f32 %v480, %v1028
      %v1030 = vpop.f32.mrb[0].mxu0
      %1031 = vmatprep.mubr.f32.mxu0 0.0
      %1032 = vmatmul.mubr.f32.gmra.mrb[0].mxu0 %v268
      %v1033 = vpop.f32.mrb[0].mxu0
      %v1034 = vadd.f32 %v480, %v1033
      %v1035 = vpop.f32.mrb[0].mxu0
      %1036 = vmatprep.mubr.f32.mxu0 0.0
      %1037 = vmatmul.mubr.f32.gmra.mrb[0].mxu0 %v269
      %v1038 = vpop.f32.mrb[0].mxu0
      %v1039 = vadd.f32 %v480, %v1038
      %v1040 = vpop.f32.mrb[0].mxu0
      %1041 = vmatprep.mubr.f32.mxu0 0.0
      %1042 = vmatmul.mubr.f32.gmra.mrb[0].mxu0 %v270
      %v1043 = vpop.f32.mrb[0].mxu0
      %v1044 = vadd.f32 %v480, %v1043
      %v1045 = vpop.f32.mrb[0].mxu0
      %1046 = vmatprep.mubr.f32.mxu0 0.0
      %1047 = vmatmul.mubr.f32.gmra.mrb[0].mxu0 %v271
      %v1048 = vpop.f32.mrb[0].mxu0
      %v1049 = vadd.f32 %v480, %v1048
      %v1050 = vpop.f32.mrb[0].mxu0
      %1051 = vmatprep.mubr.f32.mxu0 0.0
      %1052 = vmatmul.mubr.f32.gmra.mrb[0].mxu0 %v272
      %v1053 = vpop.f32.mrb[0].mxu0
      %v1054 = vadd.f32 %v480, %v1053
      %v1055 = vpop.f32.mrb[0].mxu0
      %1056 = vmatprep.mubr.f32.mxu0 0.0
      %1057 = vmatmul.mubr.f32.gmra.mrb[0].mxu0 %v273
      %v1058 = vpop.f32.mrb[0].mxu0
      %v1059 = vadd.f32 %v480, %v1058
      %v1060 = vpop.f32.mrb[0].mxu0
      %1061 = vmatprep.mubr.f32.mxu0 0.0
      %1062 = vmatmul.mubr.f32.gmra.mrb[0].mxu0 %v274
      %v1063 = vpop.f32.mrb[0].mxu0
      %v1064 = vadd.f32 %v480, %v1063
      %v1065 = vpop.f32.mrb[0].mxu0
      %1066 = vmatprep.mubr.f32.mxu0 0.0
      %1067 = vmatmul.mubr.f32.gmra.mrb[0].mxu0 %v275
      %v1068 = vpop.f32.mrb[0].mxu0
      %v1069 = vadd.f32 %v480, %v1068
      %v1070 = vpop.f32.mrb[0].mxu0
      %1071 = vmatprep.mubr.f32.mxu0 0.0
      %1072 = vmatmul.mubr.f32.gmra.mrb[0].mxu0 %v276
      %v1073 = vpop.f32.mrb[0].mxu0
      %v1074 = vadd.f32 %v480, %v1073
      %v1075 = vpop.f32.mrb[0].mxu0
      %1076 = vmatprep.mubr.f32.mxu0 0.0
      %1077 = vmatmul.mubr.f32.gmra.mrb[0].mxu0 %v277
      %v1078 = vpop.f32.mrb[0].mxu0
      %v1079 = vadd.f32 %v480, %v1078
      %v1080 = vpop.f32.mrb[0].mxu0
      %1081 = vmatprep.mubr.f32.mxu0 0.0
      %1082 = vmatmul.mubr.f32.gmra.mrb[0].mxu0 %v278
      %v1083 = vpop.f32.mrb[0].mxu0
      %v1084 = vadd.f32 %v480, %v1083
      %v1085 = vpop.f32.mrb[0].mxu0
      %1086 = vmatprep.mubr.f32.mxu0 0.0
      %1087 = vmatmul.mubr.f32.gmra.mrb[0].mxu0 %v279
      %v1088 = vpop.f32.mrb[0].mxu0
      %v1089 = vadd.f32 %v480, %v1088
      %v1090 = vpop.f32.mrb[0].mxu0
      %1091 = vmatprep.mubr.f32.mxu0 0.0
      %1092 = vmatmul.mubr.f32.gmra.mrb[0].mxu0 %v280
      %v1093 = vpop.f32.mrb[0].mxu0
      %v1094 = vadd.f32 %v480, %v1093
      %v1095 = vpop.f32.mrb[0].mxu0
      %1096 = vmatprep.mubr.f32.mxu0 0.0
      %1097 = vmatmul.mubr.f32.gmra.mrb[0].mxu0 %v281
      %v1098 = vpop.f32.mrb[0].mxu0
      %v1099 = vadd.f32 %v480, %v1098
      %v1100 = vpop.f32.mrb[0].mxu0
      %1101 = vmatprep.mubr.f32.mxu0 0.0
      %1102 = vmatmul.mubr.f32.gmra.mrb[0].mxu0 %v282
      %v1103 = vpop.f32.mrb[0].mxu0
      %v1104 = vadd.f32 %v480, %v1103
      %v1105 = vpop.f32.mrb[0].mxu0
      %1106 = vmatprep.mubr.f32.mxu0 0.0
      %1107 = vmatmul.mubr.f32.gmra.mrb[0].mxu0 %v283
      %v1108 = vpop.f32.mrb[0].mxu0
      %v1109 = vadd.f32 %v480, %v1108
      %v1110 = vpop.f32.mrb[0].mxu0
      %1111 = vmatprep.mubr.f32.mxu0 0.0
      %1112 = vmatmul.mubr.f32.gmra.mrb[0].mxu0 %v284
      %v1113 = vpop.f32.mrb[0].mxu0
      %v1114 = vadd.f32 %v480, %v1113
      %v1115 = vpop.f32.mrb[0].mxu0
      %1116 = vmatprep.mubr.f32.mxu0 0.0
      %1117 = vmatmul.mubr.f32.gmra.mrb[0].mxu0 %v285
      %v1118 = vpop.f32.mrb[0].mxu0
      %v1119 = vadd.f32 %v480, %v1118
      %v1120 = vpop.f32.mrb[0].mxu0
      %1121 = vmatprep.mubr.f32.mxu0 0.0
      %1122 = vmatmul.mubr.f32.gmra.mrb[0].mxu0 %v286
      %v1123 = vpop.f32.mrb[0].mxu0
      %v1124 = vadd.f32 %v480, %v1123
      %v1125 = vpop.f32.mrb[0].mxu0
      %1126 = vmatprep.mubr.f32.mxu0 0.0
      %1127 = vmatmul.mubr.f32.gmra.mrb[0].mxu0 %v287
      %v1128 = vpop.f32.mrb[0].mxu0
      %v1129 = vadd.f32 %v480, %v1128
      %v1130 = vpop.f32.mrb[0].mxu0
      %1131 = vmatprep.mubr.f32.mxu0 0.0
      %1132 = vmatmul.mubr.f32.gmra.mrb[0].mxu0 %v288
      %v1133 = vpop.f32.mrb[0].mxu0
      %v1134 = vadd.f32 %v480, %v1133
      %v1135 = vpop.f32.mrb[0].mxu0
      %1136 = vmatprep.mubr.f32.mxu0 0.0
      %1137 = vmatmul.mubr.f32.gmra.mrb[0].mxu0 %v289
      %v1138 = vpop.f32.mrb[0].mxu0
      %v1139 = vadd.f32 %v480, %v1138
      %v1140 = vpop.f32.mrb[0].mxu0
      %1141 = vmatprep.mubr.f32.mxu0 0.0
      %1142 = vmatmul.mubr.f32.gmra.mrb[0].mxu0 %v290
      %v1143 = vpop.f32.mrb[0].mxu0
      %v1144 = vadd.f32 %v480, %v1143
      %v1145 = vpop.f32.mrb[0].mxu0
      %1146 = vmatprep.mubr.f32.mxu0 0.0
      %1147 = vmatmul.mubr.f32.gmra.mrb[0].mxu0 %v291
      %v1148 = vpop.f32.mrb[0].mxu0
      %v1149 = vadd.f32 %v480, %v1148
      %v1150 = vpop.f32.mrb[0].mxu0
      %1151 = vmatprep.mubr.f32.mxu0 0.0
      %1152 = vmatmul.mubr.f32.gmra.mrb[0].mxu0 %v292
      %v1153 = vpop.f32.mrb[0].mxu0
      %v1154 = vadd.f32 %v480, %v1153
      %v1155 = vpop.f32.mrb[0].mxu0
      %1156 = vmatprep.mubr.f32.mxu0 0.0
      %1157 = vmatmul.mubr.f32.gmra.mrb[0].mxu0 %v293
      %v1158 = vpop.f32.mrb[0].mxu0
      %v1159 = vadd.f32 %v480, %v1158
      %v1160 = vpop.f32.mrb[0].mxu0
      %1161 = vmatprep.mubr.f32.mxu0 0.0
      %1162 = vmatmul.mubr.f32.gmra.mrb[0].mxu0 %v294
      %v1163 = vpop.f32.mrb[0].mxu0
      %v1164 = vadd.f32 %v480, %v1163
      %v1165 = vpop.f32.mrb[0].mxu0
      %1166 = vmatprep.mubr.f32.mxu0 0.0
      %1167 = vmatmul.mubr.f32.gmra.mrb[0].mxu0 %v295
      %v1168 = vpop.f32.mrb[0].mxu0
      %v1169 = vadd.f32 %v480, %v1168
      %v1170 = vpop.f32.mrb[0].mxu0
      %1171 = vmatprep.mubr.f32.mxu0 0.0
      %1172 = vmatmul.mubr.f32.gmra.mrb[0].mxu0 %v296
      %v1173 = vpop.f32.mrb[0].mxu0
      %v1174 = vadd.f32 %v480, %v1173
      %v1175 = vpop.f32.mrb[0].mxu0
      %1176 = vmatprep.mubr.f32.mxu0 0.0
      %1177 = vmatmul.mubr.f32.gmra.mrb[0].mxu0 %v297
      %v1178 = vpop.f32.mrb[0].mxu0
      %v1179 = vadd.f32 %v480, %v1178
      %v1180 = vpop.f32.mrb[0].mxu0
      %1181 = vmatprep.mubr.f32.mxu0 0.0
      %1182 = vmatmul.mubr.f32.gmra.mrb[0].mxu0 %v298
      %v1183 = vpop.f32.mrb[0].mxu0
      %v1184 = vadd.f32 %v480, %v1183
      %v1185 = vpop.f32.mrb[0].mxu0
      %1186 = vmatprep.mubr.f32.mxu0 0.0
      %1187 = vmatmul.mubr.f32.gmra.mrb[0].mxu0 %v299
      %v1188 = vpop.f32.mrb[0].mxu0
      %v1189 = vadd.f32 %v480, %v1188
      %v1190 = vpop.f32.mrb[0].mxu0
      %1191 = vmatprep.mubr.f32.mxu0 0.0
      %1192 = vmatmul.mubr.f32.gmra.mrb[0].mxu0 %v300
      %v1193 = vpop.f32.mrb[0].mxu0
      %v1194 = vadd.f32 %v480, %v1193
      %v1195 = vpop.f32.mrb[0].mxu0
      %1196 = vmatprep.mubr.f32.mxu0 0.0
      %1197 = vmatmul.mubr.f32.gmra.mrb[0].mxu0 %v301
      %v1198 = vpop.f32.mrb[0].mxu0
      %v1199 = vadd.f32 %v480, %v1198
      %v1200 = vpop.f32.mrb[0].mxu0
      %1201 = vmatprep.mubr.f32.mxu0 0.0
      %1202 = vmatmul.mubr.f32.gmra.mrb[0].mxu0 %v302
      %v1203 = vpop.f32.mrb[0].mxu0
      %v1204 = vadd.f32 %v480, %v1203
      %v1205 = vpop.f32.mrb[0].mxu0
      %1206 = vmatprep.mubr.f32.mxu0 0.0
      %1207 = vmatmul.mubr.f32.gmra.mrb[0].mxu0 %v303
      %v1208 = vpop.f32.mrb[0].mxu0
      %v1209 = vadd.f32 %v480, %v1208
      %v1210 = vpop.f32.mrb[0].mxu0
      %1211 = vmatprep.mubr.f32.mxu0 0.0
      %1212 = vmatmul.mubr.f32.gmra.mrb[0].mxu0 %v304
      %v1213 = vpop.f32.mrb[0].mxu0
      %v1214 = vadd.f32 %v480, %v1213
      %v1215 = vpop.f32.mrb[0].mxu0
      %1216 = vmatprep.mubr.f32.mxu0 0.0
      %1217 = vmatmul.mubr.f32.gmra.mrb[0].mxu0 %v305
      %v1218 = vpop.f32.mrb[0].mxu0
      %v1219 = vadd.f32 %v480, %v1218
      %v1220 = vpop.f32.mrb[0].mxu0
      %1221 = vmatprep.mubr.f32.mxu0 0.0
      %1222 = vmatmul.mubr.f32.gmra.mrb[0].mxu0 %v306
      %v1223 = vpop.f32.mrb[0].mxu0
      %v1224 = vadd.f32 %v480, %v1223
      %v1225 = vpop.f32.mrb[0].mxu0
      %1226 = vmatprep.mubr.f32.mxu0 0.0
      %1227 = vmatmul.mubr.f32.gmra.mrb[0].mxu0 %v307
      %v1228 = vpop.f32.mrb[0].mxu0
      %v1229 = vadd.f32 %v480, %v1228
      %v1230 = vpop.f32.mrb[0].mxu0
      %1231 = vmatprep.mubr.f32.mxu0 0.0
      %1232 = vmatmul.mubr.f32.gmra.mrb[0].mxu0 %v308
      %v1233 = vpop.f32.mrb[0].mxu0
      %v1234 = vadd.f32 %v480, %v1233
      %v1235 = vpop.f32.mrb[0].mxu0
      %1236 = vmatprep.mubr.f32.mxu0 0.0
      %1237 = vmatmul.mubr.f32.gmra.mrb[0].mxu0 %v309
      %v1238 = vpop.f32.mrb[0].mxu0
      %v1239 = vadd.f32 %v480, %v1238
      %v1240 = vpop.f32.mrb[0].mxu0
      %1241 = vmatprep.mubr.f32.mxu0 0.0
      %1242 = vmatmul.mubr.f32.gmra.mrb[0].mxu0 %v310
      %v1243 = vpop.f32.mrb[0].mxu0
      %v1244 = vadd.f32 %v480, %v1243
      %v1245 = vpop.f32.mrb[0].mxu0
      %1246 = vmatprep.mubr.f32.mxu0 0.0
      %1247 = vmatmul.mubr.f32.gmra.mrb[0].mxu0 %v311
      %v1248 = vpop.f32.mrb[0].mxu0
      %v1249 = vadd.f32 %v480, %v1248
      %v1250 = vpop.f32.mrb[0].mxu0
      %1251 = vmatprep.mubr.f32.mxu0 0.0
      %1252 = vmatmul.mubr.f32.gmra.mrb[0].mxu0 %v312
      %v1253 = vpop.f32.mrb[0].mxu0
      %v1254 = vadd.f32 %v480, %v1253
      %v1255 = vpop.f32.mrb[0].mxu0
      %1256 = vmatprep.mubr.f32.mxu0 0.0
      %1257 = vmatmul.mubr.f32.gmra.mrb[0].mxu0 %v313
      %v1258 = vpop.f32.mrb[0].mxu0
      %v1259 = vadd.f32 %v480, %v1258
      %v1260 = vpop.f32.mrb[0].mxu0
      %1261 = vmatprep.mubr.f32.mxu0 0.0
      %1262 = vmatmul.mubr.f32.gmra.mrb[0].mxu0 %v314
      %v1263 = vpop.f32.mrb[0].mxu0
      %v1264 = vadd.f32 %v480, %v1263
      %v1265 = vpop.f32.mrb[0].mxu0
      %1266 = vmatprep.mubr.f32.mxu0 0.0
      %1267 = vmatmul.mubr.f32.gmra.mrb[0].mxu0 %v315
      %v1268 = vpop.f32.mrb[0].mxu0
      %v1269 = vadd.f32 %v480, %v1268
      %v1270 = vpop.f32.mrb[0].mxu0
      %1271 = vmatprep.mubr.f32.mxu0 0.0
      %1272 = vmatmul.mubr.f32.gmra.mrb[0].mxu0 %v316
      %v1273 = vpop.f32.mrb[0].mxu0
      %v1274 = vadd.f32 %v480, %v1273
      %v1275 = vpop.f32.mrb[0].mxu0
      %1276 = vmatprep.mubr.f32.mxu0 0.0
      %1277 = vmatmul.mubr.f32.gmra.mrb[0].mxu0 %v317
      %v1278 = vpop.f32.mrb[0].mxu0
      %v1279 = vadd.f32 %v480, %v1278
      %v1280 = vpop.f32.mrb[0].mxu0
      %1281 = vmatprep.mubr.f32.mxu0 0.0
      %1282 = vmatmul.mubr.f32.gmra.mrb[0].mxu0 %v318
      %v1283 = vpop.f32.mrb[0].mxu0
      %v1284 = vadd.f32 %v480, %v1283
      %v1285 = vpop.f32.mrb[0].mxu0
      %1286 = vmatprep.mubr.f32.mxu0 0.0
      %1287 = vmatmul.mubr.f32.gmra.mrb[0].mxu0 %v319
      %v1288 = vpop.f32.mrb[0].mxu0
      %v1289 = vadd.f32 %v480, %v1288
      %v1290 = vpop.f32.mrb[0].mxu0
      %1291 = vmatprep.mubr.f32.mxu0 0.0
      %1292 = vmatmul.mubr.f32.gmra.mrb[0].mxu0 %v320
      %v1293 = vpop.f32.mrb[0].mxu0
      %v1294 = vadd.f32 %v480, %v1293
      %v1295 = vpop.f32.mrb[0].mxu0
      %1296 = vmatprep.mubr.f32.mxu0 0.0
      %1297 = vmatmul.mubr.f32.gmra.mrb[0].mxu0 %v321
      %v1298 = vpop.f32.mrb[0].mxu0
      %v1299 = vadd.f32 %v480, %v1298
      %v1300 = vpop.f32.mrb[0].mxu0
      %1301 = vmatprep.mubr.f32.mxu0 0.0
      %1302 = vmatmul.mubr.f32.gmra.mrb[0].mxu0 %v322
      %v1303 = vpop.f32.mrb[0].mxu0
      %v1304 = vadd.f32 %v480, %v1303
      %v1305 = vpop.f32.mrb[0].mxu0
      %1306 = vmatprep.mubr.f32.mxu0 0.0
      %1307 = vmatmul.mubr.f32.gmra.mrb[0].mxu0 %v323
      %v1308 = vpop.f32.mrb[0].mxu0
      %v1309 = vadd.f32 %v480, %v1308
      %v1310 = vpop.f32.mrb[0].mxu0
      %1311 = vmatprep.mubr.f32.mxu0 0.0
      %1312 = vmatmul.mubr.f32.gmra.mrb[0].mxu0 %v324
      %v1313 = vpop.f32.mrb[0].mxu0
      %v1314 = vadd.f32 %v480, %v1313
      %v1315 = vpop.f32.mrb[0].mxu0
      %1316 = vmatprep.mubr.f32.mxu0 0.0
      %1317 = vmatmul.mubr.f32.gmra.mrb[0].mxu0 %v325
      %v1318 = vpop.f32.mrb[0].mxu0
      %v1319 = vadd.f32 %v480, %v1318
      %v1320 = vpop.f32.mrb[0].mxu0
      %1321 = vmatprep.mubr.f32.mxu0 0.0
      %1322 = vmatmul.mubr.f32.gmra.mrb[0].mxu0 %v326
      %v1323 = vpop.f32.mrb[0].mxu0
      %v1324 = vadd.f32 %v480, %v1323
      %v1325 = vpop.f32.mrb[0].mxu0
      %1326 = vmatprep.mubr.f32.mxu0 0.0
      %1327 = vmatmul.mubr.f32.gmra.mrb[0].mxu0 %v327
      %v1328 = vpop.f32.mrb[0].mxu0
      %v1329 = vadd.f32 %v480, %v1328
      %v1330 = vpop.f32.mrb[0].mxu0
      %1331 = vmatprep.mubr.f32.mxu0 0.0
      %1332 = vmatmul.mubr.f32.gmra.mrb[0].mxu0 %v328
      %v1333 = vpop.f32.mrb[0].mxu0
      %v1334 = vadd.f32 %v480, %v1333
      %v1335 = vpop.f32.mrb[0].mxu0
      %1336 = vmatprep.mubr.f32.mxu0 0.0
      %1337 = vmatmul.mubr.f32.gmra.mrb[0].mxu0 %v329
      %v1338 = vpop.f32.mrb[0].mxu0
      %v1339 = vadd.f32 %v480, %v1338
      %v1340 = vpop.f32.mrb[0].mxu0
      %1341 = vmatprep.mubr.f32.mxu0 0.0
      %1342 = vmatmul.mubr.f32.gmra.mrb[0].mxu0 %v330
      %v1343 = vpop.f32.mrb[0].mxu0
      %v1344 = vadd.f32 %v480, %v1343
      %v1345 = vpop.f32.mrb[0].mxu0
      %1346 = vmatprep.mubr.f32.mxu0 0.0
      %1347 = vmatmul.mubr.f32.gmra.mrb[0].mxu0 %v331
      %v1348 = vpop.f32.mrb[0].mxu0
      %v1349 = vadd.f32 %v480, %v1348
      %v1350 = vpop.f32.mrb[0].mxu0
      %1351 = vmatprep.mubr.f32.mxu0 0.0
      %1352 = vmatmul.mubr.f32.gmra.mrb[0].mxu0 %v332
      %v1353 = vpop.f32.mrb[0].mxu0
      %v1354 = vadd.f32 %v480, %v1353
      %v1355 = vpop.f32.mrb[0].mxu0
      %1356 = vmatprep.mubr.f32.mxu0 0.0
      %1357 = vmatmul.mubr.f32.gmra.mrb[0].mxu0 %v333
      %v1358 = vpop.f32.mrb[0].mxu0
      %v1359 = vadd.f32 %v480, %v1358
      %v1360 = vpop.f32.mrb[0].mxu0
      %1361 = vmatprep.mubr.f32.mxu0 0.0
      %1362 = vmatmul.mubr.f32.gmra.mrb[0].mxu0 %v334
      %v1363 = vpop.f32.mrb[0].mxu0
      %v1364 = vadd.f32 %v480, %v1363
      %v1365 = vpop.f32.mrb[0].mxu0
      %1366 = vmatprep.mubr.f32.mxu0 0.0
      %1367 = vmatmul.mubr.f32.gmra.mrb[0].mxu0 %v335
      %v1368 = vpop.f32.mrb[0].mxu0
      %v1369 = vadd.f32 %v480, %v1368
      %v1370 = vpop.f32.mrb[0].mxu0
      %1371 = vmatprep.mubr.f32.mxu0 0.0
      %1372 = vmatmul.mubr.f32.gmra.mrb[0].mxu0 %v336
      %v1373 = vpop.f32.mrb[0].mxu0
      %v1374 = vadd.f32 %v480, %v1373
      %v1375 = vpop.f32.mrb[0].mxu0
      %1376 = vmatprep.mubr.f32.mxu0 0.0
      %1377 = vmatmul.mubr.f32.gmra.mrb[0].mxu0 %v337
      %v1378 = vpop.f32.mrb[0].mxu0
      %v1379 = vadd.f32 %v480, %v1378
      %v1380 = vpop.f32.mrb[0].mxu0
      %1381 = vmatprep.mubr.f32.mxu0 0.0
      %1382 = vmatmul.mubr.f32.gmra.mrb[0].mxu0 %v338
      %v1383 = vpop.f32.mrb[0].mxu0
      %v1384 = vadd.f32 %v480, %v1383
      %v1385 = vpop.f32.mrb[0].mxu0
      %1386 = vmatprep.mubr.f32.mxu0 0.0
      %1387 = vmatmul.mubr.f32.gmra.mrb[0].mxu0 %v339
      %v1388 = vpop.f32.mrb[0].mxu0
      %v1389 = vadd.f32 %v480, %v1388
      %v1390 = vpop.f32.mrb[0].mxu0
      %1391 = vmatprep.mubr.f32.mxu0 0.0
      %1392 = vmatmul.mubr.f32.gmra.mrb[0].mxu0 %v340
      %v1393 = vpop.f32.mrb[0].mxu0
      %v1394 = vadd.f32 %v480, %v1393
      %v1395 = vpop.f32.mrb[0].mxu0
      %1396 = vmatprep.mubr.f32.mxu0 0.0
      %1397 = vmatmul.mubr.f32.gmra.mrb[0].mxu0 %v341
      %v1398 = vpop.f32.mrb[0].mxu0
      %v1399 = vadd.f32 %v480, %v1398
      %v1400 = vpop.f32.mrb[0].mxu0
      %1401 = vmatprep.mubr.f32.mxu0 0.0
      %1402 = vmatmul.mubr.f32.gmra.mrb[0].mxu0 %v342
      %v1403 = vpop.f32.mrb[0].mxu0
      %v1404 = vadd.f32 %v480, %v1403
      %v1405 = vpop.f32.mrb[0].mxu0
      %1406 = vmatprep.mubr.f32.mxu0 0.0
      %1407 = vmatmul.mubr.f32.gmra.mrb[0].mxu0 %v343
      %v1408 = vpop.f32.mrb[0].mxu0
      %v1409 = vadd.f32 %v480, %v1408
      %v1410 = vpop.f32.mrb[0].mxu0
      %1411 = vmatprep.mubr.f32.mxu0 0.0
      %1412 = vmatmul.mubr.f32.gmra.mrb[0].mxu0 %v344
      %v1413 = vpop.f32.mrb[0].mxu0
      %v1414 = vadd.f32 %v480, %v1413
      %v1415 = vpop.f32.mrb[0].mxu0
      %1416 = vmatprep.mubr.f32.mxu0 0.0
      %1417 = vmatmul.mubr.f32.gmra.mrb[0].mxu0 %v345
      %v1418 = vpop.f32.mrb[0].mxu0
      %v1419 = vadd.f32 %v480, %v1418
      %v1420 = vpop.f32.mrb[0].mxu0
      %1421 = vmatprep.mubr.f32.mxu0 0.0
      %1422 = vmatmul.mubr.f32.gmra.mrb[0].mxu0 %v346
      %v1423 = vpop.f32.mrb[0].mxu0
      %v1424 = vadd.f32 %v480, %v1423
      %v1425 = vpop.f32.mrb[0].mxu0
      %1426 = vmatprep.mubr.f32.mxu0 0.0
      %1427 = vmatmul.mubr.f32.gmra.mrb[0].mxu0 %v347
      %v1428 = vpop.f32.mrb[0].mxu0
      %v1429 = vadd.f32 %v480, %v1428
      %v1430 = vpop.f32.mrb[0].mxu0
      %1431 = vmatprep.mubr.f32.mxu0 0.0
      %1432 = vmatmul.mubr.f32.gmra.mrb[0].mxu0 %v348
      %v1433 = vpop.f32.mrb[0].mxu0
      %v1434 = vadd.f32 %v480, %v1433
      %v1435 = vpop.f32.mrb[0].mxu0
      %1436 = vmatprep.mubr.f32.mxu0 0.0
      %1437 = vmatmul.mubr.f32.gmra.mrb[0].mxu0 %v349
      %v1438 = vpop.f32.mrb[0].mxu0
      %v1439 = vadd.f32 %v480, %v1438
      %v1440 = vpop.f32.mrb[0].mxu0
      %1441 = vmatprep.mubr.f32.mxu0 0.0
      %1442 = vmatmul.mubr.f32.gmra.mrb[0].mxu0 %v350
      %v1443 = vpop.f32.mrb[0].mxu0
      %v1444 = vadd.f32 %v480, %v1443
      %v1445 = vpop.f32.mrb[0].mxu0
      %1446 = vmatprep.mubr.f32.mxu0 0.0
      %1447 = vmatmul.mubr.f32.gmra.mrb[0].mxu0 %v351
      %v1448 = vpop.f32.mrb[0].mxu0
      %v1449 = vadd.f32 %v480, %v1448
      %v1450 = vpop.f32.mrb[0].mxu0
      %1451 = vmatprep.mubr.f32.mxu0 0.0
      %1452 = vmatmul.mubr.f32.gmra.mrb[0].mxu0 %v352
      %v1453 = vpop.f32.mrb[0].mxu0
      %v1454 = vadd.f32 %v480, %v1453
      %v1455 = vpop.f32.mrb[0].mxu0
      %1456 = vmatprep.mubr.f32.mxu0 0.0
      %1457 = vmatmul.mubr.f32.gmra.mrb[0].mxu0 %v353
      %v1458 = vpop.f32.mrb[0].mxu0
      %v1459 = vadd.f32 %v480, %v1458
      %v1460 = vpop.f32.mrb[0].mxu0
      %1461 = vmatprep.mubr.f32.mxu0 0.0
      %1462 = vmatmul.mubr.f32.gmra.mrb[0].mxu0 %v354
      %v1463 = vpop.f32.mrb[0].mxu0
      %v1464 = vadd.f32 %v480, %v1463
      %v1465 = vpop.f32.mrb[0].mxu0
      %1466 = vmatprep.mubr.f32.mxu0 0.0
      %1467 = vmatmul.mubr.f32.gmra.mrb[0].mxu0 %v355
      %v1468 = vpop.f32.mrb[0].mxu0
      %v1469 = vadd.f32 %v480, %v1468
      %v1470 = vpop.f32.mrb[0].mxu0
      %1471 = vmatprep.mubr.f32.mxu0 0.0
      %1472 = vmatmul.mubr.f32.gmra.mrb[0].mxu0 %v356
      %v1473 = vpop.f32.mrb[0].mxu0
      %v1474 = vadd.f32 %v480, %v1473
      %v1475 = vpop.f32.mrb[0].mxu0
      %1476 = vmatprep.mubr.f32.mxu0 0.0
      %1477 = vmatmul.mubr.f32.gmra.mrb[0].mxu0 %v357
      %v1478 = vpop.f32.mrb[0].mxu0
      %v1479 = vadd.f32 %v480, %v1478
      %v1480 = vpop.f32.mrb[0].mxu0
      %1481 = vmatprep.mubr.f32.mxu0 0.0
      %1482 = vmatmul.mubr.f32.gmra.mrb[0].mxu0 %v358
      %v1483 = vpop.f32.mrb[0].mxu0
      %v1484 = vadd.f32 %v480, %v1483
      %v1485 = vpop.f32.mrb[0].mxu0
      %1486 = vmatprep.mubr.f32.mxu0 0.0
      %1487 = vmatmul.mubr.f32.gmra.mrb[0].mxu0 %v359
      %v1488 = vpop.f32.mrb[0].mxu0
      %v1489 = vadd.f32 %v480, %v1488
      %v1490 = vpop.f32.mrb[0].mxu0
      %1491 = vmatprep.mubr.f32.mxu0 0.0
      %1492 = vmatmul.mubr.f32.gmra.mrb[0].mxu0 %v360
      %v1493 = vpop.f32.mrb[0].mxu0
      %v1494 = vadd.f32 %v480, %v1493
      %v1495 = vpop.f32.mrb[0].mxu0
      %1496 = vmatprep.mubr.f32.mxu0 0.0
      %1497 = vmatmul.mubr.f32.gmra.mrb[0].mxu0 %v361
      %v1498 = vpop.f32.mrb[0].mxu0
      %v1499 = vadd.f32 %v480, %v1498
      %v1500 = vpop.f32.mrb[0].mxu0
      %1501 = vmatprep.mubr.f32.mxu0 0.0
      %1502 = vmatmul.mubr.f32.gmra.mrb[0].mxu0 %v362
      %v1503 = vpop.f32.mrb[0].mxu0
      %v1504 = vadd.f32 %v480, %v1503
      %v1505 = vpop.f32.mrb[0].mxu0
      %1506 = vmatprep.mubr.f32.mxu0 0.0
      %1507 = vmatmul.mubr.f32.gmra.mrb[0].mxu0 %v363
      %v1508 = vpop.f32.mrb[0].mxu0
      %v1509 = vadd.f32 %v480, %v1508
      %v1510 = vpop.f32.mrb[0].mxu0
      %1511 = vmatprep.mubr.f32.mxu0 0.0
      %1512 = vmatmul.mubr.f32.gmra.mrb[0].mxu0 %v364
      %v1513 = vpop.f32.mrb[0].mxu0
      %v1514 = vadd.f32 %v480, %v1513
      %v1515 = vpop.f32.mrb[0].mxu0
      %1516 = vmatprep.mubr.f32.mxu0 0.0
      %1517 = vmatmul.mubr.f32.gmra.mrb[0].mxu0 %v365
      %v1518 = vpop.f32.mrb[0].mxu0
      %v1519 = vadd.f32 %v480, %v1518
      %v1520 = vpop.f32.mrb[0].mxu0
      %1521 = vmatprep.mubr.f32.mxu0 0.0
      %1522 = vmatmul.mubr.f32.gmra.mrb[0].mxu0 %v366
      %v1523 = vpop.f32.mrb[0].mxu0
      %v1524 = vadd.f32 %v480, %v1523
      %v1525 = vpop.f32.mrb[0].mxu0
      %1526 = vmatprep.mubr.f32.mxu0 0.0
      %1527 = vmatmul.mubr.f32.gmra.mrb[0].mxu0 %v367
      %v1528 = vpop.f32.mrb[0].mxu0
      %v1529 = vadd.f32 %v480, %v1528
      %v1530 = vpop.f32.mrb[0].mxu0
      %1531 = vmatprep.mubr.f32.mxu0 0.0
      %1532 = vmatmul.mubr.f32.gmra.mrb[0].mxu0 %v368
      %v1533 = vpop.f32.mrb[0].mxu0
      %v1534 = vadd.f32 %v480, %v1533
      %v1535 = vpop.f32.mrb[0].mxu0
      %1536 = vmatprep.mubr.f32.mxu0 0.0
      %1537 = vmatmul.mubr.f32.gmra.mrb[0].mxu0 %v369
      %v1538 = vpop.f32.mrb[0].mxu0
      %v1539 = vadd.f32 %v480, %v1538
      %v1540 = vpop.f32.mrb[0].mxu0
      %1541 = vmatprep.mubr.f32.mxu0 0.0
      %1542 = vmatmul.mubr.f32.gmra.mrb[0].mxu0 %v370
      %v1543 = vpop.f32.mrb[0].mxu0
      %v1544 = vadd.f32 %v480, %v1543
      %v1545 = vpop.f32.mrb[0].mxu0
      %1546 = vmatprep.mubr.f32.mxu0 0.0
      %1547 = vmatmul.mubr.f32.gmra.mrb[0].mxu0 %v371
      %v1548 = vpop.f32.mrb[0].mxu0
      %v1549 = vadd.f32 %v480, %v1548
      %v1550 = vpop.f32.mrb[0].mxu0
      %1551 = vmatprep.mubr.f32.mxu0 0.0
      %1552 = vmatmul.mubr.f32.gmra.mrb[0].mxu0 %v372
      %v1553 = vpop.f32.mrb[0].mxu0
      %v1554 = vadd.f32 %v480, %v1553
      %v1555 = vpop.f32.mrb[0].mxu0
      %1556 = vmatprep.mubr.f32.mxu0 0.0
      %1557 = vmatmul.mubr.f32.gmra.mrb[0].mxu0 %v373
      %v1558 = vpop.f32.mrb[0].mxu0
      %v1559 = vadd.f32 %v480, %v1558
      %v1560 = vpop.f32.mrb[0].mxu0
      %1561 = vmatprep.mubr.f32.mxu0 0.0
      %1562 = vmatmul.mubr.f32.gmra.mrb[0].mxu0 %v374
      %v1563 = vpop.f32.mrb[0].mxu0
      %v1564 = vadd.f32 %v480, %v1563
      %v1565 = vpop.f32.mrb[0].mxu0
      %1566 = vmatprep.mubr.f32.mxu0 0.0
      %1567 = vmatmul.mubr.f32.gmra.mrb[0].mxu0 %v375
      %v1568 = vpop.f32.mrb[0].mxu0
      %v1569 = vadd.f32 %v480, %v1568
      %v1570 = vpop.f32.mrb[0].mxu0
      %1571 = vmatprep.mubr.f32.mxu0 0.0
      %1572 = vmatmul.mubr.f32.gmra.mrb[0].mxu0 %v376
      %v1573 = vpop.f32.mrb[0].mxu0
      %v1574 = vadd.f32 %v480, %v1573
      %v1575 = vpop.f32.mrb[0].mxu0
      %1576 = vmatprep.mubr.f32.mxu0 0.0
      %1577 = vmatmul.mubr.f32.gmra.mrb[0].mxu0 %v377
      %v1578 = vpop.f32.mrb[0].mxu0
      %v1579 = vadd.f32 %v480, %v1578
      %v1580 = vpop.f32.mrb[0].mxu0
      %1581 = vmatprep.mubr.f32.mxu0 0.0
      %1582 = vmatmul.mubr.f32.gmra.mrb[0].mxu0 %v378
      %v1583 = vpop.f32.mrb[0].mxu0
      %v1584 = vadd.f32 %v480, %v1583
      %v1585 = vpop.f32.mrb[0].mxu0
      %1586 = vmatprep.mubr.f32.mxu0 0.0
      %1587 = vmatmul.mubr.f32.gmra.mrb[0].mxu0 %v379
      %v1588 = vpop.f32.mrb[0].mxu0
      %v1589 = vadd.f32 %v480, %v1588
      %v1590 = vpop.f32.mrb[0].mxu0
      %1591 = vmatprep.mubr.f32.mxu0 0.0
      %1592 = vmatmul.mubr.f32.gmra.mrb[0].mxu0 %v380
      %v1593 = vpop.f32.mrb[0].mxu0
      %v1594 = vadd.f32 %v480, %v1593
      %v1595 = vpop.f32.mrb[0].mxu0
      %1596 = vmatprep.mubr.f32.mxu0 0.0
      %1597 = vmatmul.mubr.f32.gmra.mrb[0].mxu0 %v381
      %v1598 = vpop.f32.mrb[0].mxu0
      %v1599 = vadd.f32 %v480, %v1598
      %v1600 = vpop.f32.mrb[0].mxu0
      %1601 = vmatprep.mubr.f32.mxu0 0.0
      %1602 = vmatmul.mubr.f32.gmra.mrb[0].mxu0 %v382
      %v1603 = vpop.f32.mrb[0].mxu0
      %v1604 = vadd.f32 %v480, %v1603
      %v1605 = vpop.f32.mrb[0].mxu0
      %1606 = vmatprep.mubr.f32.mxu0 0.0
      %1607 = vmatmul.mubr.f32.gmra.mrb[0].mxu0 %v383
      %v1608 = vpop.f32.mrb[0].mxu0
      %v1609 = vadd.f32 %v480, %v1608
      %v1610 = vpop.f32.mrb[0].mxu0
      %1611 = vmatprep.mubr.f32.mxu0 0.0
      %1612 = vmatmul.mubr.f32.gmra.mrb[0].mxu0 %v384
      %v1613 = vpop.f32.mrb[0].mxu0
      %v1614 = vadd.f32 %v480, %v1613
      %v1615 = vpop.f32.mrb[0].mxu0
      %1616 = vmatprep.mubr.f32.mxu0 0.0
      %1617 = vmatmul.mubr.f32.gmra.mrb[0].mxu0 %v385
      %v1618 = vpop.f32.mrb[0].mxu0
      %v1619 = vadd.f32 %v480, %v1618
      %v1620 = vpop.f32.mrb[0].mxu0
      %1621 = vmatprep.mubr.f32.mxu0 0.0
      %1622 = vmatmul.mubr.f32.gmra.mrb[0].mxu0 %v386
      %v1623 = vpop.f32.mrb[0].mxu0
      %v1624 = vadd.f32 %v480, %v1623
      %v1625 = vpop.f32.mrb[0].mxu0
      %1626 = vmatprep.mubr.f32.mxu0 0.0
      %1627 = vmatmul.mubr.f32.gmra.mrb[0].mxu0 %v387
      %v1628 = vpop.f32.mrb[0].mxu0
      %v1629 = vadd.f32 %v480, %v1628
      %v1630 = vpop.f32.mrb[0].mxu0
      %1631 = vmatprep.mubr.f32.mxu0 0.0
      %1632 = vmatmul.mubr.f32.gmra.mrb[0].mxu0 %v388
      %v1633 = vpop.f32.mrb[0].mxu0
      %v1634 = vadd.f32 %v480, %v1633
      %v1635 = vpop.f32.mrb[0].mxu0
      %1636 = vmatprep.mubr.f32.mxu0 0.0
      %1637 = vmatmul.mubr.f32.gmra.mrb[0].mxu0 %v389
      %v1638 = vpop.f32.mrb[0].mxu0
      %v1639 = vadd.f32 %v480, %v1638
      %v1640 = vpop.f32.mrb[0].mxu0
      %1641 = vmatprep.mubr.f32.mxu0 0.0
      %1642 = vmatmul.mubr.f32.gmra.mrb[0].mxu0 %v390
      %v1643 = vpop.f32.mrb[0].mxu0
      %v1644 = vadd.f32 %v480, %v1643
      %v1645 = vpop.f32.mrb[0].mxu0
      %1646 = vmatprep.mubr.f32.mxu0 0.0
      %1647 = vmatmul.mubr.f32.gmra.mrb[0].mxu0 %v391
      %v1648 = vpop.f32.mrb[0].mxu0
      %v1649 = vadd.f32 %v480, %v1648
      %v1650 = vpop.f32.mrb[0].mxu0
      %1651 = vmatprep.mubr.f32.mxu0 0.0
      %1652 = vmatmul.mubr.f32.gmra.mrb[0].mxu0 %v392
      %v1653 = vpop.f32.mrb[0].mxu0
      %v1654 = vadd.f32 %v480, %v1653
      %v1655 = vpop.f32.mrb[0].mxu0
      %1656 = vmatprep.mubr.f32.mxu0 0.0
      %1657 = vmatmul.mubr.f32.gmra.mrb[0].mxu0 %v393
      %v1658 = vpop.f32.mrb[0].mxu0
      %v1659 = vadd.f32 %v480, %v1658
      %v1660 = vpop.f32.mrb[0].mxu0
      %1661 = vmatprep.mubr.f32.mxu0 0.0
      %1662 = vmatmul.mubr.f32.gmra.mrb[0].mxu0 %v394
      %v1663 = vpop.f32.mrb[0].mxu0
      %v1664 = vadd.f32 %v480, %v1663
      %v1665 = vpop.f32.mrb[0].mxu0
      %1666 = vmatprep.mubr.f32.mxu0 0.0
      %1667 = vmatmul.mubr.f32.gmra.mrb[0].mxu0 %v395
      %v1668 = vpop.f32.mrb[0].mxu0
      %v1669 = vadd.f32 %v480, %v1668
      %v1670 = vpop.f32.mrb[0].mxu0
      %1671 = vmatprep.mubr.f32.mxu0 0.0
      %1672 = vmatmul.mubr.f32.gmra.mrb[0].mxu0 %v396
      %v1673 = vpop.f32.mrb[0].mxu0
      %v1674 = vadd.f32 %v480, %v1673
      %v1675 = vpop.f32.mrb[0].mxu0
      %1676 = vmatprep.mubr.f32.mxu0 0.0
      %1677 = vmatmul.mubr.f32.gmra.mrb[0].mxu0 %v397
      %v1678 = vpop.f32.mrb[0].mxu0
      %v1679 = vadd.f32 %v480, %v1678
      %v1680 = vpop.f32.mrb[0].mxu0
      %1681 = vmatprep.mubr.f32.mxu0 0.0
      %1682 = vmatmul.mubr.f32.gmra.mrb[0].mxu0 %v398
      %v1683 = vpop.f32.mrb[0].mxu0
      %v1684 = vadd.f32 %v480, %v1683
      %v1685 = vpop.f32.mrb[0].mxu0
      %1686 = vmatprep.mubr.f32.mxu0 0.0
      %1687 = vmatmul.mubr.f32.gmra.mrb[0].mxu0 %v399
      %v1688 = vpop.f32.mrb[0].mxu0
      %v1689 = vadd.f32 %v480, %v1688
      %v1690 = vpop.f32.mrb[0].mxu0
      %1691 = vmatprep.mubr.f32.mxu0 0.0
      %1692 = vmatmul.mubr.f32.gmra.mrb[0].mxu0 %v400
      %v1693 = vpop.f32.mrb[0].mxu0
      %v1694 = vadd.f32 %v480, %v1693
      %v1695 = vpop.f32.mrb[0].mxu0
      %1696 = vmatprep.mubr.f32.mxu0 0.0
      %1697 = vmatmul.mubr.f32.gmra.mrb[0].mxu0 %v401
      %v1698 = vpop.f32.mrb[0].mxu0
      %v1699 = vadd.f32 %v480, %v1698
      %v1700 = vpop.f32.mrb[0].mxu0
      %1701 = vmatprep.mubr.f32.mxu0 0.0
      %1702 = vmatmul.mubr.f32.gmra.mrb[0].mxu0 %v402
      %v1703 = vpop.f32.mrb[0].mxu0
      %v1704 = vadd.f32 %v480, %v1703
      %v1705 = vpop.f32.mrb[0].mxu0
      %1706 = vmatprep.mubr.f32.mxu0 0.0
      %1707 = vmatmul.mubr.f32.gmra.mrb[0].mxu0 %v403
      %v1708 = vpop.f32.mrb[0].mxu0
      %v1709 = vadd.f32 %v480, %v1708
      %v1710 = vpop.f32.mrb[0].mxu0
      %1711 = vmatprep.mubr.f32.mxu0 0.0
      %1712 = vmatmul.mubr.f32.gmra.mrb[0].mxu0 %v404
      %v1713 = vpop.f32.mrb[0].mxu0
      %v1714 = vadd.f32 %v480, %v1713
      %v1715 = vpop.f32.mrb[0].mxu0
      %1716 = vmatprep.mubr.f32.mxu0 0.0
      %1717 = vmatmul.mubr.f32.gmra.mrb[0].mxu0 %v405
      %v1718 = vpop.f32.mrb[0].mxu0
      %v1719 = vadd.f32 %v480, %v1718
      %v1720 = vpop.f32.mrb[0].mxu0
      %1721 = vmatprep.mubr.f32.mxu0 0.0
      %1722 = vmatmul.mubr.f32.gmra.mrb[0].mxu0 %v406
      %v1723 = vpop.f32.mrb[0].mxu0
      %v1724 = vadd.f32 %v480, %v1723
      %v1725 = vpop.f32.mrb[0].mxu0
      %1726 = vmatprep.mubr.f32.mxu0 0.0
      %1727 = vmatmul.mubr.f32.gmra.mrb[0].mxu0 %v407
      %v1728 = vpop.f32.mrb[0].mxu0
      %v1729 = vadd.f32 %v480, %v1728
      %v1730 = vpop.f32.mrb[0].mxu0
      %1731 = vmatprep.mubr.f32.mxu0 0.0
      %1732 = vmatmul.mubr.f32.gmra.mrb[0].mxu0 %v408
      %v1733 = vpop.f32.mrb[0].mxu0
      %v1734 = vadd.f32 %v480, %v1733
      %v1735 = vpop.f32.mrb[0].mxu0
      %1736 = vmatprep.mubr.f32.mxu0 0.0
      %1737 = vmatmul.mubr.f32.gmra.mrb[0].mxu0 %v409
      %v1738 = vpop.f32.mrb[0].mxu0
      %v1739 = vadd.f32 %v480, %v1738
      %v1740 = vpop.f32.mrb[0].mxu0
      %1741 = vmatprep.mubr.f32.mxu0 0.0
      %1742 = vmatmul.mubr.f32.gmra.mrb[0].mxu0 %v410
      %v1743 = vpop.f32.mrb[0].mxu0
      %v1744 = vadd.f32 %v480, %v1743
      %v1745 = vpop.f32.mrb[0].mxu0
      %1746 = vmatprep.mubr.f32.mxu0 0.0
      %1747 = vmatmul.mubr.f32.gmra.mrb[0].mxu0 %v411
      %v1748 = vpop.f32.mrb[0].mxu0
      %v1749 = vadd.f32 %v480, %v1748
      %v1750 = vpop.f32.mrb[0].mxu0
      %1751 = vmatprep.mubr.f32.mxu0 0.0
      %1752 = vmatmul.mubr.f32.gmra.mrb[0].mxu0 %v412
      %v1753 = vpop.f32.mrb[0].mxu0
      %v1754 = vadd.f32 %v480, %v1753
      %v1755 = vpop.f32.mrb[0].mxu0
      %1756 = vmatprep.mubr.f32.mxu0 0.0
      %1757 = vmatmul.mubr.f32.gmra.mrb[0].mxu0 %v413
      %v1758 = vpop.f32.mrb[0].mxu0
      %v1759 = vadd.f32 %v480, %v1758
      %v1760 = vpop.f32.mrb[0].mxu0
      %1761 = vmatprep.mubr.f32.mxu0 0.0
      %1762 = vmatmul.mubr.f32.gmra.mrb[0].mxu0 %v414
      %v1763 = vpop.f32.mrb[0].mxu0
      %v1764 = vadd.f32 %v480, %v1763
      %v1765 = vpop.f32.mrb[0].mxu0
      %1766 = vmatprep.mubr.f32.mxu0 0.0
      %1767 = vmatmul.mubr.f32.gmra.mrb[0].mxu0 %v415
      %v1768 = vpop.f32.mrb[0].mxu0
      %v1769 = vadd.f32 %v480, %v1768
      %v1770 = vpop.f32.mrb[0].mxu0
      %1771 = vmatprep.mubr.f32.mxu0 0.0
      %1772 = vmatmul.mubr.f32.gmra.mrb[0].mxu0 %v416
      %v1773 = vpop.f32.mrb[0].mxu0
      %v1774 = vadd.f32 %v480, %v1773
      %v1775 = vpop.f32.mrb[0].mxu0
      %1776 = vmatprep.mubr.f32.mxu0 0.0
      %1777 = vmatmul.mubr.f32.gmra.mrb[0].mxu0 %v417
      %v1778 = vpop.f32.mrb[0].mxu0
      %v1779 = vadd.f32 %v480, %v1778
      %v1780 = vpop.f32.mrb[0].mxu0
      %1781 = vmatprep.mubr.f32.mxu0 0.0
      %1782 = vmatmul.mubr.f32.gmra.mrb[0].mxu0 %v418
      %v1783 = vpop.f32.mrb[0].mxu0
      %v1784 = vadd.f32 %v480, %v1783
      %v1785 = vpop.f32.mrb[0].mxu0
      %1786 = vmatprep.mubr.f32.mxu0 0.0
      %1787 = vmatmul.mubr.f32.gmra.mrb[0].mxu0 %v419
      %v1788 = vpop.f32.mrb[0].mxu0
      %v1789 = vadd.f32 %v480, %v1788
      %v1790 = vpop.f32.mrb[0].mxu0
      %1791 = vmatprep.mubr.f32.mxu0 0.0
      %1792 = vmatmul.mubr.f32.gmra.mrb[0].mxu0 %v420
      %v1793 = vpop.f32.mrb[0].mxu0
      %v1794 = vadd.f32 %v480, %v1793
      %v1795 = vpop.f32.mrb[0].mxu0
      %1796 = vmatprep.mubr.f32.mxu0 0.0
      %1797 = vmatmul.mubr.f32.gmra.mrb[0].mxu0 %v421
      %v1798 = vpop.f32.mrb[0].mxu0
      %v1799 = vadd.f32 %v480, %v1798
      %v1800 = vpop.f32.mrb[0].mxu0
      %1801 = vmatprep.mubr.f32.mxu0 0.0
      %1802 = vmatmul.mubr.f32.gmra.mrb[0].mxu0 %v422
      %v1803 = vpop.f32.mrb[0].mxu0
      %v1804 = vadd.f32 %v480, %v1803
      %v1805 = vpop.f32.mrb[0].mxu0
      %1806 = vmatprep.mubr.f32.mxu0 0.0
      %1807 = vmatmul.mubr.f32.gmra.mrb[0].mxu0 %v423
      %v1808 = vpop.f32.mrb[0].mxu0
      %v1809 = vadd.f32 %v480, %v1808
      %v1810 = vpop.f32.mrb[0].mxu0
      %1811 = vmatprep.mubr.f32.mxu0 0.0
      %1812 = vmatmul.mubr.f32.gmra.mrb[0].mxu0 %v424
      %v1813 = vpop.f32.mrb[0].mxu0
      %v1814 = vadd.f32 %v480, %v1813
      %v1815 = vpop.f32.mrb[0].mxu0
      %1816 = vmatprep.mubr.f32.mxu0 0.0
      %1817 = vmatmul.mubr.f32.gmra.mrb[0].mxu0 %v425
      %v1818 = vpop.f32.mrb[0].mxu0
      %v1819 = vadd.f32 %v480, %v1818
      %v1820 = vpop.f32.mrb[0].mxu0
      %1821 = vmatprep.mubr.f32.mxu0 0.0
      %1822 = vmatmul.mubr.f32.gmra.mrb[0].mxu0 %v426
      %v1823 = vpop.f32.mrb[0].mxu0
      %v1824 = vadd.f32 %v480, %v1823
      %v1825 = vpop.f32.mrb[0].mxu0
      %1826 = vmatprep.mubr.f32.mxu0 0.0
      %1827 = vmatmul.mubr.f32.gmra.mrb[0].mxu0 %v427
      %v1828 = vpop.f32.mrb[0].mxu0
      %v1829 = vadd.f32 %v480, %v1828
      %v1830 = vpop.f32.mrb[0].mxu0
      %1831 = vmatprep.mubr.f32.mxu0 0.0
      %1832 = vmatmul.mubr.f32.gmra.mrb[0].mxu0 %v428
      %v1833 = vpop.f32.mrb[0].mxu0
      %v1834 = vadd.f32 %v480, %v1833
      %v1835 = vpop.f32.mrb[0].mxu0
      %1836 = vmatprep.mubr.f32.mxu0 0.0
      %1837 = vmatmul.mubr.f32.gmra.mrb[0].mxu0 %v429
      %v1838 = vpop.f32.mrb[0].mxu0
      %v1839 = vadd.f32 %v480, %v1838
      %v1840 = vpop.f32.mrb[0].mxu0
      %1841 = vmatprep.mubr.f32.mxu0 0.0
      %1842 = vmatmul.mubr.f32.gmra.mrb[0].mxu0 %v430
      %v1843 = vpop.f32.mrb[0].mxu0
      %v1844 = vadd.f32 %v480, %v1843
      %v1845 = vpop.f32.mrb[0].mxu0
      %1846 = vmatprep.mubr.f32.mxu0 0.0
      %1847 = vmatmul.mubr.f32.gmra.mrb[0].mxu0 %v431
      %v1848 = vpop.f32.mrb[0].mxu0
      %v1849 = vadd.f32 %v480, %v1848
      %v1850 = vpop.f32.mrb[0].mxu0
      %1851 = vmatprep.mubr.f32.mxu0 0.0
      %1852 = vmatmul.mubr.f32.gmra.mrb[0].mxu0 %v432
      %v1853 = vpop.f32.mrb[0].mxu0
      %v1854 = vadd.f32 %v480, %v1853
      %v1855 = vpop.f32.mrb[0].mxu0
      %1856 = vmatprep.mubr.f32.mxu0 0.0
      %1857 = vmatmul.mubr.f32.gmra.mrb[0].mxu0 %v433
      %v1858 = vpop.f32.mrb[0].mxu0
      %v1859 = vadd.f32 %v480, %v1858
      %v1860 = vpop.f32.mrb[0].mxu0
      %1861 = vmatprep.mubr.f32.mxu0 0.0
      %1862 = vmatmul.mubr.f32.gmra.mrb[0].mxu0 %v434
      %v1863 = vpop.f32.mrb[0].mxu0
      %v1864 = vadd.f32 %v480, %v1863
      %v1865 = vpop.f32.mrb[0].mxu0
      %1866 = vmatprep.mubr.f32.mxu0 0.0
      %1867 = vmatmul.mubr.f32.gmra.mrb[0].mxu0 %v435
      %v1868 = vpop.f32.mrb[0].mxu0
      %v1869 = vadd.f32 %v480, %v1868
      %v1870 = vpop.f32.mrb[0].mxu0
      %1871 = vmatprep.mubr.f32.mxu0 0.0
      %1872 = vmatmul.mubr.f32.gmra.mrb[0].mxu0 %v436
      %v1873 = vpop.f32.mrb[0].mxu0
      %v1874 = vadd.f32 %v480, %v1873
      %v1875 = vpop.f32.mrb[0].mxu0
      %1876 = vmatprep.mubr.f32.mxu0 0.0
      %1877 = vmatmul.mubr.f32.gmra.mrb[0].mxu0 %v437
      %v1878 = vpop.f32.mrb[0].mxu0
      %v1879 = vadd.f32 %v480, %v1878
      %v1880 = vpop.f32.mrb[0].mxu0
      %1881 = vmatprep.mubr.f32.mxu0 0.0
      %1882 = vmatmul.mubr.f32.gmra.mrb[0].mxu0 %v438
      %v1883 = vpop.f32.mrb[0].mxu0
      %v1884 = vadd.f32 %v480, %v1883
      %v1885 = vpop.f32.mrb[0].mxu0
      %1886 = vmatprep.mubr.f32.mxu0 0.0
      %1887 = vmatmul.mubr.f32.gmra.mrb[0].mxu0 %v439
      %v1888 = vpop.f32.mrb[0].mxu0
      %v1889 = vadd.f32 %v480, %v1888
      %v1890 = vpop.f32.mrb[0].mxu0
      %1891 = vmatprep.mubr.f32.mxu0 0.0
      %1892 = vmatmul.mubr.f32.gmra.mrb[0].mxu0 %v440
      %v1893 = vpop.f32.mrb[0].mxu0
      %v1894 = vadd.f32 %v480, %v1893
      %v1895 = vpop.f32.mrb[0].mxu0
      %1896 = vmatprep.mubr.f32.mxu0 0.0
      %1897 = vmatmul.mubr.f32.gmra.mrb[0].mxu0 %v441
      %v1898 = vpop.f32.mrb[0].mxu0
      %v1899 = vadd.f32 %v480, %v1898
      %v1900 = vpop.f32.mrb[0].mxu0
      %1901 = vmatprep.mubr.f32.mxu0 0.0
      %1902 = vmatmul.mubr.f32.gmra.mrb[0].mxu0 %v442
      %v1903 = vpop.f32.mrb[0].mxu0
      %v1904 = vadd.f32 %v480, %v1903
      %v1905 = vpop.f32.mrb[0].mxu0
      %1906 = vmatprep.mubr.f32.mxu0 0.0
      %1907 = vmatmul.mubr.f32.gmra.mrb[0].mxu0 %v443
      %v1908 = vpop.f32.mrb[0].mxu0
      %v1909 = vadd.f32 %v480, %v1908
      %v1910 = vpop.f32.mrb[0].mxu0
      %1911 = vmatprep.mubr.f32.mxu0 0.0
      %1912 = vmatmul.mubr.f32.gmra.mrb[0].mxu0 %v444
      %v1913 = vpop.f32.mrb[0].mxu0
      %v1914 = vadd.f32 %v480, %v1913
      %v1915 = vpop.f32.mrb[0].mxu0
      %1916 = vmatprep.mubr.f32.mxu0 0.0
      %1917 = vmatmul.mubr.f32.gmra.mrb[0].mxu0 %v445
      %v1918 = vpop.f32.mrb[0].mxu0
      %v1919 = vadd.f32 %v480, %v1918
      %v1920 = vpop.f32.mrb[0].mxu0
      %1921 = vmatprep.mubr.f32.mxu0 0.0
      %1922 = vmatmul.mubr.f32.gmra.mrb[0].mxu0 %v446
      %v1923 = vpop.f32.mrb[0].mxu0
      %v1924 = vadd.f32 %v480, %v1923
      %v1925 = vpop.f32.mrb[0].mxu0
      %1926 = vmatprep.mubr.f32.mxu0 0.0
      %1927 = vmatmul.mubr.f32.gmra.mrb[0].mxu0 %v447
      %v1928 = vpop.f32.mrb[0].mxu0
      %v1929 = vadd.f32 %v480, %v1928
      %v1930 = vpop.f32.mrb[0].mxu0
      %1931 = vmatprep.mubr.f32.mxu0 0.0
      %1932 = vmatmul.mubr.f32.gmra.mrb[0].mxu0 %v448
      %v1933 = vpop.f32.mrb[0].mxu0
      %v1934 = vadd.f32 %v480, %v1933
      %v1935 = vpop.f32.mrb[0].mxu0
      %1936 = vmatprep.mubr.f32.mxu0 0.0
      %1937 = vmatmul.mubr.f32.gmra.mrb[0].mxu0 %v449
      %v1938 = vpop.f32.mrb[0].mxu0
      %v1939 = vadd.f32 %v480, %v1938
      %v1940 = vpop.f32.mrb[0].mxu0
      %1941 = vmatprep.mubr.f32.mxu0 0.0
      %1942 = vmatmul.mubr.f32.gmra.mrb[0].mxu0 %v450
      %v1943 = vpop.f32.mrb[0].mxu0
      %v1944 = vadd.f32 %v480, %v1943
      %v1945 = vpop.f32.mrb[0].mxu0
      %1946 = vmatprep.mubr.f32.mxu0 0.0
      %1947 = vmatmul.mubr.f32.gmra.mrb[0].mxu0 %v451
      %v1948 = vpop.f32.mrb[0].mxu0
      %v1949 = vadd.f32 %v480, %v1948
      %v1950 = vpop.f32.mrb[0].mxu0
      %1951 = vmatprep.mubr.f32.mxu0 0.0
      %1952 = vmatmul.mubr.f32.gmra.mrb[0].mxu0 %v452
      %v1953 = vpop.f32.mrb[0].mxu0
      %v1954 = vadd.f32 %v480, %v1953
      %v1955 = vpop.f32.mrb[0].mxu0
      %1956 = vmatprep.mubr.f32.mxu0 0.0
      %1957 = vmatmul.mubr.f32.gmra.mrb[0].mxu0 %v453
      %v1958 = vpop.f32.mrb[0].mxu0
      %v1959 = vadd.f32 %v480, %v1958
      %v1960 = vpop.f32.mrb[0].mxu0
      %1961 = vmatprep.mubr.f32.mxu0 0.0
      %1962 = vmatmul.mubr.f32.gmra.mrb[0].mxu0 %v454
      %v1963 = vpop.f32.mrb[0].mxu0
      %v1964 = vadd.f32 %v480, %v1963
      %v1965 = vpop.f32.mrb[0].mxu0
      %1966 = vmatprep.mubr.f32.mxu0 0.0
      %1967 = vmatmul.mubr.f32.gmra.mrb[0].mxu0 %v455
      %v1968 = vpop.f32.mrb[0].mxu0
      %v1969 = vadd.f32 %v480, %v1968
      %v1970 = vpop.f32.mrb[0].mxu0
      %1971 = vmatprep.mubr.f32.mxu0 0.0
      %1972 = vmatmul.mubr.f32.gmra.mrb[0].mxu0 %v456
      %v1973 = vpop.f32.mrb[0].mxu0
      %v1974 = vadd.f32 %v480, %v1973
      %v1975 = vpop.f32.mrb[0].mxu0
      %1976 = vmatprep.mubr.f32.mxu0 0.0
      %1977 = vmatmul.mubr.f32.gmra.mrb[0].mxu0 %v457
      %v1978 = vpop.f32.mrb[0].mxu0
      %v1979 = vadd.f32 %v480, %v1978
      %v1980 = vpop.f32.mrb[0].mxu0
      %1981 = vmatprep.mubr.f32.mxu0 0.0
      %1982 = vmatmul.mubr.f32.gmra.mrb[0].mxu0 %v458
      %v1983 = vpop.f32.mrb[0].mxu0
      %v1984 = vadd.f32 %v480, %v1983
      %v1985 = vpop.f32.mrb[0].mxu0
      %1986 = vdwg.mxu0
      %v1987 = vmax.f32 %v549, 0.0
      %v1988 = vmax.f32 %v554, 0.0
      %v1989 = vmax.f32 %v559, 0.0
      %v1990 = vmax.f32 %v564, 0.0
      %v1991 = vmax.f32 %v569, 0.0
      %v1992 = vmax.f32 %v574, 0.0
      %v1993 = vmax.f32 %v579, 0.0
      %v1994 = vmax.f32 %v584, 0.0
      %v1995 = vmax.f32 %v589, 0.0
      %v1996 = vmax.f32 %v594, 0.0
      %v1997 = vmax.f32 %v599, 0.0
      %v1998 = vmax.f32 %v604, 0.0
      %v1999 = vmax.f32 %v609, 0.0
      %v2000 = vmax.f32 %v614, 0.0
      %v2001 = vmax.f32 %v619, 0.0
      %v2002 = vmax.f32 %v624, 0.0
      %v2003 = vmax.f32 %v629, 0.0
      %v2004 = vmax.f32 %v634, 0.0
      %v2005 = vmax.f32 %v639, 0.0
      %v2006 = vmax.f32 %v644, 0.0
      %v2007 = vmax.f32 %v649, 0.0
      %v2008 = vmax.f32 %v654, 0.0
      %v2009 = vmax.f32 %v659, 0.0
      %v2010 = vmax.f32 %v664, 0.0
      %v2011 = vmax.f32 %v669, 0.0
      %v2012 = vmax.f32 %v674, 0.0
      %v2013 = vmax.f32 %v679, 0.0
      %v2014 = vmax.f32 %v684, 0.0
      %v2015 = vmax.f32 %v689, 0.0
      %v2016 = vmax.f32 %v694, 0.0
      %v2017 = vmax.f32 %v699, 0.0
      %v2018 = vmax.f32 %v704, 0.0
      %v2019 = vmax.f32 %v709, 0.0
      %v2020 = vmax.f32 %v714, 0.0
      %v2021 = vmax.f32 %v719, 0.0
      %v2022 = vmax.f32 %v724, 0.0
      %v2023 = vmax.f32 %v729, 0.0
      %v2024 = vmax.f32 %v734, 0.0
      %v2025 = vmax.f32 %v739, 0.0
      %v2026 = vmax.f32 %v744, 0.0
      %v2027 = vmax.f32 %v749, 0.0
      %v2028 = vmax.f32 %v754, 0.0
      %v2029 = vmax.f32 %v759, 0.0
      %v2030 = vmax.f32 %v764, 0.0
      %v2031 = vmax.f32 %v769, 0.0
      %v2032 = vmax.f32 %v774, 0.0
      %v2033 = vmax.f32 %v779, 0.0
      %v2034 = vmax.f32 %v784, 0.0
      %v2035 = vmax.f32 %v789, 0.0
      %v2036 = vmax.f32 %v794, 0.0
      %v2037 = vmax.f32 %v799, 0.0
      %v2038 = vmax.f32 %v804, 0.0
      %v2039 = vmax.f32 %v809, 0.0
      %v2040 = vmax.f32 %v814, 0.0
      %v2041 = vmax.f32 %v819, 0.0
      %v2042 = vmax.f32 %v824, 0.0
      %v2043 = vmax.f32 %v829, 0.0
      %v2044 = vmax.f32 %v834, 0.0
      %v2045 = vmax.f32 %v839, 0.0
      %v2046 = vmax.f32 %v844, 0.0
      %v2047 = vmax.f32 %v849, 0.0
      %v2048 = vmax.f32 %v854, 0.0
      %v2049 = vmax.f32 %v859, 0.0
      %v2050 = vmax.f32 %v864, 0.0
      %v2051 = vmax.f32 %v869, 0.0
      %v2052 = vmax.f32 %v874, 0.0
      %v2053 = vmax.f32 %v879, 0.0
      %v2054 = vmax.f32 %v884, 0.0
      %v2055 = vmax.f32 %v889, 0.0
      %v2056 = vmax.f32 %v894, 0.0
      %v2057 = vmax.f32 %v899, 0.0
      %v2058 = vmax.f32 %v904, 0.0
      %v2059 = vmax.f32 %v909, 0.0
      %v2060 = vmax.f32 %v914, 0.0
      %v2061 = vmax.f32 %v919, 0.0
      %v2062 = vmax.f32 %v924, 0.0
      %v2063 = vmax.f32 %v929, 0.0
      %v2064 = vmax.f32 %v934, 0.0
      %v2065 = vmax.f32 %v939, 0.0
      %v2066 = vmax.f32 %v944, 0.0
      %v2067 = vmax.f32 %v949, 0.0
      %v2068 = vmax.f32 %v954, 0.0
      %v2069 = vmax.f32 %v959, 0.0
      %v2070 = vmax.f32 %v964, 0.0
      %v2071 = vmax.f32 %v969, 0.0
      %v2072 = vmax.f32 %v974, 0.0
      %v2073 = vmax.f32 %v979, 0.0
      %v2074 = vmax.f32 %v984, 0.0
      %v2075 = vmax.f32 %v989, 0.0
      %v2076 = vmax.f32 %v994, 0.0
      %v2077 = vmax.f32 %v999, 0.0
      %v2078 = vmax.f32 %v1004, 0.0
      %v2079 = vmax.f32 %v1009, 0.0
      %v2080 = vmax.f32 %v1014, 0.0
      %v2081 = vmax.f32 %v1019, 0.0
      %v2082 = vmax.f32 %v1024, 0.0
      %v2083 = vmax.f32 %v1029, 0.0
      %v2084 = vmax.f32 %v1034, 0.0
      %v2085 = vmax.f32 %v1039, 0.0
      %v2086 = vmax.f32 %v1044, 0.0
      %v2087 = vmax.f32 %v1049, 0.0
      %v2088 = vmax.f32 %v1054, 0.0
      %v2089 = vmax.f32 %v1059, 0.0
      %v2090 = vmax.f32 %v1064, 0.0
      %v2091 = vmax.f32 %v1069, 0.0
      %v2092 = vmax.f32 %v1074, 0.0
      %v2093 = vmax.f32 %v1079, 0.0
      %v2094 = vmax.f32 %v1084, 0.0
      %v2095 = vmax.f32 %v1089, 0.0
      %v2096 = vmax.f32 %v1094, 0.0
      %v2097 = vmax.f32 %v1099, 0.0
      %v2098 = vmax.f32 %v1104, 0.0
      %v2099 = vmax.f32 %v1109, 0.0
      %v2100 = vmax.f32 %v1114, 0.0
      %v2101 = vmax.f32 %v1119, 0.0
      %v2102 = vmax.f32 %v1124, 0.0
      %v2103 = vmax.f32 %v1129, 0.0
      %v2104 = vmax.f32 %v1134, 0.0
      %v2105 = vmax.f32 %v1139, 0.0
      %v2106 = vmax.f32 %v1144, 0.0
      %v2107 = vmax.f32 %v1149, 0.0
      %v2108 = vmax.f32 %v1154, 0.0
      %v2109 = vmax.f32 %v1159, 0.0
      %v2110 = vmax.f32 %v1164, 0.0
      %v2111 = vmax.f32 %v1169, 0.0
      %v2112 = vmax.f32 %v1174, 0.0
      %v2113 = vmax.f32 %v1179, 0.0
      %v2114 = vmax.f32 %v1184, 0.0
      %v2115 = vmax.f32 %v1189, 0.0
      %v2116 = vmax.f32 %v1194, 0.0
      %v2117 = vmax.f32 %v1199, 0.0
      %v2118 = vmax.f32 %v1204, 0.0
      %v2119 = vmax.f32 %v1209, 0.0
      %v2120 = vmax.f32 %v1214, 0.0
      %v2121 = vmax.f32 %v1219, 0.0
      %v2122 = vmax.f32 %v1224, 0.0
      %v2123 = vmax.f32 %v1229, 0.0
      %v2124 = vmax.f32 %v1234, 0.0
      %v2125 = vmax.f32 %v1239, 0.0
      %v2126 = vmax.f32 %v1244, 0.0
      %v2127 = vmax.f32 %v1249, 0.0
      %v2128 = vmax.f32 %v1254, 0.0
      %v2129 = vmax.f32 %v1259, 0.0
      %v2130 = vmax.f32 %v1264, 0.0
      %v2131 = vmax.f32 %v1269, 0.0
      %v2132 = vmax.f32 %v1274, 0.0
      %v2133 = vmax.f32 %v1279, 0.0
      %v2134 = vmax.f32 %v1284, 0.0
      %v2135 = vmax.f32 %v1289, 0.0
      %v2136 = vmax.f32 %v1294, 0.0
      %v2137 = vmax.f32 %v1299, 0.0
      %v2138 = vmax.f32 %v1304, 0.0
      %v2139 = vmax.f32 %v1309, 0.0
      %v2140 = vmax.f32 %v1314, 0.0
      %v2141 = vmax.f32 %v1319, 0.0
      %v2142 = vmax.f32 %v1324, 0.0
      %v2143 = vmax.f32 %v1329, 0.0
      %v2144 = vmax.f32 %v1334, 0.0
      %v2145 = vmax.f32 %v1339, 0.0
      %v2146 = vmax.f32 %v1344, 0.0
      %v2147 = vmax.f32 %v1349, 0.0
      %v2148 = vmax.f32 %v1354, 0.0
      %v2149 = vmax.f32 %v1359, 0.0
      %v2150 = vmax.f32 %v1364, 0.0
      %v2151 = vmax.f32 %v1369, 0.0
      %v2152 = vmax.f32 %v1374, 0.0
      %v2153 = vmax.f32 %v1379, 0.0
      %v2154 = vmax.f32 %v1384, 0.0
      %v2155 = vmax.f32 %v1389, 0.0
      %v2156 = vmax.f32 %v1394, 0.0
      %v2157 = vmax.f32 %v1399, 0.0
      %v2158 = vmax.f32 %v1404, 0.0
      %v2159 = vmax.f32 %v1409, 0.0
      %v2160 = vmax.f32 %v1414, 0.0
      %v2161 = vmax.f32 %v1419, 0.0
      %v2162 = vmax.f32 %v1424, 0.0
      %v2163 = vmax.f32 %v1429, 0.0
      %v2164 = vmax.f32 %v1434, 0.0
      %v2165 = vmax.f32 %v1439, 0.0
      %v2166 = vmax.f32 %v1444, 0.0
      %v2167 = vmax.f32 %v1449, 0.0
      %v2168 = vmax.f32 %v1454, 0.0
      %v2169 = vmax.f32 %v1459, 0.0
      %v2170 = vmax.f32 %v1464, 0.0
      %v2171 = vmax.f32 %v1469, 0.0
      %v2172 = vmax.f32 %v1474, 0.0
      %v2173 = vmax.f32 %v1479, 0.0
      %v2174 = vmax.f32 %v1484, 0.0
      %v2175 = vmax.f32 %v1489, 0.0
      %v2176 = vmax.f32 %v1494, 0.0
      %v2177 = vmax.f32 %v1499, 0.0
      %v2178 = vmax.f32 %v1504, 0.0
      %v2179 = vmax.f32 %v1509, 0.0
      %v2180 = vmax.f32 %v1514, 0.0
      %v2181 = vmax.f32 %v1519, 0.0
      %v2182 = vmax.f32 %v1524, 0.0
      %v2183 = vmax.f32 %v1529, 0.0
      %v2184 = vmax.f32 %v1534, 0.0
      %v2185 = vmax.f32 %v1539, 0.0
      %v2186 = vmax.f32 %v1544, 0.0
      %v2187 = vmax.f32 %v1549, 0.0
      %v2188 = vmax.f32 %v1554, 0.0
      %v2189 = vmax.f32 %v1559, 0.0
      %v2190 = vmax.f32 %v1564, 0.0
      %v2191 = vmax.f32 %v1569, 0.0
      %v2192 = vmax.f32 %v1574, 0.0
      %v2193 = vmax.f32 %v1579, 0.0
      %v2194 = vmax.f32 %v1584, 0.0
      %v2195 = vmax.f32 %v1589, 0.0
      %v2196 = vmax.f32 %v1594, 0.0
      %v2197 = vmax.f32 %v1599, 0.0
      %v2198 = vmax.f32 %v1604, 0.0
      %v2199 = vmax.f32 %v1609, 0.0
      %v2200 = vmax.f32 %v1614, 0.0
      %v2201 = vmax.f32 %v1619, 0.0
      %v2202 = vmax.f32 %v1624, 0.0
      %v2203 = vmax.f32 %v1629, 0.0
      %v2204 = vmax.f32 %v1634, 0.0
      %v2205 = vmax.f32 %v1639, 0.0
      %v2206 = vmax.f32 %v1644, 0.0
      %v2207 = vmax.f32 %v1649, 0.0
      %v2208 = vmax.f32 %v1654, 0.0
      %v2209 = vmax.f32 %v1659, 0.0
      %v2210 = vmax.f32 %v1664, 0.0
      %v2211 = vmax.f32 %v1669, 0.0
      %v2212 = vmax.f32 %v1674, 0.0
      %v2213 = vmax.f32 %v1679, 0.0
      %v2214 = vmax.f32 %v1684, 0.0
      %v2215 = vmax.f32 %v1689, 0.0
      %v2216 = vmax.f32 %v1694, 0.0
      %v2217 = vmax.f32 %v1699, 0.0
      %v2218 = vmax.f32 %v1704, 0.0
      %v2219 = vmax.f32 %v1709, 0.0
      %v2220 = vmax.f32 %v1714, 0.0
      %v2221 = vmax.f32 %v1719, 0.0
      %v2222 = vmax.f32 %v1724, 0.0
      %v2223 = vmax.f32 %v1729, 0.0
      %v2224 = vmax.f32 %v1734, 0.0
      %v2225 = vmax.f32 %v1739, 0.0
      %v2226 = vmax.f32 %v1744, 0.0
      %v2227 = vmax.f32 %v1749, 0.0
      %v2228 = vmax.f32 %v1754, 0.0
      %v2229 = vmax.f32 %v1759, 0.0
      %v2230 = vmax.f32 %v1764, 0.0
      %v2231 = vmax.f32 %v1769, 0.0
      %v2232 = vmax.f32 %v1774, 0.0
      %v2233 = vmax.f32 %v1779, 0.0
      %v2234 = vmax.f32 %v1784, 0.0
      %v2235 = vmax.f32 %v1789, 0.0
      %v2236 = vmax.f32 %v1794, 0.0
      %v2237 = vmax.f32 %v1799, 0.0
      %v2238 = vmax.f32 %v1804, 0.0
      %v2239 = vmax.f32 %v1809, 0.0
      %v2240 = vmax.f32 %v1814, 0.0
      %v2241 = vmax.f32 %v1819, 0.0
      %v2242 = vmax.f32 %v1824, 0.0
      %v2243 = vmax.f32 %v1829, 0.0
      %v2244 = vmax.f32 %v1834, 0.0
      %v2245 = vmax.f32 %v1839, 0.0
      %v2246 = vmax.f32 %v1844, 0.0
      %v2247 = vmax.f32 %v1849, 0.0
      %v2248 = vmax.f32 %v1854, 0.0
      %v2249 = vmax.f32 %v1859, 0.0
      %v2250 = vmax.f32 %v1864, 0.0
      %v2251 = vmax.f32 %v1869, 0.0
      %v2252 = vmax.f32 %v1874, 0.0
      %v2253 = vmax.f32 %v1879, 0.0
      %v2254 = vmax.f32 %v1884, 0.0
      %v2255 = vmax.f32 %v1889, 0.0
      %v2256 = vmax.f32 %v1894, 0.0
      %v2257 = vmax.f32 %v1899, 0.0
      %v2258 = vmax.f32 %v1904, 0.0
      %v2259 = vmax.f32 %v1909, 0.0
      %v2260 = vmax.f32 %v1914, 0.0
      %v2261 = vmax.f32 %v1919, 0.0
      %v2262 = vmax.f32 %v1924, 0.0
      %v2263 = vmax.f32 %v1929, 0.0
      %v2264 = vmax.f32 %v1934, 0.0
      %v2265 = vmax.f32 %v1939, 0.0
      %v2266 = vmax.f32 %v1944, 0.0
      %v2267 = vmax.f32 %v1949, 0.0
      %v2268 = vmax.f32 %v1954, 0.0
      %v2269 = vmax.f32 %v1959, 0.0
      %v2270 = vmax.f32 %v1964, 0.0
      %v2271 = vmax.f32 %v1969, 0.0
      %v2272 = vmax.f32 %v1974, 0.0
      %v2273 = vmax.f32 %v1979, 0.0
      %v2274 = vmax.f32 %v1984, 0.0
      %v2275 = vmax.f32 %v1987, %v2059
      %v2276 = vmax.f32 %v1988, %v2060
      %v2277 = vmax.f32 %v1989, %v2061
      %v2278 = vmax.f32 %v1990, %v2062
      %v2279 = vmax.f32 %v1991, %v2063
      %v2280 = vmax.f32 %v1992, %v2064
      %v2281 = vmax.f32 %v1993, %v2065
      %v2282 = vmax.f32 %v1994, %v2066
      %v2283 = vmax.f32 %v1995, %v2067
      %v2284 = vmax.f32 %v1996, %v2068
      %v2285 = vmax.f32 %v1997, %v2069
      %v2286 = vmax.f32 %v1998, %v2070
      %v2287 = vmax.f32 %v1999, %v2071
      %v2288 = vmax.f32 %v2000, %v2072
      %v2289 = vmax.f32 %v2001, %v2073
      %v2290 = vmax.f32 %v2002, %v2074
      %v2291 = vmax.f32 %v2003, %v2075
      %v2292 = vmax.f32 %v2004, %v2076
      %v2293 = vmax.f32 %v2005, %v2077
      %v2294 = vmax.f32 %v2006, %v2078
      %v2295 = vmax.f32 %v2007, %v2079
      %v2296 = vmax.f32 %v2008, %v2080
      %v2297 = vmax.f32 %v2009, %v2081
      %v2298 = vmax.f32 %v2010, %v2082
      %v2299 = vmax.f32 %v2011, %v2083
      %v2300 = vmax.f32 %v2012, %v2084
      %v2301 = vmax.f32 %v2013, %v2085
      %v2302 = vmax.f32 %v2014, %v2086
      %v2303 = vmax.f32 %v2015, %v2087
      %v2304 = vmax.f32 %v2016, %v2088
      %v2305 = vmax.f32 %v2017, %v2089
      %v2306 = vmax.f32 %v2018, %v2090
      %v2307 = vmax.f32 %v2019, %v2091
      %v2308 = vmax.f32 %v2020, %v2092
      %v2309 = vmax.f32 %v2021, %v2093
      %v2310 = vmax.f32 %v2022, %v2094
      %v2311 = vmax.f32 %v2023, %v2095
      %v2312 = vmax.f32 %v2024, %v2096
      %v2313 = vmax.f32 %v2025, %v2097
      %v2314 = vmax.f32 %v2026, %v2098
      %v2315 = vmax.f32 %v2027, %v2099
      %v2316 = vmax.f32 %v2028, %v2100
      %v2317 = vmax.f32 %v2029, %v2101
      %v2318 = vmax.f32 %v2030, %v2102
      %v2319 = vmax.f32 %v2031, %v2103
      %v2320 = vmax.f32 %v2032, %v2104
      %v2321 = vmax.f32 %v2033, %v2105
      %v2322 = vmax.f32 %v2034, %v2106
      %v2323 = vmax.f32 %v2035, %v2107
      %v2324 = vmax.f32 %v2036, %v2108
      %v2325 = vmax.f32 %v2037, %v2109
      %v2326 = vmax.f32 %v2038, %v2110
      %v2327 = vmax.f32 %v2039, %v2111
      %v2328 = vmax.f32 %v2040, %v2112
      %v2329 = vmax.f32 %v2041, %v2113
      %v2330 = vmax.f32 %v2042, %v2114
      %v2331 = vmax.f32 %v2043, %v2115
      %v2332 = vmax.f32 %v2044, %v2116
      %v2333 = vmax.f32 %v2045, %v2117
      %v2334 = vmax.f32 %v2046, %v2118
      %v2335 = vmax.f32 %v2047, %v2119
      %v2336 = vmax.f32 %v2048, %v2120
      %v2337 = vmax.f32 %v2049, %v2121
      %v2338 = vmax.f32 %v2050, %v2122
      %v2339 = vmax.f32 %v2051, %v2123
      %v2340 = vmax.f32 %v2052, %v2124
      %v2341 = vmax.f32 %v2053, %v2125
      %v2342 = vmax.f32 %v2054, %v2126
      %v2343 = vmax.f32 %v2055, %v2127
      %v2344 = vmax.f32 %v2056, %v2128
      %v2345 = vmax.f32 %v2057, %v2129
      %v2346 = vmax.f32 %v2058, %v2130
      %v2347 = vmax.f32 %v2131, %v2203
      %v2348 = vmax.f32 %v2132, %v2204
      %v2349 = vmax.f32 %v2133, %v2205
      %v2350 = vmax.f32 %v2134, %v2206
      %v2351 = vmax.f32 %v2135, %v2207
      %v2352 = vmax.f32 %v2136, %v2208
      %v2353 = vmax.f32 %v2137, %v2209
      %v2354 = vmax.f32 %v2138, %v2210
      %v2355 = vmax.f32 %v2139, %v2211
      %v2356 = vmax.f32 %v2140, %v2212
      %v2357 = vmax.f32 %v2141, %v2213
      %v2358 = vmax.f32 %v2142, %v2214
      %v2359 = vmax.f32 %v2143, %v2215
      %v2360 = vmax.f32 %v2144, %v2216
      %v2361 = vmax.f32 %v2145, %v2217
      %v2362 = vmax.f32 %v2146, %v2218
      %v2363 = vmax.f32 %v2147, %v2219
      %v2364 = vmax.f32 %v2148, %v2220
      %v2365 = vmax.f32 %v2149, %v2221
      %v2366 = vmax.f32 %v2150, %v2222
      %v2367 = vmax.f32 %v2151, %v2223
      %v2368 = vmax.f32 %v2152, %v2224
      %v2369 = vmax.f32 %v2153, %v2225
      %v2370 = vmax.f32 %v2154, %v2226
      %v2371 = vmax.f32 %v2155, %v2227
      %v2372 = vmax.f32 %v2156, %v2228
      %v2373 = vmax.f32 %v2157, %v2229
      %v2374 = vmax.f32 %v2158, %v2230
      %v2375 = vmax.f32 %v2159, %v2231
      %v2376 = vmax.f32 %v2160, %v2232
      %v2377 = vmax.f32 %v2161, %v2233
      %v2378 = vmax.f32 %v2162, %v2234
      %v2379 = vmax.f32 %v2163, %v2235
      %v2380 = vmax.f32 %v2164, %v2236
      %v2381 = vmax.f32 %v2165, %v2237
      %v2382 = vmax.f32 %v2166, %v2238
      %v2383 = vmax.f32 %v2167, %v2239
      %v2384 = vmax.f32 %v2168, %v2240
      %v2385 = vmax.f32 %v2169, %v2241
      %v2386 = vmax.f32 %v2170, %v2242
      %v2387 = vmax.f32 %v2171, %v2243
      %v2388 = vmax.f32 %v2172, %v2244
      %v2389 = vmax.f32 %v2173, %v2245
      %v2390 = vmax.f32 %v2174, %v2246
      %v2391 = vmax.f32 %v2175, %v2247
      %v2392 = vmax.f32 %v2176, %v2248
      %v2393 = vmax.f32 %v2177, %v2249
      %v2394 = vmax.f32 %v2178, %v2250
      %v2395 = vmax.f32 %v2179, %v2251
      %v2396 = vmax.f32 %v2180, %v2252
      %v2397 = vmax.f32 %v2181, %v2253
      %v2398 = vmax.f32 %v2182, %v2254
      %v2399 = vmax.f32 %v2183, %v2255
      %v2400 = vmax.f32 %v2184, %v2256
      %v2401 = vmax.f32 %v2185, %v2257
      %v2402 = vmax.f32 %v2186, %v2258
      %v2403 = vmax.f32 %v2187, %v2259
      %v2404 = vmax.f32 %v2188, %v2260
      %v2405 = vmax.f32 %v2189, %v2261
      %v2406 = vmax.f32 %v2190, %v2262
      %v2407 = vmax.f32 %v2191, %v2263
      %v2408 = vmax.f32 %v2192, %v2264
      %v2409 = vmax.f32 %v2193, %v2265
      %v2410 = vmax.f32 %v2194, %v2266
      %v2411 = vmax.f32 %v2195, %v2267
      %v2412 = vmax.f32 %v2196, %v2268
      %v2413 = vmax.f32 %v2197, %v2269
      %v2414 = vmax.f32 %v2198, %v2270
      %v2415 = vmax.f32 %v2199, %v2271
      %v2416 = vmax.f32 %v2200, %v2272
      %v2417 = vmax.f32 %v2201, %v2273
      %v2418 = vmax.f32 %v2202, %v2274
      %v2419 = vmax.f32 %v2275, %v2347
      %v2420 = vmax.f32 %v2276, %v2348
      %v2421 = vmax.f32 %v2277, %v2349
      %v2422 = vmax.f32 %v2278, %v2350
      %v2423 = vmax.f32 %v2279, %v2351
      %v2424 = vmax.f32 %v2280, %v2352
      %v2425 = vmax.f32 %v2281, %v2353
      %v2426 = vmax.f32 %v2282, %v2354
      %v2427 = vmax.f32 %v2283, %v2355
      %v2428 = vmax.f32 %v2284, %v2356
      %v2429 = vmax.f32 %v2285, %v2357
      %v2430 = vmax.f32 %v2286, %v2358
      %v2431 = vmax.f32 %v2287, %v2359
      %v2432 = vmax.f32 %v2288, %v2360
      %v2433 = vmax.f32 %v2289, %v2361
      %v2434 = vmax.f32 %v2290, %v2362
      %v2435 = vmax.f32 %v2291, %v2363
      %v2436 = vmax.f32 %v2292, %v2364
      %v2437 = vmax.f32 %v2293, %v2365
      %v2438 = vmax.f32 %v2294, %v2366
      %v2439 = vmax.f32 %v2295, %v2367
      %v2440 = vmax.f32 %v2296, %v2368
      %v2441 = vmax.f32 %v2297, %v2369
      %v2442 = vmax.f32 %v2298, %v2370
      %v2443 = vmax.f32 %v2299, %v2371
      %v2444 = vmax.f32 %v2300, %v2372
      %v2445 = vmax.f32 %v2301, %v2373
      %v2446 = vmax.f32 %v2302, %v2374
      %v2447 = vmax.f32 %v2303, %v2375
      %v2448 = vmax.f32 %v2304, %v2376
      %v2449 = vmax.f32 %v2305, %v2377
      %v2450 = vmax.f32 %v2306, %v2378
      %v2451 = vmax.f32 %v2307, %v2379
      %v2452 = vmax.f32 %v2308, %v2380
      %v2453 = vmax.f32 %v2309, %v2381
      %v2454 = vmax.f32 %v2310, %v2382
      %v2455 = vmax.f32 %v2311, %v2383
      %v2456 = vmax.f32 %v2312, %v2384
      %v2457 = vmax.f32 %v2313, %v2385
      %v2458 = vmax.f32 %v2314, %v2386
      %v2459 = vmax.f32 %v2315, %v2387
      %v2460 = vmax.f32 %v2316, %v2388
      %v2461 = vmax.f32 %v2317, %v2389
      %v2462 = vmax.f32 %v2318, %v2390
      %v2463 = vmax.f32 %v2319, %v2391
      %v2464 = vmax.f32 %v2320, %v2392
      %v2465 = vmax.f32 %v2321, %v2393
      %v2466 = vmax.f32 %v2322, %v2394
      %v2467 = vmax.f32 %v2323, %v2395
      %v2468 = vmax.f32 %v2324, %v2396
      %v2469 = vmax.f32 %v2325, %v2397
      %v2470 = vmax.f32 %v2326, %v2398
      %v2471 = vmax.f32 %v2327, %v2399
      %v2472 = vmax.f32 %v2328, %v2400
      %v2473 = vmax.f32 %v2329, %v2401
      %v2474 = vmax.f32 %v2330, %v2402
      %v2475 = vmax.f32 %v2331, %v2403
      %v2476 = vmax.f32 %v2332, %v2404
      %v2477 = vmax.f32 %v2333, %v2405
      %v2478 = vmax.f32 %v2334, %v2406
      %v2479 = vmax.f32 %v2335, %v2407
      %v2480 = vmax.f32 %v2336, %v2408
      %v2481 = vmax.f32 %v2337, %v2409
      %v2482 = vmax.f32 %v2338, %v2410
      %v2483 = vmax.f32 %v2339, %v2411
      %v2484 = vmax.f32 %v2340, %v2412
      %v2485 = vmax.f32 %v2341, %v2413
      %v2486 = vmax.f32 %v2342, %v2414
      %v2487 = vmax.f32 %v2343, %v2415
      %v2488 = vmax.f32 %v2344, %v2416
      %v2489 = vmax.f32 %v2345, %v2417
      %v2490 = vmax.f32 %v2346, %v2418
      %2491 = vst [vmem:[%s170] sm:$0xff] %v2419
      %2492 = vst [vmem:[%s170 + $0x8] sm:$0xff] %v2420
      %2493 = vst [vmem:[%s170 + $0x10] sm:$0xff] %v2421
      %2494 = vst [vmem:[%s170 + $0x18] sm:$0xff] %v2422
      %2495 = vst [vmem:[%s170 + $0x20] sm:$0xff] %v2423
      %2496 = vst [vmem:[%s170 + $0x28] sm:$0xff] %v2424
      %2497 = vst [vmem:[%s170 + $0x30] sm:$0xff] %v2425
      %2498 = vst [vmem:[%s170 + $0x38] sm:$0xff] %v2426
      %2499 = vst [vmem:[%s170 + $0x40] sm:$0xff] %v2427
      %2500 = vst [vmem:[%s170 + $0x48] sm:$0xff] %v2428
      %2501 = vst [vmem:[%s170 + $0x50] sm:$0xff] %v2429
      %2502 = vst [vmem:[%s170 + $0x58] sm:$0xff] %v2430
      %2503 = vst [vmem:[%s170 + $0x60] sm:$0xff] %v2431
      %2504 = vst [vmem:[%s170 + $0x68] sm:$0xff] %v2432
      %2505 = vst [vmem:[%s170 + $0x70] sm:$0xff] %v2433
      %2506 = vst [vmem:[%s170 + $0x78] sm:$0xff] %v2434
      %2507 = vst [vmem:[%s170 + $0x80] sm:$0xff] %v2435
      %2508 = vst [vmem:[%s170 + $0x88] sm:$0xff] %v2436
      %2509 = vst [vmem:[%s170 + $0x90] sm:$0xff] %v2437
      %2510 = vst [vmem:[%s170 + $0x98] sm:$0xff] %v2438
      %2511 = vst [vmem:[%s170 + $0xa0] sm:$0xff] %v2439
      %2512 = vst [vmem:[%s170 + $0xa8] sm:$0xff] %v2440
      %2513 = vst [vmem:[%s170 + $0xb0] sm:$0xff] %v2441
      %2514 = vst [vmem:[%s170 + $0xb8] sm:$0xff] %v2442
      %2515 = vst [vmem:[%s170 + $0xc0] sm:$0xff] %v2443
      %2516 = vst [vmem:[%s170 + $0xc8] sm:$0xff] %v2444
      %2517 = vst [vmem:[%s170 + $0xd0] sm:$0xff] %v2445
      %2518 = vst [vmem:[%s170 + $0xd8] sm:$0xff] %v2446
      %2519 = vst [vmem:[%s170 + $0xe0] sm:$0xff] %v2447
      %2520 = vst [vmem:[%s170 + $0xe8] sm:$0xff] %v2448
      %2521 = vst [vmem:[%s170 + $0xf0] sm:$0xff] %v2449
      %2522 = vst [vmem:[%s170 + $0xf8] sm:$0xff] %v2450
      %2523 = vst [vmem:[%s170 + $0x100] sm:$0xff] %v2451
      %2524 = vst [vmem:[%s170 + $0x108] sm:$0xff] %v2452
      %2525 = vst [vmem:[%s170 + $0x110] sm:$0xff] %v2453
      %2526 = vst [vmem:[%s170 + $0x118] sm:$0xff] %v2454
      %2527 = vst [vmem:[%s170 + $0x120] sm:$0xff] %v2455
      %2528 = vst [vmem:[%s170 + $0x128] sm:$0xff] %v2456
      %2529 = vst [vmem:[%s170 + $0x130] sm:$0xff] %v2457
      %2530 = vst [vmem:[%s170 + $0x138] sm:$0xff] %v2458
      %2531 = vst [vmem:[%s170 + $0x140] sm:$0xff] %v2459
      %2532 = vst [vmem:[%s170 + $0x148] sm:$0xff] %v2460
      %2533 = vst [vmem:[%s170 + $0x150] sm:$0xff] %v2461
      %2534 = vst [vmem:[%s170 + $0x158] sm:$0xff] %v2462
      %2535 = vst [vmem:[%s170 + $0x160] sm:$0xff] %v2463
      %2536 = vst [vmem:[%s170 + $0x168] sm:$0xff] %v2464
      %2537 = vst [vmem:[%s170 + $0x170] sm:$0xff] %v2465
      %2538 = vst [vmem:[%s170 + $0x178] sm:$0xff] %v2466
      %2539 = vst [vmem:[%s170 + $0x180] sm:$0xff] %v2467
      %2540 = vst [vmem:[%s170 + $0x188] sm:$0xff] %v2468
      %2541 = vst [vmem:[%s170 + $0x190] sm:$0xff] %v2469
      %2542 = vst [vmem:[%s170 + $0x198] sm:$0xff] %v2470
      %2543 = vst [vmem:[%s170 + $0x1a0] sm:$0xff] %v2471
      %2544 = vst [vmem:[%s170 + $0x1a8] sm:$0xff] %v2472
      %2545 = vst [vmem:[%s170 + $0x1b0] sm:$0xff] %v2473
      %2546 = vst [vmem:[%s170 + $0x1b8] sm:$0xff] %v2474
      %2547 = vst [vmem:[%s170 + $0x1c0] sm:$0xff] %v2475
      %2548 = vst [vmem:[%s170 + $0x1c8] sm:$0xff] %v2476
      %2549 = vst [vmem:[%s170 + $0x1d0] sm:$0xff] %v2477
      %2550 = vst [vmem:[%s170 + $0x1d8] sm:$0xff] %v2478
      %2551 = vst [vmem:[%s170 + $0x1e0] sm:$0xff] %v2479
      %2552 = vst [vmem:[%s170 + $0x1e8] sm:$0xff] %v2480
      %2553 = vst [vmem:[%s170 + $0x1f0] sm:$0xff] %v2481
      %2554 = vst [vmem:[%s170 + $0x1f8] sm:$0xff] %v2482
      %2555 = vst [vmem:[%s170 + $0x200] sm:$0xff] %v2483
      %2556 = vst [vmem:[%s170 + $0x208] sm:$0xff] %v2484
      %2557 = vst [vmem:[%s170 + $0x210] sm:$0xff] %v2485
      %2558 = vst [vmem:[%s170 + $0x218] sm:$0xff] %v2486
      %2559 = vst [vmem:[%s170 + $0x220] sm:$0xff] %v2487
      %2560 = vst [vmem:[%s170 + $0x228] sm:$0xff] %v2488
      %2561 = vst [vmem:[%s170 + $0x230] sm:$0xff] %v2489
      %2562 = vst [vmem:[%s170 + $0x238] sm:$0xff] %v2490
      %p2563 = scmp.lt.s32.totalorder %s14, 1
      %s2564 = scalar_select %p2563, %s14, 1
      %s2565 = smul.addr %s2564, 72
      %s2566 = smul.addr %s2565, 8
      %s2567 = scalar_lea.vmem %s3, %s2566
      // Predicated region
      $region33: #{classification_network_forward.3} parent=31 // pred_check
        %p2568 = pneg %p100
      $region34: #{classification_network_forward.3} parent=31 // pred_check_branch
        %2570 = sbr.rel (%p2568) target = $region36
      $region35: #{classification_network_forward.3} parent=31 // pred_region
        _
      $region36: #{classification_network_forward.3} parent=31 // pred_fallthru
        _
    $region32: #{classification_network_forward.3} parent=5 // pred_fallthru
      _
    %p2571 = scmp.le.s32.totalorder 2, %s9
    // Predicated region
    $region37: #{classification_network_forward.3} parent=5 // pred_check
      %p2572 = pneg %p2571
    $region38: #{classification_network_forward.3} parent=5 // pred_check_branch
      %2574 = sbr.rel (%p2572) target = $region40
    $region39: #{classification_network_forward.3} parent=5 // pred_region
      %s2575 = ssub.s32 %s9, 2
      // Predicated region
      $region41: #{classification_network_forward.3} parent=39 // pred_check
        %p2576 = pneg %p106
      $region42: #{classification_network_forward.3} parent=39 // pred_check_branch
        %2578 = sbr.rel (%p2576) target = $region44
      $region43: #{classification_network_forward.3} parent=39 // pred_region
        %p2579 = scmp.lt.s32.totalorder %s15, 1
        %s2580 = scalar_select %p2579, %s15, 1
        %s2581 = smul.addr %s2580, 72
        %s2582 = smul.addr %s2581, 8
        %s2583 = scalar_lea.vmem %s3, %s2582
      $region44: #{classification_network_forward.3} parent=39 // pred_fallthru
        _
    $region40: #{classification_network_forward.3} parent=5 // pred_fallthru
      _
  $region6: #{classification_network_forward.3} parent=0 // loop_footer
    %s13 = sadd.s32 1, %s9
  $region7: #{classification_network_forward.3} parent=0 // loop_footer_branch
    %8 = sbr.rel target = $region3
  $region8: #{classification_network_forward.3} parent=0 // loop_exit
    _

// kernel: classification_network_forward.4
$region0: #{classification_network_forward.4}
  #allocation0 [shape = 'u32[]', space=smem, size = 0x4, offset = 0x4, fixed_abs, tag = 'smem constant byte address 0x4 - core index']
  #allocation1 [shape = 'u32[144,128]{1,0:T(1,128)}', space=vmem, size = 0x12000, scoped, tag = 'internal scratch']
  %s0 = inlined_call_operand.vmem [shape: f32[2,704,256], index: 0, kind: input, shape index: {}]
  %s1 = inlined_call_operand.vmem [shape: f32[256,128], index: 1, kind: input, shape index: {}]
  %s2 = inlined_call_operand.vmem [shape: f32[1,128], index: 2, kind: input, shape index: {}]
  %s3 = inlined_call_operand.vmem [shape: f32[2,176,128], index: 3, kind: output, shape index: {}]
  %s4 = sld [smem:[#allocation0]]
  $region45: #{classification_network_forward.4} parent=0
    _
  %s6 = ssub.s32 1, %s4
  %s7 = scalar_select 0, %s6, %s4
  loop: start=0, step=1, limit=4
  $region2: #{classification_network_forward.4} parent=0 // loop_pre_header
    _
  $region3: #{classification_network_forward.4} parent=0 // loop_header
    %s9 = sphi 0, %s13
    %p10 = scmp.ge.s32.totalorder %s9, 4
    %s19 = sphi 0, %s21
    %s22 = sphi 0, %s19
    %s23 = sphi 0, %s22
    %s39 = sphi 0, %s23
    %s43 = sphi 0, %s43
    %s45 = sphi 0, %s43
    %s46 = sphi 0, %s45
    %s60 = sphi 0, %s46
    %s64 = sphi 0, %s64
    %s66 = sphi 0, %s64
    %s67 = sphi 0, %s66
    %s81 = sphi 0, %s67
    %s87 = sphi 0, %s89
    %s90 = sphi 0, %s87
    %s91 = sphi 0, %s90
    %s107 = sphi 0, %s91
  $region4: #{classification_network_forward.4} parent=0 // loop_header_branch
    %12 = sbr.rel (%p10) target = $region8
  $region5: #{classification_network_forward.4} parent=0 // loop_body
    %s14 = ssub.s32 %s9, 1
    %s15 = ssub.s32 %s9, 2
    %s16 = sadd.s32 %s9, 1
    %s17 = ssub.s32 %s9, %s16
    %p18 = scmp.eq.s32.totalorder %s17, 0
    %s20 = sadd.s32 %s19, 1
    %s21 = scalar_select %p18, %s19, %s20
    %p24 = pneg %p18
    %p25 = scmp.eq.s32.totalorder %s9, 1
    %p26 = por %p24, %p25
    %p27 = scmp.ne.s32.totalorder %s19, %s22
    %p28 = scmp.eq.s32.totalorder %s9, 0
    %p29 = por %p27, %p28
    %p30 = scmp.ne.s32.totalorder %s19, %s22
    %p31 = scmp.eq.s32.totalorder %s14, 1
    %p32 = por %p30, %p31
    %p33 = scmp.ne.s32.totalorder %s22, %s23
    %p34 = scmp.eq.s32.totalorder %s14, 0
    %p35 = por %p33, %p34
    %p36 = scmp.ne.s32.totalorder %s22, %s23
    %p37 = scmp.eq.s32.totalorder %s15, 1
    %p38 = por %p36, %p37
    %p40 = scmp.ne.s32.totalorder %s23, %s39
    %p41 = scmp.eq.s32.totalorder %s15, 0
    %p42 = por %p40, %p41
    %s44 = sadd.s32 %s43, 1
    %p47 = scmp.eq.s32.totalorder %s9, 1
    %p48 = scmp.ne.s32.totalorder %s43, %s45
    %p49 = scmp.eq.s32.totalorder %s9, 0
    %p50 = por %p48, %p49
    %p51 = scmp.ne.s32.totalorder %s43, %s45
    %p52 = scmp.eq.s32.totalorder %s14, 1
    %p53 = por %p51, %p52
    %p54 = scmp.ne.s32.totalorder %s45, %s46
    %p55 = scmp.eq.s32.totalorder %s14, 0
    %p56 = por %p54, %p55
    %p57 = scmp.ne.s32.totalorder %s45, %s46
    %p58 = scmp.eq.s32.totalorder %s15, 1
    %p59 = por %p57, %p58
    %p61 = scmp.ne.s32.totalorder %s46, %s60
    %p62 = scmp.eq.s32.totalorder %s15, 0
    %p63 = por %p61, %p62
    %s65 = sadd.s32 %s64, 1
    %p68 = scmp.eq.s32.totalorder %s9, 1
    %p69 = scmp.ne.s32.totalorder %s64, %s66
    %p70 = scmp.eq.s32.totalorder %s9, 0
    %p71 = por %p69, %p70
    %p72 = scmp.ne.s32.totalorder %s64, %s66
    %p73 = scmp.eq.s32.totalorder %s14, 1
    %p74 = por %p72, %p73
    %p75 = scmp.ne.s32.totalorder %s66, %s67
    %p76 = scmp.eq.s32.totalorder %s14, 0
    %p77 = por %p75, %p76
    %p78 = scmp.ne.s32.totalorder %s66, %s67
    %p79 = scmp.eq.s32.totalorder %s15, 1
    %p80 = por %p78, %p79
    %p82 = scmp.ne.s32.totalorder %s67, %s81
    %p83 = scmp.eq.s32.totalorder %s15, 0
    %p84 = por %p82, %p83
    %s85 = ssub.s32 %s9, %s16
    %p86 = scmp.eq.s32.totalorder %s85, 0
    %s88 = sadd.s32 %s87, 1
    %s89 = scalar_select %p86, %s87, %s88
    %p92 = pneg %p86
    %p93 = scmp.eq.s32.totalorder %s9, 1
    %p94 = por %p92, %p93
    %p95 = scmp.ne.s32.totalorder %s87, %s90
    %p96 = scmp.eq.s32.totalorder %s9, 0
    %p97 = por %p95, %p96
    %p98 = scmp.ne.s32.totalorder %s87, %s90
    %p99 = scmp.eq.s32.totalorder %s14, 1
    %p100 = por %p98, %p99
    %p101 = scmp.ne.s32.totalorder %s90, %s91
    %p102 = scmp.eq.s32.totalorder %s14, 0
    %p103 = por %p101, %p102
    %p104 = scmp.ne.s32.totalorder %s90, %s91
    %p105 = scmp.eq.s32.totalorder %s15, 1
    %p106 = por %p104, %p105
    %p108 = scmp.ne.s32.totalorder %s91, %s107
    %p109 = scmp.eq.s32.totalorder %s15, 0
    %p110 = por %p108, %p109
    %p111 = scmp.le.s32.totalorder 1, %s9
    %p112 = scmp.lt.s32.totalorder %s9, 3
    %p113 = pnand %p111, %p112
    %p114 = pneg %p113
    // Predicated region
    $region9: #{classification_network_forward.4} parent=5 // pred_check
      _
    $region10: #{classification_network_forward.4} parent=5 // pred_check_branch
      %116 = sbr.rel (%p113) target = $region12
    $region11: #{classification_network_forward.4} parent=5 // pred_region
      %s117 = ssub.s32 %s9, 1
      // Predicated region
      $region13: #{classification_network_forward.4} parent=11 // pred_check
        %p118 = pneg %p56
      $region14: #{classification_network_forward.4} parent=11 // pred_check_branch
        %120 = sbr.rel (%p118) target = $region16
      $region15: #{classification_network_forward.4} parent=11 // pred_region
        _
      $region16: #{classification_network_forward.4} parent=11 // pred_fallthru
        _
      // Predicated region
      $region17: #{classification_network_forward.4} parent=11 // pred_check
        %p121 = pneg %p77
      $region18: #{classification_network_forward.4} parent=11 // pred_check_branch
        %123 = sbr.rel (%p121) target = $region20
      $region19: #{classification_network_forward.4} parent=11 // pred_region
        _
      $region20: #{classification_network_forward.4} parent=11 // pred_fallthru
        _
    $region12: #{classification_network_forward.4} parent=5 // pred_fallthru
      _
    %p124 = scmp.lt.s32.totalorder %s9, 2
    // Predicated region
    $region21: #{classification_network_forward.4} parent=5 // pred_check
      %p125 = pneg %p124
    $region22: #{classification_network_forward.4} parent=5 // pred_check_branch
      %127 = sbr.rel (%p125) target = $region24
    $region23: #{classification_network_forward.4} parent=5 // pred_region
      // Predicated region
      $region25: #{classification_network_forward.4} parent=23 // pred_check
        %p128 = pneg %p29
      $region26: #{classification_network_forward.4} parent=23 // pred_check_branch
        %130 = sbr.rel (%p128) target = $region28
      $region27: #{classification_network_forward.4} parent=23 // pred_region
        %p131 = scmp.lt.s32.totalorder %s9, 1
        %s132 = scalar_select %p131, %s9, 1
        %s133 = smul.addr %s132, 176
        %s134 = smul.addr %s133, 8
        %s135 = scalar_lea.vmem %s0, %s134
      $region28: #{classification_network_forward.4} parent=23 // pred_fallthru
        _
    $region24: #{classification_network_forward.4} parent=5 // pred_fallthru
      _
    %p136 = scmp.le.s32.totalorder 1, %s9
    %p137 = scmp.lt.s32.totalorder %s9, 3
    %p138 = pnand %p136, %p137
    %p139 = pneg %p138
    // Predicated region
    $region29: #{classification_network_forward.4} parent=5 // pred_check
      _
    $region30: #{classification_network_forward.4} parent=5 // pred_check_branch
      %141 = sbr.rel (%p138) target = $region32
    $region31: #{classification_network_forward.4} parent=5 // pred_region
      %s142 = ssub.s32 %s9, 1
      %p143 = scmp.lt.s32.totalorder %s14, 1
      %s144 = scalar_select %p143, %s14, 1
      %s145 = smul.addr %s144, 176
      %s146 = smul.addr %s145, 8
      %s147 = scalar_lea.vmem %s0, %s146
      %p148 = pneg %p35
      %p149 = pneg %p32
      %p150 = pneg %p56
      %p151 = pneg %p53
      %p152 = pneg %p77
      %p153 = pneg %p74
      %p154 = pneg %p103
      %p155 = pneg %p100
      %p156 = scmp.lt.s32.totalorder %s14, 1
      %s157 = scalar_select %p156, %s14, 1
      %s158 = smul.addr %s157, 22
      %s159 = smul.addr %s158, 8
      %s160 = scalar_lea.vmem %s3, %s159
      %p161 = scmp.lt.s32.totalorder %s14, 1
      %s162 = scalar_select %p161, %s14, 1
      %s163 = smul.addr %s162, 176
      %s164 = smul.addr %s163, 8
      %s165 = scalar_lea.vmem %s0, %s164
      %p166 = scmp.lt.s32.totalorder %s14, 1
      %s167 = scalar_select %p166, %s14, 1
      %s168 = smul.addr %s167, 22
      %s169 = smul.addr %s168, 8
      %s170 = scalar_lea.vmem %s3, %s169
      %v171 = vld [vmem:[%s165] sm:$0xff]
      %v172 = vld [vmem:[%s165 + $0x8] sm:$0xff]
      %v173 = vld [vmem:[%s165 + $0x10] sm:$0xff]
      %v174 = vld [vmem:[%s165 + $0x18] sm:$0xff]
      %v175 = vld [vmem:[%s165 + $0x20] sm:$0xff]
      %v176 = vld [vmem:[%s165 + $0x28] sm:$0xff]
      %v177 = vld [vmem:[%s165 + $0x30] sm:$0xff]
      %v178 = vld [vmem:[%s165 + $0x38] sm:$0xff]
      %v179 = vld [vmem:[%s165 + $0x40] sm:$0xff]
      %v180 = vld [vmem:[%s165 + $0x48] sm:$0xff]
      %v181 = vld [vmem:[%s165 + $0x50] sm:$0xff]
      %v182 = vld [vmem:[%s165 + $0x58] sm:$0xff]
      %v183 = vld [vmem:[%s165 + $0x60] sm:$0xff]
      %v184 = vld [vmem:[%s165 + $0x68] sm:$0xff]
      %v185 = vld [vmem:[%s165 + $0x70] sm:$0xff]
      %v186 = vld [vmem:[%s165 + $0x78] sm:$0xff]
      %v187 = vld [vmem:[%s165 + $0x80] sm:$0xff]
      %v188 = vld [vmem:[%s165 + $0x88] sm:$0xff]
      %v189 = vld [vmem:[%s165 + $0x90] sm:$0xff]
      %v190 = vld [vmem:[%s165 + $0x98] sm:$0xff]
      %v191 = vld [vmem:[%s165 + $0xa0] sm:$0xff]
      %v192 = vld [vmem:[%s165 + $0xa8] sm:$0xff]
      %v193 = vld [vmem:[%s165 + $0xb0] sm:$0xff]
      %v194 = vld [vmem:[%s165 + $0xb8] sm:$0xff]
      %v195 = vld [vmem:[%s165 + $0xc0] sm:$0xff]
      %v196 = vld [vmem:[%s165 + $0xc8] sm:$0xff]
      %v197 = vld [vmem:[%s165 + $0xd0] sm:$0xff]
      %v198 = vld [vmem:[%s165 + $0xd8] sm:$0xff]
      %v199 = vld [vmem:[%s165 + $0xe0] sm:$0xff]
      %v200 = vld [vmem:[%s165 + $0xe8] sm:$0xff]
      %v201 = vld [vmem:[%s165 + $0xf0] sm:$0xff]
      %v202 = vld [vmem:[%s165 + $0xf8] sm:$0xff]
      %v203 = vld [vmem:[%s165 + $0x100] sm:$0xff]
      %v204 = vld [vmem:[%s165 + $0x108] sm:$0xff]
      %v205 = vld [vmem:[%s165 + $0x110] sm:$0xff]
      %v206 = vld [vmem:[%s165 + $0x118] sm:$0xff]
      %v207 = vld [vmem:[%s165 + $0x120] sm:$0xff]
      %v208 = vld [vmem:[%s165 + $0x128] sm:$0xff]
      %v209 = vld [vmem:[%s165 + $0x130] sm:$0xff]
      %v210 = vld [vmem:[%s165 + $0x138] sm:$0xff]
      %v211 = vld [vmem:[%s165 + $0x140] sm:$0xff]
      %v212 = vld [vmem:[%s165 + $0x148] sm:$0xff]
      %v213 = vld [vmem:[%s165 + $0x150] sm:$0xff]
      %v214 = vld [vmem:[%s165 + $0x158] sm:$0xff]
      %v215 = vld [vmem:[%s165 + $0x160] sm:$0xff]
      %v216 = vld [vmem:[%s165 + $0x168] sm:$0xff]
      %v217 = vld [vmem:[%s165 + $0x170] sm:$0xff]
      %v218 = vld [vmem:[%s165 + $0x178] sm:$0xff]
      %v219 = vld [vmem:[%s165 + $0x180] sm:$0xff]
      %v220 = vld [vmem:[%s165 + $0x188] sm:$0xff]
      %v221 = vld [vmem:[%s165 + $0x190] sm:$0xff]
      %v222 = vld [vmem:[%s165 + $0x198] sm:$0xff]
      %v223 = vld [vmem:[%s165 + $0x1a0] sm:$0xff]
      %v224 = vld [vmem:[%s165 + $0x1a8] sm:$0xff]
      %v225 = vld [vmem:[%s165 + $0x1b0] sm:$0xff]
      %v226 = vld [vmem:[%s165 + $0x1b8] sm:$0xff]
      %v227 = vld [vmem:[%s165 + $0x1c0] sm:$0xff]
      %v228 = vld [vmem:[%s165 + $0x1c8] sm:$0xff]
      %v229 = vld [vmem:[%s165 + $0x1d0] sm:$0xff]
      %v230 = vld [vmem:[%s165 + $0x1d8] sm:$0xff]
      %v231 = vld [vmem:[%s165 + $0x1e0] sm:$0xff]
      %v232 = vld [vmem:[%s165 + $0x1e8] sm:$0xff]
      %v233 = vld [vmem:[%s165 + $0x1f0] sm:$0xff]
      %v234 = vld [vmem:[%s165 + $0x1f8] sm:$0xff]
      %v235 = vld [vmem:[%s165 + $0x200] sm:$0xff]
      %v236 = vld [vmem:[%s165 + $0x208] sm:$0xff]
      %v237 = vld [vmem:[%s165 + $0x210] sm:$0xff]
      %v238 = vld [vmem:[%s165 + $0x218] sm:$0xff]
      %v239 = vld [vmem:[%s165 + $0x220] sm:$0xff]
      %v240 = vld [vmem:[%s165 + $0x228] sm:$0xff]
      %v241 = vld [vmem:[%s165 + $0x230] sm:$0xff]
      %v242 = vld [vmem:[%s165 + $0x238] sm:$0xff]
      %v243 = vld [vmem:[%s165 + $0x240] sm:$0xff]
      %v244 = vld [vmem:[%s165 + $0x248] sm:$0xff]
      %v245 = vld [vmem:[%s165 + $0x250] sm:$0xff]
      %v246 = vld [vmem:[%s165 + $0x258] sm:$0xff]
      %v247 = vld [vmem:[%s165 + $0x260] sm:$0xff]
      %v248 = vld [vmem:[%s165 + $0x268] sm:$0xff]
      %v249 = vld [vmem:[%s165 + $0x270] sm:$0xff]
      %v250 = vld [vmem:[%s165 + $0x278] sm:$0xff]
      %v251 = vld [vmem:[%s165 + $0x280] sm:$0xff]
      %v252 = vld [vmem:[%s165 + $0x288] sm:$0xff]
      %v253 = vld [vmem:[%s165 + $0x290] sm:$0xff]
      %v254 = vld [vmem:[%s165 + $0x298] sm:$0xff]
      %v255 = vld [vmem:[%s165 + $0x2a0] sm:$0xff]
      %v256 = vld [vmem:[%s165 + $0x2a8] sm:$0xff]
      %v257 = vld [vmem:[%s165 + $0x2b0] sm:$0xff]
      %v258 = vld [vmem:[%s165 + $0x2b8] sm:$0xff]
      %v259 = vld [vmem:[%s165 + $0x2c0] sm:$0xff]
      %v260 = vld [vmem:[%s165 + $0x2c8] sm:$0xff]
      %v261 = vld [vmem:[%s165 + $0x2d0] sm:$0xff]
      %v262 = vld [vmem:[%s165 + $0x2d8] sm:$0xff]
      %v263 = vld [vmem:[%s165 + $0x2e0] sm:$0xff]
      %v264 = vld [vmem:[%s165 + $0x2e8] sm:$0xff]
      %v265 = vld [vmem:[%s165 + $0x2f0] sm:$0xff]
      %v266 = vld [vmem:[%s165 + $0x2f8] sm:$0xff]
      %v267 = vld [vmem:[%s165 + $0x300] sm:$0xff]
      %v268 = vld [vmem:[%s165 + $0x308] sm:$0xff]
      %v269 = vld [vmem:[%s165 + $0x310] sm:$0xff]
      %v270 = vld [vmem:[%s165 + $0x318] sm:$0xff]
      %v271 = vld [vmem:[%s165 + $0x320] sm:$0xff]
      %v272 = vld [vmem:[%s165 + $0x328] sm:$0xff]
      %v273 = vld [vmem:[%s165 + $0x330] sm:$0xff]
      %v274 = vld [vmem:[%s165 + $0x338] sm:$0xff]
      %v275 = vld [vmem:[%s165 + $0x340] sm:$0xff]
      %v276 = vld [vmem:[%s165 + $0x348] sm:$0xff]
      %v277 = vld [vmem:[%s165 + $0x350] sm:$0xff]
      %v278 = vld [vmem:[%s165 + $0x358] sm:$0xff]
      %v279 = vld [vmem:[%s165 + $0x360] sm:$0xff]
      %v280 = vld [vmem:[%s165 + $0x368] sm:$0xff]
      %v281 = vld [vmem:[%s165 + $0x370] sm:$0xff]
      %v282 = vld [vmem:[%s165 + $0x378] sm:$0xff]
      %v283 = vld [vmem:[%s165 + $0x380] sm:$0xff]
      %v284 = vld [vmem:[%s165 + $0x388] sm:$0xff]
      %v285 = vld [vmem:[%s165 + $0x390] sm:$0xff]
      %v286 = vld [vmem:[%s165 + $0x398] sm:$0xff]
      %v287 = vld [vmem:[%s165 + $0x3a0] sm:$0xff]
      %v288 = vld [vmem:[%s165 + $0x3a8] sm:$0xff]
      %v289 = vld [vmem:[%s165 + $0x3b0] sm:$0xff]
      %v290 = vld [vmem:[%s165 + $0x3b8] sm:$0xff]
      %v291 = vld [vmem:[%s165 + $0x3c0] sm:$0xff]
      %v292 = vld [vmem:[%s165 + $0x3c8] sm:$0xff]
      %v293 = vld [vmem:[%s165 + $0x3d0] sm:$0xff]
      %v294 = vld [vmem:[%s165 + $0x3d8] sm:$0xff]
      %v295 = vld [vmem:[%s165 + $0x3e0] sm:$0xff]
      %v296 = vld [vmem:[%s165 + $0x3e8] sm:$0xff]
      %v297 = vld [vmem:[%s165 + $0x3f0] sm:$0xff]
      %v298 = vld [vmem:[%s165 + $0x3f8] sm:$0xff]
      %v299 = vld [vmem:[%s165 + $0x400] sm:$0xff]
      %v300 = vld [vmem:[%s165 + $0x408] sm:$0xff]
      %v301 = vld [vmem:[%s165 + $0x410] sm:$0xff]
      %v302 = vld [vmem:[%s165 + $0x418] sm:$0xff]
      %v303 = vld [vmem:[%s165 + $0x420] sm:$0xff]
      %v304 = vld [vmem:[%s165 + $0x428] sm:$0xff]
      %v305 = vld [vmem:[%s165 + $0x430] sm:$0xff]
      %v306 = vld [vmem:[%s165 + $0x438] sm:$0xff]
      %v307 = vld [vmem:[%s165 + $0x440] sm:$0xff]
      %v308 = vld [vmem:[%s165 + $0x448] sm:$0xff]
      %v309 = vld [vmem:[%s165 + $0x450] sm:$0xff]
      %v310 = vld [vmem:[%s165 + $0x458] sm:$0xff]
      %v311 = vld [vmem:[%s165 + $0x460] sm:$0xff]
      %v312 = vld [vmem:[%s165 + $0x468] sm:$0xff]
      %v313 = vld [vmem:[%s165 + $0x470] sm:$0xff]
      %v314 = vld [vmem:[%s165 + $0x478] sm:$0xff]
      %v315 = vld [vmem:[%s165 + $0x480] sm:$0xff]
      %v316 = vld [vmem:[%s165 + $0x488] sm:$0xff]
      %v317 = vld [vmem:[%s165 + $0x490] sm:$0xff]
      %v318 = vld [vmem:[%s165 + $0x498] sm:$0xff]
      %v319 = vld [vmem:[%s165 + $0x4a0] sm:$0xff]
      %v320 = vld [vmem:[%s165 + $0x4a8] sm:$0xff]
      %v321 = vld [vmem:[%s165 + $0x4b0] sm:$0xff]
      %v322 = vld [vmem:[%s165 + $0x4b8] sm:$0xff]
      %v323 = vld [vmem:[%s165 + $0x4c0] sm:$0xff]
      %v324 = vld [vmem:[%s165 + $0x4c8] sm:$0xff]
      %v325 = vld [vmem:[%s165 + $0x4d0] sm:$0xff]
      %v326 = vld [vmem:[%s165 + $0x4d8] sm:$0xff]
      %v327 = vld [vmem:[%s165 + $0x4e0] sm:$0xff]
      %v328 = vld [vmem:[%s165 + $0x4e8] sm:$0xff]
      %v329 = vld [vmem:[%s165 + $0x4f0] sm:$0xff]
      %v330 = vld [vmem:[%s165 + $0x4f8] sm:$0xff]
      %v331 = vld [vmem:[%s165 + $0x500] sm:$0xff]
      %v332 = vld [vmem:[%s165 + $0x508] sm:$0xff]
      %v333 = vld [vmem:[%s165 + $0x510] sm:$0xff]
      %v334 = vld [vmem:[%s165 + $0x518] sm:$0xff]
      %v335 = vld [vmem:[%s165 + $0x520] sm:$0xff]
      %v336 = vld [vmem:[%s165 + $0x528] sm:$0xff]
      %v337 = vld [vmem:[%s165 + $0x530] sm:$0xff]
      %v338 = vld [vmem:[%s165 + $0x538] sm:$0xff]
      %v339 = vld [vmem:[%s165 + $0x540] sm:$0xff]
      %v340 = vld [vmem:[%s165 + $0x548] sm:$0xff]
      %v341 = vld [vmem:[%s165 + $0x550] sm:$0xff]
      %v342 = vld [vmem:[%s165 + $0x558] sm:$0xff]
      %v343 = vld [vmem:[%s165 + $0x560] sm:$0xff]
      %v344 = vld [vmem:[%s165 + $0x568] sm:$0xff]
      %v345 = vld [vmem:[%s165 + $0x570] sm:$0xff]
      %v346 = vld [vmem:[%s165 + $0x578] sm:$0xff]
      %v347 = vld [vmem:[%s1] sm:$0xff]
      %v348 = vld [vmem:[%s1 + $0x8] sm:$0xff]
      %v349 = vld [vmem:[%s1 + $0x10] sm:$0xff]
      %v350 = vld [vmem:[%s1 + $0x18] sm:$0xff]
      %v351 = vld [vmem:[%s1 + $0x20] sm:$0xff]
      %v352 = vld [vmem:[%s1 + $0x28] sm:$0xff]
      %v353 = vld [vmem:[%s1 + $0x30] sm:$0xff]
      %v354 = vld [vmem:[%s1 + $0x38] sm:$0xff]
      %v355 = vld [vmem:[%s1 + $0x40] sm:$0xff]
      %v356 = vld [vmem:[%s1 + $0x48] sm:$0xff]
      %v357 = vld [vmem:[%s1 + $0x50] sm:$0xff]
      %v358 = vld [vmem:[%s1 + $0x58] sm:$0xff]
      %v359 = vld [vmem:[%s1 + $0x60] sm:$0xff]
      %v360 = vld [vmem:[%s1 + $0x68] sm:$0xff]
      %v361 = vld [vmem:[%s1 + $0x70] sm:$0xff]
      %v362 = vld [vmem:[%s1 + $0x78] sm:$0xff]
      %v363 = vld [vmem:[%s1 + $0x80] sm:$0xff]
      %v364 = vld [vmem:[%s1 + $0x88] sm:$0xff]
      %v365 = vld [vmem:[%s1 + $0x90] sm:$0xff]
      %v366 = vld [vmem:[%s1 + $0x98] sm:$0xff]
      %v367 = vld [vmem:[%s1 + $0xa0] sm:$0xff]
      %v368 = vld [vmem:[%s1 + $0xa8] sm:$0xff]
      %v369 = vld [vmem:[%s1 + $0xb0] sm:$0xff]
      %v370 = vld [vmem:[%s1 + $0xb8] sm:$0xff]
      %v371 = vld [vmem:[%s1 + $0xc0] sm:$0xff]
      %v372 = vld [vmem:[%s1 + $0xc8] sm:$0xff]
      %v373 = vld [vmem:[%s1 + $0xd0] sm:$0xff]
      %v374 = vld [vmem:[%s1 + $0xd8] sm:$0xff]
      %v375 = vld [vmem:[%s1 + $0xe0] sm:$0xff]
      %v376 = vld [vmem:[%s1 + $0xe8] sm:$0xff]
      %v377 = vld [vmem:[%s1 + $0xf0] sm:$0xff]
      %v378 = vld [vmem:[%s1 + $0xf8] sm:$0xff]
      %v379 = vld [vmem:[%s2] sm:$0x1]
      %v381 = vlaneseq
      %v382 = vshrl.u32 %v381, 7
      %v383 = vsub.s32 0, %v382
      %v384 = vrot.slane %v379, %v383
      %386 = vmatprep.subr.mxu0 0.0
      %387 = vmatpush1.msra.mxu0 %v347
      %388 = vmatprep.subr.mxu0 0.0
      %389 = vmatpush1.msra.mxu0 %v348
      %390 = vmatprep.subr.mxu0 0.0
      %391 = vmatpush1.msra.mxu0 %v349
      %392 = vmatprep.subr.mxu0 0.0
      %393 = vmatpush1.msra.mxu0 %v350
      %394 = vmatprep.subr.mxu0 0.0
      %395 = vmatpush1.msra.mxu0 %v351
      %396 = vmatprep.subr.mxu0 0.0
      %397 = vmatpush1.msra.mxu0 %v352
      %398 = vmatprep.subr.mxu0 0.0
      %399 = vmatpush1.msra.mxu0 %v353
      %400 = vmatprep.subr.mxu0 0.0
      %401 = vmatpush1.msra.mxu0 %v354
      %402 = vmatprep.subr.mxu0 0.0
      %403 = vmatpush1.msra.mxu0 %v355
      %404 = vmatprep.subr.mxu0 0.0
      %405 = vmatpush1.msra.mxu0 %v356
      %406 = vmatprep.subr.mxu0 0.0
      %407 = vmatpush1.msra.mxu0 %v357
      %408 = vmatprep.subr.mxu0 0.0
      %409 = vmatpush1.msra.mxu0 %v358
      %410 = vmatprep.subr.mxu0 0.0
      %411 = vmatpush1.msra.mxu0 %v359
      %412 = vmatprep.subr.mxu0 0.0
      %413 = vmatpush1.msra.mxu0 %v360
      %414 = vmatprep.subr.mxu0 0.0
      %415 = vmatpush1.msra.mxu0 %v361
      %416 = vmatprep.subr.mxu0 0.0
      %417 = vmatpush1.msra.mxu0 %v362
      %418 = vmatprep.subr.mxu0 0.0
      %419 = vmatpush1.msra.mxu0 %v363
      %420 = vmatprep.subr.mxu0 0.0
      %421 = vmatpush1.msra.mxu0 %v364
      %422 = vmatprep.subr.mxu0 0.0
      %423 = vmatpush1.msra.mxu0 %v365
      %424 = vmatprep.subr.mxu0 0.0
      %425 = vmatpush1.msra.mxu0 %v366
      %426 = vmatprep.subr.mxu0 0.0
      %427 = vmatpush1.msra.mxu0 %v367
      %428 = vmatprep.subr.mxu0 0.0
      %429 = vmatpush1.msra.mxu0 %v368
      %430 = vmatprep.subr.mxu0 0.0
      %431 = vmatpush1.msra.mxu0 %v369
      %432 = vmatprep.subr.mxu0 0.0
      %433 = vmatpush1.msra.mxu0 %v370
      %434 = vmatprep.subr.mxu0 0.0
      %435 = vmatpush1.msra.mxu0 %v371
      %436 = vmatprep.subr.mxu0 0.0
      %437 = vmatpush1.msra.mxu0 %v372
      %438 = vmatprep.subr.mxu0 0.0
      %439 = vmatpush1.msra.mxu0 %v373
      %440 = vmatprep.subr.mxu0 0.0
      %441 = vmatpush1.msra.mxu0 %v374
      %442 = vmatprep.subr.mxu0 0.0
      %443 = vmatpush1.msra.mxu0 %v375
      %444 = vmatprep.subr.mxu0 0.0
      %445 = vmatpush1.msra.mxu0 %v376
      %446 = vmatprep.subr.mxu0 0.0
      %447 = vmatpush1.msra.mxu0 %v377
      %448 = vmatprep.subr.mxu0 0.0
      %449 = vmatpush1.msra.mxu0 %v378
      %450 = vmatprep.mubr.f32.mxu0 %v172
      %451 = vmatmul.mubr.f32.gmra.mrb[0].mxu0 %v171
      %v452 = vpop.f32.mrb[0].mxu0
      %v453 = vadd.f32 %v384, %v452
      %v454 = vpop.f32.mrb[0].mxu0
      %455 = vmatprep.mubr.f32.mxu0 %v174
      %456 = vmatmul.mubr.f32.gmra.mrb[0].mxu0 %v173
      %v457 = vpop.f32.mrb[0].mxu0
      %v458 = vadd.f32 %v384, %v457
      %v459 = vpop.f32.mrb[0].mxu0
      %460 = vmatprep.mubr.f32.mxu0 %v176
      %461 = vmatmul.mubr.f32.gmra.mrb[0].mxu0 %v175
      %v462 = vpop.f32.mrb[0].mxu0
      %v463 = vadd.f32 %v384, %v462
      %v464 = vpop.f32.mrb[0].mxu0
      %465 = vmatprep.mubr.f32.mxu0 %v178
      %466 = vmatmul.mubr.f32.gmra.mrb[0].mxu0 %v177
      %v467 = vpop.f32.mrb[0].mxu0
      %v468 = vadd.f32 %v384, %v467
      %v469 = vpop.f32.mrb[0].mxu0
      %470 = vmatprep.mubr.f32.mxu0 %v180
      %471 = vmatmul.mubr.f32.gmra.mrb[0].mxu0 %v179
      %v472 = vpop.f32.mrb[0].mxu0
      %v473 = vadd.f32 %v384, %v472
      %v474 = vpop.f32.mrb[0].mxu0
      %475 = vmatprep.mubr.f32.mxu0 %v182
      %476 = vmatmul.mubr.f32.gmra.mrb[0].mxu0 %v181
      %v477 = vpop.f32.mrb[0].mxu0
      %v478 = vadd.f32 %v384, %v477
      %v479 = vpop.f32.mrb[0].mxu0
      %480 = vmatprep.mubr.f32.mxu0 %v184
      %481 = vmatmul.mubr.f32.gmra.mrb[0].mxu0 %v183
      %v482 = vpop.f32.mrb[0].mxu0
      %v483 = vadd.f32 %v384, %v482
      %v484 = vpop.f32.mrb[0].mxu0
      %485 = vmatprep.mubr.f32.mxu0 %v186
      %486 = vmatmul.mubr.f32.gmra.mrb[0].mxu0 %v185
      %v487 = vpop.f32.mrb[0].mxu0
      %v488 = vadd.f32 %v384, %v487
      %v489 = vpop.f32.mrb[0].mxu0
      %490 = vmatprep.mubr.f32.mxu0 %v188
      %491 = vmatmul.mubr.f32.gmra.mrb[0].mxu0 %v187
      %v492 = vpop.f32.mrb[0].mxu0
      %v493 = vadd.f32 %v384, %v492
      %v494 = vpop.f32.mrb[0].mxu0
      %495 = vmatprep.mubr.f32.mxu0 %v190
      %496 = vmatmul.mubr.f32.gmra.mrb[0].mxu0 %v189
      %v497 = vpop.f32.mrb[0].mxu0
      %v498 = vadd.f32 %v384, %v497
      %v499 = vpop.f32.mrb[0].mxu0
      %500 = vmatprep.mubr.f32.mxu0 %v192
      %501 = vmatmul.mubr.f32.gmra.mrb[0].mxu0 %v191
      %v502 = vpop.f32.mrb[0].mxu0
      %v503 = vadd.f32 %v384, %v502
      %v504 = vpop.f32.mrb[0].mxu0
      %505 = vmatprep.mubr.f32.mxu0 %v194
      %506 = vmatmul.mubr.f32.gmra.mrb[0].mxu0 %v193
      %v507 = vpop.f32.mrb[0].mxu0
      %v508 = vadd.f32 %v384, %v507
      %v509 = vpop.f32.mrb[0].mxu0
      %510 = vmatprep.mubr.f32.mxu0 %v196
      %511 = vmatmul.mubr.f32.gmra.mrb[0].mxu0 %v195
      %v512 = vpop.f32.mrb[0].mxu0
      %v513 = vadd.f32 %v384, %v512
      %v514 = vpop.f32.mrb[0].mxu0
      %515 = vmatprep.mubr.f32.mxu0 %v198
      %516 = vmatmul.mubr.f32.gmra.mrb[0].mxu0 %v197
      %v517 = vpop.f32.mrb[0].mxu0
      %v518 = vadd.f32 %v384, %v517
      %v519 = vpop.f32.mrb[0].mxu0
      %520 = vmatprep.mubr.f32.mxu0 %v200
      %521 = vmatmul.mubr.f32.gmra.mrb[0].mxu0 %v199
      %v522 = vpop.f32.mrb[0].mxu0
      %v523 = vadd.f32 %v384, %v522
      %v524 = vpop.f32.mrb[0].mxu0
      %525 = vmatprep.mubr.f32.mxu0 %v202
      %526 = vmatmul.mubr.f32.gmra.mrb[0].mxu0 %v201
      %v527 = vpop.f32.mrb[0].mxu0
      %v528 = vadd.f32 %v384, %v527
      %v529 = vpop.f32.mrb[0].mxu0
      %530 = vmatprep.mubr.f32.mxu0 %v204
      %531 = vmatmul.mubr.f32.gmra.mrb[0].mxu0 %v203
      %v532 = vpop.f32.mrb[0].mxu0
      %v533 = vadd.f32 %v384, %v532
      %v534 = vpop.f32.mrb[0].mxu0
      %535 = vmatprep.mubr.f32.mxu0 %v206
      %536 = vmatmul.mubr.f32.gmra.mrb[0].mxu0 %v205
      %v537 = vpop.f32.mrb[0].mxu0
      %v538 = vadd.f32 %v384, %v537
      %v539 = vpop.f32.mrb[0].mxu0
      %540 = vmatprep.mubr.f32.mxu0 %v208
      %541 = vmatmul.mubr.f32.gmra.mrb[0].mxu0 %v207
      %v542 = vpop.f32.mrb[0].mxu0
      %v543 = vadd.f32 %v384, %v542
      %v544 = vpop.f32.mrb[0].mxu0
      %545 = vmatprep.mubr.f32.mxu0 %v210
      %546 = vmatmul.mubr.f32.gmra.mrb[0].mxu0 %v209
      %v547 = vpop.f32.mrb[0].mxu0
      %v548 = vadd.f32 %v384, %v547
      %v549 = vpop.f32.mrb[0].mxu0
      %550 = vmatprep.mubr.f32.mxu0 %v212
      %551 = vmatmul.mubr.f32.gmra.mrb[0].mxu0 %v211
      %v552 = vpop.f32.mrb[0].mxu0
      %v553 = vadd.f32 %v384, %v552
      %v554 = vpop.f32.mrb[0].mxu0
      %555 = vmatprep.mubr.f32.mxu0 %v214
      %556 = vmatmul.mubr.f32.gmra.mrb[0].mxu0 %v213
      %v557 = vpop.f32.mrb[0].mxu0
      %v558 = vadd.f32 %v384, %v557
      %v559 = vpop.f32.mrb[0].mxu0
      %560 = vmatprep.mubr.f32.mxu0 %v216
      %561 = vmatmul.mubr.f32.gmra.mrb[0].mxu0 %v215
      %v562 = vpop.f32.mrb[0].mxu0
      %v563 = vadd.f32 %v384, %v562
      %v564 = vpop.f32.mrb[0].mxu0
      %565 = vmatprep.mubr.f32.mxu0 %v218
      %566 = vmatmul.mubr.f32.gmra.mrb[0].mxu0 %v217
      %v567 = vpop.f32.mrb[0].mxu0
      %v568 = vadd.f32 %v384, %v567
      %v569 = vpop.f32.mrb[0].mxu0
      %570 = vmatprep.mubr.f32.mxu0 %v220
      %571 = vmatmul.mubr.f32.gmra.mrb[0].mxu0 %v219
      %v572 = vpop.f32.mrb[0].mxu0
      %v573 = vadd.f32 %v384, %v572
      %v574 = vpop.f32.mrb[0].mxu0
      %575 = vmatprep.mubr.f32.mxu0 %v222
      %576 = vmatmul.mubr.f32.gmra.mrb[0].mxu0 %v221
      %v577 = vpop.f32.mrb[0].mxu0
      %v578 = vadd.f32 %v384, %v577
      %v579 = vpop.f32.mrb[0].mxu0
      %580 = vmatprep.mubr.f32.mxu0 %v224
      %581 = vmatmul.mubr.f32.gmra.mrb[0].mxu0 %v223
      %v582 = vpop.f32.mrb[0].mxu0
      %v583 = vadd.f32 %v384, %v582
      %v584 = vpop.f32.mrb[0].mxu0
      %585 = vmatprep.mubr.f32.mxu0 %v226
      %586 = vmatmul.mubr.f32.gmra.mrb[0].mxu0 %v225
      %v587 = vpop.f32.mrb[0].mxu0
      %v588 = vadd.f32 %v384, %v587
      %v589 = vpop.f32.mrb[0].mxu0
      %590 = vmatprep.mubr.f32.mxu0 %v228
      %591 = vmatmul.mubr.f32.gmra.mrb[0].mxu0 %v227
      %v592 = vpop.f32.mrb[0].mxu0
      %v593 = vadd.f32 %v384, %v592
      %v594 = vpop.f32.mrb[0].mxu0
      %595 = vmatprep.mubr.f32.mxu0 %v230
      %596 = vmatmul.mubr.f32.gmra.mrb[0].mxu0 %v229
      %v597 = vpop.f32.mrb[0].mxu0
      %v598 = vadd.f32 %v384, %v597
      %v599 = vpop.f32.mrb[0].mxu0
      %600 = vmatprep.mubr.f32.mxu0 %v232
      %601 = vmatmul.mubr.f32.gmra.mrb[0].mxu0 %v231
      %v602 = vpop.f32.mrb[0].mxu0
      %v603 = vadd.f32 %v384, %v602
      %v604 = vpop.f32.mrb[0].mxu0
      %605 = vmatprep.mubr.f32.mxu0 %v234
      %606 = vmatmul.mubr.f32.gmra.mrb[0].mxu0 %v233
      %v607 = vpop.f32.mrb[0].mxu0
      %v608 = vadd.f32 %v384, %v607
      %v609 = vpop.f32.mrb[0].mxu0
      %610 = vmatprep.mubr.f32.mxu0 %v236
      %611 = vmatmul.mubr.f32.gmra.mrb[0].mxu0 %v235
      %v612 = vpop.f32.mrb[0].mxu0
      %v613 = vadd.f32 %v384, %v612
      %v614 = vpop.f32.mrb[0].mxu0
      %615 = vmatprep.mubr.f32.mxu0 %v238
      %616 = vmatmul.mubr.f32.gmra.mrb[0].mxu0 %v237
      %v617 = vpop.f32.mrb[0].mxu0
      %v618 = vadd.f32 %v384, %v617
      %v619 = vpop.f32.mrb[0].mxu0
      %620 = vmatprep.mubr.f32.mxu0 %v240
      %621 = vmatmul.mubr.f32.gmra.mrb[0].mxu0 %v239
      %v622 = vpop.f32.mrb[0].mxu0
      %v623 = vadd.f32 %v384, %v622
      %v624 = vpop.f32.mrb[0].mxu0
      %625 = vmatprep.mubr.f32.mxu0 %v242
      %626 = vmatmul.mubr.f32.gmra.mrb[0].mxu0 %v241
      %v627 = vpop.f32.mrb[0].mxu0
      %v628 = vadd.f32 %v384, %v627
      %v629 = vpop.f32.mrb[0].mxu0
      %630 = vmatprep.mubr.f32.mxu0 %v244
      %631 = vmatmul.mubr.f32.gmra.mrb[0].mxu0 %v243
      %v632 = vpop.f32.mrb[0].mxu0
      %v633 = vadd.f32 %v384, %v632
      %v634 = vpop.f32.mrb[0].mxu0
      %635 = vmatprep.mubr.f32.mxu0 %v246
      %636 = vmatmul.mubr.f32.gmra.mrb[0].mxu0 %v245
      %v637 = vpop.f32.mrb[0].mxu0
      %v638 = vadd.f32 %v384, %v637
      %v639 = vpop.f32.mrb[0].mxu0
      %640 = vmatprep.mubr.f32.mxu0 %v248
      %641 = vmatmul.mubr.f32.gmra.mrb[0].mxu0 %v247
      %v642 = vpop.f32.mrb[0].mxu0
      %v643 = vadd.f32 %v384, %v642
      %v644 = vpop.f32.mrb[0].mxu0
      %645 = vmatprep.mubr.f32.mxu0 %v250
      %646 = vmatmul.mubr.f32.gmra.mrb[0].mxu0 %v249
      %v647 = vpop.f32.mrb[0].mxu0
      %v648 = vadd.f32 %v384, %v647
      %v649 = vpop.f32.mrb[0].mxu0
      %650 = vmatprep.mubr.f32.mxu0 %v252
      %651 = vmatmul.mubr.f32.gmra.mrb[0].mxu0 %v251
      %v652 = vpop.f32.mrb[0].mxu0
      %v653 = vadd.f32 %v384, %v652
      %v654 = vpop.f32.mrb[0].mxu0
      %655 = vmatprep.mubr.f32.mxu0 %v254
      %656 = vmatmul.mubr.f32.gmra.mrb[0].mxu0 %v253
      %v657 = vpop.f32.mrb[0].mxu0
      %v658 = vadd.f32 %v384, %v657
      %v659 = vpop.f32.mrb[0].mxu0
      %660 = vmatprep.mubr.f32.mxu0 %v256
      %661 = vmatmul.mubr.f32.gmra.mrb[0].mxu0 %v255
      %v662 = vpop.f32.mrb[0].mxu0
      %v663 = vadd.f32 %v384, %v662
      %v664 = vpop.f32.mrb[0].mxu0
      %665 = vmatprep.mubr.f32.mxu0 %v258
      %666 = vmatmul.mubr.f32.gmra.mrb[0].mxu0 %v257
      %v667 = vpop.f32.mrb[0].mxu0
      %v668 = vadd.f32 %v384, %v667
      %v669 = vpop.f32.mrb[0].mxu0
      %670 = vmatprep.mubr.f32.mxu0 %v260
      %671 = vmatmul.mubr.f32.gmra.mrb[0].mxu0 %v259
      %v672 = vpop.f32.mrb[0].mxu0
      %v673 = vadd.f32 %v384, %v672
      %v674 = vpop.f32.mrb[0].mxu0
      %675 = vmatprep.mubr.f32.mxu0 %v262
      %676 = vmatmul.mubr.f32.gmra.mrb[0].mxu0 %v261
      %v677 = vpop.f32.mrb[0].mxu0
      %v678 = vadd.f32 %v384, %v677
      %v679 = vpop.f32.mrb[0].mxu0
      %680 = vmatprep.mubr.f32.mxu0 %v264
      %681 = vmatmul.mubr.f32.gmra.mrb[0].mxu0 %v263
      %v682 = vpop.f32.mrb[0].mxu0
      %v683 = vadd.f32 %v384, %v682
      %v684 = vpop.f32.mrb[0].mxu0
      %685 = vmatprep.mubr.f32.mxu0 %v266
      %686 = vmatmul.mubr.f32.gmra.mrb[0].mxu0 %v265
      %v687 = vpop.f32.mrb[0].mxu0
      %v688 = vadd.f32 %v384, %v687
      %v689 = vpop.f32.mrb[0].mxu0
      %690 = vmatprep.mubr.f32.mxu0 %v268
      %691 = vmatmul.mubr.f32.gmra.mrb[0].mxu0 %v267
      %v692 = vpop.f32.mrb[0].mxu0
      %v693 = vadd.f32 %v384, %v692
      %v694 = vpop.f32.mrb[0].mxu0
      %695 = vmatprep.mubr.f32.mxu0 %v270
      %696 = vmatmul.mubr.f32.gmra.mrb[0].mxu0 %v269
      %v697 = vpop.f32.mrb[0].mxu0
      %v698 = vadd.f32 %v384, %v697
      %v699 = vpop.f32.mrb[0].mxu0
      %700 = vmatprep.mubr.f32.mxu0 %v272
      %701 = vmatmul.mubr.f32.gmra.mrb[0].mxu0 %v271
      %v702 = vpop.f32.mrb[0].mxu0
      %v703 = vadd.f32 %v384, %v702
      %v704 = vpop.f32.mrb[0].mxu0
      %705 = vmatprep.mubr.f32.mxu0 %v274
      %706 = vmatmul.mubr.f32.gmra.mrb[0].mxu0 %v273
      %v707 = vpop.f32.mrb[0].mxu0
      %v708 = vadd.f32 %v384, %v707
      %v709 = vpop.f32.mrb[0].mxu0
      %710 = vmatprep.mubr.f32.mxu0 %v276
      %711 = vmatmul.mubr.f32.gmra.mrb[0].mxu0 %v275
      %v712 = vpop.f32.mrb[0].mxu0
      %v713 = vadd.f32 %v384, %v712
      %v714 = vpop.f32.mrb[0].mxu0
      %715 = vmatprep.mubr.f32.mxu0 %v278
      %716 = vmatmul.mubr.f32.gmra.mrb[0].mxu0 %v277
      %v717 = vpop.f32.mrb[0].mxu0
      %v718 = vadd.f32 %v384, %v717
      %v719 = vpop.f32.mrb[0].mxu0
      %720 = vmatprep.mubr.f32.mxu0 %v280
      %721 = vmatmul.mubr.f32.gmra.mrb[0].mxu0 %v279
      %v722 = vpop.f32.mrb[0].mxu0
      %v723 = vadd.f32 %v384, %v722
      %v724 = vpop.f32.mrb[0].mxu0
      %725 = vmatprep.mubr.f32.mxu0 %v282
      %726 = vmatmul.mubr.f32.gmra.mrb[0].mxu0 %v281
      %v727 = vpop.f32.mrb[0].mxu0
      %v728 = vadd.f32 %v384, %v727
      %v729 = vpop.f32.mrb[0].mxu0
      %730 = vmatprep.mubr.f32.mxu0 %v284
      %731 = vmatmul.mubr.f32.gmra.mrb[0].mxu0 %v283
      %v732 = vpop.f32.mrb[0].mxu0
      %v733 = vadd.f32 %v384, %v732
      %v734 = vpop.f32.mrb[0].mxu0
      %735 = vmatprep.mubr.f32.mxu0 %v286
      %736 = vmatmul.mubr.f32.gmra.mrb[0].mxu0 %v285
      %v737 = vpop.f32.mrb[0].mxu0
      %v738 = vadd.f32 %v384, %v737
      %v739 = vpop.f32.mrb[0].mxu0
      %740 = vmatprep.mubr.f32.mxu0 %v288
      %741 = vmatmul.mubr.f32.gmra.mrb[0].mxu0 %v287
      %v742 = vpop.f32.mrb[0].mxu0
      %v743 = vadd.f32 %v384, %v742
      %v744 = vpop.f32.mrb[0].mxu0
      %745 = vmatprep.mubr.f32.mxu0 %v290
      %746 = vmatmul.mubr.f32.gmra.mrb[0].mxu0 %v289
      %v747 = vpop.f32.mrb[0].mxu0
      %v748 = vadd.f32 %v384, %v747
      %v749 = vpop.f32.mrb[0].mxu0
      %750 = vmatprep.mubr.f32.mxu0 %v292
      %751 = vmatmul.mubr.f32.gmra.mrb[0].mxu0 %v291
      %v752 = vpop.f32.mrb[0].mxu0
      %v753 = vadd.f32 %v384, %v752
      %v754 = vpop.f32.mrb[0].mxu0
      %755 = vmatprep.mubr.f32.mxu0 %v294
      %756 = vmatmul.mubr.f32.gmra.mrb[0].mxu0 %v293
      %v757 = vpop.f32.mrb[0].mxu0
      %v758 = vadd.f32 %v384, %v757
      %v759 = vpop.f32.mrb[0].mxu0
      %760 = vmatprep.mubr.f32.mxu0 %v296
      %761 = vmatmul.mubr.f32.gmra.mrb[0].mxu0 %v295
      %v762 = vpop.f32.mrb[0].mxu0
      %v763 = vadd.f32 %v384, %v762
      %v764 = vpop.f32.mrb[0].mxu0
      %765 = vmatprep.mubr.f32.mxu0 %v298
      %766 = vmatmul.mubr.f32.gmra.mrb[0].mxu0 %v297
      %v767 = vpop.f32.mrb[0].mxu0
      %v768 = vadd.f32 %v384, %v767
      %v769 = vpop.f32.mrb[0].mxu0
      %770 = vmatprep.mubr.f32.mxu0 %v300
      %771 = vmatmul.mubr.f32.gmra.mrb[0].mxu0 %v299
      %v772 = vpop.f32.mrb[0].mxu0
      %v773 = vadd.f32 %v384, %v772
      %v774 = vpop.f32.mrb[0].mxu0
      %775 = vmatprep.mubr.f32.mxu0 %v302
      %776 = vmatmul.mubr.f32.gmra.mrb[0].mxu0 %v301
      %v777 = vpop.f32.mrb[0].mxu0
      %v778 = vadd.f32 %v384, %v777
      %v779 = vpop.f32.mrb[0].mxu0
      %780 = vmatprep.mubr.f32.mxu0 %v304
      %781 = vmatmul.mubr.f32.gmra.mrb[0].mxu0 %v303
      %v782 = vpop.f32.mrb[0].mxu0
      %v783 = vadd.f32 %v384, %v782
      %v784 = vpop.f32.mrb[0].mxu0
      %785 = vmatprep.mubr.f32.mxu0 %v306
      %786 = vmatmul.mubr.f32.gmra.mrb[0].mxu0 %v305
      %v787 = vpop.f32.mrb[0].mxu0
      %v788 = vadd.f32 %v384, %v787
      %v789 = vpop.f32.mrb[0].mxu0
      %790 = vmatprep.mubr.f32.mxu0 %v308
      %791 = vmatmul.mubr.f32.gmra.mrb[0].mxu0 %v307
      %v792 = vpop.f32.mrb[0].mxu0
      %v793 = vadd.f32 %v384, %v792
      %v794 = vpop.f32.mrb[0].mxu0
      %795 = vmatprep.mubr.f32.mxu0 %v310
      %796 = vmatmul.mubr.f32.gmra.mrb[0].mxu0 %v309
      %v797 = vpop.f32.mrb[0].mxu0
      %v798 = vadd.f32 %v384, %v797
      %v799 = vpop.f32.mrb[0].mxu0
      %800 = vmatprep.mubr.f32.mxu0 %v312
      %801 = vmatmul.mubr.f32.gmra.mrb[0].mxu0 %v311
      %v802 = vpop.f32.mrb[0].mxu0
      %v803 = vadd.f32 %v384, %v802
      %v804 = vpop.f32.mrb[0].mxu0
      %805 = vmatprep.mubr.f32.mxu0 %v314
      %806 = vmatmul.mubr.f32.gmra.mrb[0].mxu0 %v313
      %v807 = vpop.f32.mrb[0].mxu0
      %v808 = vadd.f32 %v384, %v807
      %v809 = vpop.f32.mrb[0].mxu0
      %810 = vmatprep.mubr.f32.mxu0 %v316
      %811 = vmatmul.mubr.f32.gmra.mrb[0].mxu0 %v315
      %v812 = vpop.f32.mrb[0].mxu0
      %v813 = vadd.f32 %v384, %v812
      %v814 = vpop.f32.mrb[0].mxu0
      %815 = vmatprep.mubr.f32.mxu0 %v318
      %816 = vmatmul.mubr.f32.gmra.mrb[0].mxu0 %v317
      %v817 = vpop.f32.mrb[0].mxu0
      %v818 = vadd.f32 %v384, %v817
      %v819 = vpop.f32.mrb[0].mxu0
      %820 = vmatprep.mubr.f32.mxu0 %v320
      %821 = vmatmul.mubr.f32.gmra.mrb[0].mxu0 %v319
      %v822 = vpop.f32.mrb[0].mxu0
      %v823 = vadd.f32 %v384, %v822
      %v824 = vpop.f32.mrb[0].mxu0
      %825 = vmatprep.mubr.f32.mxu0 %v322
      %826 = vmatmul.mubr.f32.gmra.mrb[0].mxu0 %v321
      %v827 = vpop.f32.mrb[0].mxu0
      %v828 = vadd.f32 %v384, %v827
      %v829 = vpop.f32.mrb[0].mxu0
      %830 = vmatprep.mubr.f32.mxu0 %v324
      %831 = vmatmul.mubr.f32.gmra.mrb[0].mxu0 %v323
      %v832 = vpop.f32.mrb[0].mxu0
      %v833 = vadd.f32 %v384, %v832
      %v834 = vpop.f32.mrb[0].mxu0
      %835 = vmatprep.mubr.f32.mxu0 %v326
      %836 = vmatmul.mubr.f32.gmra.mrb[0].mxu0 %v325
      %v837 = vpop.f32.mrb[0].mxu0
      %v838 = vadd.f32 %v384, %v837
      %v839 = vpop.f32.mrb[0].mxu0
      %840 = vmatprep.mubr.f32.mxu0 %v328
      %841 = vmatmul.mubr.f32.gmra.mrb[0].mxu0 %v327
      %v842 = vpop.f32.mrb[0].mxu0
      %v843 = vadd.f32 %v384, %v842
      %v844 = vpop.f32.mrb[0].mxu0
      %845 = vmatprep.mubr.f32.mxu0 %v330
      %846 = vmatmul.mubr.f32.gmra.mrb[0].mxu0 %v329
      %v847 = vpop.f32.mrb[0].mxu0
      %v848 = vadd.f32 %v384, %v847
      %v849 = vpop.f32.mrb[0].mxu0
      %850 = vmatprep.mubr.f32.mxu0 %v332
      %851 = vmatmul.mubr.f32.gmra.mrb[0].mxu0 %v331
      %v852 = vpop.f32.mrb[0].mxu0
      %v853 = vadd.f32 %v384, %v852
      %v854 = vpop.f32.mrb[0].mxu0
      %855 = vmatprep.mubr.f32.mxu0 %v334
      %856 = vmatmul.mubr.f32.gmra.mrb[0].mxu0 %v333
      %v857 = vpop.f32.mrb[0].mxu0
      %v858 = vadd.f32 %v384, %v857
      %v859 = vpop.f32.mrb[0].mxu0
      %860 = vmatprep.mubr.f32.mxu0 %v336
      %861 = vmatmul.mubr.f32.gmra.mrb[0].mxu0 %v335
      %v862 = vpop.f32.mrb[0].mxu0
      %v863 = vadd.f32 %v384, %v862
      %v864 = vpop.f32.mrb[0].mxu0
      %865 = vmatprep.mubr.f32.mxu0 %v338
      %866 = vmatmul.mubr.f32.gmra.mrb[0].mxu0 %v337
      %v867 = vpop.f32.mrb[0].mxu0
      %v868 = vadd.f32 %v384, %v867
      %v869 = vpop.f32.mrb[0].mxu0
      %870 = vmatprep.mubr.f32.mxu0 %v340
      %871 = vmatmul.mubr.f32.gmra.mrb[0].mxu0 %v339
      %v872 = vpop.f32.mrb[0].mxu0
      %v873 = vadd.f32 %v384, %v872
      %v874 = vpop.f32.mrb[0].mxu0
      %875 = vmatprep.mubr.f32.mxu0 %v342
      %876 = vmatmul.mubr.f32.gmra.mrb[0].mxu0 %v341
      %v877 = vpop.f32.mrb[0].mxu0
      %v878 = vadd.f32 %v384, %v877
      %v879 = vpop.f32.mrb[0].mxu0
      %880 = vmatprep.mubr.f32.mxu0 %v344
      %881 = vmatmul.mubr.f32.gmra.mrb[0].mxu0 %v343
      %v882 = vpop.f32.mrb[0].mxu0
      %v883 = vadd.f32 %v384, %v882
      %v884 = vpop.f32.mrb[0].mxu0
      %885 = vmatprep.mubr.f32.mxu0 %v346
      %886 = vmatmul.mubr.f32.gmra.mrb[0].mxu0 %v345
      %v887 = vpop.f32.mrb[0].mxu0
      %v888 = vadd.f32 %v384, %v887
      %v889 = vpop.f32.mrb[0].mxu0
      %890 = vdwg.mxu0
      %v891 = vmax.f32 %v453, 0.0
      %v892 = vmax.f32 %v458, 0.0
      %v893 = vmax.f32 %v463, 0.0
      %v894 = vmax.f32 %v468, 0.0
      %v895 = vmax.f32 %v473, 0.0
      %v896 = vmax.f32 %v478, 0.0
      %v897 = vmax.f32 %v483, 0.0
      %v898 = vmax.f32 %v488, 0.0
      %v899 = vmax.f32 %v493, 0.0
      %v900 = vmax.f32 %v498, 0.0
      %v901 = vmax.f32 %v503, 0.0
      %v902 = vmax.f32 %v508, 0.0
      %v903 = vmax.f32 %v513, 0.0
      %v904 = vmax.f32 %v518, 0.0
      %v905 = vmax.f32 %v523, 0.0
      %v906 = vmax.f32 %v528, 0.0
      %v907 = vmax.f32 %v533, 0.0
      %v908 = vmax.f32 %v538, 0.0
      %v909 = vmax.f32 %v543, 0.0
      %v910 = vmax.f32 %v548, 0.0
      %v911 = vmax.f32 %v553, 0.0
      %v912 = vmax.f32 %v558, 0.0
      %v913 = vmax.f32 %v563, 0.0
      %v914 = vmax.f32 %v568, 0.0
      %v915 = vmax.f32 %v573, 0.0
      %v916 = vmax.f32 %v578, 0.0
      %v917 = vmax.f32 %v583, 0.0
      %v918 = vmax.f32 %v588, 0.0
      %v919 = vmax.f32 %v593, 0.0
      %v920 = vmax.f32 %v598, 0.0
      %v921 = vmax.f32 %v603, 0.0
      %v922 = vmax.f32 %v608, 0.0
      %v923 = vmax.f32 %v613, 0.0
      %v924 = vmax.f32 %v618, 0.0
      %v925 = vmax.f32 %v623, 0.0
      %v926 = vmax.f32 %v628, 0.0
      %v927 = vmax.f32 %v633, 0.0
      %v928 = vmax.f32 %v638, 0.0
      %v929 = vmax.f32 %v643, 0.0
      %v930 = vmax.f32 %v648, 0.0
      %v931 = vmax.f32 %v653, 0.0
      %v932 = vmax.f32 %v658, 0.0
      %v933 = vmax.f32 %v663, 0.0
      %v934 = vmax.f32 %v668, 0.0
      %v935 = vmax.f32 %v673, 0.0
      %v936 = vmax.f32 %v678, 0.0
      %v937 = vmax.f32 %v683, 0.0
      %v938 = vmax.f32 %v688, 0.0
      %v939 = vmax.f32 %v693, 0.0
      %v940 = vmax.f32 %v698, 0.0
      %v941 = vmax.f32 %v703, 0.0
      %v942 = vmax.f32 %v708, 0.0
      %v943 = vmax.f32 %v713, 0.0
      %v944 = vmax.f32 %v718, 0.0
      %v945 = vmax.f32 %v723, 0.0
      %v946 = vmax.f32 %v728, 0.0
      %v947 = vmax.f32 %v733, 0.0
      %v948 = vmax.f32 %v738, 0.0
      %v949 = vmax.f32 %v743, 0.0
      %v950 = vmax.f32 %v748, 0.0
      %v951 = vmax.f32 %v753, 0.0
      %v952 = vmax.f32 %v758, 0.0
      %v953 = vmax.f32 %v763, 0.0
      %v954 = vmax.f32 %v768, 0.0
      %v955 = vmax.f32 %v773, 0.0
      %v956 = vmax.f32 %v778, 0.0
      %v957 = vmax.f32 %v783, 0.0
      %v958 = vmax.f32 %v788, 0.0
      %v959 = vmax.f32 %v793, 0.0
      %v960 = vmax.f32 %v798, 0.0
      %v961 = vmax.f32 %v803, 0.0
      %v962 = vmax.f32 %v808, 0.0
      %v963 = vmax.f32 %v813, 0.0
      %v964 = vmax.f32 %v818, 0.0
      %v965 = vmax.f32 %v823, 0.0
      %v966 = vmax.f32 %v828, 0.0
      %v967 = vmax.f32 %v833, 0.0
      %v968 = vmax.f32 %v838, 0.0
      %v969 = vmax.f32 %v843, 0.0
      %v970 = vmax.f32 %v848, 0.0
      %v971 = vmax.f32 %v853, 0.0
      %v972 = vmax.f32 %v858, 0.0
      %v973 = vmax.f32 %v863, 0.0
      %v974 = vmax.f32 %v868, 0.0
      %v975 = vmax.f32 %v873, 0.0
      %v976 = vmax.f32 %v878, 0.0
      %v977 = vmax.f32 %v883, 0.0
      %v978 = vmax.f32 %v888, 0.0
      %v979 = vmax.f32 %v891, %v913
      %v980 = vmax.f32 %v892, %v914
      %v981 = vmax.f32 %v893, %v915
      %v982 = vmax.f32 %v894, %v916
      %v983 = vmax.f32 %v895, %v917
      %v984 = vmax.f32 %v896, %v918
      %v985 = vmax.f32 %v897, %v919
      %v986 = vmax.f32 %v898, %v920
      %v987 = vmax.f32 %v899, %v921
      %v988 = vmax.f32 %v900, %v922
      %v989 = vmax.f32 %v901, %v923
      %v990 = vmax.f32 %v902, %v924
      %v991 = vmax.f32 %v903, %v925
      %v992 = vmax.f32 %v904, %v926
      %v993 = vmax.f32 %v905, %v927
      %v994 = vmax.f32 %v906, %v928
      %v995 = vmax.f32 %v907, %v929
      %v996 = vmax.f32 %v908, %v930
      %v997 = vmax.f32 %v909, %v931
      %v998 = vmax.f32 %v910, %v932
      %v999 = vmax.f32 %v911, %v933
      %v1000 = vmax.f32 %v912, %v934
      %v1001 = vmax.f32 %v935, %v957
      %v1002 = vmax.f32 %v936, %v958
      %v1003 = vmax.f32 %v937, %v959
      %v1004 = vmax.f32 %v938, %v960
      %v1005 = vmax.f32 %v939, %v961
      %v1006 = vmax.f32 %v940, %v962
      %v1007 = vmax.f32 %v941, %v963
      %v1008 = vmax.f32 %v942, %v964
      %v1009 = vmax.f32 %v943, %v965
      %v1010 = vmax.f32 %v944, %v966
      %v1011 = vmax.f32 %v945, %v967
      %v1012 = vmax.f32 %v946, %v968
      %v1013 = vmax.f32 %v947, %v969
      %v1014 = vmax.f32 %v948, %v970
      %v1015 = vmax.f32 %v949, %v971
      %v1016 = vmax.f32 %v950, %v972
      %v1017 = vmax.f32 %v951, %v973
      %v1018 = vmax.f32 %v952, %v974
      %v1019 = vmax.f32 %v953, %v975
      %v1020 = vmax.f32 %v954, %v976
      %v1021 = vmax.f32 %v955, %v977
      %v1022 = vmax.f32 %v956, %v978
      %v1023 = vmax.f32 %v979, %v1001
      %v1024 = vmax.f32 %v980, %v1002
      %v1025 = vmax.f32 %v981, %v1003
      %v1026 = vmax.f32 %v982, %v1004
      %v1027 = vmax.f32 %v983, %v1005
      %v1028 = vmax.f32 %v984, %v1006
      %v1029 = vmax.f32 %v985, %v1007
      %v1030 = vmax.f32 %v986, %v1008
      %v1031 = vmax.f32 %v987, %v1009
      %v1032 = vmax.f32 %v988, %v1010
      %v1033 = vmax.f32 %v989, %v1011
      %v1034 = vmax.f32 %v990, %v1012
      %v1035 = vmax.f32 %v991, %v1013
      %v1036 = vmax.f32 %v992, %v1014
      %v1037 = vmax.f32 %v993, %v1015
      %v1038 = vmax.f32 %v994, %v1016
      %v1039 = vmax.f32 %v995, %v1017
      %v1040 = vmax.f32 %v996, %v1018
      %v1041 = vmax.f32 %v997, %v1019
      %v1042 = vmax.f32 %v998, %v1020
      %v1043 = vmax.f32 %v999, %v1021
      %v1044 = vmax.f32 %v1000, %v1022
      %1045 = vst [vmem:[%s170] sm:$0xff] %v1023
      %1046 = vst [vmem:[%s170 + $0x8] sm:$0xff] %v1024
      %1047 = vst [vmem:[%s170 + $0x10] sm:$0xff] %v1025
      %1048 = vst [vmem:[%s170 + $0x18] sm:$0xff] %v1026
      %1049 = vst [vmem:[%s170 + $0x20] sm:$0xff] %v1027
      %1050 = vst [vmem:[%s170 + $0x28] sm:$0xff] %v1028
      %1051 = vst [vmem:[%s170 + $0x30] sm:$0xff] %v1029
      %1052 = vst [vmem:[%s170 + $0x38] sm:$0xff] %v1030
      %1053 = vst [vmem:[%s170 + $0x40] sm:$0xff] %v1031
      %1054 = vst [vmem:[%s170 + $0x48] sm:$0xff] %v1032
      %1055 = vst [vmem:[%s170 + $0x50] sm:$0xff] %v1033
      %1056 = vst [vmem:[%s170 + $0x58] sm:$0xff] %v1034
      %1057 = vst [vmem:[%s170 + $0x60] sm:$0xff] %v1035
      %1058 = vst [vmem:[%s170 + $0x68] sm:$0xff] %v1036
      %1059 = vst [vmem:[%s170 + $0x70] sm:$0xff] %v1037
      %1060 = vst [vmem:[%s170 + $0x78] sm:$0xff] %v1038
      %1061 = vst [vmem:[%s170 + $0x80] sm:$0xff] %v1039
      %1062 = vst [vmem:[%s170 + $0x88] sm:$0xff] %v1040
      %1063 = vst [vmem:[%s170 + $0x90] sm:$0xff] %v1041
      %1064 = vst [vmem:[%s170 + $0x98] sm:$0xff] %v1042
      %1065 = vst [vmem:[%s170 + $0xa0] sm:$0xff] %v1043
      %1066 = vst [vmem:[%s170 + $0xa8] sm:$0xff] %v1044
      %p1067 = scmp.lt.s32.totalorder %s14, 1
      %s1068 = scalar_select %p1067, %s14, 1
      %s1069 = smul.addr %s1068, 22
      %s1070 = smul.addr %s1069, 8
      %s1071 = scalar_lea.vmem %s3, %s1070
      // Predicated region
      $region33: #{classification_network_forward.4} parent=31 // pred_check
        %p1072 = pneg %p100
      $region34: #{classification_network_forward.4} parent=31 // pred_check_branch
        %1074 = sbr.rel (%p1072) target = $region36
      $region35: #{classification_network_forward.4} parent=31 // pred_region
        _
      $region36: #{classification_network_forward.4} parent=31 // pred_fallthru
        _
    $region32: #{classification_network_forward.4} parent=5 // pred_fallthru
      _
    %p1075 = scmp.le.s32.totalorder 2, %s9
    // Predicated region
    $region37: #{classification_network_forward.4} parent=5 // pred_check
      %p1076 = pneg %p1075
    $region38: #{classification_network_forward.4} parent=5 // pred_check_branch
      %1078 = sbr.rel (%p1076) target = $region40
    $region39: #{classification_network_forward.4} parent=5 // pred_region
      %s1079 = ssub.s32 %s9, 2
      // Predicated region
      $region41: #{classification_network_forward.4} parent=39 // pred_check
        %p1080 = pneg %p106
      $region42: #{classification_network_forward.4} parent=39 // pred_check_branch
        %1082 = sbr.rel (%p1080) target = $region44
      $region43: #{classification_network_forward.4} parent=39 // pred_region
        %p1083 = scmp.lt.s32.totalorder %s15, 1
        %s1084 = scalar_select %p1083, %s15, 1
        %s1085 = smul.addr %s1084, 22
        %s1086 = smul.addr %s1085, 8
        %s1087 = scalar_lea.vmem %s3, %s1086
      $region44: #{classification_network_forward.4} parent=39 // pred_fallthru
        _
    $region40: #{classification_network_forward.4} parent=5 // pred_fallthru
      _
  $region6: #{classification_network_forward.4} parent=0 // loop_footer
    %s13 = sadd.s32 1, %s9
  $region7: #{classification_network_forward.4} parent=0 // loop_footer_branch
    %8 = sbr.rel target = $region3
  $region8: #{classification_network_forward.4} parent=0 // loop_exit
    _

// kernel: classification_network_forward.5
$region0: #{classification_network_forward.5}
  #allocation0 [shape = 'u32[]', space=smem, size = 0x4, offset = 0x4, fixed_abs, tag = 'smem constant byte address 0x4 - core index']
  #allocation1 [shape = 'u32[144,128]{1,0:T(1,128)}', space=vmem, size = 0x12000, scoped, tag = 'internal scratch']
  %s0 = inlined_call_operand.vmem [shape: f32[8,5408], index: 0, kind: input, shape index: {}]
  %s1 = inlined_call_operand.vmem [shape: f32[5408,128], index: 1, kind: input, shape index: {}]
  %s2 = inlined_call_operand.vmem [shape: f32[1,128], index: 2, kind: input, shape index: {}]
  %s3 = inlined_call_operand.vmem [shape: f32[128,128], index: 3, kind: input, shape index: {}]
  %s4 = inlined_call_operand.vmem [shape: f32[1,128], index: 4, kind: input, shape index: {}]
  %s5 = inlined_call_operand.vmem [shape: f32[8,128], index: 5, kind: output, shape index: {}]
  %s6 = sld [smem:[#allocation0]]
  $region30: #{classification_network_forward.5} parent=0
    _
  %s8 = ssub.s32 1, %s6
  %s9 = scalar_select 0, %s8, %s6
  // Predicated region
  $region2: #{classification_network_forward.5} parent=0 // pred_check
    _
  $region3: #{classification_network_forward.5} parent=0 // pred_check_branch
    %11 = sbr.rel (0) target = $region5
  $region4: #{classification_network_forward.5} parent=0 // pred_region
    _
  $region5: #{classification_network_forward.5} parent=0 // pred_fallthru
    _
  // Predicated region
  $region6: #{classification_network_forward.5} parent=0 // pred_check
    _
  $region7: #{classification_network_forward.5} parent=0 // pred_check_branch
    %13 = sbr.rel (0) target = $region9
  $region8: #{classification_network_forward.5} parent=0 // pred_region
    _
  $region9: #{classification_network_forward.5} parent=0 // pred_fallthru
    _
  // Predicated region
  $region10: #{classification_network_forward.5} parent=0 // pred_check
    _
  $region11: #{classification_network_forward.5} parent=0 // pred_check_branch
    %15 = sbr.rel (0) target = $region13
  $region12: #{classification_network_forward.5} parent=0 // pred_region
    _
  $region13: #{classification_network_forward.5} parent=0 // pred_fallthru
    _
  // Predicated region
  $region14: #{classification_network_forward.5} parent=0 // pred_check
    _
  $region15: #{classification_network_forward.5} parent=0 // pred_check_branch
    %17 = sbr.rel (0) target = $region17
  $region16: #{classification_network_forward.5} parent=0 // pred_region
    _
  $region17: #{classification_network_forward.5} parent=0 // pred_fallthru
    _
  // Predicated region
  $region18: #{classification_network_forward.5} parent=0 // pred_check
    _
  $region19: #{classification_network_forward.5} parent=0 // pred_check_branch
    %19 = sbr.rel (0) target = $region21
  $region20: #{classification_network_forward.5} parent=0 // pred_region
    _
  $region21: #{classification_network_forward.5} parent=0 // pred_fallthru
    _
  %v20 = vld [vmem:[%s0] sm:$0xff]
  %v21 = vld [vmem:[%s0 + $0x8] sm:$0xff]
  %v22 = vld [vmem:[%s0 + $0x10] sm:$0xff]
  %v23 = vld [vmem:[%s0 + $0x18] sm:$0xff]
  %v24 = vld [vmem:[%s0 + $0x20] sm:$0xff]
  %v25 = vld [vmem:[%s0 + $0x28] sm:$0xff]
  %v26 = vld [vmem:[%s0 + $0x30] sm:$0xff]
  %v27 = vld [vmem:[%s0 + $0x38] sm:$0xff]
  %v28 = vld [vmem:[%s0 + $0x40] sm:$0xff]
  %v29 = vld [vmem:[%s0 + $0x48] sm:$0xff]
  %v30 = vld [vmem:[%s0 + $0x50] sm:$0xff]
  %v31 = vld [vmem:[%s0 + $0x58] sm:$0xff]
  %v32 = vld [vmem:[%s0 + $0x60] sm:$0xff]
  %v33 = vld [vmem:[%s0 + $0x68] sm:$0xff]
  %v34 = vld [vmem:[%s0 + $0x70] sm:$0xff]
  %v35 = vld [vmem:[%s0 + $0x78] sm:$0xff]
  %v36 = vld [vmem:[%s0 + $0x80] sm:$0xff]
  %v37 = vld [vmem:[%s0 + $0x88] sm:$0xff]
  %v38 = vld [vmem:[%s0 + $0x90] sm:$0xff]
  %v39 = vld [vmem:[%s0 + $0x98] sm:$0xff]
  %v40 = vld [vmem:[%s0 + $0xa0] sm:$0xff]
  %v41 = vld [vmem:[%s0 + $0xa8] sm:$0xff]
  %v42 = vld [vmem:[%s0 + $0xb0] sm:$0xff]
  %v43 = vld [vmem:[%s0 + $0xb8] sm:$0xff]
  %v44 = vld [vmem:[%s0 + $0xc0] sm:$0xff]
  %v45 = vld [vmem:[%s0 + $0xc8] sm:$0xff]
  %v46 = vld [vmem:[%s0 + $0xd0] sm:$0xff]
  %v47 = vld [vmem:[%s0 + $0xd8] sm:$0xff]
  %v48 = vld [vmem:[%s0 + $0xe0] sm:$0xff]
  %v49 = vld [vmem:[%s0 + $0xe8] sm:$0xff]
  %v50 = vld [vmem:[%s0 + $0xf0] sm:$0xff]
  %v51 = vld [vmem:[%s0 + $0xf8] sm:$0xff]
  %v52 = vld [vmem:[%s0 + $0x100] sm:$0xff]
  %v53 = vld [vmem:[%s0 + $0x108] sm:$0xff]
  %v54 = vld [vmem:[%s0 + $0x110] sm:$0xff]
  %v55 = vld [vmem:[%s0 + $0x118] sm:$0xff]
  %v56 = vld [vmem:[%s0 + $0x120] sm:$0xff]
  %v57 = vld [vmem:[%s0 + $0x128] sm:$0xff]
  %v58 = vld [vmem:[%s0 + $0x130] sm:$0xff]
  %v59 = vld [vmem:[%s0 + $0x138] sm:$0xff]
  %v60 = vld [vmem:[%s0 + $0x140] sm:$0xff]
  %v61 = vld [vmem:[%s0 + $0x148] sm:$0xff]
  %v62 = vld [vmem:[%s0 + $0x150] sm:$0xff]
  %v63 = vld [vmem:[%s1] sm:$0xff]
  %v64 = vld [vmem:[%s1 + $0x8] sm:$0xff]
  %v65 = vld [vmem:[%s1 + $0x10] sm:$0xff]
  %v66 = vld [vmem:[%s1 + $0x18] sm:$0xff]
  %v67 = vld [vmem:[%s1 + $0x20] sm:$0xff]
  %v68 = vld [vmem:[%s1 + $0x28] sm:$0xff]
  %v69 = vld [vmem:[%s1 + $0x30] sm:$0xff]
  %v70 = vld [vmem:[%s1 + $0x38] sm:$0xff]
  %v71 = vld [vmem:[%s1 + $0x40] sm:$0xff]
  %v72 = vld [vmem:[%s1 + $0x48] sm:$0xff]
  %v73 = vld [vmem:[%s1 + $0x50] sm:$0xff]
  %v74 = vld [vmem:[%s1 + $0x58] sm:$0xff]
  %v75 = vld [vmem:[%s1 + $0x60] sm:$0xff]
  %v76 = vld [vmem:[%s1 + $0x68] sm:$0xff]
  %v77 = vld [vmem:[%s1 + $0x70] sm:$0xff]
  %v78 = vld [vmem:[%s1 + $0x78] sm:$0xff]
  %v79 = vld [vmem:[%s1 + $0x80] sm:$0xff]
  %v80 = vld [vmem:[%s1 + $0x88] sm:$0xff]
  %v81 = vld [vmem:[%s1 + $0x90] sm:$0xff]
  %v82 = vld [vmem:[%s1 + $0x98] sm:$0xff]
  %v83 = vld [vmem:[%s1 + $0xa0] sm:$0xff]
  %v84 = vld [vmem:[%s1 + $0xa8] sm:$0xff]
  %v85 = vld [vmem:[%s1 + $0xb0] sm:$0xff]
  %v86 = vld [vmem:[%s1 + $0xb8] sm:$0xff]
  %v87 = vld [vmem:[%s1 + $0xc0] sm:$0xff]
  %v88 = vld [vmem:[%s1 + $0xc8] sm:$0xff]
  %v89 = vld [vmem:[%s1 + $0xd0] sm:$0xff]
  %v90 = vld [vmem:[%s1 + $0xd8] sm:$0xff]
  %v91 = vld [vmem:[%s1 + $0xe0] sm:$0xff]
  %v92 = vld [vmem:[%s1 + $0xe8] sm:$0xff]
  %v93 = vld [vmem:[%s1 + $0xf0] sm:$0xff]
  %v94 = vld [vmem:[%s1 + $0xf8] sm:$0xff]
  %v95 = vld [vmem:[%s1 + $0x100] sm:$0xff]
  %v96 = vld [vmem:[%s1 + $0x108] sm:$0xff]
  %v97 = vld [vmem:[%s1 + $0x110] sm:$0xff]
  %v98 = vld [vmem:[%s1 + $0x118] sm:$0xff]
  %v99 = vld [vmem:[%s1 + $0x120] sm:$0xff]
  %v100 = vld [vmem:[%s1 + $0x128] sm:$0xff]
  %v101 = vld [vmem:[%s1 + $0x130] sm:$0xff]
  %v102 = vld [vmem:[%s1 + $0x138] sm:$0xff]
  %v103 = vld [vmem:[%s1 + $0x140] sm:$0xff]
  %v104 = vld [vmem:[%s1 + $0x148] sm:$0xff]
  %v105 = vld [vmem:[%s1 + $0x150] sm:$0xff]
  %v106 = vld [vmem:[%s1 + $0x158] sm:$0xff]
  %v107 = vld [vmem:[%s1 + $0x160] sm:$0xff]
  %v108 = vld [vmem:[%s1 + $0x168] sm:$0xff]
  %v109 = vld [vmem:[%s1 + $0x170] sm:$0xff]
  %v110 = vld [vmem:[%s1 + $0x178] sm:$0xff]
  %v111 = vld [vmem:[%s1 + $0x180] sm:$0xff]
  %v112 = vld [vmem:[%s1 + $0x188] sm:$0xff]
  %v113 = vld [vmem:[%s1 + $0x190] sm:$0xff]
  %v114 = vld [vmem:[%s1 + $0x198] sm:$0xff]
  %v115 = vld [vmem:[%s1 + $0x1a0] sm:$0xff]
  %v116 = vld [vmem:[%s1 + $0x1a8] sm:$0xff]
  %v117 = vld [vmem:[%s1 + $0x1b0] sm:$0xff]
  %v118 = vld [vmem:[%s1 + $0x1b8] sm:$0xff]
  %v119 = vld [vmem:[%s1 + $0x1c0] sm:$0xff]
  %v120 = vld [vmem:[%s1 + $0x1c8] sm:$0xff]
  %v121 = vld [vmem:[%s1 + $0x1d0] sm:$0xff]
  %v122 = vld [vmem:[%s1 + $0x1d8] sm:$0xff]
  %v123 = vld [vmem:[%s1 + $0x1e0] sm:$0xff]
  %v124 = vld [vmem:[%s1 + $0x1e8] sm:$0xff]
  %v125 = vld [vmem:[%s1 + $0x1f0] sm:$0xff]
  %v126 = vld [vmem:[%s1 + $0x1f8] sm:$0xff]
  %v127 = vld [vmem:[%s1 + $0x200] sm:$0xff]
  %v128 = vld [vmem:[%s1 + $0x208] sm:$0xff]
  %v129 = vld [vmem:[%s1 + $0x210] sm:$0xff]
  %v130 = vld [vmem:[%s1 + $0x218] sm:$0xff]
  %v131 = vld [vmem:[%s1 + $0x220] sm:$0xff]
  %v132 = vld [vmem:[%s1 + $0x228] sm:$0xff]
  %v133 = vld [vmem:[%s1 + $0x230] sm:$0xff]
  %v134 = vld [vmem:[%s1 + $0x238] sm:$0xff]
  %v135 = vld [vmem:[%s1 + $0x240] sm:$0xff]
  %v136 = vld [vmem:[%s1 + $0x248] sm:$0xff]
  %v137 = vld [vmem:[%s1 + $0x250] sm:$0xff]
  %v138 = vld [vmem:[%s1 + $0x258] sm:$0xff]
  %v139 = vld [vmem:[%s1 + $0x260] sm:$0xff]
  %v140 = vld [vmem:[%s1 + $0x268] sm:$0xff]
  %v141 = vld [vmem:[%s1 + $0x270] sm:$0xff]
  %v142 = vld [vmem:[%s1 + $0x278] sm:$0xff]
  %v143 = vld [vmem:[%s1 + $0x280] sm:$0xff]
  %v144 = vld [vmem:[%s1 + $0x288] sm:$0xff]
  %v145 = vld [vmem:[%s1 + $0x290] sm:$0xff]
  %v146 = vld [vmem:[%s1 + $0x298] sm:$0xff]
  %v147 = vld [vmem:[%s1 + $0x2a0] sm:$0xff]
  %v148 = vld [vmem:[%s1 + $0x2a8] sm:$0xff]
  %v149 = vld [vmem:[%s1 + $0x2b0] sm:$0xff]
  %v150 = vld [vmem:[%s1 + $0x2b8] sm:$0xff]
  %v151 = vld [vmem:[%s1 + $0x2c0] sm:$0xff]
  %v152 = vld [vmem:[%s1 + $0x2c8] sm:$0xff]
  %v153 = vld [vmem:[%s1 + $0x2d0] sm:$0xff]
  %v154 = vld [vmem:[%s1 + $0x2d8] sm:$0xff]
  %v155 = vld [vmem:[%s1 + $0x2e0] sm:$0xff]
  %v156 = vld [vmem:[%s1 + $0x2e8] sm:$0xff]
  %v157 = vld [vmem:[%s1 + $0x2f0] sm:$0xff]
  %v158 = vld [vmem:[%s1 + $0x2f8] sm:$0xff]
  %v159 = vld [vmem:[%s1 + $0x300] sm:$0xff]
  %v160 = vld [vmem:[%s1 + $0x308] sm:$0xff]
  %v161 = vld [vmem:[%s1 + $0x310] sm:$0xff]
  %v162 = vld [vmem:[%s1 + $0x318] sm:$0xff]
  %v163 = vld [vmem:[%s1 + $0x320] sm:$0xff]
  %v164 = vld [vmem:[%s1 + $0x328] sm:$0xff]
  %v165 = vld [vmem:[%s1 + $0x330] sm:$0xff]
  %v166 = vld [vmem:[%s1 + $0x338] sm:$0xff]
  %v167 = vld [vmem:[%s1 + $0x340] sm:$0xff]
  %v168 = vld [vmem:[%s1 + $0x348] sm:$0xff]
  %v169 = vld [vmem:[%s1 + $0x350] sm:$0xff]
  %v170 = vld [vmem:[%s1 + $0x358] sm:$0xff]
  %v171 = vld [vmem:[%s1 + $0x360] sm:$0xff]
  %v172 = vld [vmem:[%s1 + $0x368] sm:$0xff]
  %v173 = vld [vmem:[%s1 + $0x370] sm:$0xff]
  %v174 = vld [vmem:[%s1 + $0x378] sm:$0xff]
  %v175 = vld [vmem:[%s1 + $0x380] sm:$0xff]
  %v176 = vld [vmem:[%s1 + $0x388] sm:$0xff]
  %v177 = vld [vmem:[%s1 + $0x390] sm:$0xff]
  %v178 = vld [vmem:[%s1 + $0x398] sm:$0xff]
  %v179 = vld [vmem:[%s1 + $0x3a0] sm:$0xff]
  %v180 = vld [vmem:[%s1 + $0x3a8] sm:$0xff]
  %v181 = vld [vmem:[%s1 + $0x3b0] sm:$0xff]
  %v182 = vld [vmem:[%s1 + $0x3b8] sm:$0xff]
  %v183 = vld [vmem:[%s1 + $0x3c0] sm:$0xff]
  %v184 = vld [vmem:[%s1 + $0x3c8] sm:$0xff]
  %v185 = vld [vmem:[%s1 + $0x3d0] sm:$0xff]
  %v186 = vld [vmem:[%s1 + $0x3d8] sm:$0xff]
  %v187 = vld [vmem:[%s1 + $0x3e0] sm:$0xff]
  %v188 = vld [vmem:[%s1 + $0x3e8] sm:$0xff]
  %v189 = vld [vmem:[%s1 + $0x3f0] sm:$0xff]
  %v190 = vld [vmem:[%s1 + $0x3f8] sm:$0xff]
  %v191 = vld [vmem:[%s1 + $0x400] sm:$0xff]
  %v192 = vld [vmem:[%s1 + $0x408] sm:$0xff]
  %v193 = vld [vmem:[%s1 + $0x410] sm:$0xff]
  %v194 = vld [vmem:[%s1 + $0x418] sm:$0xff]
  %v195 = vld [vmem:[%s1 + $0x420] sm:$0xff]
  %v196 = vld [vmem:[%s1 + $0x428] sm:$0xff]
  %v197 = vld [vmem:[%s1 + $0x430] sm:$0xff]
  %v198 = vld [vmem:[%s1 + $0x438] sm:$0xff]
  %v199 = vld [vmem:[%s1 + $0x440] sm:$0xff]
  %v200 = vld [vmem:[%s1 + $0x448] sm:$0xff]
  %v201 = vld [vmem:[%s1 + $0x450] sm:$0xff]
  %v202 = vld [vmem:[%s1 + $0x458] sm:$0xff]
  %v203 = vld [vmem:[%s1 + $0x460] sm:$0xff]
  %v204 = vld [vmem:[%s1 + $0x468] sm:$0xff]
  %v205 = vld [vmem:[%s1 + $0x470] sm:$0xff]
  %v206 = vld [vmem:[%s1 + $0x478] sm:$0xff]
  %v207 = vld [vmem:[%s1 + $0x480] sm:$0xff]
  %v208 = vld [vmem:[%s1 + $0x488] sm:$0xff]
  %v209 = vld [vmem:[%s1 + $0x490] sm:$0xff]
  %v210 = vld [vmem:[%s1 + $0x498] sm:$0xff]
  %v211 = vld [vmem:[%s1 + $0x4a0] sm:$0xff]
  %v212 = vld [vmem:[%s1 + $0x4a8] sm:$0xff]
  %v213 = vld [vmem:[%s1 + $0x4b0] sm:$0xff]
  %v214 = vld [vmem:[%s1 + $0x4b8] sm:$0xff]
  %v215 = vld [vmem:[%s1 + $0x4c0] sm:$0xff]
  %v216 = vld [vmem:[%s1 + $0x4c8] sm:$0xff]
  %v217 = vld [vmem:[%s1 + $0x4d0] sm:$0xff]
  %v218 = vld [vmem:[%s1 + $0x4d8] sm:$0xff]
  %v219 = vld [vmem:[%s1 + $0x4e0] sm:$0xff]
  %v220 = vld [vmem:[%s1 + $0x4e8] sm:$0xff]
  %v221 = vld [vmem:[%s1 + $0x4f0] sm:$0xff]
  %v222 = vld [vmem:[%s1 + $0x4f8] sm:$0xff]
  %v223 = vld [vmem:[%s1 + $0x500] sm:$0xff]
  %v224 = vld [vmem:[%s1 + $0x508] sm:$0xff]
  %v225 = vld [vmem:[%s1 + $0x510] sm:$0xff]
  %v226 = vld [vmem:[%s1 + $0x518] sm:$0xff]
  %v227 = vld [vmem:[%s1 + $0x520] sm:$0xff]
  %v228 = vld [vmem:[%s1 + $0x528] sm:$0xff]
  %v229 = vld [vmem:[%s1 + $0x530] sm:$0xff]
  %v230 = vld [vmem:[%s1 + $0x538] sm:$0xff]
  %v231 = vld [vmem:[%s1 + $0x540] sm:$0xff]
  %v232 = vld [vmem:[%s1 + $0x548] sm:$0xff]
  %v233 = vld [vmem:[%s1 + $0x550] sm:$0xff]
  %v234 = vld [vmem:[%s1 + $0x558] sm:$0xff]
  %v235 = vld [vmem:[%s1 + $0x560] sm:$0xff]
  %v236 = vld [vmem:[%s1 + $0x568] sm:$0xff]
  %v237 = vld [vmem:[%s1 + $0x570] sm:$0xff]
  %v238 = vld [vmem:[%s1 + $0x578] sm:$0xff]
  %v239 = vld [vmem:[%s1 + $0x580] sm:$0xff]
  %v240 = vld [vmem:[%s1 + $0x588] sm:$0xff]
  %v241 = vld [vmem:[%s1 + $0x590] sm:$0xff]
  %v242 = vld [vmem:[%s1 + $0x598] sm:$0xff]
  %v243 = vld [vmem:[%s1 + $0x5a0] sm:$0xff]
  %v244 = vld [vmem:[%s1 + $0x5a8] sm:$0xff]
  %v245 = vld [vmem:[%s1 + $0x5b0] sm:$0xff]
  %v246 = vld [vmem:[%s1 + $0x5b8] sm:$0xff]
  %v247 = vld [vmem:[%s1 + $0x5c0] sm:$0xff]
  %v248 = vld [vmem:[%s1 + $0x5c8] sm:$0xff]
  %v249 = vld [vmem:[%s1 + $0x5d0] sm:$0xff]
  %v250 = vld [vmem:[%s1 + $0x5d8] sm:$0xff]
  %v251 = vld [vmem:[%s1 + $0x5e0] sm:$0xff]
  %v252 = vld [vmem:[%s1 + $0x5e8] sm:$0xff]
  %v253 = vld [vmem:[%s1 + $0x5f0] sm:$0xff]
  %v254 = vld [vmem:[%s1 + $0x5f8] sm:$0xff]
  %v255 = vld [vmem:[%s1 + $0x600] sm:$0xff]
  %v256 = vld [vmem:[%s1 + $0x608] sm:$0xff]
  %v257 = vld [vmem:[%s1 + $0x610] sm:$0xff]
  %v258 = vld [vmem:[%s1 + $0x618] sm:$0xff]
  %v259 = vld [vmem:[%s1 + $0x620] sm:$0xff]
  %v260 = vld [vmem:[%s1 + $0x628] sm:$0xff]
  %v261 = vld [vmem:[%s1 + $0x630] sm:$0xff]
  %v262 = vld [vmem:[%s1 + $0x638] sm:$0xff]
  %v263 = vld [vmem:[%s1 + $0x640] sm:$0xff]
  %v264 = vld [vmem:[%s1 + $0x648] sm:$0xff]
  %v265 = vld [vmem:[%s1 + $0x650] sm:$0xff]
  %v266 = vld [vmem:[%s1 + $0x658] sm:$0xff]
  %v267 = vld [vmem:[%s1 + $0x660] sm:$0xff]
  %v268 = vld [vmem:[%s1 + $0x668] sm:$0xff]
  %v269 = vld [vmem:[%s1 + $0x670] sm:$0xff]
  %v270 = vld [vmem:[%s1 + $0x678] sm:$0xff]
  %v271 = vld [vmem:[%s1 + $0x680] sm:$0xff]
  %v272 = vld [vmem:[%s1 + $0x688] sm:$0xff]
  %v273 = vld [vmem:[%s1 + $0x690] sm:$0xff]
  %v274 = vld [vmem:[%s1 + $0x698] sm:$0xff]
  %v275 = vld [vmem:[%s1 + $0x6a0] sm:$0xff]
  %v276 = vld [vmem:[%s1 + $0x6a8] sm:$0xff]
  %v277 = vld [vmem:[%s1 + $0x6b0] sm:$0xff]
  %v278 = vld [vmem:[%s1 + $0x6b8] sm:$0xff]
  %v279 = vld [vmem:[%s1 + $0x6c0] sm:$0xff]
  %v280 = vld [vmem:[%s1 + $0x6c8] sm:$0xff]
  %v281 = vld [vmem:[%s1 + $0x6d0] sm:$0xff]
  %v282 = vld [vmem:[%s1 + $0x6d8] sm:$0xff]
  %v283 = vld [vmem:[%s1 + $0x6e0] sm:$0xff]
  %v284 = vld [vmem:[%s1 + $0x6e8] sm:$0xff]
  %v285 = vld [vmem:[%s1 + $0x6f0] sm:$0xff]
  %v286 = vld [vmem:[%s1 + $0x6f8] sm:$0xff]
  %v287 = vld [vmem:[%s1 + $0x700] sm:$0xff]
  %v288 = vld [vmem:[%s1 + $0x708] sm:$0xff]
  %v289 = vld [vmem:[%s1 + $0x710] sm:$0xff]
  %v290 = vld [vmem:[%s1 + $0x718] sm:$0xff]
  %v291 = vld [vmem:[%s1 + $0x720] sm:$0xff]
  %v292 = vld [vmem:[%s1 + $0x728] sm:$0xff]
  %v293 = vld [vmem:[%s1 + $0x730] sm:$0xff]
  %v294 = vld [vmem:[%s1 + $0x738] sm:$0xff]
  %v295 = vld [vmem:[%s1 + $0x740] sm:$0xff]
  %v296 = vld [vmem:[%s1 + $0x748] sm:$0xff]
  %v297 = vld [vmem:[%s1 + $0x750] sm:$0xff]
  %v298 = vld [vmem:[%s1 + $0x758] sm:$0xff]
  %v299 = vld [vmem:[%s1 + $0x760] sm:$0xff]
  %v300 = vld [vmem:[%s1 + $0x768] sm:$0xff]
  %v301 = vld [vmem:[%s1 + $0x770] sm:$0xff]
  %v302 = vld [vmem:[%s1 + $0x778] sm:$0xff]
  %v303 = vld [vmem:[%s1 + $0x780] sm:$0xff]
  %v304 = vld [vmem:[%s1 + $0x788] sm:$0xff]
  %v305 = vld [vmem:[%s1 + $0x790] sm:$0xff]
  %v306 = vld [vmem:[%s1 + $0x798] sm:$0xff]
  %v307 = vld [vmem:[%s1 + $0x7a0] sm:$0xff]
  %v308 = vld [vmem:[%s1 + $0x7a8] sm:$0xff]
  %v309 = vld [vmem:[%s1 + $0x7b0] sm:$0xff]
  %v310 = vld [vmem:[%s1 + $0x7b8] sm:$0xff]
  %v311 = vld [vmem:[%s1 + $0x7c0] sm:$0xff]
  %v312 = vld [vmem:[%s1 + $0x7c8] sm:$0xff]
  %v313 = vld [vmem:[%s1 + $0x7d0] sm:$0xff]
  %v314 = vld [vmem:[%s1 + $0x7d8] sm:$0xff]
  %v315 = vld [vmem:[%s1 + $0x7e0] sm:$0xff]
  %v316 = vld [vmem:[%s1 + $0x7e8] sm:$0xff]
  %v317 = vld [vmem:[%s1 + $0x7f0] sm:$0xff]
  %v318 = vld [vmem:[%s1 + $0x7f8] sm:$0xff]
  %v319 = vld [vmem:[%s1 + $0x800] sm:$0xff]
  %v320 = vld [vmem:[%s1 + $0x808] sm:$0xff]
  %v321 = vld [vmem:[%s1 + $0x810] sm:$0xff]
  %v322 = vld [vmem:[%s1 + $0x818] sm:$0xff]
  %v323 = vld [vmem:[%s1 + $0x820] sm:$0xff]
  %v324 = vld [vmem:[%s1 + $0x828] sm:$0xff]
  %v325 = vld [vmem:[%s1 + $0x830] sm:$0xff]
  %v326 = vld [vmem:[%s1 + $0x838] sm:$0xff]
  %v327 = vld [vmem:[%s1 + $0x840] sm:$0xff]
  %v328 = vld [vmem:[%s1 + $0x848] sm:$0xff]
  %v329 = vld [vmem:[%s1 + $0x850] sm:$0xff]
  %v330 = vld [vmem:[%s1 + $0x858] sm:$0xff]
  %v331 = vld [vmem:[%s1 + $0x860] sm:$0xff]
  %v332 = vld [vmem:[%s1 + $0x868] sm:$0xff]
  %v333 = vld [vmem:[%s1 + $0x870] sm:$0xff]
  %v334 = vld [vmem:[%s1 + $0x878] sm:$0xff]
  %v335 = vld [vmem:[%s1 + $0x880] sm:$0xff]
  %v336 = vld [vmem:[%s1 + $0x888] sm:$0xff]
  %v337 = vld [vmem:[%s1 + $0x890] sm:$0xff]
  %v338 = vld [vmem:[%s1 + $0x898] sm:$0xff]
  %v339 = vld [vmem:[%s1 + $0x8a0] sm:$0xff]
  %v340 = vld [vmem:[%s1 + $0x8a8] sm:$0xff]
  %v341 = vld [vmem:[%s1 + $0x8b0] sm:$0xff]
  %v342 = vld [vmem:[%s1 + $0x8b8] sm:$0xff]
  %v343 = vld [vmem:[%s1 + $0x8c0] sm:$0xff]
  %v344 = vld [vmem:[%s1 + $0x8c8] sm:$0xff]
  %v345 = vld [vmem:[%s1 + $0x8d0] sm:$0xff]
  %v346 = vld [vmem:[%s1 + $0x8d8] sm:$0xff]
  %v347 = vld [vmem:[%s1 + $0x8e0] sm:$0xff]
  %v348 = vld [vmem:[%s1 + $0x8e8] sm:$0xff]
  %v349 = vld [vmem:[%s1 + $0x8f0] sm:$0xff]
  %v350 = vld [vmem:[%s1 + $0x8f8] sm:$0xff]
  %v351 = vld [vmem:[%s1 + $0x900] sm:$0xff]
  %v352 = vld [vmem:[%s1 + $0x908] sm:$0xff]
  %v353 = vld [vmem:[%s1 + $0x910] sm:$0xff]
  %v354 = vld [vmem:[%s1 + $0x918] sm:$0xff]
  %v355 = vld [vmem:[%s1 + $0x920] sm:$0xff]
  %v356 = vld [vmem:[%s1 + $0x928] sm:$0xff]
  %v357 = vld [vmem:[%s1 + $0x930] sm:$0xff]
  %v358 = vld [vmem:[%s1 + $0x938] sm:$0xff]
  %v359 = vld [vmem:[%s1 + $0x940] sm:$0xff]
  %v360 = vld [vmem:[%s1 + $0x948] sm:$0xff]
  %v361 = vld [vmem:[%s1 + $0x950] sm:$0xff]
  %v362 = vld [vmem:[%s1 + $0x958] sm:$0xff]
  %v363 = vld [vmem:[%s1 + $0x960] sm:$0xff]
  %v364 = vld [vmem:[%s1 + $0x968] sm:$0xff]
  %v365 = vld [vmem:[%s1 + $0x970] sm:$0xff]
  %v366 = vld [vmem:[%s1 + $0x978] sm:$0xff]
  %v367 = vld [vmem:[%s1 + $0x980] sm:$0xff]
  %v368 = vld [vmem:[%s1 + $0x988] sm:$0xff]
  %v369 = vld [vmem:[%s1 + $0x990] sm:$0xff]
  %v370 = vld [vmem:[%s1 + $0x998] sm:$0xff]
  %v371 = vld [vmem:[%s1 + $0x9a0] sm:$0xff]
  %v372 = vld [vmem:[%s1 + $0x9a8] sm:$0xff]
  %v373 = vld [vmem:[%s1 + $0x9b0] sm:$0xff]
  %v374 = vld [vmem:[%s1 + $0x9b8] sm:$0xff]
  %v375 = vld [vmem:[%s1 + $0x9c0] sm:$0xff]
  %v376 = vld [vmem:[%s1 + $0x9c8] sm:$0xff]
  %v377 = vld [vmem:[%s1 + $0x9d0] sm:$0xff]
  %v378 = vld [vmem:[%s1 + $0x9d8] sm:$0xff]
  %v379 = vld [vmem:[%s1 + $0x9e0] sm:$0xff]
  %v380 = vld [vmem:[%s1 + $0x9e8] sm:$0xff]
  %v381 = vld [vmem:[%s1 + $0x9f0] sm:$0xff]
  %v382 = vld [vmem:[%s1 + $0x9f8] sm:$0xff]
  %v383 = vld [vmem:[%s1 + $0xa00] sm:$0xff]
  %v384 = vld [vmem:[%s1 + $0xa08] sm:$0xff]
  %v385 = vld [vmem:[%s1 + $0xa10] sm:$0xff]
  %v386 = vld [vmem:[%s1 + $0xa18] sm:$0xff]
  %v387 = vld [vmem:[%s1 + $0xa20] sm:$0xff]
  %v388 = vld [vmem:[%s1 + $0xa28] sm:$0xff]
  %v389 = vld [vmem:[%s1 + $0xa30] sm:$0xff]
  %v390 = vld [vmem:[%s1 + $0xa38] sm:$0xff]
  %v391 = vld [vmem:[%s1 + $0xa40] sm:$0xff]
  %v392 = vld [vmem:[%s1 + $0xa48] sm:$0xff]
  %v393 = vld [vmem:[%s1 + $0xa50] sm:$0xff]
  %v394 = vld [vmem:[%s1 + $0xa58] sm:$0xff]
  %v395 = vld [vmem:[%s1 + $0xa60] sm:$0xff]
  %v396 = vld [vmem:[%s1 + $0xa68] sm:$0xff]
  %v397 = vld [vmem:[%s1 + $0xa70] sm:$0xff]
  %v398 = vld [vmem:[%s1 + $0xa78] sm:$0xff]
  %v399 = vld [vmem:[%s1 + $0xa80] sm:$0xff]
  %v400 = vld [vmem:[%s1 + $0xa88] sm:$0xff]
  %v401 = vld [vmem:[%s1 + $0xa90] sm:$0xff]
  %v402 = vld [vmem:[%s1 + $0xa98] sm:$0xff]
  %v403 = vld [vmem:[%s1 + $0xaa0] sm:$0xff]
  %v404 = vld [vmem:[%s1 + $0xaa8] sm:$0xff]
  %v405 = vld [vmem:[%s1 + $0xab0] sm:$0xff]
  %v406 = vld [vmem:[%s1 + $0xab8] sm:$0xff]
  %v407 = vld [vmem:[%s1 + $0xac0] sm:$0xff]
  %v408 = vld [vmem:[%s1 + $0xac8] sm:$0xff]
  %v409 = vld [vmem:[%s1 + $0xad0] sm:$0xff]
  %v410 = vld [vmem:[%s1 + $0xad8] sm:$0xff]
  %v411 = vld [vmem:[%s1 + $0xae0] sm:$0xff]
  %v412 = vld [vmem:[%s1 + $0xae8] sm:$0xff]
  %v413 = vld [vmem:[%s1 + $0xaf0] sm:$0xff]
  %v414 = vld [vmem:[%s1 + $0xaf8] sm:$0xff]
  %v415 = vld [vmem:[%s1 + $0xb00] sm:$0xff]
  %v416 = vld [vmem:[%s1 + $0xb08] sm:$0xff]
  %v417 = vld [vmem:[%s1 + $0xb10] sm:$0xff]
  %v418 = vld [vmem:[%s1 + $0xb18] sm:$0xff]
  %v419 = vld [vmem:[%s1 + $0xb20] sm:$0xff]
  %v420 = vld [vmem:[%s1 + $0xb28] sm:$0xff]
  %v421 = vld [vmem:[%s1 + $0xb30] sm:$0xff]
  %v422 = vld [vmem:[%s1 + $0xb38] sm:$0xff]
  %v423 = vld [vmem:[%s1 + $0xb40] sm:$0xff]
  %v424 = vld [vmem:[%s1 + $0xb48] sm:$0xff]
  %v425 = vld [vmem:[%s1 + $0xb50] sm:$0xff]
  %v426 = vld [vmem:[%s1 + $0xb58] sm:$0xff]
  %v427 = vld [vmem:[%s1 + $0xb60] sm:$0xff]
  %v428 = vld [vmem:[%s1 + $0xb68] sm:$0xff]
  %v429 = vld [vmem:[%s1 + $0xb70] sm:$0xff]
  %v430 = vld [vmem:[%s1 + $0xb78] sm:$0xff]
  %v431 = vld [vmem:[%s1 + $0xb80] sm:$0xff]
  %v432 = vld [vmem:[%s1 + $0xb88] sm:$0xff]
  %v433 = vld [vmem:[%s1 + $0xb90] sm:$0xff]
  %v434 = vld [vmem:[%s1 + $0xb98] sm:$0xff]
  %v435 = vld [vmem:[%s1 + $0xba0] sm:$0xff]
  %v436 = vld [vmem:[%s1 + $0xba8] sm:$0xff]
  %v437 = vld [vmem:[%s1 + $0xbb0] sm:$0xff]
  %v438 = vld [vmem:[%s1 + $0xbb8] sm:$0xff]
  %v439 = vld [vmem:[%s1 + $0xbc0] sm:$0xff]
  %v440 = vld [vmem:[%s1 + $0xbc8] sm:$0xff]
  %v441 = vld [vmem:[%s1 + $0xbd0] sm:$0xff]
  %v442 = vld [vmem:[%s1 + $0xbd8] sm:$0xff]
  %v443 = vld [vmem:[%s1 + $0xbe0] sm:$0xff]
  %v444 = vld [vmem:[%s1 + $0xbe8] sm:$0xff]
  %v445 = vld [vmem:[%s1 + $0xbf0] sm:$0xff]
  %v446 = vld [vmem:[%s1 + $0xbf8] sm:$0xff]
  %v447 = vld [vmem:[%s1 + $0xc00] sm:$0xff]
  %v448 = vld [vmem:[%s1 + $0xc08] sm:$0xff]
  %v449 = vld [vmem:[%s1 + $0xc10] sm:$0xff]
  %v450 = vld [vmem:[%s1 + $0xc18] sm:$0xff]
  %v451 = vld [vmem:[%s1 + $0xc20] sm:$0xff]
  %v452 = vld [vmem:[%s1 + $0xc28] sm:$0xff]
  %v453 = vld [vmem:[%s1 + $0xc30] sm:$0xff]
  %v454 = vld [vmem:[%s1 + $0xc38] sm:$0xff]
  %v455 = vld [vmem:[%s1 + $0xc40] sm:$0xff]
  %v456 = vld [vmem:[%s1 + $0xc48] sm:$0xff]
  %v457 = vld [vmem:[%s1 + $0xc50] sm:$0xff]
  %v458 = vld [vmem:[%s1 + $0xc58] sm:$0xff]
  %v459 = vld [vmem:[%s1 + $0xc60] sm:$0xff]
  %v460 = vld [vmem:[%s1 + $0xc68] sm:$0xff]
  %v461 = vld [vmem:[%s1 + $0xc70] sm:$0xff]
  %v462 = vld [vmem:[%s1 + $0xc78] sm:$0xff]
  %v463 = vld [vmem:[%s1 + $0xc80] sm:$0xff]
  %v464 = vld [vmem:[%s1 + $0xc88] sm:$0xff]
  %v465 = vld [vmem:[%s1 + $0xc90] sm:$0xff]
  %v466 = vld [vmem:[%s1 + $0xc98] sm:$0xff]
  %v467 = vld [vmem:[%s1 + $0xca0] sm:$0xff]
  %v468 = vld [vmem:[%s1 + $0xca8] sm:$0xff]
  %v469 = vld [vmem:[%s1 + $0xcb0] sm:$0xff]
  %v470 = vld [vmem:[%s1 + $0xcb8] sm:$0xff]
  %v471 = vld [vmem:[%s1 + $0xcc0] sm:$0xff]
  %v472 = vld [vmem:[%s1 + $0xcc8] sm:$0xff]
  %v473 = vld [vmem:[%s1 + $0xcd0] sm:$0xff]
  %v474 = vld [vmem:[%s1 + $0xcd8] sm:$0xff]
  %v475 = vld [vmem:[%s1 + $0xce0] sm:$0xff]
  %v476 = vld [vmem:[%s1 + $0xce8] sm:$0xff]
  %v477 = vld [vmem:[%s1 + $0xcf0] sm:$0xff]
  %v478 = vld [vmem:[%s1 + $0xcf8] sm:$0xff]
  %v479 = vld [vmem:[%s1 + $0xd00] sm:$0xff]
  %v480 = vld [vmem:[%s1 + $0xd08] sm:$0xff]
  %v481 = vld [vmem:[%s1 + $0xd10] sm:$0xff]
  %v482 = vld [vmem:[%s1 + $0xd18] sm:$0xff]
  %v483 = vld [vmem:[%s1 + $0xd20] sm:$0xff]
  %v484 = vld [vmem:[%s1 + $0xd28] sm:$0xff]
  %v485 = vld [vmem:[%s1 + $0xd30] sm:$0xff]
  %v486 = vld [vmem:[%s1 + $0xd38] sm:$0xff]
  %v487 = vld [vmem:[%s1 + $0xd40] sm:$0xff]
  %v488 = vld [vmem:[%s1 + $0xd48] sm:$0xff]
  %v489 = vld [vmem:[%s1 + $0xd50] sm:$0xff]
  %v490 = vld [vmem:[%s1 + $0xd58] sm:$0xff]
  %v491 = vld [vmem:[%s1 + $0xd60] sm:$0xff]
  %v492 = vld [vmem:[%s1 + $0xd68] sm:$0xff]
  %v493 = vld [vmem:[%s1 + $0xd70] sm:$0xff]
  %v494 = vld [vmem:[%s1 + $0xd78] sm:$0xff]
  %v495 = vld [vmem:[%s1 + $0xd80] sm:$0xff]
  %v496 = vld [vmem:[%s1 + $0xd88] sm:$0xff]
  %v497 = vld [vmem:[%s1 + $0xd90] sm:$0xff]
  %v498 = vld [vmem:[%s1 + $0xd98] sm:$0xff]
  %v499 = vld [vmem:[%s1 + $0xda0] sm:$0xff]
  %v500 = vld [vmem:[%s1 + $0xda8] sm:$0xff]
  %v501 = vld [vmem:[%s1 + $0xdb0] sm:$0xff]
  %v502 = vld [vmem:[%s1 + $0xdb8] sm:$0xff]
  %v503 = vld [vmem:[%s1 + $0xdc0] sm:$0xff]
  %v504 = vld [vmem:[%s1 + $0xdc8] sm:$0xff]
  %v505 = vld [vmem:[%s1 + $0xdd0] sm:$0xff]
  %v506 = vld [vmem:[%s1 + $0xdd8] sm:$0xff]
  %v507 = vld [vmem:[%s1 + $0xde0] sm:$0xff]
  %v508 = vld [vmem:[%s1 + $0xde8] sm:$0xff]
  %v509 = vld [vmem:[%s1 + $0xdf0] sm:$0xff]
  %v510 = vld [vmem:[%s1 + $0xdf8] sm:$0xff]
  %v511 = vld [vmem:[%s1 + $0xe00] sm:$0xff]
  %v512 = vld [vmem:[%s1 + $0xe08] sm:$0xff]
  %v513 = vld [vmem:[%s1 + $0xe10] sm:$0xff]
  %v514 = vld [vmem:[%s1 + $0xe18] sm:$0xff]
  %v515 = vld [vmem:[%s1 + $0xe20] sm:$0xff]
  %v516 = vld [vmem:[%s1 + $0xe28] sm:$0xff]
  %v517 = vld [vmem:[%s1 + $0xe30] sm:$0xff]
  %v518 = vld [vmem:[%s1 + $0xe38] sm:$0xff]
  %v519 = vld [vmem:[%s1 + $0xe40] sm:$0xff]
  %v520 = vld [vmem:[%s1 + $0xe48] sm:$0xff]
  %v521 = vld [vmem:[%s1 + $0xe50] sm:$0xff]
  %v522 = vld [vmem:[%s1 + $0xe58] sm:$0xff]
  %v523 = vld [vmem:[%s1 + $0xe60] sm:$0xff]
  %v524 = vld [vmem:[%s1 + $0xe68] sm:$0xff]
  %v525 = vld [vmem:[%s1 + $0xe70] sm:$0xff]
  %v526 = vld [vmem:[%s1 + $0xe78] sm:$0xff]
  %v527 = vld [vmem:[%s1 + $0xe80] sm:$0xff]
  %v528 = vld [vmem:[%s1 + $0xe88] sm:$0xff]
  %v529 = vld [vmem:[%s1 + $0xe90] sm:$0xff]
  %v530 = vld [vmem:[%s1 + $0xe98] sm:$0xff]
  %v531 = vld [vmem:[%s1 + $0xea0] sm:$0xff]
  %v532 = vld [vmem:[%s1 + $0xea8] sm:$0xff]
  %v533 = vld [vmem:[%s1 + $0xeb0] sm:$0xff]
  %v534 = vld [vmem:[%s1 + $0xeb8] sm:$0xff]
  %v535 = vld [vmem:[%s1 + $0xec0] sm:$0xff]
  %v536 = vld [vmem:[%s1 + $0xec8] sm:$0xff]
  %v537 = vld [vmem:[%s1 + $0xed0] sm:$0xff]
  %v538 = vld [vmem:[%s1 + $0xed8] sm:$0xff]
  %v539 = vld [vmem:[%s1 + $0xee0] sm:$0xff]
  %v540 = vld [vmem:[%s1 + $0xee8] sm:$0xff]
  %v541 = vld [vmem:[%s1 + $0xef0] sm:$0xff]
  %v542 = vld [vmem:[%s1 + $0xef8] sm:$0xff]
  %v543 = vld [vmem:[%s1 + $0xf00] sm:$0xff]
  %v544 = vld [vmem:[%s1 + $0xf08] sm:$0xff]
  %v545 = vld [vmem:[%s1 + $0xf10] sm:$0xff]
  %v546 = vld [vmem:[%s1 + $0xf18] sm:$0xff]
  %v547 = vld [vmem:[%s1 + $0xf20] sm:$0xff]
  %v548 = vld [vmem:[%s1 + $0xf28] sm:$0xff]
  %v549 = vld [vmem:[%s1 + $0xf30] sm:$0xff]
  %v550 = vld [vmem:[%s1 + $0xf38] sm:$0xff]
  %v551 = vld [vmem:[%s1 + $0xf40] sm:$0xff]
  %v552 = vld [vmem:[%s1 + $0xf48] sm:$0xff]
  %v553 = vld [vmem:[%s1 + $0xf50] sm:$0xff]
  %v554 = vld [vmem:[%s1 + $0xf58] sm:$0xff]
  %v555 = vld [vmem:[%s1 + $0xf60] sm:$0xff]
  %v556 = vld [vmem:[%s1 + $0xf68] sm:$0xff]
  %v557 = vld [vmem:[%s1 + $0xf70] sm:$0xff]
  %v558 = vld [vmem:[%s1 + $0xf78] sm:$0xff]
  %v559 = vld [vmem:[%s1 + $0xf80] sm:$0xff]
  %v560 = vld [vmem:[%s1 + $0xf88] sm:$0xff]
  %v561 = vld [vmem:[%s1 + $0xf90] sm:$0xff]
  %v562 = vld [vmem:[%s1 + $0xf98] sm:$0xff]
  %v563 = vld [vmem:[%s1 + $0xfa0] sm:$0xff]
  %v564 = vld [vmem:[%s1 + $0xfa8] sm:$0xff]
  %v565 = vld [vmem:[%s1 + $0xfb0] sm:$0xff]
  %v566 = vld [vmem:[%s1 + $0xfb8] sm:$0xff]
  %v567 = vld [vmem:[%s1 + $0xfc0] sm:$0xff]
  %v568 = vld [vmem:[%s1 + $0xfc8] sm:$0xff]
  %v569 = vld [vmem:[%s1 + $0xfd0] sm:$0xff]
  %v570 = vld [vmem:[%s1 + $0xfd8] sm:$0xff]
  %v571 = vld [vmem:[%s1 + $0xfe0] sm:$0xff]
  %v572 = vld [vmem:[%s1 + $0xfe8] sm:$0xff]
  %v573 = vld [vmem:[%s1 + $0xff0] sm:$0xff]
  %v574 = vld [vmem:[%s1 + $0xff8] sm:$0xff]
  %v575 = vld [vmem:[%s1 + $0x1000] sm:$0xff]
  %v576 = vld [vmem:[%s1 + $0x1008] sm:$0xff]
  %v577 = vld [vmem:[%s1 + $0x1010] sm:$0xff]
  %v578 = vld [vmem:[%s1 + $0x1018] sm:$0xff]
  %v579 = vld [vmem:[%s1 + $0x1020] sm:$0xff]
  %v580 = vld [vmem:[%s1 + $0x1028] sm:$0xff]
  %v581 = vld [vmem:[%s1 + $0x1030] sm:$0xff]
  %v582 = vld [vmem:[%s1 + $0x1038] sm:$0xff]
  %v583 = vld [vmem:[%s1 + $0x1040] sm:$0xff]
  %v584 = vld [vmem:[%s1 + $0x1048] sm:$0xff]
  %v585 = vld [vmem:[%s1 + $0x1050] sm:$0xff]
  %v586 = vld [vmem:[%s1 + $0x1058] sm:$0xff]
  %v587 = vld [vmem:[%s1 + $0x1060] sm:$0xff]
  %v588 = vld [vmem:[%s1 + $0x1068] sm:$0xff]
  %v589 = vld [vmem:[%s1 + $0x1070] sm:$0xff]
  %v590 = vld [vmem:[%s1 + $0x1078] sm:$0xff]
  %v591 = vld [vmem:[%s1 + $0x1080] sm:$0xff]
  %v592 = vld [vmem:[%s1 + $0x1088] sm:$0xff]
  %v593 = vld [vmem:[%s1 + $0x1090] sm:$0xff]
  %v594 = vld [vmem:[%s1 + $0x1098] sm:$0xff]
  %v595 = vld [vmem:[%s1 + $0x10a0] sm:$0xff]
  %v596 = vld [vmem:[%s1 + $0x10a8] sm:$0xff]
  %v597 = vld [vmem:[%s1 + $0x10b0] sm:$0xff]
  %v598 = vld [vmem:[%s1 + $0x10b8] sm:$0xff]
  %v599 = vld [vmem:[%s1 + $0x10c0] sm:$0xff]
  %v600 = vld [vmem:[%s1 + $0x10c8] sm:$0xff]
  %v601 = vld [vmem:[%s1 + $0x10d0] sm:$0xff]
  %v602 = vld [vmem:[%s1 + $0x10d8] sm:$0xff]
  %v603 = vld [vmem:[%s1 + $0x10e0] sm:$0xff]
  %v604 = vld [vmem:[%s1 + $0x10e8] sm:$0xff]
  %v605 = vld [vmem:[%s1 + $0x10f0] sm:$0xff]
  %v606 = vld [vmem:[%s1 + $0x10f8] sm:$0xff]
  %v607 = vld [vmem:[%s1 + $0x1100] sm:$0xff]
  %v608 = vld [vmem:[%s1 + $0x1108] sm:$0xff]
  %v609 = vld [vmem:[%s1 + $0x1110] sm:$0xff]
  %v610 = vld [vmem:[%s1 + $0x1118] sm:$0xff]
  %v611 = vld [vmem:[%s1 + $0x1120] sm:$0xff]
  %v612 = vld [vmem:[%s1 + $0x1128] sm:$0xff]
  %v613 = vld [vmem:[%s1 + $0x1130] sm:$0xff]
  %v614 = vld [vmem:[%s1 + $0x1138] sm:$0xff]
  %v615 = vld [vmem:[%s1 + $0x1140] sm:$0xff]
  %v616 = vld [vmem:[%s1 + $0x1148] sm:$0xff]
  %v617 = vld [vmem:[%s1 + $0x1150] sm:$0xff]
  %v618 = vld [vmem:[%s1 + $0x1158] sm:$0xff]
  %v619 = vld [vmem:[%s1 + $0x1160] sm:$0xff]
  %v620 = vld [vmem:[%s1 + $0x1168] sm:$0xff]
  %v621 = vld [vmem:[%s1 + $0x1170] sm:$0xff]
  %v622 = vld [vmem:[%s1 + $0x1178] sm:$0xff]
  %v623 = vld [vmem:[%s1 + $0x1180] sm:$0xff]
  %v624 = vld [vmem:[%s1 + $0x1188] sm:$0xff]
  %v625 = vld [vmem:[%s1 + $0x1190] sm:$0xff]
  %v626 = vld [vmem:[%s1 + $0x1198] sm:$0xff]
  %v627 = vld [vmem:[%s1 + $0x11a0] sm:$0xff]
  %v628 = vld [vmem:[%s1 + $0x11a8] sm:$0xff]
  %v629 = vld [vmem:[%s1 + $0x11b0] sm:$0xff]
  %v630 = vld [vmem:[%s1 + $0x11b8] sm:$0xff]
  %v631 = vld [vmem:[%s1 + $0x11c0] sm:$0xff]
  %v632 = vld [vmem:[%s1 + $0x11c8] sm:$0xff]
  %v633 = vld [vmem:[%s1 + $0x11d0] sm:$0xff]
  %v634 = vld [vmem:[%s1 + $0x11d8] sm:$0xff]
  %v635 = vld [vmem:[%s1 + $0x11e0] sm:$0xff]
  %v636 = vld [vmem:[%s1 + $0x11e8] sm:$0xff]
  %v637 = vld [vmem:[%s1 + $0x11f0] sm:$0xff]
  %v638 = vld [vmem:[%s1 + $0x11f8] sm:$0xff]
  %v639 = vld [vmem:[%s1 + $0x1200] sm:$0xff]
  %v640 = vld [vmem:[%s1 + $0x1208] sm:$0xff]
  %v641 = vld [vmem:[%s1 + $0x1210] sm:$0xff]
  %v642 = vld [vmem:[%s1 + $0x1218] sm:$0xff]
  %v643 = vld [vmem:[%s1 + $0x1220] sm:$0xff]
  %v644 = vld [vmem:[%s1 + $0x1228] sm:$0xff]
  %v645 = vld [vmem:[%s1 + $0x1230] sm:$0xff]
  %v646 = vld [vmem:[%s1 + $0x1238] sm:$0xff]
  %v647 = vld [vmem:[%s1 + $0x1240] sm:$0xff]
  %v648 = vld [vmem:[%s1 + $0x1248] sm:$0xff]
  %v649 = vld [vmem:[%s1 + $0x1250] sm:$0xff]
  %v650 = vld [vmem:[%s1 + $0x1258] sm:$0xff]
  %v651 = vld [vmem:[%s1 + $0x1260] sm:$0xff]
  %v652 = vld [vmem:[%s1 + $0x1268] sm:$0xff]
  %v653 = vld [vmem:[%s1 + $0x1270] sm:$0xff]
  %v654 = vld [vmem:[%s1 + $0x1278] sm:$0xff]
  %v655 = vld [vmem:[%s1 + $0x1280] sm:$0xff]
  %v656 = vld [vmem:[%s1 + $0x1288] sm:$0xff]
  %v657 = vld [vmem:[%s1 + $0x1290] sm:$0xff]
  %v658 = vld [vmem:[%s1 + $0x1298] sm:$0xff]
  %v659 = vld [vmem:[%s1 + $0x12a0] sm:$0xff]
  %v660 = vld [vmem:[%s1 + $0x12a8] sm:$0xff]
  %v661 = vld [vmem:[%s1 + $0x12b0] sm:$0xff]
  %v662 = vld [vmem:[%s1 + $0x12b8] sm:$0xff]
  %v663 = vld [vmem:[%s1 + $0x12c0] sm:$0xff]
  %v664 = vld [vmem:[%s1 + $0x12c8] sm:$0xff]
  %v665 = vld [vmem:[%s1 + $0x12d0] sm:$0xff]
  %v666 = vld [vmem:[%s1 + $0x12d8] sm:$0xff]
  %v667 = vld [vmem:[%s1 + $0x12e0] sm:$0xff]
  %v668 = vld [vmem:[%s1 + $0x12e8] sm:$0xff]
  %v669 = vld [vmem:[%s1 + $0x12f0] sm:$0xff]
  %v670 = vld [vmem:[%s1 + $0x12f8] sm:$0xff]
  %v671 = vld [vmem:[%s1 + $0x1300] sm:$0xff]
  %v672 = vld [vmem:[%s1 + $0x1308] sm:$0xff]
  %v673 = vld [vmem:[%s1 + $0x1310] sm:$0xff]
  %v674 = vld [vmem:[%s1 + $0x1318] sm:$0xff]
  %v675 = vld [vmem:[%s1 + $0x1320] sm:$0xff]
  %v676 = vld [vmem:[%s1 + $0x1328] sm:$0xff]
  %v677 = vld [vmem:[%s1 + $0x1330] sm:$0xff]
  %v678 = vld [vmem:[%s1 + $0x1338] sm:$0xff]
  %v679 = vld [vmem:[%s1 + $0x1340] sm:$0xff]
  %v680 = vld [vmem:[%s1 + $0x1348] sm:$0xff]
  %v681 = vld [vmem:[%s1 + $0x1350] sm:$0xff]
  %v682 = vld [vmem:[%s1 + $0x1358] sm:$0xff]
  %v683 = vld [vmem:[%s1 + $0x1360] sm:$0xff]
  %v684 = vld [vmem:[%s1 + $0x1368] sm:$0xff]
  %v685 = vld [vmem:[%s1 + $0x1370] sm:$0xff]
  %v686 = vld [vmem:[%s1 + $0x1378] sm:$0xff]
  %v687 = vld [vmem:[%s1 + $0x1380] sm:$0xff]
  %v688 = vld [vmem:[%s1 + $0x1388] sm:$0xff]
  %v689 = vld [vmem:[%s1 + $0x1390] sm:$0xff]
  %v690 = vld [vmem:[%s1 + $0x1398] sm:$0xff]
  %v691 = vld [vmem:[%s1 + $0x13a0] sm:$0xff]
  %v692 = vld [vmem:[%s1 + $0x13a8] sm:$0xff]
  %v693 = vld [vmem:[%s1 + $0x13b0] sm:$0xff]
  %v694 = vld [vmem:[%s1 + $0x13b8] sm:$0xff]
  %v695 = vld [vmem:[%s1 + $0x13c0] sm:$0xff]
  %v696 = vld [vmem:[%s1 + $0x13c8] sm:$0xff]
  %v697 = vld [vmem:[%s1 + $0x13d0] sm:$0xff]
  %v698 = vld [vmem:[%s1 + $0x13d8] sm:$0xff]
  %v699 = vld [vmem:[%s1 + $0x13e0] sm:$0xff]
  %v700 = vld [vmem:[%s1 + $0x13e8] sm:$0xff]
  %v701 = vld [vmem:[%s1 + $0x13f0] sm:$0xff]
  %v702 = vld [vmem:[%s1 + $0x13f8] sm:$0xff]
  %v703 = vld [vmem:[%s1 + $0x1400] sm:$0xff]
  %v704 = vld [vmem:[%s1 + $0x1408] sm:$0xff]
  %v705 = vld [vmem:[%s1 + $0x1410] sm:$0xff]
  %v706 = vld [vmem:[%s1 + $0x1418] sm:$0xff]
  %v707 = vld [vmem:[%s1 + $0x1420] sm:$0xff]
  %v708 = vld [vmem:[%s1 + $0x1428] sm:$0xff]
  %v709 = vld [vmem:[%s1 + $0x1430] sm:$0xff]
  %v710 = vld [vmem:[%s1 + $0x1438] sm:$0xff]
  %v711 = vld [vmem:[%s1 + $0x1440] sm:$0xff]
  %v712 = vld [vmem:[%s1 + $0x1448] sm:$0xff]
  %v713 = vld [vmem:[%s1 + $0x1450] sm:$0xff]
  %v714 = vld [vmem:[%s1 + $0x1458] sm:$0xff]
  %v715 = vld [vmem:[%s1 + $0x1460] sm:$0xff]
  %v716 = vld [vmem:[%s1 + $0x1468] sm:$0xff]
  %v717 = vld [vmem:[%s1 + $0x1470] sm:$0xff]
  %v718 = vld [vmem:[%s1 + $0x1478] sm:$0xff]
  %v719 = vld [vmem:[%s1 + $0x1480] sm:$0xff]
  %v720 = vld [vmem:[%s1 + $0x1488] sm:$0xff]
  %v721 = vld [vmem:[%s1 + $0x1490] sm:$0xff]
  %v722 = vld [vmem:[%s1 + $0x1498] sm:$0xff]
  %v723 = vld [vmem:[%s1 + $0x14a0] sm:$0xff]
  %v724 = vld [vmem:[%s1 + $0x14a8] sm:$0xff]
  %v725 = vld [vmem:[%s1 + $0x14b0] sm:$0xff]
  %v726 = vld [vmem:[%s1 + $0x14b8] sm:$0xff]
  %v727 = vld [vmem:[%s1 + $0x14c0] sm:$0xff]
  %v728 = vld [vmem:[%s1 + $0x14c8] sm:$0xff]
  %v729 = vld [vmem:[%s1 + $0x14d0] sm:$0xff]
  %v730 = vld [vmem:[%s1 + $0x14d8] sm:$0xff]
  %v731 = vld [vmem:[%s1 + $0x14e0] sm:$0xff]
  %v732 = vld [vmem:[%s1 + $0x14e8] sm:$0xff]
  %v733 = vld [vmem:[%s1 + $0x14f0] sm:$0xff]
  %v734 = vld [vmem:[%s1 + $0x14f8] sm:$0xff]
  %v735 = vld [vmem:[%s1 + $0x1500] sm:$0xff]
  %v736 = vld [vmem:[%s1 + $0x1508] sm:$0xff]
  %v737 = vld [vmem:[%s1 + $0x1510] sm:$0xff]
  %v738 = vld [vmem:[%s1 + $0x1518] sm:$0xff]
  %v739 = vld [vmem:[%s2] sm:$0x1]
  %v741 = vlaneseq
  %v742 = vshrl.u32 %v741, 7
  %v743 = vsub.s32 0, %v742
  %v744 = vrot.slane %v739, %v743
  %vm746 = vcmask 261120
  %v748 = vsel %vm746, %v62, 0
  %750 = vmatprep.subr.mxu0 0.0
  %751 = vmatpush1.msra.mxu0 %v63
  %752 = vmatprep.subr.mxu0 0.0
  %753 = vmatpush1.msra.mxu0 %v64
  %754 = vmatprep.subr.mxu0 0.0
  %755 = vmatpush1.msra.mxu0 %v65
  %756 = vmatprep.subr.mxu0 0.0
  %757 = vmatpush1.msra.mxu0 %v66
  %758 = vmatprep.subr.mxu0 0.0
  %759 = vmatpush1.msra.mxu0 %v67
  %760 = vmatprep.subr.mxu0 0.0
  %761 = vmatpush1.msra.mxu0 %v68
  %762 = vmatprep.subr.mxu0 0.0
  %763 = vmatpush1.msra.mxu0 %v69
  %764 = vmatprep.subr.mxu0 0.0
  %765 = vmatpush1.msra.mxu0 %v70
  %766 = vmatprep.subr.mxu0 0.0
  %767 = vmatpush1.msra.mxu0 %v71
  %768 = vmatprep.subr.mxu0 0.0
  %769 = vmatpush1.msra.mxu0 %v72
  %770 = vmatprep.subr.mxu0 0.0
  %771 = vmatpush1.msra.mxu0 %v73
  %772 = vmatprep.subr.mxu0 0.0
  %773 = vmatpush1.msra.mxu0 %v74
  %774 = vmatprep.subr.mxu0 0.0
  %775 = vmatpush1.msra.mxu0 %v75
  %776 = vmatprep.subr.mxu0 0.0
  %777 = vmatpush1.msra.mxu0 %v76
  %778 = vmatprep.subr.mxu0 0.0
  %779 = vmatpush1.msra.mxu0 %v77
  %780 = vmatprep.subr.mxu0 0.0
  %781 = vmatpush1.msra.mxu0 %v78
  %782 = vmatprep.subr.mxu0 0.0
  %783 = vmatpush1.msra.mxu0 %v79
  %784 = vmatprep.subr.mxu0 0.0
  %785 = vmatpush1.msra.mxu0 %v80
  %786 = vmatprep.subr.mxu0 0.0
  %787 = vmatpush1.msra.mxu0 %v81
  %788 = vmatprep.subr.mxu0 0.0
  %789 = vmatpush1.msra.mxu0 %v82
  %790 = vmatprep.subr.mxu0 0.0
  %791 = vmatpush1.msra.mxu0 %v83
  %792 = vmatprep.subr.mxu0 0.0
  %793 = vmatpush1.msra.mxu0 %v84
  %794 = vmatprep.subr.mxu0 0.0
  %795 = vmatpush1.msra.mxu0 %v85
  %796 = vmatprep.subr.mxu0 0.0
  %797 = vmatpush1.msra.mxu0 %v86
  %798 = vmatprep.subr.mxu0 0.0
  %799 = vmatpush1.msra.mxu0 %v87
  %800 = vmatprep.subr.mxu0 0.0
  %801 = vmatpush1.msra.mxu0 %v88
  %802 = vmatprep.subr.mxu0 0.0
  %803 = vmatpush1.msra.mxu0 %v89
  %804 = vmatprep.subr.mxu0 0.0
  %805 = vmatpush1.msra.mxu0 %v90
  %806 = vmatprep.subr.mxu0 0.0
  %807 = vmatpush1.msra.mxu0 %v91
  %808 = vmatprep.subr.mxu0 0.0
  %809 = vmatpush1.msra.mxu0 %v92
  %810 = vmatprep.subr.mxu0 0.0
  %811 = vmatpush1.msra.mxu0 %v93
  %812 = vmatprep.subr.mxu0 0.0
  %813 = vmatpush1.msra.mxu0 %v94
  %814 = vmatprep.mubr.f32.mxu0 %v21
  %815 = vmatmul.mubr.f32.gmra.mrb[0].mxu0 %v20
  %v816 = vpop.f32.mrb[0].mxu0
  %v817 = vadd.f32 %v744, %v816
  %v818 = vpop.f32.mrb[0].mxu0
  %819 = vdwg.mxu0
  %820 = vmatprep.subr.mxu0 0.0
  %821 = vmatpush1.msra.mxu0 %v95
  %822 = vmatprep.subr.mxu0 0.0
  %823 = vmatpush1.msra.mxu0 %v96
  %824 = vmatprep.subr.mxu0 0.0
  %825 = vmatpush1.msra.mxu0 %v97
  %826 = vmatprep.subr.mxu0 0.0
  %827 = vmatpush1.msra.mxu0 %v98
  %828 = vmatprep.subr.mxu0 0.0
  %829 = vmatpush1.msra.mxu0 %v99
  %830 = vmatprep.subr.mxu0 0.0
  %831 = vmatpush1.msra.mxu0 %v100
  %832 = vmatprep.subr.mxu0 0.0
  %833 = vmatpush1.msra.mxu0 %v101
  %834 = vmatprep.subr.mxu0 0.0
  %835 = vmatpush1.msra.mxu0 %v102
  %836 = vmatprep.subr.mxu0 0.0
  %837 = vmatpush1.msra.mxu0 %v103
  %838 = vmatprep.subr.mxu0 0.0
  %839 = vmatpush1.msra.mxu0 %v104
  %840 = vmatprep.subr.mxu0 0.0
  %841 = vmatpush1.msra.mxu0 %v105
  %842 = vmatprep.subr.mxu0 0.0
  %843 = vmatpush1.msra.mxu0 %v106
  %844 = vmatprep.subr.mxu0 0.0
  %845 = vmatpush1.msra.mxu0 %v107
  %846 = vmatprep.subr.mxu0 0.0
  %847 = vmatpush1.msra.mxu0 %v108
  %848 = vmatprep.subr.mxu0 0.0
  %849 = vmatpush1.msra.mxu0 %v109
  %850 = vmatprep.subr.mxu0 0.0
  %851 = vmatpush1.msra.mxu0 %v110
  %852 = vmatprep.subr.mxu0 0.0
  %853 = vmatpush1.msra.mxu0 %v111
  %854 = vmatprep.subr.mxu0 0.0
  %855 = vmatpush1.msra.mxu0 %v112
  %856 = vmatprep.subr.mxu0 0.0
  %857 = vmatpush1.msra.mxu0 %v113
  %858 = vmatprep.subr.mxu0 0.0
  %859 = vmatpush1.msra.mxu0 %v114
  %860 = vmatprep.subr.mxu0 0.0
  %861 = vmatpush1.msra.mxu0 %v115
  %862 = vmatprep.subr.mxu0 0.0
  %863 = vmatpush1.msra.mxu0 %v116
  %864 = vmatprep.subr.mxu0 0.0
  %865 = vmatpush1.msra.mxu0 %v117
  %866 = vmatprep.subr.mxu0 0.0
  %867 = vmatpush1.msra.mxu0 %v118
  %868 = vmatprep.subr.mxu0 0.0
  %869 = vmatpush1.msra.mxu0 %v119
  %870 = vmatprep.subr.mxu0 0.0
  %871 = vmatpush1.msra.mxu0 %v120
  %872 = vmatprep.subr.mxu0 0.0
  %873 = vmatpush1.msra.mxu0 %v121
  %874 = vmatprep.subr.mxu0 0.0
  %875 = vmatpush1.msra.mxu0 %v122
  %876 = vmatprep.subr.mxu0 0.0
  %877 = vmatpush1.msra.mxu0 %v123
  %878 = vmatprep.subr.mxu0 0.0
  %879 = vmatpush1.msra.mxu0 %v124
  %880 = vmatprep.subr.mxu0 0.0
  %881 = vmatpush1.msra.mxu0 %v125
  %882 = vmatprep.subr.mxu0 0.0
  %883 = vmatpush1.msra.mxu0 %v126
  %884 = vmatprep.mubr.f32.mxu0 %v23
  %885 = vmatmul.mubr.f32.gmra.mrb[0].mxu0 %v22
  %v886 = vpop.f32.mrb[0].mxu0
  %v887 = vadd.f32 %v817, %v886
  %v888 = vpop.f32.mrb[0].mxu0
  %889 = vdwg.mxu0
  %890 = vmatprep.subr.mxu0 0.0
  %891 = vmatpush1.msra.mxu0 %v127
  %892 = vmatprep.subr.mxu0 0.0
  %893 = vmatpush1.msra.mxu0 %v128
  %894 = vmatprep.subr.mxu0 0.0
  %895 = vmatpush1.msra.mxu0 %v129
  %896 = vmatprep.subr.mxu0 0.0
  %897 = vmatpush1.msra.mxu0 %v130
  %898 = vmatprep.subr.mxu0 0.0
  %899 = vmatpush1.msra.mxu0 %v131
  %900 = vmatprep.subr.mxu0 0.0
  %901 = vmatpush1.msra.mxu0 %v132
  %902 = vmatprep.subr.mxu0 0.0
  %903 = vmatpush1.msra.mxu0 %v133
  %904 = vmatprep.subr.mxu0 0.0
  %905 = vmatpush1.msra.mxu0 %v134
  %906 = vmatprep.subr.mxu0 0.0
  %907 = vmatpush1.msra.mxu0 %v135
  %908 = vmatprep.subr.mxu0 0.0
  %909 = vmatpush1.msra.mxu0 %v136
  %910 = vmatprep.subr.mxu0 0.0
  %911 = vmatpush1.msra.mxu0 %v137
  %912 = vmatprep.subr.mxu0 0.0
  %913 = vmatpush1.msra.mxu0 %v138
  %914 = vmatprep.subr.mxu0 0.0
  %915 = vmatpush1.msra.mxu0 %v139
  %916 = vmatprep.subr.mxu0 0.0
  %917 = vmatpush1.msra.mxu0 %v140
  %918 = vmatprep.subr.mxu0 0.0
  %919 = vmatpush1.msra.mxu0 %v141
  %920 = vmatprep.subr.mxu0 0.0
  %921 = vmatpush1.msra.mxu0 %v142
  %922 = vmatprep.subr.mxu0 0.0
  %923 = vmatpush1.msra.mxu0 %v143
  %924 = vmatprep.subr.mxu0 0.0
  %925 = vmatpush1.msra.mxu0 %v144
  %926 = vmatprep.subr.mxu0 0.0
  %927 = vmatpush1.msra.mxu0 %v145
  %928 = vmatprep.subr.mxu0 0.0
  %929 = vmatpush1.msra.mxu0 %v146
  %930 = vmatprep.subr.mxu0 0.0
  %931 = vmatpush1.msra.mxu0 %v147
  %932 = vmatprep.subr.mxu0 0.0
  %933 = vmatpush1.msra.mxu0 %v148
  %934 = vmatprep.subr.mxu0 0.0
  %935 = vmatpush1.msra.mxu0 %v149
  %936 = vmatprep.subr.mxu0 0.0
  %937 = vmatpush1.msra.mxu0 %v150
  %938 = vmatprep.subr.mxu0 0.0
  %939 = vmatpush1.msra.mxu0 %v151
  %940 = vmatprep.subr.mxu0 0.0
  %941 = vmatpush1.msra.mxu0 %v152
  %942 = vmatprep.subr.mxu0 0.0
  %943 = vmatpush1.msra.mxu0 %v153
  %944 = vmatprep.subr.mxu0 0.0
  %945 = vmatpush1.msra.mxu0 %v154
  %946 = vmatprep.subr.mxu0 0.0
  %947 = vmatpush1.msra.mxu0 %v155
  %948 = vmatprep.subr.mxu0 0.0
  %949 = vmatpush1.msra.mxu0 %v156
  %950 = vmatprep.subr.mxu0 0.0
  %951 = vmatpush1.msra.mxu0 %v157
  %952 = vmatprep.subr.mxu0 0.0
  %953 = vmatpush1.msra.mxu0 %v158
  %954 = vmatprep.mubr.f32.mxu0 %v25
  %955 = vmatmul.mubr.f32.gmra.mrb[0].mxu0 %v24
  %v956 = vpop.f32.mrb[0].mxu0
  %v957 = vadd.f32 %v887, %v956
  %v958 = vpop.f32.mrb[0].mxu0
  %959 = vdwg.mxu0
  %960 = vmatprep.subr.mxu0 0.0
  %961 = vmatpush1.msra.mxu0 %v159
  %962 = vmatprep.subr.mxu0 0.0
  %963 = vmatpush1.msra.mxu0 %v160
  %964 = vmatprep.subr.mxu0 0.0
  %965 = vmatpush1.msra.mxu0 %v161
  %966 = vmatprep.subr.mxu0 0.0
  %967 = vmatpush1.msra.mxu0 %v162
  %968 = vmatprep.subr.mxu0 0.0
  %969 = vmatpush1.msra.mxu0 %v163
  %970 = vmatprep.subr.mxu0 0.0
  %971 = vmatpush1.msra.mxu0 %v164
  %972 = vmatprep.subr.mxu0 0.0
  %973 = vmatpush1.msra.mxu0 %v165
  %974 = vmatprep.subr.mxu0 0.0
  %975 = vmatpush1.msra.mxu0 %v166
  %976 = vmatprep.subr.mxu0 0.0
  %977 = vmatpush1.msra.mxu0 %v167
  %978 = vmatprep.subr.mxu0 0.0
  %979 = vmatpush1.msra.mxu0 %v168
  %980 = vmatprep.subr.mxu0 0.0
  %981 = vmatpush1.msra.mxu0 %v169
  %982 = vmatprep.subr.mxu0 0.0
  %983 = vmatpush1.msra.mxu0 %v170
  %984 = vmatprep.subr.mxu0 0.0
  %985 = vmatpush1.msra.mxu0 %v171
  %986 = vmatprep.subr.mxu0 0.0
  %987 = vmatpush1.msra.mxu0 %v172
  %988 = vmatprep.subr.mxu0 0.0
  %989 = vmatpush1.msra.mxu0 %v173
  %990 = vmatprep.subr.mxu0 0.0
  %991 = vmatpush1.msra.mxu0 %v174
  %992 = vmatprep.subr.mxu0 0.0
  %993 = vmatpush1.msra.mxu0 %v175
  %994 = vmatprep.subr.mxu0 0.0
  %995 = vmatpush1.msra.mxu0 %v176
  %996 = vmatprep.subr.mxu0 0.0
  %997 = vmatpush1.msra.mxu0 %v177
  %998 = vmatprep.subr.mxu0 0.0
  %999 = vmatpush1.msra.mxu0 %v178
  %1000 = vmatprep.subr.mxu0 0.0
  %1001 = vmatpush1.msra.mxu0 %v179
  %1002 = vmatprep.subr.mxu0 0.0
  %1003 = vmatpush1.msra.mxu0 %v180
  %1004 = vmatprep.subr.mxu0 0.0
  %1005 = vmatpush1.msra.mxu0 %v181
  %1006 = vmatprep.subr.mxu0 0.0
  %1007 = vmatpush1.msra.mxu0 %v182
  %1008 = vmatprep.subr.mxu0 0.0
  %1009 = vmatpush1.msra.mxu0 %v183
  %1010 = vmatprep.subr.mxu0 0.0
  %1011 = vmatpush1.msra.mxu0 %v184
  %1012 = vmatprep.subr.mxu0 0.0
  %1013 = vmatpush1.msra.mxu0 %v185
  %1014 = vmatprep.subr.mxu0 0.0
  %1015 = vmatpush1.msra.mxu0 %v186
  %1016 = vmatprep.subr.mxu0 0.0
  %1017 = vmatpush1.msra.mxu0 %v187
  %1018 = vmatprep.subr.mxu0 0.0
  %1019 = vmatpush1.msra.mxu0 %v188
  %1020 = vmatprep.subr.mxu0 0.0
  %1021 = vmatpush1.msra.mxu0 %v189
  %1022 = vmatprep.subr.mxu0 0.0
  %1023 = vmatpush1.msra.mxu0 %v190
  %1024 = vmatprep.mubr.f32.mxu0 %v27
  %1025 = vmatmul.mubr.f32.gmra.mrb[0].mxu0 %v26
  %v1026 = vpop.f32.mrb[0].mxu0
  %v1027 = vadd.f32 %v957, %v1026
  %v1028 = vpop.f32.mrb[0].mxu0
  %1029 = vdwg.mxu0
  %1030 = vmatprep.subr.mxu0 0.0
  %1031 = vmatpush1.msra.mxu0 %v191
  %1032 = vmatprep.subr.mxu0 0.0
  %1033 = vmatpush1.msra.mxu0 %v192
  %1034 = vmatprep.subr.mxu0 0.0
  %1035 = vmatpush1.msra.mxu0 %v193
  %1036 = vmatprep.subr.mxu0 0.0
  %1037 = vmatpush1.msra.mxu0 %v194
  %1038 = vmatprep.subr.mxu0 0.0
  %1039 = vmatpush1.msra.mxu0 %v195
  %1040 = vmatprep.subr.mxu0 0.0
  %1041 = vmatpush1.msra.mxu0 %v196
  %1042 = vmatprep.subr.mxu0 0.0
  %1043 = vmatpush1.msra.mxu0 %v197
  %1044 = vmatprep.subr.mxu0 0.0
  %1045 = vmatpush1.msra.mxu0 %v198
  %1046 = vmatprep.subr.mxu0 0.0
  %1047 = vmatpush1.msra.mxu0 %v199
  %1048 = vmatprep.subr.mxu0 0.0
  %1049 = vmatpush1.msra.mxu0 %v200
  %1050 = vmatprep.subr.mxu0 0.0
  %1051 = vmatpush1.msra.mxu0 %v201
  %1052 = vmatprep.subr.mxu0 0.0
  %1053 = vmatpush1.msra.mxu0 %v202
  %1054 = vmatprep.subr.mxu0 0.0
  %1055 = vmatpush1.msra.mxu0 %v203
  %1056 = vmatprep.subr.mxu0 0.0
  %1057 = vmatpush1.msra.mxu0 %v204
  %1058 = vmatprep.subr.mxu0 0.0
  %1059 = vmatpush1.msra.mxu0 %v205
  %1060 = vmatprep.subr.mxu0 0.0
  %1061 = vmatpush1.msra.mxu0 %v206
  %1062 = vmatprep.subr.mxu0 0.0
  %1063 = vmatpush1.msra.mxu0 %v207
  %1064 = vmatprep.subr.mxu0 0.0
  %1065 = vmatpush1.msra.mxu0 %v208
  %1066 = vmatprep.subr.mxu0 0.0
  %1067 = vmatpush1.msra.mxu0 %v209
  %1068 = vmatprep.subr.mxu0 0.0
  %1069 = vmatpush1.msra.mxu0 %v210
  %1070 = vmatprep.subr.mxu0 0.0
  %1071 = vmatpush1.msra.mxu0 %v211
  %1072 = vmatprep.subr.mxu0 0.0
  %1073 = vmatpush1.msra.mxu0 %v212
  %1074 = vmatprep.subr.mxu0 0.0
  %1075 = vmatpush1.msra.mxu0 %v213
  %1076 = vmatprep.subr.mxu0 0.0
  %1077 = vmatpush1.msra.mxu0 %v214
  %1078 = vmatprep.subr.mxu0 0.0
  %1079 = vmatpush1.msra.mxu0 %v215
  %1080 = vmatprep.subr.mxu0 0.0
  %1081 = vmatpush1.msra.mxu0 %v216
  %1082 = vmatprep.subr.mxu0 0.0
  %1083 = vmatpush1.msra.mxu0 %v217
  %1084 = vmatprep.subr.mxu0 0.0
  %1085 = vmatpush1.msra.mxu0 %v218
  %1086 = vmatprep.subr.mxu0 0.0
  %1087 = vmatpush1.msra.mxu0 %v219
  %1088 = vmatprep.subr.mxu0 0.0
  %1089 = vmatpush1.msra.mxu0 %v220
  %1090 = vmatprep.subr.mxu0 0.0
  %1091 = vmatpush1.msra.mxu0 %v221
  %1092 = vmatprep.subr.mxu0 0.0
  %1093 = vmatpush1.msra.mxu0 %v222
  %1094 = vmatprep.mubr.f32.mxu0 %v29
  %1095 = vmatmul.mubr.f32.gmra.mrb[0].mxu0 %v28
  %v1096 = vpop.f32.mrb[0].mxu0
  %v1097 = vadd.f32 %v1027, %v1096
  %v1098 = vpop.f32.mrb[0].mxu0
  %1099 = vdwg.mxu0
  %1100 = vmatprep.subr.mxu0 0.0
  %1101 = vmatpush1.msra.mxu0 %v223
  %1102 = vmatprep.subr.mxu0 0.0
  %1103 = vmatpush1.msra.mxu0 %v224
  %1104 = vmatprep.subr.mxu0 0.0
  %1105 = vmatpush1.msra.mxu0 %v225
  %1106 = vmatprep.subr.mxu0 0.0
  %1107 = vmatpush1.msra.mxu0 %v226
  %1108 = vmatprep.subr.mxu0 0.0
  %1109 = vmatpush1.msra.mxu0 %v227
  %1110 = vmatprep.subr.mxu0 0.0
  %1111 = vmatpush1.msra.mxu0 %v228
  %1112 = vmatprep.subr.mxu0 0.0
  %1113 = vmatpush1.msra.mxu0 %v229
  %1114 = vmatprep.subr.mxu0 0.0
  %1115 = vmatpush1.msra.mxu0 %v230
  %1116 = vmatprep.subr.mxu0 0.0
  %1117 = vmatpush1.msra.mxu0 %v231
  %1118 = vmatprep.subr.mxu0 0.0
  %1119 = vmatpush1.msra.mxu0 %v232
  %1120 = vmatprep.subr.mxu0 0.0
  %1121 = vmatpush1.msra.mxu0 %v233
  %1122 = vmatprep.subr.mxu0 0.0
  %1123 = vmatpush1.msra.mxu0 %v234
  %1124 = vmatprep.subr.mxu0 0.0
  %1125 = vmatpush1.msra.mxu0 %v235
  %1126 = vmatprep.subr.mxu0 0.0
  %1127 = vmatpush1.msra.mxu0 %v236
  %1128 = vmatprep.subr.mxu0 0.0
  %1129 = vmatpush1.msra.mxu0 %v237
  %1130 = vmatprep.subr.mxu0 0.0
  %1131 = vmatpush1.msra.mxu0 %v238
  %1132 = vmatprep.subr.mxu0 0.0
  %1133 = vmatpush1.msra.mxu0 %v239
  %1134 = vmatprep.subr.mxu0 0.0
  %1135 = vmatpush1.msra.mxu0 %v240
  %1136 = vmatprep.subr.mxu0 0.0
  %1137 = vmatpush1.msra.mxu0 %v241
  %1138 = vmatprep.subr.mxu0 0.0
  %1139 = vmatpush1.msra.mxu0 %v242
  %1140 = vmatprep.subr.mxu0 0.0
  %1141 = vmatpush1.msra.mxu0 %v243
  %1142 = vmatprep.subr.mxu0 0.0
  %1143 = vmatpush1.msra.mxu0 %v244
  %1144 = vmatprep.subr.mxu0 0.0
  %1145 = vmatpush1.msra.mxu0 %v245
  %1146 = vmatprep.subr.mxu0 0.0
  %1147 = vmatpush1.msra.mxu0 %v246
  %1148 = vmatprep.subr.mxu0 0.0
  %1149 = vmatpush1.msra.mxu0 %v247
  %1150 = vmatprep.subr.mxu0 0.0
  %1151 = vmatpush1.msra.mxu0 %v248
  %1152 = vmatprep.subr.mxu0 0.0
  %1153 = vmatpush1.msra.mxu0 %v249
  %1154 = vmatprep.subr.mxu0 0.0
  %1155 = vmatpush1.msra.mxu0 %v250
  %1156 = vmatprep.subr.mxu0 0.0
  %1157 = vmatpush1.msra.mxu0 %v251
  %1158 = vmatprep.subr.mxu0 0.0
  %1159 = vmatpush1.msra.mxu0 %v252
  %1160 = vmatprep.subr.mxu0 0.0
  %1161 = vmatpush1.msra.mxu0 %v253
  %1162 = vmatprep.subr.mxu0 0.0
  %1163 = vmatpush1.msra.mxu0 %v254
  %1164 = vmatprep.mubr.f32.mxu0 %v31
  %1165 = vmatmul.mubr.f32.gmra.mrb[0].mxu0 %v30
  %v1166 = vpop.f32.mrb[0].mxu0
  %v1167 = vadd.f32 %v1097, %v1166
  %v1168 = vpop.f32.mrb[0].mxu0
  %1169 = vdwg.mxu0
  %1170 = vmatprep.subr.mxu0 0.0
  %1171 = vmatpush1.msra.mxu0 %v255
  %1172 = vmatprep.subr.mxu0 0.0
  %1173 = vmatpush1.msra.mxu0 %v256
  %1174 = vmatprep.subr.mxu0 0.0
  %1175 = vmatpush1.msra.mxu0 %v257
  %1176 = vmatprep.subr.mxu0 0.0
  %1177 = vmatpush1.msra.mxu0 %v258
  %1178 = vmatprep.subr.mxu0 0.0
  %1179 = vmatpush1.msra.mxu0 %v259
  %1180 = vmatprep.subr.mxu0 0.0
  %1181 = vmatpush1.msra.mxu0 %v260
  %1182 = vmatprep.subr.mxu0 0.0
  %1183 = vmatpush1.msra.mxu0 %v261
  %1184 = vmatprep.subr.mxu0 0.0
  %1185 = vmatpush1.msra.mxu0 %v262
  %1186 = vmatprep.subr.mxu0 0.0
  %1187 = vmatpush1.msra.mxu0 %v263
  %1188 = vmatprep.subr.mxu0 0.0
  %1189 = vmatpush1.msra.mxu0 %v264
  %1190 = vmatprep.subr.mxu0 0.0
  %1191 = vmatpush1.msra.mxu0 %v265
  %1192 = vmatprep.subr.mxu0 0.0
  %1193 = vmatpush1.msra.mxu0 %v266
  %1194 = vmatprep.subr.mxu0 0.0
  %1195 = vmatpush1.msra.mxu0 %v267
  %1196 = vmatprep.subr.mxu0 0.0
  %1197 = vmatpush1.msra.mxu0 %v268
  %1198 = vmatprep.subr.mxu0 0.0
  %1199 = vmatpush1.msra.mxu0 %v269
  %1200 = vmatprep.subr.mxu0 0.0
  %1201 = vmatpush1.msra.mxu0 %v270
  %1202 = vmatprep.subr.mxu0 0.0
  %1203 = vmatpush1.msra.mxu0 %v271
  %1204 = vmatprep.subr.mxu0 0.0
  %1205 = vmatpush1.msra.mxu0 %v272
  %1206 = vmatprep.subr.mxu0 0.0
  %1207 = vmatpush1.msra.mxu0 %v273
  %1208 = vmatprep.subr.mxu0 0.0
  %1209 = vmatpush1.msra.mxu0 %v274
  %1210 = vmatprep.subr.mxu0 0.0
  %1211 = vmatpush1.msra.mxu0 %v275
  %1212 = vmatprep.subr.mxu0 0.0
  %1213 = vmatpush1.msra.mxu0 %v276
  %1214 = vmatprep.subr.mxu0 0.0
  %1215 = vmatpush1.msra.mxu0 %v277
  %1216 = vmatprep.subr.mxu0 0.0
  %1217 = vmatpush1.msra.mxu0 %v278
  %1218 = vmatprep.subr.mxu0 0.0
  %1219 = vmatpush1.msra.mxu0 %v279
  %1220 = vmatprep.subr.mxu0 0.0
  %1221 = vmatpush1.msra.mxu0 %v280
  %1222 = vmatprep.subr.mxu0 0.0
  %1223 = vmatpush1.msra.mxu0 %v281
  %1224 = vmatprep.subr.mxu0 0.0
  %1225 = vmatpush1.msra.mxu0 %v282
  %1226 = vmatprep.subr.mxu0 0.0
  %1227 = vmatpush1.msra.mxu0 %v283
  %1228 = vmatprep.subr.mxu0 0.0
  %1229 = vmatpush1.msra.mxu0 %v284
  %1230 = vmatprep.subr.mxu0 0.0
  %1231 = vmatpush1.msra.mxu0 %v285
  %1232 = vmatprep.subr.mxu0 0.0
  %1233 = vmatpush1.msra.mxu0 %v286
  %1234 = vmatprep.mubr.f32.mxu0 %v33
  %1235 = vmatmul.mubr.f32.gmra.mrb[0].mxu0 %v32
  %v1236 = vpop.f32.mrb[0].mxu0
  %v1237 = vadd.f32 %v1167, %v1236
  %v1238 = vpop.f32.mrb[0].mxu0
  %1239 = vdwg.mxu0
  %1240 = vmatprep.subr.mxu0 0.0
  %1241 = vmatpush1.msra.mxu0 %v287
  %1242 = vmatprep.subr.mxu0 0.0
  %1243 = vmatpush1.msra.mxu0 %v288
  %1244 = vmatprep.subr.mxu0 0.0
  %1245 = vmatpush1.msra.mxu0 %v289
  %1246 = vmatprep.subr.mxu0 0.0
  %1247 = vmatpush1.msra.mxu0 %v290
  %1248 = vmatprep.subr.mxu0 0.0
  %1249 = vmatpush1.msra.mxu0 %v291
  %1250 = vmatprep.subr.mxu0 0.0
  %1251 = vmatpush1.msra.mxu0 %v292
  %1252 = vmatprep.subr.mxu0 0.0
  %1253 = vmatpush1.msra.mxu0 %v293
  %1254 = vmatprep.subr.mxu0 0.0
  %1255 = vmatpush1.msra.mxu0 %v294
  %1256 = vmatprep.subr.mxu0 0.0
  %1257 = vmatpush1.msra.mxu0 %v295
  %1258 = vmatprep.subr.mxu0 0.0
  %1259 = vmatpush1.msra.mxu0 %v296
  %1260 = vmatprep.subr.mxu0 0.0
  %1261 = vmatpush1.msra.mxu0 %v297
  %1262 = vmatprep.subr.mxu0 0.0
  %1263 = vmatpush1.msra.mxu0 %v298
  %1264 = vmatprep.subr.mxu0 0.0
  %1265 = vmatpush1.msra.mxu0 %v299
  %1266 = vmatprep.subr.mxu0 0.0
  %1267 = vmatpush1.msra.mxu0 %v300
  %1268 = vmatprep.subr.mxu0 0.0
  %1269 = vmatpush1.msra.mxu0 %v301
  %1270 = vmatprep.subr.mxu0 0.0
  %1271 = vmatpush1.msra.mxu0 %v302
  %1272 = vmatprep.subr.mxu0 0.0
  %1273 = vmatpush1.msra.mxu0 %v303
  %1274 = vmatprep.subr.mxu0 0.0
  %1275 = vmatpush1.msra.mxu0 %v304
  %1276 = vmatprep.subr.mxu0 0.0
  %1277 = vmatpush1.msra.mxu0 %v305
  %1278 = vmatprep.subr.mxu0 0.0
  %1279 = vmatpush1.msra.mxu0 %v306
  %1280 = vmatprep.subr.mxu0 0.0
  %1281 = vmatpush1.msra.mxu0 %v307
  %1282 = vmatprep.subr.mxu0 0.0
  %1283 = vmatpush1.msra.mxu0 %v308
  %1284 = vmatprep.subr.mxu0 0.0
  %1285 = vmatpush1.msra.mxu0 %v309
  %1286 = vmatprep.subr.mxu0 0.0
  %1287 = vmatpush1.msra.mxu0 %v310
  %1288 = vmatprep.subr.mxu0 0.0
  %1289 = vmatpush1.msra.mxu0 %v311
  %1290 = vmatprep.subr.mxu0 0.0
  %1291 = vmatpush1.msra.mxu0 %v312
  %1292 = vmatprep.subr.mxu0 0.0
  %1293 = vmatpush1.msra.mxu0 %v313
  %1294 = vmatprep.subr.mxu0 0.0
  %1295 = vmatpush1.msra.mxu0 %v314
  %1296 = vmatprep.subr.mxu0 0.0
  %1297 = vmatpush1.msra.mxu0 %v315
  %1298 = vmatprep.subr.mxu0 0.0
  %1299 = vmatpush1.msra.mxu0 %v316
  %1300 = vmatprep.subr.mxu0 0.0
  %1301 = vmatpush1.msra.mxu0 %v317
  %1302 = vmatprep.subr.mxu0 0.0
  %1303 = vmatpush1.msra.mxu0 %v318
  %1304 = vmatprep.mubr.f32.mxu0 %v35
  %1305 = vmatmul.mubr.f32.gmra.mrb[0].mxu0 %v34
  %v1306 = vpop.f32.mrb[0].mxu0
  %v1307 = vadd.f32 %v1237, %v1306
  %v1308 = vpop.f32.mrb[0].mxu0
  %1309 = vdwg.mxu0
  %1310 = vmatprep.subr.mxu0 0.0
  %1311 = vmatpush1.msra.mxu0 %v319
  %1312 = vmatprep.subr.mxu0 0.0
  %1313 = vmatpush1.msra.mxu0 %v320
  %1314 = vmatprep.subr.mxu0 0.0
  %1315 = vmatpush1.msra.mxu0 %v321
  %1316 = vmatprep.subr.mxu0 0.0
  %1317 = vmatpush1.msra.mxu0 %v322
  %1318 = vmatprep.subr.mxu0 0.0
  %1319 = vmatpush1.msra.mxu0 %v323
  %1320 = vmatprep.subr.mxu0 0.0
  %1321 = vmatpush1.msra.mxu0 %v324
  %1322 = vmatprep.subr.mxu0 0.0
  %1323 = vmatpush1.msra.mxu0 %v325
  %1324 = vmatprep.subr.mxu0 0.0
  %1325 = vmatpush1.msra.mxu0 %v326
  %1326 = vmatprep.subr.mxu0 0.0
  %1327 = vmatpush1.msra.mxu0 %v327
  %1328 = vmatprep.subr.mxu0 0.0
  %1329 = vmatpush1.msra.mxu0 %v328
  %1330 = vmatprep.subr.mxu0 0.0
  %1331 = vmatpush1.msra.mxu0 %v329
  %1332 = vmatprep.subr.mxu0 0.0
  %1333 = vmatpush1.msra.mxu0 %v330
  %1334 = vmatprep.subr.mxu0 0.0
  %1335 = vmatpush1.msra.mxu0 %v331
  %1336 = vmatprep.subr.mxu0 0.0
  %1337 = vmatpush1.msra.mxu0 %v332
  %1338 = vmatprep.subr.mxu0 0.0
  %1339 = vmatpush1.msra.mxu0 %v333
  %1340 = vmatprep.subr.mxu0 0.0
  %1341 = vmatpush1.msra.mxu0 %v334
  %1342 = vmatprep.subr.mxu0 0.0
  %1343 = vmatpush1.msra.mxu0 %v335
  %1344 = vmatprep.subr.mxu0 0.0
  %1345 = vmatpush1.msra.mxu0 %v336
  %1346 = vmatprep.subr.mxu0 0.0
  %1347 = vmatpush1.msra.mxu0 %v337
  %1348 = vmatprep.subr.mxu0 0.0
  %1349 = vmatpush1.msra.mxu0 %v338
  %1350 = vmatprep.subr.mxu0 0.0
  %1351 = vmatpush1.msra.mxu0 %v339
  %1352 = vmatprep.subr.mxu0 0.0
  %1353 = vmatpush1.msra.mxu0 %v340
  %1354 = vmatprep.subr.mxu0 0.0
  %1355 = vmatpush1.msra.mxu0 %v341
  %1356 = vmatprep.subr.mxu0 0.0
  %1357 = vmatpush1.msra.mxu0 %v342
  %1358 = vmatprep.subr.mxu0 0.0
  %1359 = vmatpush1.msra.mxu0 %v343
  %1360 = vmatprep.subr.mxu0 0.0
  %1361 = vmatpush1.msra.mxu0 %v344
  %1362 = vmatprep.subr.mxu0 0.0
  %1363 = vmatpush1.msra.mxu0 %v345
  %1364 = vmatprep.subr.mxu0 0.0
  %1365 = vmatpush1.msra.mxu0 %v346
  %1366 = vmatprep.subr.mxu0 0.0
  %1367 = vmatpush1.msra.mxu0 %v347
  %1368 = vmatprep.subr.mxu0 0.0
  %1369 = vmatpush1.msra.mxu0 %v348
  %1370 = vmatprep.subr.mxu0 0.0
  %1371 = vmatpush1.msra.mxu0 %v349
  %1372 = vmatprep.subr.mxu0 0.0
  %1373 = vmatpush1.msra.mxu0 %v350
  %1374 = vmatprep.mubr.f32.mxu0 %v37
  %1375 = vmatmul.mubr.f32.gmra.mrb[0].mxu0 %v36
  %v1376 = vpop.f32.mrb[0].mxu0
  %v1377 = vadd.f32 %v1307, %v1376
  %v1378 = vpop.f32.mrb[0].mxu0
  %1379 = vdwg.mxu0
  %1380 = vmatprep.subr.mxu0 0.0
  %1381 = vmatpush1.msra.mxu0 %v351
  %1382 = vmatprep.subr.mxu0 0.0
  %1383 = vmatpush1.msra.mxu0 %v352
  %1384 = vmatprep.subr.mxu0 0.0
  %1385 = vmatpush1.msra.mxu0 %v353
  %1386 = vmatprep.subr.mxu0 0.0
  %1387 = vmatpush1.msra.mxu0 %v354
  %1388 = vmatprep.subr.mxu0 0.0
  %1389 = vmatpush1.msra.mxu0 %v355
  %1390 = vmatprep.subr.mxu0 0.0
  %1391 = vmatpush1.msra.mxu0 %v356
  %1392 = vmatprep.subr.mxu0 0.0
  %1393 = vmatpush1.msra.mxu0 %v357
  %1394 = vmatprep.subr.mxu0 0.0
  %1395 = vmatpush1.msra.mxu0 %v358
  %1396 = vmatprep.subr.mxu0 0.0
  %1397 = vmatpush1.msra.mxu0 %v359
  %1398 = vmatprep.subr.mxu0 0.0
  %1399 = vmatpush1.msra.mxu0 %v360
  %1400 = vmatprep.subr.mxu0 0.0
  %1401 = vmatpush1.msra.mxu0 %v361
  %1402 = vmatprep.subr.mxu0 0.0
  %1403 = vmatpush1.msra.mxu0 %v362
  %1404 = vmatprep.subr.mxu0 0.0
  %1405 = vmatpush1.msra.mxu0 %v363
  %1406 = vmatprep.subr.mxu0 0.0
  %1407 = vmatpush1.msra.mxu0 %v364
  %1408 = vmatprep.subr.mxu0 0.0
  %1409 = vmatpush1.msra.mxu0 %v365
  %1410 = vmatprep.subr.mxu0 0.0
  %1411 = vmatpush1.msra.mxu0 %v366
  %1412 = vmatprep.subr.mxu0 0.0
  %1413 = vmatpush1.msra.mxu0 %v367
  %1414 = vmatprep.subr.mxu0 0.0
  %1415 = vmatpush1.msra.mxu0 %v368
  %1416 = vmatprep.subr.mxu0 0.0
  %1417 = vmatpush1.msra.mxu0 %v369
  %1418 = vmatprep.subr.mxu0 0.0
  %1419 = vmatpush1.msra.mxu0 %v370
  %1420 = vmatprep.subr.mxu0 0.0
  %1421 = vmatpush1.msra.mxu0 %v371
  %1422 = vmatprep.subr.mxu0 0.0
  %1423 = vmatpush1.msra.mxu0 %v372
  %1424 = vmatprep.subr.mxu0 0.0
  %1425 = vmatpush1.msra.mxu0 %v373
  %1426 = vmatprep.subr.mxu0 0.0
  %1427 = vmatpush1.msra.mxu0 %v374
  %1428 = vmatprep.subr.mxu0 0.0
  %1429 = vmatpush1.msra.mxu0 %v375
  %1430 = vmatprep.subr.mxu0 0.0
  %1431 = vmatpush1.msra.mxu0 %v376
  %1432 = vmatprep.subr.mxu0 0.0
  %1433 = vmatpush1.msra.mxu0 %v377
  %1434 = vmatprep.subr.mxu0 0.0
  %1435 = vmatpush1.msra.mxu0 %v378
  %1436 = vmatprep.subr.mxu0 0.0
  %1437 = vmatpush1.msra.mxu0 %v379
  %1438 = vmatprep.subr.mxu0 0.0
  %1439 = vmatpush1.msra.mxu0 %v380
  %1440 = vmatprep.subr.mxu0 0.0
  %1441 = vmatpush1.msra.mxu0 %v381
  %1442 = vmatprep.subr.mxu0 0.0
  %1443 = vmatpush1.msra.mxu0 %v382
  %1444 = vmatprep.mubr.f32.mxu0 %v39
  %1445 = vmatmul.mubr.f32.gmra.mrb[0].mxu0 %v38
  %v1446 = vpop.f32.mrb[0].mxu0
  %v1447 = vadd.f32 %v1377, %v1446
  %v1448 = vpop.f32.mrb[0].mxu0
  %1449 = vdwg.mxu0
  %1450 = vmatprep.subr.mxu0 0.0
  %1451 = vmatpush1.msra.mxu0 %v383
  %1452 = vmatprep.subr.mxu0 0.0
  %1453 = vmatpush1.msra.mxu0 %v384
  %1454 = vmatprep.subr.mxu0 0.0
  %1455 = vmatpush1.msra.mxu0 %v385
  %1456 = vmatprep.subr.mxu0 0.0
  %1457 = vmatpush1.msra.mxu0 %v386
  %1458 = vmatprep.subr.mxu0 0.0
  %1459 = vmatpush1.msra.mxu0 %v387
  %1460 = vmatprep.subr.mxu0 0.0
  %1461 = vmatpush1.msra.mxu0 %v388
  %1462 = vmatprep.subr.mxu0 0.0
  %1463 = vmatpush1.msra.mxu0 %v389
  %1464 = vmatprep.subr.mxu0 0.0
  %1465 = vmatpush1.msra.mxu0 %v390
  %1466 = vmatprep.subr.mxu0 0.0
  %1467 = vmatpush1.msra.mxu0 %v391
  %1468 = vmatprep.subr.mxu0 0.0
  %1469 = vmatpush1.msra.mxu0 %v392
  %1470 = vmatprep.subr.mxu0 0.0
  %1471 = vmatpush1.msra.mxu0 %v393
  %1472 = vmatprep.subr.mxu0 0.0
  %1473 = vmatpush1.msra.mxu0 %v394
  %1474 = vmatprep.subr.mxu0 0.0
  %1475 = vmatpush1.msra.mxu0 %v395
  %1476 = vmatprep.subr.mxu0 0.0
  %1477 = vmatpush1.msra.mxu0 %v396
  %1478 = vmatprep.subr.mxu0 0.0
  %1479 = vmatpush1.msra.mxu0 %v397
  %1480 = vmatprep.subr.mxu0 0.0
  %1481 = vmatpush1.msra.mxu0 %v398
  %1482 = vmatprep.subr.mxu0 0.0
  %1483 = vmatpush1.msra.mxu0 %v399
  %1484 = vmatprep.subr.mxu0 0.0
  %1485 = vmatpush1.msra.mxu0 %v400
  %1486 = vmatprep.subr.mxu0 0.0
  %1487 = vmatpush1.msra.mxu0 %v401
  %1488 = vmatprep.subr.mxu0 0.0
  %1489 = vmatpush1.msra.mxu0 %v402
  %1490 = vmatprep.subr.mxu0 0.0
  %1491 = vmatpush1.msra.mxu0 %v403
  %1492 = vmatprep.subr.mxu0 0.0
  %1493 = vmatpush1.msra.mxu0 %v404
  %1494 = vmatprep.subr.mxu0 0.0
  %1495 = vmatpush1.msra.mxu0 %v405
  %1496 = vmatprep.subr.mxu0 0.0
  %1497 = vmatpush1.msra.mxu0 %v406
  %1498 = vmatprep.subr.mxu0 0.0
  %1499 = vmatpush1.msra.mxu0 %v407
  %1500 = vmatprep.subr.mxu0 0.0
  %1501 = vmatpush1.msra.mxu0 %v408
  %1502 = vmatprep.subr.mxu0 0.0
  %1503 = vmatpush1.msra.mxu0 %v409
  %1504 = vmatprep.subr.mxu0 0.0
  %1505 = vmatpush1.msra.mxu0 %v410
  %1506 = vmatprep.subr.mxu0 0.0
  %1507 = vmatpush1.msra.mxu0 %v411
  %1508 = vmatprep.subr.mxu0 0.0
  %1509 = vmatpush1.msra.mxu0 %v412
  %1510 = vmatprep.subr.mxu0 0.0
  %1511 = vmatpush1.msra.mxu0 %v413
  %1512 = vmatprep.subr.mxu0 0.0
  %1513 = vmatpush1.msra.mxu0 %v414
  %1514 = vmatprep.mubr.f32.mxu0 %v41
  %1515 = vmatmul.mubr.f32.gmra.mrb[0].mxu0 %v40
  %v1516 = vpop.f32.mrb[0].mxu0
  %v1517 = vadd.f32 %v1447, %v1516
  %v1518 = vpop.f32.mrb[0].mxu0
  %1519 = vdwg.mxu0
  %1520 = vmatprep.subr.mxu0 0.0
  %1521 = vmatpush1.msra.mxu0 %v415
  %1522 = vmatprep.subr.mxu0 0.0
  %1523 = vmatpush1.msra.mxu0 %v416
  %1524 = vmatprep.subr.mxu0 0.0
  %1525 = vmatpush1.msra.mxu0 %v417
  %1526 = vmatprep.subr.mxu0 0.0
  %1527 = vmatpush1.msra.mxu0 %v418
  %1528 = vmatprep.subr.mxu0 0.0
  %1529 = vmatpush1.msra.mxu0 %v419
  %1530 = vmatprep.subr.mxu0 0.0
  %1531 = vmatpush1.msra.mxu0 %v420
  %1532 = vmatprep.subr.mxu0 0.0
  %1533 = vmatpush1.msra.mxu0 %v421
  %1534 = vmatprep.subr.mxu0 0.0
  %1535 = vmatpush1.msra.mxu0 %v422
  %1536 = vmatprep.subr.mxu0 0.0
  %1537 = vmatpush1.msra.mxu0 %v423
  %1538 = vmatprep.subr.mxu0 0.0
  %1539 = vmatpush1.msra.mxu0 %v424
  %1540 = vmatprep.subr.mxu0 0.0
  %1541 = vmatpush1.msra.mxu0 %v425
  %1542 = vmatprep.subr.mxu0 0.0
  %1543 = vmatpush1.msra.mxu0 %v426
  %1544 = vmatprep.subr.mxu0 0.0
  %1545 = vmatpush1.msra.mxu0 %v427
  %1546 = vmatprep.subr.mxu0 0.0
  %1547 = vmatpush1.msra.mxu0 %v428
  %1548 = vmatprep.subr.mxu0 0.0
  %1549 = vmatpush1.msra.mxu0 %v429
  %1550 = vmatprep.subr.mxu0 0.0
  %1551 = vmatpush1.msra.mxu0 %v430
  %1552 = vmatprep.subr.mxu0 0.0
  %1553 = vmatpush1.msra.mxu0 %v431
  %1554 = vmatprep.subr.mxu0 0.0
  %1555 = vmatpush1.msra.mxu0 %v432
  %1556 = vmatprep.subr.mxu0 0.0
  %1557 = vmatpush1.msra.mxu0 %v433
  %1558 = vmatprep.subr.mxu0 0.0
  %1559 = vmatpush1.msra.mxu0 %v434
  %1560 = vmatprep.subr.mxu0 0.0
  %1561 = vmatpush1.msra.mxu0 %v435
  %1562 = vmatprep.subr.mxu0 0.0
  %1563 = vmatpush1.msra.mxu0 %v436
  %1564 = vmatprep.subr.mxu0 0.0
  %1565 = vmatpush1.msra.mxu0 %v437
  %1566 = vmatprep.subr.mxu0 0.0
  %1567 = vmatpush1.msra.mxu0 %v438
  %1568 = vmatprep.subr.mxu0 0.0
  %1569 = vmatpush1.msra.mxu0 %v439
  %1570 = vmatprep.subr.mxu0 0.0
  %1571 = vmatpush1.msra.mxu0 %v440
  %1572 = vmatprep.subr.mxu0 0.0
  %1573 = vmatpush1.msra.mxu0 %v441
  %1574 = vmatprep.subr.mxu0 0.0
  %1575 = vmatpush1.msra.mxu0 %v442
  %1576 = vmatprep.subr.mxu0 0.0
  %1577 = vmatpush1.msra.mxu0 %v443
  %1578 = vmatprep.subr.mxu0 0.0
  %1579 = vmatpush1.msra.mxu0 %v444
  %1580 = vmatprep.subr.mxu0 0.0
  %1581 = vmatpush1.msra.mxu0 %v445
  %1582 = vmatprep.subr.mxu0 0.0
  %1583 = vmatpush1.msra.mxu0 %v446
  %1584 = vmatprep.mubr.f32.mxu0 %v43
  %1585 = vmatmul.mubr.f32.gmra.mrb[0].mxu0 %v42
  %v1586 = vpop.f32.mrb[0].mxu0
  %v1587 = vadd.f32 %v1517, %v1586
  %v1588 = vpop.f32.mrb[0].mxu0
  %1589 = vdwg.mxu0
  %1590 = vmatprep.subr.mxu0 0.0
  %1591 = vmatpush1.msra.mxu0 %v447
  %1592 = vmatprep.subr.mxu0 0.0
  %1593 = vmatpush1.msra.mxu0 %v448
  %1594 = vmatprep.subr.mxu0 0.0
  %1595 = vmatpush1.msra.mxu0 %v449
  %1596 = vmatprep.subr.mxu0 0.0
  %1597 = vmatpush1.msra.mxu0 %v450
  %1598 = vmatprep.subr.mxu0 0.0
  %1599 = vmatpush1.msra.mxu0 %v451
  %1600 = vmatprep.subr.mxu0 0.0
  %1601 = vmatpush1.msra.mxu0 %v452
  %1602 = vmatprep.subr.mxu0 0.0
  %1603 = vmatpush1.msra.mxu0 %v453
  %1604 = vmatprep.subr.mxu0 0.0
  %1605 = vmatpush1.msra.mxu0 %v454
  %1606 = vmatprep.subr.mxu0 0.0
  %1607 = vmatpush1.msra.mxu0 %v455
  %1608 = vmatprep.subr.mxu0 0.0
  %1609 = vmatpush1.msra.mxu0 %v456
  %1610 = vmatprep.subr.mxu0 0.0
  %1611 = vmatpush1.msra.mxu0 %v457
  %1612 = vmatprep.subr.mxu0 0.0
  %1613 = vmatpush1.msra.mxu0 %v458
  %1614 = vmatprep.subr.mxu0 0.0
  %1615 = vmatpush1.msra.mxu0 %v459
  %1616 = vmatprep.subr.mxu0 0.0
  %1617 = vmatpush1.msra.mxu0 %v460
  %1618 = vmatprep.subr.mxu0 0.0
  %1619 = vmatpush1.msra.mxu0 %v461
  %1620 = vmatprep.subr.mxu0 0.0
  %1621 = vmatpush1.msra.mxu0 %v462
  %1622 = vmatprep.subr.mxu0 0.0
  %1623 = vmatpush1.msra.mxu0 %v463
  %1624 = vmatprep.subr.mxu0 0.0
  %1625 = vmatpush1.msra.mxu0 %v464
  %1626 = vmatprep.subr.mxu0 0.0
  %1627 = vmatpush1.msra.mxu0 %v465
  %1628 = vmatprep.subr.mxu0 0.0
  %1629 = vmatpush1.msra.mxu0 %v466
  %1630 = vmatprep.subr.mxu0 0.0
  %1631 = vmatpush1.msra.mxu0 %v467
  %1632 = vmatprep.subr.mxu0 0.0
  %1633 = vmatpush1.msra.mxu0 %v468
  %1634 = vmatprep.subr.mxu0 0.0
  %1635 = vmatpush1.msra.mxu0 %v469
  %1636 = vmatprep.subr.mxu0 0.0
  %1637 = vmatpush1.msra.mxu0 %v470
  %1638 = vmatprep.subr.mxu0 0.0
  %1639 = vmatpush1.msra.mxu0 %v471
  %1640 = vmatprep.subr.mxu0 0.0
  %1641 = vmatpush1.msra.mxu0 %v472
  %1642 = vmatprep.subr.mxu0 0.0
  %1643 = vmatpush1.msra.mxu0 %v473
  %1644 = vmatprep.subr.mxu0 0.0
  %1645 = vmatpush1.msra.mxu0 %v474
  %1646 = vmatprep.subr.mxu0 0.0
  %1647 = vmatpush1.msra.mxu0 %v475
  %1648 = vmatprep.subr.mxu0 0.0
  %1649 = vmatpush1.msra.mxu0 %v476
  %1650 = vmatprep.subr.mxu0 0.0
  %1651 = vmatpush1.msra.mxu0 %v477
  %1652 = vmatprep.subr.mxu0 0.0
  %1653 = vmatpush1.msra.mxu0 %v478
  %1654 = vmatprep.mubr.f32.mxu0 %v45
  %1655 = vmatmul.mubr.f32.gmra.mrb[0].mxu0 %v44
  %v1656 = vpop.f32.mrb[0].mxu0
  %v1657 = vadd.f32 %v1587, %v1656
  %v1658 = vpop.f32.mrb[0].mxu0
  %1659 = vdwg.mxu0
  %1660 = vmatprep.subr.mxu0 0.0
  %1661 = vmatpush1.msra.mxu0 %v479
  %1662 = vmatprep.subr.mxu0 0.0
  %1663 = vmatpush1.msra.mxu0 %v480
  %1664 = vmatprep.subr.mxu0 0.0
  %1665 = vmatpush1.msra.mxu0 %v481
  %1666 = vmatprep.subr.mxu0 0.0
  %1667 = vmatpush1.msra.mxu0 %v482
  %1668 = vmatprep.subr.mxu0 0.0
  %1669 = vmatpush1.msra.mxu0 %v483
  %1670 = vmatprep.subr.mxu0 0.0
  %1671 = vmatpush1.msra.mxu0 %v484
  %1672 = vmatprep.subr.mxu0 0.0
  %1673 = vmatpush1.msra.mxu0 %v485
  %1674 = vmatprep.subr.mxu0 0.0
  %1675 = vmatpush1.msra.mxu0 %v486
  %1676 = vmatprep.subr.mxu0 0.0
  %1677 = vmatpush1.msra.mxu0 %v487
  %1678 = vmatprep.subr.mxu0 0.0
  %1679 = vmatpush1.msra.mxu0 %v488
  %1680 = vmatprep.subr.mxu0 0.0
  %1681 = vmatpush1.msra.mxu0 %v489
  %1682 = vmatprep.subr.mxu0 0.0
  %1683 = vmatpush1.msra.mxu0 %v490
  %1684 = vmatprep.subr.mxu0 0.0
  %1685 = vmatpush1.msra.mxu0 %v491
  %1686 = vmatprep.subr.mxu0 0.0
  %1687 = vmatpush1.msra.mxu0 %v492
  %1688 = vmatprep.subr.mxu0 0.0
  %1689 = vmatpush1.msra.mxu0 %v493
  %1690 = vmatprep.subr.mxu0 0.0
  %1691 = vmatpush1.msra.mxu0 %v494
  %1692 = vmatprep.subr.mxu0 0.0
  %1693 = vmatpush1.msra.mxu0 %v495
  %1694 = vmatprep.subr.mxu0 0.0
  %1695 = vmatpush1.msra.mxu0 %v496
  %1696 = vmatprep.subr.mxu0 0.0
  %1697 = vmatpush1.msra.mxu0 %v497
  %1698 = vmatprep.subr.mxu0 0.0
  %1699 = vmatpush1.msra.mxu0 %v498
  %1700 = vmatprep.subr.mxu0 0.0
  %1701 = vmatpush1.msra.mxu0 %v499
  %1702 = vmatprep.subr.mxu0 0.0
  %1703 = vmatpush1.msra.mxu0 %v500
  %1704 = vmatprep.subr.mxu0 0.0
  %1705 = vmatpush1.msra.mxu0 %v501
  %1706 = vmatprep.subr.mxu0 0.0
  %1707 = vmatpush1.msra.mxu0 %v502
  %1708 = vmatprep.subr.mxu0 0.0
  %1709 = vmatpush1.msra.mxu0 %v503
  %1710 = vmatprep.subr.mxu0 0.0
  %1711 = vmatpush1.msra.mxu0 %v504
  %1712 = vmatprep.subr.mxu0 0.0
  %1713 = vmatpush1.msra.mxu0 %v505
  %1714 = vmatprep.subr.mxu0 0.0
  %1715 = vmatpush1.msra.mxu0 %v506
  %1716 = vmatprep.subr.mxu0 0.0
  %1717 = vmatpush1.msra.mxu0 %v507
  %1718 = vmatprep.subr.mxu0 0.0
  %1719 = vmatpush1.msra.mxu0 %v508
  %1720 = vmatprep.subr.mxu0 0.0
  %1721 = vmatpush1.msra.mxu0 %v509
  %1722 = vmatprep.subr.mxu0 0.0
  %1723 = vmatpush1.msra.mxu0 %v510
  %1724 = vmatprep.mubr.f32.mxu0 %v47
  %1725 = vmatmul.mubr.f32.gmra.mrb[0].mxu0 %v46
  %v1726 = vpop.f32.mrb[0].mxu0
  %v1727 = vadd.f32 %v1657, %v1726
  %v1728 = vpop.f32.mrb[0].mxu0
  %1729 = vdwg.mxu0
  %1730 = vmatprep.subr.mxu0 0.0
  %1731 = vmatpush1.msra.mxu0 %v511
  %1732 = vmatprep.subr.mxu0 0.0
  %1733 = vmatpush1.msra.mxu0 %v512
  %1734 = vmatprep.subr.mxu0 0.0
  %1735 = vmatpush1.msra.mxu0 %v513
  %1736 = vmatprep.subr.mxu0 0.0
  %1737 = vmatpush1.msra.mxu0 %v514
  %1738 = vmatprep.subr.mxu0 0.0
  %1739 = vmatpush1.msra.mxu0 %v515
  %1740 = vmatprep.subr.mxu0 0.0
  %1741 = vmatpush1.msra.mxu0 %v516
  %1742 = vmatprep.subr.mxu0 0.0
  %1743 = vmatpush1.msra.mxu0 %v517
  %1744 = vmatprep.subr.mxu0 0.0
  %1745 = vmatpush1.msra.mxu0 %v518
  %1746 = vmatprep.subr.mxu0 0.0
  %1747 = vmatpush1.msra.mxu0 %v519
  %1748 = vmatprep.subr.mxu0 0.0
  %1749 = vmatpush1.msra.mxu0 %v520
  %1750 = vmatprep.subr.mxu0 0.0
  %1751 = vmatpush1.msra.mxu0 %v521
  %1752 = vmatprep.subr.mxu0 0.0
  %1753 = vmatpush1.msra.mxu0 %v522
  %1754 = vmatprep.subr.mxu0 0.0
  %1755 = vmatpush1.msra.mxu0 %v523
  %1756 = vmatprep.subr.mxu0 0.0
  %1757 = vmatpush1.msra.mxu0 %v524
  %1758 = vmatprep.subr.mxu0 0.0
  %1759 = vmatpush1.msra.mxu0 %v525
  %1760 = vmatprep.subr.mxu0 0.0
  %1761 = vmatpush1.msra.mxu0 %v526
  %1762 = vmatprep.subr.mxu0 0.0
  %1763 = vmatpush1.msra.mxu0 %v527
  %1764 = vmatprep.subr.mxu0 0.0
  %1765 = vmatpush1.msra.mxu0 %v528
  %1766 = vmatprep.subr.mxu0 0.0
  %1767 = vmatpush1.msra.mxu0 %v529
  %1768 = vmatprep.subr.mxu0 0.0
  %1769 = vmatpush1.msra.mxu0 %v530
  %1770 = vmatprep.subr.mxu0 0.0
  %1771 = vmatpush1.msra.mxu0 %v531
  %1772 = vmatprep.subr.mxu0 0.0
  %1773 = vmatpush1.msra.mxu0 %v532
  %1774 = vmatprep.subr.mxu0 0.0
  %1775 = vmatpush1.msra.mxu0 %v533
  %1776 = vmatprep.subr.mxu0 0.0
  %1777 = vmatpush1.msra.mxu0 %v534
  %1778 = vmatprep.subr.mxu0 0.0
  %1779 = vmatpush1.msra.mxu0 %v535
  %1780 = vmatprep.subr.mxu0 0.0
  %1781 = vmatpush1.msra.mxu0 %v536
  %1782 = vmatprep.subr.mxu0 0.0
  %1783 = vmatpush1.msra.mxu0 %v537
  %1784 = vmatprep.subr.mxu0 0.0
  %1785 = vmatpush1.msra.mxu0 %v538
  %1786 = vmatprep.subr.mxu0 0.0
  %1787 = vmatpush1.msra.mxu0 %v539
  %1788 = vmatprep.subr.mxu0 0.0
  %1789 = vmatpush1.msra.mxu0 %v540
  %1790 = vmatprep.subr.mxu0 0.0
  %1791 = vmatpush1.msra.mxu0 %v541
  %1792 = vmatprep.subr.mxu0 0.0
  %1793 = vmatpush1.msra.mxu0 %v542
  %1794 = vmatprep.mubr.f32.mxu0 %v49
  %1795 = vmatmul.mubr.f32.gmra.mrb[0].mxu0 %v48
  %v1796 = vpop.f32.mrb[0].mxu0
  %v1797 = vadd.f32 %v1727, %v1796
  %v1798 = vpop.f32.mrb[0].mxu0
  %1799 = vdwg.mxu0
  %1800 = vmatprep.subr.mxu0 0.0
  %1801 = vmatpush1.msra.mxu0 %v543
  %1802 = vmatprep.subr.mxu0 0.0
  %1803 = vmatpush1.msra.mxu0 %v544
  %1804 = vmatprep.subr.mxu0 0.0
  %1805 = vmatpush1.msra.mxu0 %v545
  %1806 = vmatprep.subr.mxu0 0.0
  %1807 = vmatpush1.msra.mxu0 %v546
  %1808 = vmatprep.subr.mxu0 0.0
  %1809 = vmatpush1.msra.mxu0 %v547
  %1810 = vmatprep.subr.mxu0 0.0
  %1811 = vmatpush1.msra.mxu0 %v548
  %1812 = vmatprep.subr.mxu0 0.0
  %1813 = vmatpush1.msra.mxu0 %v549
  %1814 = vmatprep.subr.mxu0 0.0
  %1815 = vmatpush1.msra.mxu0 %v550
  %1816 = vmatprep.subr.mxu0 0.0
  %1817 = vmatpush1.msra.mxu0 %v551
  %1818 = vmatprep.subr.mxu0 0.0
  %1819 = vmatpush1.msra.mxu0 %v552
  %1820 = vmatprep.subr.mxu0 0.0
  %1821 = vmatpush1.msra.mxu0 %v553
  %1822 = vmatprep.subr.mxu0 0.0
  %1823 = vmatpush1.msra.mxu0 %v554
  %1824 = vmatprep.subr.mxu0 0.0
  %1825 = vmatpush1.msra.mxu0 %v555
  %1826 = vmatprep.subr.mxu0 0.0
  %1827 = vmatpush1.msra.mxu0 %v556
  %1828 = vmatprep.subr.mxu0 0.0
  %1829 = vmatpush1.msra.mxu0 %v557
  %1830 = vmatprep.subr.mxu0 0.0
  %1831 = vmatpush1.msra.mxu0 %v558
  %1832 = vmatprep.subr.mxu0 0.0
  %1833 = vmatpush1.msra.mxu0 %v559
  %1834 = vmatprep.subr.mxu0 0.0
  %1835 = vmatpush1.msra.mxu0 %v560
  %1836 = vmatprep.subr.mxu0 0.0
  %1837 = vmatpush1.msra.mxu0 %v561
  %1838 = vmatprep.subr.mxu0 0.0
  %1839 = vmatpush1.msra.mxu0 %v562
  %1840 = vmatprep.subr.mxu0 0.0
  %1841 = vmatpush1.msra.mxu0 %v563
  %1842 = vmatprep.subr.mxu0 0.0
  %1843 = vmatpush1.msra.mxu0 %v564
  %1844 = vmatprep.subr.mxu0 0.0
  %1845 = vmatpush1.msra.mxu0 %v565
  %1846 = vmatprep.subr.mxu0 0.0
  %1847 = vmatpush1.msra.mxu0 %v566
  %1848 = vmatprep.subr.mxu0 0.0
  %1849 = vmatpush1.msra.mxu0 %v567
  %1850 = vmatprep.subr.mxu0 0.0
  %1851 = vmatpush1.msra.mxu0 %v568
  %1852 = vmatprep.subr.mxu0 0.0
  %1853 = vmatpush1.msra.mxu0 %v569
  %1854 = vmatprep.subr.mxu0 0.0
  %1855 = vmatpush1.msra.mxu0 %v570
  %1856 = vmatprep.subr.mxu0 0.0
  %1857 = vmatpush1.msra.mxu0 %v571
  %1858 = vmatprep.subr.mxu0 0.0
  %1859 = vmatpush1.msra.mxu0 %v572
  %1860 = vmatprep.subr.mxu0 0.0
  %1861 = vmatpush1.msra.mxu0 %v573
  %1862 = vmatprep.subr.mxu0 0.0
  %1863 = vmatpush1.msra.mxu0 %v574
  %1864 = vmatprep.mubr.f32.mxu0 %v51
  %1865 = vmatmul.mubr.f32.gmra.mrb[0].mxu0 %v50
  %v1866 = vpop.f32.mrb[0].mxu0
  %v1867 = vadd.f32 %v1797, %v1866
  %v1868 = vpop.f32.mrb[0].mxu0
  %1869 = vdwg.mxu0
  %1870 = vmatprep.subr.mxu0 0.0
  %1871 = vmatpush1.msra.mxu0 %v575
  %1872 = vmatprep.subr.mxu0 0.0
  %1873 = vmatpush1.msra.mxu0 %v576
  %1874 = vmatprep.subr.mxu0 0.0
  %1875 = vmatpush1.msra.mxu0 %v577
  %1876 = vmatprep.subr.mxu0 0.0
  %1877 = vmatpush1.msra.mxu0 %v578
  %1878 = vmatprep.subr.mxu0 0.0
  %1879 = vmatpush1.msra.mxu0 %v579
  %1880 = vmatprep.subr.mxu0 0.0
  %1881 = vmatpush1.msra.mxu0 %v580
  %1882 = vmatprep.subr.mxu0 0.0
  %1883 = vmatpush1.msra.mxu0 %v581
  %1884 = vmatprep.subr.mxu0 0.0
  %1885 = vmatpush1.msra.mxu0 %v582
  %1886 = vmatprep.subr.mxu0 0.0
  %1887 = vmatpush1.msra.mxu0 %v583
  %1888 = vmatprep.subr.mxu0 0.0
  %1889 = vmatpush1.msra.mxu0 %v584
  %1890 = vmatprep.subr.mxu0 0.0
  %1891 = vmatpush1.msra.mxu0 %v585
  %1892 = vmatprep.subr.mxu0 0.0
  %1893 = vmatpush1.msra.mxu0 %v586
  %1894 = vmatprep.subr.mxu0 0.0
  %1895 = vmatpush1.msra.mxu0 %v587
  %1896 = vmatprep.subr.mxu0 0.0
  %1897 = vmatpush1.msra.mxu0 %v588
  %1898 = vmatprep.subr.mxu0 0.0
  %1899 = vmatpush1.msra.mxu0 %v589
  %1900 = vmatprep.subr.mxu0 0.0
  %1901 = vmatpush1.msra.mxu0 %v590
  %1902 = vmatprep.subr.mxu0 0.0
  %1903 = vmatpush1.msra.mxu0 %v591
  %1904 = vmatprep.subr.mxu0 0.0
  %1905 = vmatpush1.msra.mxu0 %v592
  %1906 = vmatprep.subr.mxu0 0.0
  %1907 = vmatpush1.msra.mxu0 %v593
  %1908 = vmatprep.subr.mxu0 0.0
  %1909 = vmatpush1.msra.mxu0 %v594
  %1910 = vmatprep.subr.mxu0 0.0
  %1911 = vmatpush1.msra.mxu0 %v595
  %1912 = vmatprep.subr.mxu0 0.0
  %1913 = vmatpush1.msra.mxu0 %v596
  %1914 = vmatprep.subr.mxu0 0.0
  %1915 = vmatpush1.msra.mxu0 %v597
  %1916 = vmatprep.subr.mxu0 0.0
  %1917 = vmatpush1.msra.mxu0 %v598
  %1918 = vmatprep.subr.mxu0 0.0
  %1919 = vmatpush1.msra.mxu0 %v599
  %1920 = vmatprep.subr.mxu0 0.0
  %1921 = vmatpush1.msra.mxu0 %v600
  %1922 = vmatprep.subr.mxu0 0.0
  %1923 = vmatpush1.msra.mxu0 %v601
  %1924 = vmatprep.subr.mxu0 0.0
  %1925 = vmatpush1.msra.mxu0 %v602
  %1926 = vmatprep.subr.mxu0 0.0
  %1927 = vmatpush1.msra.mxu0 %v603
  %1928 = vmatprep.subr.mxu0 0.0
  %1929 = vmatpush1.msra.mxu0 %v604
  %1930 = vmatprep.subr.mxu0 0.0
  %1931 = vmatpush1.msra.mxu0 %v605
  %1932 = vmatprep.subr.mxu0 0.0
  %1933 = vmatpush1.msra.mxu0 %v606
  %1934 = vmatprep.mubr.f32.mxu0 %v53
  %1935 = vmatmul.mubr.f32.gmra.mrb[0].mxu0 %v52
  %v1936 = vpop.f32.mrb[0].mxu0
  %v1937 = vadd.f32 %v1867, %v1936
  %v1938 = vpop.f32.mrb[0].mxu0
  %1939 = vdwg.mxu0
  %1940 = vmatprep.subr.mxu0 0.0
  %1941 = vmatpush1.msra.mxu0 %v607
  %1942 = vmatprep.subr.mxu0 0.0
  %1943 = vmatpush1.msra.mxu0 %v608
  %1944 = vmatprep.subr.mxu0 0.0
  %1945 = vmatpush1.msra.mxu0 %v609
  %1946 = vmatprep.subr.mxu0 0.0
  %1947 = vmatpush1.msra.mxu0 %v610
  %1948 = vmatprep.subr.mxu0 0.0
  %1949 = vmatpush1.msra.mxu0 %v611
  %1950 = vmatprep.subr.mxu0 0.0
  %1951 = vmatpush1.msra.mxu0 %v612
  %1952 = vmatprep.subr.mxu0 0.0
  %1953 = vmatpush1.msra.mxu0 %v613
  %1954 = vmatprep.subr.mxu0 0.0
  %1955 = vmatpush1.msra.mxu0 %v614
  %1956 = vmatprep.subr.mxu0 0.0
  %1957 = vmatpush1.msra.mxu0 %v615
  %1958 = vmatprep.subr.mxu0 0.0
  %1959 = vmatpush1.msra.mxu0 %v616
  %1960 = vmatprep.subr.mxu0 0.0
  %1961 = vmatpush1.msra.mxu0 %v617
  %1962 = vmatprep.subr.mxu0 0.0
  %1963 = vmatpush1.msra.mxu0 %v618
  %1964 = vmatprep.subr.mxu0 0.0
  %1965 = vmatpush1.msra.mxu0 %v619
  %1966 = vmatprep.subr.mxu0 0.0
  %1967 = vmatpush1.msra.mxu0 %v620
  %1968 = vmatprep.subr.mxu0 0.0
  %1969 = vmatpush1.msra.mxu0 %v621
  %1970 = vmatprep.subr.mxu0 0.0
  %1971 = vmatpush1.msra.mxu0 %v622
  %1972 = vmatprep.subr.mxu0 0.0
  %1973 = vmatpush1.msra.mxu0 %v623
  %1974 = vmatprep.subr.mxu0 0.0
  %1975 = vmatpush1.msra.mxu0 %v624
  %1976 = vmatprep.subr.mxu0 0.0
  %1977 = vmatpush1.msra.mxu0 %v625
  %1978 = vmatprep.subr.mxu0 0.0
  %1979 = vmatpush1.msra.mxu0 %v626
  %1980 = vmatprep.subr.mxu0 0.0
  %1981 = vmatpush1.msra.mxu0 %v627
  %1982 = vmatprep.subr.mxu0 0.0
  %1983 = vmatpush1.msra.mxu0 %v628
  %1984 = vmatprep.subr.mxu0 0.0
  %1985 = vmatpush1.msra.mxu0 %v629
  %1986 = vmatprep.subr.mxu0 0.0
  %1987 = vmatpush1.msra.mxu0 %v630
  %1988 = vmatprep.subr.mxu0 0.0
  %1989 = vmatpush1.msra.mxu0 %v631
  %1990 = vmatprep.subr.mxu0 0.0
  %1991 = vmatpush1.msra.mxu0 %v632
  %1992 = vmatprep.subr.mxu0 0.0
  %1993 = vmatpush1.msra.mxu0 %v633
  %1994 = vmatprep.subr.mxu0 0.0
  %1995 = vmatpush1.msra.mxu0 %v634
  %1996 = vmatprep.subr.mxu0 0.0
  %1997 = vmatpush1.msra.mxu0 %v635
  %1998 = vmatprep.subr.mxu0 0.0
  %1999 = vmatpush1.msra.mxu0 %v636
  %2000 = vmatprep.subr.mxu0 0.0
  %2001 = vmatpush1.msra.mxu0 %v637
  %2002 = vmatprep.subr.mxu0 0.0
  %2003 = vmatpush1.msra.mxu0 %v638
  %2004 = vmatprep.mubr.f32.mxu0 %v55
  %2005 = vmatmul.mubr.f32.gmra.mrb[0].mxu0 %v54
  %v2006 = vpop.f32.mrb[0].mxu0
  %v2007 = vadd.f32 %v1937, %v2006
  %v2008 = vpop.f32.mrb[0].mxu0
  %2009 = vdwg.mxu0
  %2010 = vmatprep.subr.mxu0 0.0
  %2011 = vmatpush1.msra.mxu0 %v639
  %2012 = vmatprep.subr.mxu0 0.0
  %2013 = vmatpush1.msra.mxu0 %v640
  %2014 = vmatprep.subr.mxu0 0.0
  %2015 = vmatpush1.msra.mxu0 %v641
  %2016 = vmatprep.subr.mxu0 0.0
  %2017 = vmatpush1.msra.mxu0 %v642
  %2018 = vmatprep.subr.mxu0 0.0
  %2019 = vmatpush1.msra.mxu0 %v643
  %2020 = vmatprep.subr.mxu0 0.0
  %2021 = vmatpush1.msra.mxu0 %v644
  %2022 = vmatprep.subr.mxu0 0.0
  %2023 = vmatpush1.msra.mxu0 %v645
  %2024 = vmatprep.subr.mxu0 0.0
  %2025 = vmatpush1.msra.mxu0 %v646
  %2026 = vmatprep.subr.mxu0 0.0
  %2027 = vmatpush1.msra.mxu0 %v647
  %2028 = vmatprep.subr.mxu0 0.0
  %2029 = vmatpush1.msra.mxu0 %v648
  %2030 = vmatprep.subr.mxu0 0.0
  %2031 = vmatpush1.msra.mxu0 %v649
  %2032 = vmatprep.subr.mxu0 0.0
  %2033 = vmatpush1.msra.mxu0 %v650
  %2034 = vmatprep.subr.mxu0 0.0
  %2035 = vmatpush1.msra.mxu0 %v651
  %2036 = vmatprep.subr.mxu0 0.0
  %2037 = vmatpush1.msra.mxu0 %v652
  %2038 = vmatprep.subr.mxu0 0.0
  %2039 = vmatpush1.msra.mxu0 %v653
  %2040 = vmatprep.subr.mxu0 0.0
  %2041 = vmatpush1.msra.mxu0 %v654
  %2042 = vmatprep.subr.mxu0 0.0
  %2043 = vmatpush1.msra.mxu0 %v655
  %2044 = vmatprep.subr.mxu0 0.0
  %2045 = vmatpush1.msra.mxu0 %v656
  %2046 = vmatprep.subr.mxu0 0.0
  %2047 = vmatpush1.msra.mxu0 %v657
  %2048 = vmatprep.subr.mxu0 0.0
  %2049 = vmatpush1.msra.mxu0 %v658
  %2050 = vmatprep.subr.mxu0 0.0
  %2051 = vmatpush1.msra.mxu0 %v659
  %2052 = vmatprep.subr.mxu0 0.0
  %2053 = vmatpush1.msra.mxu0 %v660
  %2054 = vmatprep.subr.mxu0 0.0
  %2055 = vmatpush1.msra.mxu0 %v661
  %2056 = vmatprep.subr.mxu0 0.0
  %2057 = vmatpush1.msra.mxu0 %v662
  %2058 = vmatprep.subr.mxu0 0.0
  %2059 = vmatpush1.msra.mxu0 %v663
  %2060 = vmatprep.subr.mxu0 0.0
  %2061 = vmatpush1.msra.mxu0 %v664
  %2062 = vmatprep.subr.mxu0 0.0
  %2063 = vmatpush1.msra.mxu0 %v665
  %2064 = vmatprep.subr.mxu0 0.0
  %2065 = vmatpush1.msra.mxu0 %v666
  %2066 = vmatprep.subr.mxu0 0.0
  %2067 = vmatpush1.msra.mxu0 %v667
  %2068 = vmatprep.subr.mxu0 0.0
  %2069 = vmatpush1.msra.mxu0 %v668
  %2070 = vmatprep.subr.mxu0 0.0
  %2071 = vmatpush1.msra.mxu0 %v669
  %2072 = vmatprep.subr.mxu0 0.0
  %2073 = vmatpush1.msra.mxu0 %v670
  %2074 = vmatprep.mubr.f32.mxu0 %v57
  %2075 = vmatmul.mubr.f32.gmra.mrb[0].mxu0 %v56
  %v2076 = vpop.f32.mrb[0].mxu0
  %v2077 = vadd.f32 %v2007, %v2076
  %v2078 = vpop.f32.mrb[0].mxu0
  %2079 = vdwg.mxu0
  %2080 = vmatprep.subr.mxu0 0.0
  %2081 = vmatpush1.msra.mxu0 %v671
  %2082 = vmatprep.subr.mxu0 0.0
  %2083 = vmatpush1.msra.mxu0 %v672
  %2084 = vmatprep.subr.mxu0 0.0
  %2085 = vmatpush1.msra.mxu0 %v673
  %2086 = vmatprep.subr.mxu0 0.0
  %2087 = vmatpush1.msra.mxu0 %v674
  %2088 = vmatprep.subr.mxu0 0.0
  %2089 = vmatpush1.msra.mxu0 %v675
  %2090 = vmatprep.subr.mxu0 0.0
  %2091 = vmatpush1.msra.mxu0 %v676
  %2092 = vmatprep.subr.mxu0 0.0
  %2093 = vmatpush1.msra.mxu0 %v677
  %2094 = vmatprep.subr.mxu0 0.0
  %2095 = vmatpush1.msra.mxu0 %v678
  %2096 = vmatprep.subr.mxu0 0.0
  %2097 = vmatpush1.msra.mxu0 %v679
  %2098 = vmatprep.subr.mxu0 0.0
  %2099 = vmatpush1.msra.mxu0 %v680
  %2100 = vmatprep.subr.mxu0 0.0
  %2101 = vmatpush1.msra.mxu0 %v681
  %2102 = vmatprep.subr.mxu0 0.0
  %2103 = vmatpush1.msra.mxu0 %v682
  %2104 = vmatprep.subr.mxu0 0.0
  %2105 = vmatpush1.msra.mxu0 %v683
  %2106 = vmatprep.subr.mxu0 0.0
  %2107 = vmatpush1.msra.mxu0 %v684
  %2108 = vmatprep.subr.mxu0 0.0
  %2109 = vmatpush1.msra.mxu0 %v685
  %2110 = vmatprep.subr.mxu0 0.0
  %2111 = vmatpush1.msra.mxu0 %v686
  %2112 = vmatprep.subr.mxu0 0.0
  %2113 = vmatpush1.msra.mxu0 %v687
  %2114 = vmatprep.subr.mxu0 0.0
  %2115 = vmatpush1.msra.mxu0 %v688
  %2116 = vmatprep.subr.mxu0 0.0
  %2117 = vmatpush1.msra.mxu0 %v689
  %2118 = vmatprep.subr.mxu0 0.0
  %2119 = vmatpush1.msra.mxu0 %v690
  %2120 = vmatprep.subr.mxu0 0.0
  %2121 = vmatpush1.msra.mxu0 %v691
  %2122 = vmatprep.subr.mxu0 0.0
  %2123 = vmatpush1.msra.mxu0 %v692
  %2124 = vmatprep.subr.mxu0 0.0
  %2125 = vmatpush1.msra.mxu0 %v693
  %2126 = vmatprep.subr.mxu0 0.0
  %2127 = vmatpush1.msra.mxu0 %v694
  %2128 = vmatprep.subr.mxu0 0.0
  %2129 = vmatpush1.msra.mxu0 %v695
  %2130 = vmatprep.subr.mxu0 0.0
  %2131 = vmatpush1.msra.mxu0 %v696
  %2132 = vmatprep.subr.mxu0 0.0
  %2133 = vmatpush1.msra.mxu0 %v697
  %2134 = vmatprep.subr.mxu0 0.0
  %2135 = vmatpush1.msra.mxu0 %v698
  %2136 = vmatprep.subr.mxu0 0.0
  %2137 = vmatpush1.msra.mxu0 %v699
  %2138 = vmatprep.subr.mxu0 0.0
  %2139 = vmatpush1.msra.mxu0 %v700
  %2140 = vmatprep.subr.mxu0 0.0
  %2141 = vmatpush1.msra.mxu0 %v701
  %2142 = vmatprep.subr.mxu0 0.0
  %2143 = vmatpush1.msra.mxu0 %v702
  %2144 = vmatprep.mubr.f32.mxu0 %v59
  %2145 = vmatmul.mubr.f32.gmra.mrb[0].mxu0 %v58
  %v2146 = vpop.f32.mrb[0].mxu0
  %v2147 = vadd.f32 %v2077, %v2146
  %v2148 = vpop.f32.mrb[0].mxu0
  %2149 = vdwg.mxu0
  %2150 = vmatprep.subr.mxu0 0.0
  %2151 = vmatpush1.msra.mxu0 %v703
  %2152 = vmatprep.subr.mxu0 0.0
  %2153 = vmatpush1.msra.mxu0 %v704
  %2154 = vmatprep.subr.mxu0 0.0
  %2155 = vmatpush1.msra.mxu0 %v705
  %2156 = vmatprep.subr.mxu0 0.0
  %2157 = vmatpush1.msra.mxu0 %v706
  %2158 = vmatprep.subr.mxu0 0.0
  %2159 = vmatpush1.msra.mxu0 %v707
  %2160 = vmatprep.subr.mxu0 0.0
  %2161 = vmatpush1.msra.mxu0 %v708
  %2162 = vmatprep.subr.mxu0 0.0
  %2163 = vmatpush1.msra.mxu0 %v709
  %2164 = vmatprep.subr.mxu0 0.0
  %2165 = vmatpush1.msra.mxu0 %v710
  %2166 = vmatprep.subr.mxu0 0.0
  %2167 = vmatpush1.msra.mxu0 %v711
  %2168 = vmatprep.subr.mxu0 0.0
  %2169 = vmatpush1.msra.mxu0 %v712
  %2170 = vmatprep.subr.mxu0 0.0
  %2171 = vmatpush1.msra.mxu0 %v713
  %2172 = vmatprep.subr.mxu0 0.0
  %2173 = vmatpush1.msra.mxu0 %v714
  %2174 = vmatprep.subr.mxu0 0.0
  %2175 = vmatpush1.msra.mxu0 %v715
  %2176 = vmatprep.subr.mxu0 0.0
  %2177 = vmatpush1.msra.mxu0 %v716
  %2178 = vmatprep.subr.mxu0 0.0
  %2179 = vmatpush1.msra.mxu0 %v717
  %2180 = vmatprep.subr.mxu0 0.0
  %2181 = vmatpush1.msra.mxu0 %v718
  %2182 = vmatprep.subr.mxu0 0.0
  %2183 = vmatpush1.msra.mxu0 %v719
  %2184 = vmatprep.subr.mxu0 0.0
  %2185 = vmatpush1.msra.mxu0 %v720
  %2186 = vmatprep.subr.mxu0 0.0
  %2187 = vmatpush1.msra.mxu0 %v721
  %2188 = vmatprep.subr.mxu0 0.0
  %2189 = vmatpush1.msra.mxu0 %v722
  %2190 = vmatprep.subr.mxu0 0.0
  %2191 = vmatpush1.msra.mxu0 %v723
  %2192 = vmatprep.subr.mxu0 0.0
  %2193 = vmatpush1.msra.mxu0 %v724
  %2194 = vmatprep.subr.mxu0 0.0
  %2195 = vmatpush1.msra.mxu0 %v725
  %2196 = vmatprep.subr.mxu0 0.0
  %2197 = vmatpush1.msra.mxu0 %v726
  %2198 = vmatprep.subr.mxu0 0.0
  %2199 = vmatpush1.msra.mxu0 %v727
  %2200 = vmatprep.subr.mxu0 0.0
  %2201 = vmatpush1.msra.mxu0 %v728
  %2202 = vmatprep.subr.mxu0 0.0
  %2203 = vmatpush1.msra.mxu0 %v729
  %2204 = vmatprep.subr.mxu0 0.0
  %2205 = vmatpush1.msra.mxu0 %v730
  %2206 = vmatprep.subr.mxu0 0.0
  %2207 = vmatpush1.msra.mxu0 %v731
  %2208 = vmatprep.subr.mxu0 0.0
  %2209 = vmatpush1.msra.mxu0 %v732
  %2210 = vmatprep.subr.mxu0 0.0
  %2211 = vmatpush1.msra.mxu0 %v733
  %2212 = vmatprep.subr.mxu0 0.0
  %2213 = vmatpush1.msra.mxu0 %v734
  %2214 = vmatprep.mubr.f32.mxu0 %v61
  %2215 = vmatmul.mubr.f32.gmra.mrb[0].mxu0 %v60
  %v2216 = vpop.f32.mrb[0].mxu0
  %v2217 = vadd.f32 %v2147, %v2216
  %v2218 = vpop.f32.mrb[0].mxu0
  %2219 = vdwg.mxu0
  %2220 = vmatprep.subr.mxu0 0.0
  %2221 = vmatpush1.msra.mxu0 %v735
  %2222 = vmatprep.subr.mxu0 0.0
  %2223 = vmatpush1.msra.mxu0 %v736
  %2224 = vmatprep.subr.mxu0 0.0
  %2225 = vmatpush1.msra.mxu0 %v737
  %2226 = vmatprep.subr.mxu0 0.0
  %2227 = vmatpush1.msra.mxu0 %v738
  %2228 = vmatprep.subr.mxu0 0.0
  %2229 = vmatpush1.msra.mxu0 0.0
  %2230 = vmatprep.subr.mxu0 0.0
  %2231 = vmatpush1.msra.mxu0 0.0
  %2232 = vmatprep.subr.mxu0 0.0
  %2233 = vmatpush1.msra.mxu0 0.0
  %2234 = vmatprep.subr.mxu0 0.0
  %2235 = vmatpush1.msra.mxu0 0.0
  %2236 = vmatprep.subr.mxu0 0.0
  %2237 = vmatpush1.msra.mxu0 0.0
  %2238 = vmatprep.subr.mxu0 0.0
  %2239 = vmatpush1.msra.mxu0 0.0
  %2240 = vmatprep.subr.mxu0 0.0
  %2241 = vmatpush1.msra.mxu0 0.0
  %2242 = vmatprep.subr.mxu0 0.0
  %2243 = vmatpush1.msra.mxu0 0.0
  %2244 = vmatprep.subr.mxu0 0.0
  %2245 = vmatpush1.msra.mxu0 0.0
  %2246 = vmatprep.subr.mxu0 0.0
  %2247 = vmatpush1.msra.mxu0 0.0
  %2248 = vmatprep.subr.mxu0 0.0
  %2249 = vmatpush1.msra.mxu0 0.0
  %2250 = vmatprep.subr.mxu0 0.0
  %2251 = vmatpush1.msra.mxu0 0.0
  %2252 = vmatprep.subr.mxu0 0.0
  %2253 = vmatpush1.msra.mxu0 0.0
  %2254 = vmatprep.subr.mxu0 0.0
  %2255 = vmatpush1.msra.mxu0 0.0
  %2256 = vmatprep.subr.mxu0 0.0
  %2257 = vmatpush1.msra.mxu0 0.0
  %2258 = vmatprep.subr.mxu0 0.0
  %2259 = vmatpush1.msra.mxu0 0.0
  %2260 = vmatprep.subr.mxu0 0.0
  %2261 = vmatpush1.msra.mxu0 0.0
  %2262 = vmatprep.subr.mxu0 0.0
  %2263 = vmatpush1.msra.mxu0 0.0
  %2264 = vmatprep.subr.mxu0 0.0
  %2265 = vmatpush1.msra.mxu0 0.0
  %2266 = vmatprep.subr.mxu0 0.0
  %2267 = vmatpush1.msra.mxu0 0.0
  %2268 = vmatprep.subr.mxu0 0.0
  %2269 = vmatpush1.msra.mxu0 0.0
  %2270 = vmatprep.subr.mxu0 0.0
  %2271 = vmatpush1.msra.mxu0 0.0
  %2272 = vmatprep.subr.mxu0 0.0
  %2273 = vmatpush1.msra.mxu0 0.0
  %2274 = vmatprep.subr.mxu0 0.0
  %2275 = vmatpush1.msra.mxu0 0.0
  %2276 = vmatprep.subr.mxu0 0.0
  %2277 = vmatpush1.msra.mxu0 0.0
  %2278 = vmatprep.subr.mxu0 0.0
  %2279 = vmatpush1.msra.mxu0 0.0
  %2280 = vmatprep.subr.mxu0 0.0
  %2281 = vmatpush1.msra.mxu0 0.0
  %2282 = vmatprep.subr.mxu0 0.0
  %2283 = vmatpush1.msra.mxu0 0.0
  %2284 = vmatprep.mubr.f32.mxu0 0.0
  %2285 = vmatmul.mubr.f32.gmra.mrb[0].mxu0 %v748
  %v2286 = vpop.f32.mrb[0].mxu0
  %v2287 = vadd.f32 %v2217, %v2286
  %v2288 = vpop.f32.mrb[0].mxu0
  %2289 = vdwg.mxu0
  %v2290 = vmax.f32 %v2287, 0.0
  %v2291 = vld [vmem:[%s3] sm:$0xff]
  %v2292 = vld [vmem:[%s3 + $0x8] sm:$0xff]
  %v2293 = vld [vmem:[%s3 + $0x10] sm:$0xff]
  %v2294 = vld [vmem:[%s3 + $0x18] sm:$0xff]
  %v2295 = vld [vmem:[%s3 + $0x20] sm:$0xff]
  %v2296 = vld [vmem:[%s3 + $0x28] sm:$0xff]
  %v2297 = vld [vmem:[%s3 + $0x30] sm:$0xff]
  %v2298 = vld [vmem:[%s3 + $0x38] sm:$0xff]
  %v2299 = vld [vmem:[%s3 + $0x40] sm:$0xff]
  %v2300 = vld [vmem:[%s3 + $0x48] sm:$0xff]
  %v2301 = vld [vmem:[%s3 + $0x50] sm:$0xff]
  %v2302 = vld [vmem:[%s3 + $0x58] sm:$0xff]
  %v2303 = vld [vmem:[%s3 + $0x60] sm:$0xff]
  %v2304 = vld [vmem:[%s3 + $0x68] sm:$0xff]
  %v2305 = vld [vmem:[%s3 + $0x70] sm:$0xff]
  %v2306 = vld [vmem:[%s3 + $0x78] sm:$0xff]
  %v2307 = vld [vmem:[%s4] sm:$0x1]
  %v2309 = vlaneseq
  %v2310 = vshrl.u32 %v2309, 7
  %v2311 = vsub.s32 0, %v2310
  %v2312 = vrot.slane %v2307, %v2311
  %2314 = vmatprep.subr.mxu0 0.0
  %2315 = vmatpush1.msra.mxu0 %v2291
  %2316 = vmatprep.subr.mxu0 0.0
  %2317 = vmatpush1.msra.mxu0 %v2292
  %2318 = vmatprep.subr.mxu0 0.0
  %2319 = vmatpush1.msra.mxu0 %v2293
  %2320 = vmatprep.subr.mxu0 0.0
  %2321 = vmatpush1.msra.mxu0 %v2294
  %2322 = vmatprep.subr.mxu0 0.0
  %2323 = vmatpush1.msra.mxu0 %v2295
  %2324 = vmatprep.subr.mxu0 0.0
  %2325 = vmatpush1.msra.mxu0 %v2296
  %2326 = vmatprep.subr.mxu0 0.0
  %2327 = vmatpush1.msra.mxu0 %v2297
  %2328 = vmatprep.subr.mxu0 0.0
  %2329 = vmatpush1.msra.mxu0 %v2298
  %2330 = vmatprep.subr.mxu0 0.0
  %2331 = vmatpush1.msra.mxu0 %v2299
  %2332 = vmatprep.subr.mxu0 0.0
  %2333 = vmatpush1.msra.mxu0 %v2300
  %2334 = vmatprep.subr.mxu0 0.0
  %2335 = vmatpush1.msra.mxu0 %v2301
  %2336 = vmatprep.subr.mxu0 0.0
  %2337 = vmatpush1.msra.mxu0 %v2302
  %2338 = vmatprep.subr.mxu0 0.0
  %2339 = vmatpush1.msra.mxu0 %v2303
  %2340 = vmatprep.subr.mxu0 0.0
  %2341 = vmatpush1.msra.mxu0 %v2304
  %2342 = vmatprep.subr.mxu0 0.0
  %2343 = vmatpush1.msra.mxu0 %v2305
  %2344 = vmatprep.subr.mxu0 0.0
  %2345 = vmatpush1.msra.mxu0 %v2306
  %2346 = vmatprep.subr.mxu0 0.0
  %2347 = vmatpush1.msra.mxu0 0.0
  %2348 = vmatprep.subr.mxu0 0.0
  %2349 = vmatpush1.msra.mxu0 0.0
  %2350 = vmatprep.subr.mxu0 0.0
  %2351 = vmatpush1.msra.mxu0 0.0
  %2352 = vmatprep.subr.mxu0 0.0
  %2353 = vmatpush1.msra.mxu0 0.0
  %2354 = vmatprep.subr.mxu0 0.0
  %2355 = vmatpush1.msra.mxu0 0.0
  %2356 = vmatprep.subr.mxu0 0.0
  %2357 = vmatpush1.msra.mxu0 0.0
  %2358 = vmatprep.subr.mxu0 0.0
  %2359 = vmatpush1.msra.mxu0 0.0
  %2360 = vmatprep.subr.mxu0 0.0
  %2361 = vmatpush1.msra.mxu0 0.0
  %2362 = vmatprep.subr.mxu0 0.0
  %2363 = vmatpush1.msra.mxu0 0.0
  %2364 = vmatprep.subr.mxu0 0.0
  %2365 = vmatpush1.msra.mxu0 0.0
  %2366 = vmatprep.subr.mxu0 0.0
  %2367 = vmatpush1.msra.mxu0 0.0
  %2368 = vmatprep.subr.mxu0 0.0
  %2369 = vmatpush1.msra.mxu0 0.0
  %2370 = vmatprep.subr.mxu0 0.0
  %2371 = vmatpush1.msra.mxu0 0.0
  %2372 = vmatprep.subr.mxu0 0.0
  %2373 = vmatpush1.msra.mxu0 0.0
  %2374 = vmatprep.subr.mxu0 0.0
  %2375 = vmatpush1.msra.mxu0 0.0
  %2376 = vmatprep.subr.mxu0 0.0
  %2377 = vmatpush1.msra.mxu0 0.0
  %2378 = vmatprep.mubr.f32.mxu0 0.0
  %2379 = vmatmul.mubr.f32.gmra.mrb[0].mxu0 %v2290
  %v2380 = vpop.f32.mrb[0].mxu0
  %v2381 = vadd.f32 %v2312, %v2380
  %v2382 = vpop.f32.mrb[0].mxu0
  %2383 = vdwg.mxu0
  %2384 = vst [vmem:[%s5] sm:$0xff] %v2381
  // Predicated region
  $region22: #{classification_network_forward.5} parent=0 // pred_check
    _
  $region23: #{classification_network_forward.5} parent=0 // pred_check_branch
    %2386 = sbr.rel (0) target = $region25
  $region24: #{classification_network_forward.5} parent=0 // pred_region
    _
  $region25: #{classification_network_forward.5} parent=0 // pred_fallthru
    _
  // Predicated region
  $region26: #{classification_network_forward.5} parent=0 // pred_check
    _
  $region27: #{classification_network_forward.5} parent=0 // pred_check_branch
    %2388 = sbr.rel (0) target = $region29
  $region28: #{classification_network_forward.5} parent=0 // pred_region
    _
  $region29: #{classification_network_forward.5} parent=0 // pred_fallthru
    _

</llo_original>
